<compile_context>
chip_gen: v6e
topology: v6e:2x2x1
jax: 0.10.0
libtpu: 0.0.40
codegen_flags: <defaults>
</compile_context>

<pallas_src>
import functools

import numpy as np
import jax
import jax.numpy as jnp
from jax.experimental import pallas as pl
from jax.experimental.pallas import tpu as pltpu


_FUSE_MAX_M = 256                 # largest single-tile M for fully fused BN
_GEMM_TILE_M = 256                # M-tile cap for multi-tile GEMMs
_VMEM_LIMIT = 32 * 1024 * 1024    # raise v5e's 16 MiB scoped-VMEM default


def _round_up(x, m):
    return (x + m - 1) // m * m


def _mtile(M, cap):
    tiles = -(-M // cap)
    tm = _round_up(-(-M // tiles), 16)   # bf16 packs 16 rows per sublane group
    return tm, tm * tiles, tiles


def _pad_rows(a, Mp):
    M = a.shape[0]
    return a if Mp == M else jnp.pad(a, ((0, Mp - M), (0, 0)))


def _apply_act(x, act):
    if act == "leaky":
        return jnp.where(x > 0, x, 0.2 * x)      # LeakyReLU(0.2)
    if act == "relu":
        return jnp.maximum(x, 0.0)
    if act == "tanh":
        return jnp.tanh(x)
    return x


# ----------------------------------------------------------------------------
# Pallas kernels
# ----------------------------------------------------------------------------
def _fused_gemm_kernel(*refs, n_ops, act, bn, m_actual, needs_mask, eps):
    # (sum of) bf16 GEMMs with f32 MXU accumulation, fused bias
    # [+ in-kernel train-mode BatchNorm (single M tile)] + activation.
    a_refs = refs[:n_ops]
    w_refs = refs[n_ops:2 * n_ops]
    p_ref = refs[2 * n_ops]           # (8, N): row0 bias, row1 gamma, row2 beta
    o_ref = refs[2 * n_ops + 1]

    acc = jnp.dot(a_refs[0][...], w_refs[0][...],
                  preferred_element_type=jnp.float32)
    for k in range(1, n_ops):         # skip-connection operand (no HBM concat)
        acc = acc + jnp.dot(a_refs[k][...], w_refs[k][...],
                            preferred_element_type=jnp.float32)
    acc = acc + p_ref[0:1, :]

    if bn:
        if needs_mask:                # only emitted when Mp != M (compile-time)
            rows = jax.lax.broadcasted_iota(jnp.int32, acc.shape, 0)
            accm = jnp.where(rows < m_actual, acc, 0.0)
        else:
            accm = acc
        inv_n = 1.0 / float(m_actual)
        mean = jnp.sum(accm, axis=0, keepdims=True) * inv_n
        var = jnp.sum(accm * accm, axis=0, keepdims=True) * inv_n - mean * mean
        acc = (acc - mean) * (jax.lax.rsqrt(var + eps) * p_ref[1:2, :]) + p_ref[2:3, :]

    o_ref[...] = _apply_act(acc, act).astype(o_ref.dtype)


def _gemm_pstats_kernel(*refs, n_ops, m_actual, tm, needs_mask):
    # GEMM + bias -> bf16 output, plus PER-TILE partial sum / sum-of-squares
    # written to the tile's own (8, N) stats block.  No cross-tile RMW, so the
    # M grid axis stays fully "parallel" (v7x megacore).
    a_refs = refs[:n_ops]
    w_refs = refs[n_ops:2 * n_ops]
    p_ref = refs[2 * n_ops]           # (8, N): row0 bias
    o_ref = refs[2 * n_ops + 1]
    stats_ref = refs[2 * n_ops + 2]   # (8, N) per-tile block

    acc = jnp.dot(a_refs[0][...], w_refs[0][...],
                  preferred_element_type=jnp.float32)
    for k in range(1, n_ops):
        acc = acc + jnp.dot(a_refs[k][...], w_refs[k][...],
                            preferred_element_type=jnp.float32)
    acc = acc + p_ref[0:1, :]
    o_ref[...] = acc.astype(o_ref.dtype)

    if needs_mask:
        rows = (jax.lax.broadcasted_iota(jnp.int32, acc.shape, 0)
                + pl.program_id(0) * tm)
        accm = jnp.where(rows < m_actual, acc, 0.0)
    else:
        accm = acc
    stats_ref[0:1, :] = jnp.sum(accm, axis=0, keepdims=True)
    stats_ref[1:2, :] = jnp.sum(accm * accm, axis=0, keepdims=True)
    stats_ref[2:8, :] = jnp.zeros((6, accm.shape[-1]), jnp.float32)


def _bn_act_kernel(y_ref, p_ref, o_ref, *, act, count, eps):
    # Normalize + activation; stats/gamma/beta packed into one (8, N) block:
    # row0 sum, row1 sumsq, row2 gamma, row3 beta.
    inv_n = 1.0 / count
    mean = p_ref[0:1, :] * inv_n
    var = p_ref[1:2, :] * inv_n - mean * mean
    y = y_ref[...].astype(jnp.float32)
    y = (y - mean) * (jax.lax.rsqrt(var + eps) * p_ref[2:3, :]) + p_ref[3:4, :]
    o_ref[...] = _apply_act(y, act).astype(o_ref.dtype)


# ----------------------------------------------------------------------------
# pallas_call wrappers
# ----------------------------------------------------------------------------
def _gemm_cost(Mp, Ks, N, out_bytes, act):
    flops = 2 * Mp * N * sum(Ks)
    trans = Mp * N if act == "tanh" else 0
    bytes_accessed = (sum(Mp * K * 2 for K in Ks) + sum(K * N * 2 for K in Ks)
                      + 8 * N * 4 + Mp * N * out_bytes)
    return pl.CostEstimate(flops=flops, transcendentals=trans,
                           bytes_accessed=bytes_accessed)


def fused_gemm(a_list, w_list, pblock, act, bn,
               out_dtype=jnp.bfloat16, eps=1e-5):
    n_ops = len(a_list)
    M = a_list[0].shape[0]
    N = w_list[0].shape[1]
    Ks = [w.shape[0] for w in w_list]
    if bn:
        # BN statistics are computed in-kernel over a single M tile;
        # callers only take this path when M <= _FUSE_MAX_M.
        tm = _round_up(M, 16)
        Mp, tiles = tm, 1
    else:
        tm, Mp, tiles = _mtile(M, _GEMM_TILE_M)
    needs_mask = Mp != M
    in_specs = ([pl.BlockSpec((tm, K), lambda i: (i, 0)) for K in Ks]
                + [pl.BlockSpec((K, N), lambda i: (0, 0)) for K in Ks]
                + [pl.BlockSpec((8, N), lambda i: (0, 0))])
    out = pl.pallas_call(
        functools.partial(_fused_gemm_kernel, n_ops=n_ops, act=act, bn=bn,
                          m_actual=M, needs_mask=needs_mask, eps=eps),
        out_shape=jax.ShapeDtypeStruct((Mp, N), out_dtype),
        grid_spec=pltpu.PrefetchScalarGridSpec(
            num_scalar_prefetch=0,
            grid=(tiles,),
            in_specs=in_specs,
            out_specs=pl.BlockSpec((tm, N), lambda i: (i, 0))),
        compiler_params=pltpu.CompilerParams(
            dimension_semantics=("parallel",),
            vmem_limit_bytes=_VMEM_LIMIT),
        cost_estimate=_gemm_cost(Mp, Ks, N, np.dtype(out_dtype).itemsize, act),
    )(*[_pad_rows(a, Mp) for a in a_list], *w_list, pblock)
    return out if Mp == M else out[:M]


def gemm_pstats(a_list, w_list, pblock, out_dtype=jnp.bfloat16):
    n_ops = len(a_list)
    M = a_list[0].shape[0]
    N = w_list[0].shape[1]
    Ks = [w.shape[0] for w in w_list]
    tm, Mp, tiles = _mtile(M, _GEMM_TILE_M)
    needs_mask = Mp != M
    in_specs = ([pl.BlockSpec((tm, K), lambda i: (i, 0)) for K in Ks]
                + [pl.BlockSpec((K, N), lambda i: (0, 0)) for K in Ks]
                + [pl.BlockSpec((8, N), lambda i: (0, 0))])
    out, pstats = pl.pallas_call(
        functools.partial(_gemm_pstats_kernel, n_ops=n_ops, m_actual=M,
                          tm=tm, needs_mask=needs_mask),
        out_shape=(jax.ShapeDtypeStruct((Mp, N), out_dtype),
                   jax.ShapeDtypeStruct((tiles * 8, N), jnp.float32)),
        grid_spec=pltpu.PrefetchScalarGridSpec(
            num_scalar_prefetch=0,
            grid=(tiles,),
            in_specs=in_specs,
            out_specs=(pl.BlockSpec((tm, N), lambda i: (i, 0)),
                       pl.BlockSpec((8, N), lambda i: (i, 0)))),
        compiler_params=pltpu.CompilerParams(
            dimension_semantics=("parallel",),
            vmem_limit_bytes=_VMEM_LIMIT),
        cost_estimate=_gemm_cost(Mp, Ks, N, np.dtype(out_dtype).itemsize, None),
    )(*[_pad_rows(a, Mp) for a in a_list], *w_list, pblock)
    stats = pstats.reshape(tiles, 8, N)[:, :2, :].sum(axis=0)   # (2, N) f32
    return (out if Mp == M else out[:M]), stats


def bn_act(y, stats, gamma, beta, act, count, eps=1e-5):
    M, N = y.shape
    tm, Mp, tiles = _mtile(M, 512)
    # pack stats + affine params into one sublane-aligned (8, N) block.
    pblock = jnp.concatenate(
        [stats, gamma, beta, jnp.zeros((4, N), jnp.float32)], axis=0)
    out = pl.pallas_call(
        functools.partial(_bn_act_kernel, act=act, count=float(count), eps=eps),
        out_shape=jax.ShapeDtypeStruct((Mp, N), jnp.bfloat16),
        grid_spec=pltpu.PrefetchScalarGridSpec(
            num_scalar_prefetch=0,
            grid=(tiles,),
            in_specs=[pl.BlockSpec((tm, N), lambda i: (i, 0)),
                      pl.BlockSpec((8, N), lambda i: (0, 0))],
            out_specs=pl.BlockSpec((tm, N), lambda i: (i, 0))),
        compiler_params=pltpu.CompilerParams(
            dimension_semantics=("parallel",),
            vmem_limit_bytes=_VMEM_LIMIT),
    )(_pad_rows(y, Mp), pblock)
    return out if Mp == M else out[:M]


# ----------------------------------------------------------------------------
# Layer glue (tiny tensors; all heavy math is in the Pallas GEMMs above)
# ----------------------------------------------------------------------------
def _im2col(x, k, stride, pad):
    # TODO(synk): fold into the GEMM kernel (implicit GEMM: kh,kw as trailing
    # 'arbitrary' grid axes over a windowed input BlockSpec) to avoid the HBM
    # patch-matrix materialization.
    B, H, W, C = x.shape
    xp = jnp.pad(x, ((0, 0), (pad, pad), (pad, pad), (0, 0)))
    Ho = (H + 2 * pad - k) // stride + 1
    Wo = (W + 2 * pad - k) // stride + 1
    cols = []
    for i in range(k):
        for j in range(k):
            cols.append(xp[:, i:i + stride * (Ho - 1) + 1:stride,
                           j:j + stride * (Wo - 1) + 1:stride, :])
    a = jnp.concatenate(cols, axis=-1).reshape(B * Ho * Wo, k * k * C)
    return a, (B, Ho, Wo)


def _conv_layer(x, p, act, bn):
    # Conv2d(k=4, s=2, p=1) [+ BatchNorm] + activation.
    a, (B, Ho, Wo) = _im2col(x, 4, 2, 1)
    M = B * Ho * Wo
    N = p["ws"][0].shape[1]
    if bn and M > _FUSE_MAX_M:
        # two-pass: GEMM emits bf16 pre-norm acts + per-tile partial stats.
        y, stats = gemm_pstats([a], p["ws"], p["p"])
        y = bn_act(y, stats, p["gamma"], p["beta"], act, count=M)
    else:
        y = fused_gemm([a], p["ws"], p["p"], act, bn)
    return y.reshape(B, Ho, Wo, N)


def _convt_layer(x_list, p, act, bn, out_dtype=jnp.bfloat16):
    # ConvTranspose2d(k=4, s=2, p=1) via sub-pixel decomposition: one GEMM on
    # 3x3/stride-1 patches with the 4 phase sub-kernels packed along N, then
    # a pixel shuffle.  x_list holds one or two NHWC tensors whose channel
    # concat is the layer input (skip connections are never materialized).
    B, H, W, _ = x_list[0].shape
    a_list = [_im2col(xi, 3, 1, 1)[0] for xi in x_list]
    M = B * H * W
    N4 = p["ws"][0].shape[1]
    Cout = N4 // 4
    if bn:
        # TODO(synk): fold the 4 sub-pixel phases in-kernel (pltpu.roll on the
        # per-column stats) so this layer can use the fully fused path too.
        y, stats = gemm_pstats(a_list, p["ws"], p["p"])
        st = jnp.tile(stats.reshape(2, 4, Cout).sum(axis=1), (1, 4))
        y = bn_act(y, st, p["gamma"], p["beta"], act, count=4 * M)
    else:
        y = fused_gemm(a_list, p["ws"], p["p"], act, bn=False,
                       out_dtype=out_dtype)
    y = y.reshape(B, H, W, 2, 2, Cout)
    y = jnp.transpose(y, (0, 1, 3, 2, 4, 5)).reshape(B, 2 * H, 2 * W, Cout)
    return y


# ----------------------------------------------------------------------------
# Parameters: canonical init + one-time packing into GEMM-ready layout
# ----------------------------------------------------------------------------
def init_generator_params(key, c_i=1, c_o=2, nf=64):
    keys = iter(jax.random.split(key, 16))

    def conv_p(cin, cout):
        return {"w": 0.02 * jax.random.normal(next(keys), (4, 4, cin, cout),
                                              jnp.float32),
                "b": jnp.zeros((cout,), jnp.float32)}

    def bn_p(c):
        return {"gamma": 1.0 + 0.02 * jax.random.normal(next(keys), (c,),
                                                        jnp.float32),
                "beta": jnp.zeros((c,), jnp.float32)}

    return {
        "d1": conv_p(c_i, nf),
        "d2": conv_p(nf, nf * 2), "bn_d2": bn_p(nf * 2),
        "d3": conv_p(nf * 2, nf * 4), "bn_d3": bn_p(nf * 4),
        "u1": conv_p(nf * 4, nf * 2), "bn_u1": bn_p(nf * 2),
        "u2": conv_p(nf * 4, nf), "bn_u2": bn_p(nf),
        "u3": conv_p(nf * 2, c_o),
    }


# sub-pixel decomposition of a 4x4/s2/p1 transposed conv:
# (output parity a, 3-tap window position p) -> 1-D kernel tap.
_PHASE_TAP = {(0, 0): 3, (0, 1): 1, (1, 1): 2, (1, 2): 0}


def _convt_weight_matrix(w):
    """(4,4,Cin,Cout) ConvTranspose weights -> (9*Cin, 4*Cout) GEMM matrix."""
    _, _, cin, cout = w.shape
    wn = np.asarray(w, np.float32)
    wm = np.zeros((3, 3, cin, 2, 2, cout), np.float32)
    for a in range(2):
        for b in range(2):
            for p in range(3):
                for q in range(3):
                    ka = _PHASE_TAP.get((a, p))
                    kb = _PHASE_TAP.get((b, q))
                    if ka is not None and kb is not None:
                        wm[p, q, :, a, b, :] = wn[ka, kb]
    return jnp.asarray(wm.reshape(9 * cin, 4 * cout))


def _pack_param_block(bias_row, gamma_row=None, beta_row=None):
    """bias [+ gamma + beta] -> one sublane-aligned (8, N) f32 block."""
    rows = [bias_row.reshape(1, -1).astype(jnp.float32)]
    if gamma_row is not None:
        rows += [gamma_row.reshape(1, -1).astype(jnp.float32),
                 beta_row.reshape(1, -1).astype(jnp.float32)]
    N = rows[0].shape[1]
    rows.append(jnp.zeros((8 - len(rows), N), jnp.float32))
    return jnp.concatenate(rows, axis=0)


def prepare_generator_params(raw, nf=64, c_o_pad=32):
    """One-time packing: bf16 GEMM weight matrices (split along K for
    skip-connection operands) and (8, N) f32 parameter blocks."""

    def conv(p, bnp=None):
        kh, kw, cin, cout = p["w"].shape
        w = p["w"].reshape(kh * kw * cin, cout).astype(jnp.bfloat16)
        gamma = beta = None
        d = {"ws": [w]}
        if bnp is not None:
            gamma = bnp["gamma"].astype(jnp.float32)
            beta = bnp["beta"].astype(jnp.float32)
            d["gamma"] = gamma.reshape(1, cout)
            d["beta"] = beta.reshape(1, cout)
        d["p"] = _pack_param_block(p["b"], gamma, beta)
        return d

    def convt(p, bnp=None, split=None, cout_pad=None):
        w, b = p["w"], p["b"]
        if cout_pad is not None:     # pad final 2 channels -> lane-dense N
            w = jnp.pad(w, ((0, 0), (0, 0), (0, 0), (0, cout_pad - w.shape[-1])))
            b = jnp.pad(b, ((0, cout_pad - b.shape[0]),))
        cout = w.shape[-1]
        if split is None:
            ws = [_convt_weight_matrix(w).astype(jnp.bfloat16)]
        else:                        # skip-connection: split K into 2 operands
            ws = [_convt_weight_matrix(w[:, :, :split, :]).astype(jnp.bfloat16),
                  _convt_weight_matrix(w[:, :, split:, :]).astype(jnp.bfloat16)]
        d = {"ws": ws, "p": _pack_param_block(jnp.tile(b, 4))}
        if bnp is not None:
            d["gamma"] = jnp.tile(bnp["gamma"], 4).reshape(1, 4 * cout).astype(jnp.float32)
            d["beta"] = jnp.tile(bnp["beta"], 4).reshape(1, 4 * cout).astype(jnp.float32)
        return d

    return {
        "d1": conv(raw["d1"]),
        "d2": conv(raw["d2"], raw["bn_d2"]),
        "d3": conv(raw["d3"], raw["bn_d3"]),
        "u1": convt(raw["u1"], raw["bn_u1"]),
        "u2": convt(raw["u2"], raw["bn_u2"], split=nf * 2),
        "u3": convt(raw["u3"], split=nf, cout_pad=c_o_pad),
    }


# ----------------------------------------------------------------------------
# Generator forward (== cGAN.forward(): fake_color = generator(L))
# ----------------------------------------------------------------------------
@jax.jit
def cgan_forward(params, L_nchw):
    """L: (B,1,H,W) float32 -> fake_color: (B,2,H,W) float32."""
    x = jnp.transpose(L_nchw, (0, 2, 3, 1)).astype(jnp.bfloat16)   # NCHW->NHWC
    # encoder
    d1 = _conv_layer(x, params["d1"], "leaky", bn=False)           # H/2,  64
    d2 = _conv_layer(d1, params["d2"], "leaky", bn=True)           # H/4, 128
    d3 = _conv_layer(d2, params["d3"], "leaky", bn=True)           # H/8, 256
    # decoder; skip connections enter as separate GEMM operands (no concat)
    u1 = _convt_layer([d3], params["u1"], "relu", bn=True)         # H/4, 128
    u2 = _convt_layer([u1, d2], params["u2"], "relu", bn=True)     # H/2,  64
    out = _convt_layer([u2, d1], params["u3"], "tanh", bn=False)   # H, 32 (2 real)
    out = out[..., :2].astype(jnp.float32)                         # drop pad, f32
    return jnp.transpose(out, (0, 3, 1, 2))                        # NHWC -> NCHW


if __name__ == "__main__":
    key = jax.random.PRNGKey(0)
    k_param, k_data = jax.random.split(key)

    raw = init_generator_params(k_param, c_i=1, c_o=2, nf=64)
    params = prepare_generator_params(raw)      # one-time GEMM-layout packing

    # L channel input (as in cGAN.setup_input / forward), small shape.
    L = jax.random.normal(k_data, (2, 1, 16, 16), jnp.float32)

    fake_color = cgan_forward(params, L)
    jax.block_until_ready(fake_color)

    assert fake_color.shape == (2, 2, 16, 16), fake_color.shape
    assert bool(jnp.all(jnp.isfinite(fake_color)))
    assert bool(jnp.all(jnp.abs(fake_color) <= 1.0 + 1e-5))  # tanh output
    print("KERNEL_OK")
</pallas_src>

<mosaic_0001>
module attributes {stable_mosaic.version = 11 : i64} {
  func.func @_fused_gemm_kernel(%arg0: i32, %arg1: memref<128x16xbf16, #tpu.memory_space<vmem>>, %arg2: memref<16x64xbf16, #tpu.memory_space<vmem>>, %arg3: memref<8x64xf32, #tpu.memory_space<vmem>>, %arg4: memref<128x64xbf16, #tpu.memory_space<vmem>>) attributes {dimension_semantics = [#tpu.dimension_semantics<parallel>], iteration_bounds = array<i64: 1>, scalar_prefetch = 0 : i64, scratch_operands = 0 : i64, tpu.core_type = #tpu.core_type<tc>, window_params = [{transform_indices = @transform_0, window_bounds = array<i64: 128, 16>}, {pipeline_mode = #tpu.pipeline_mode<synchronous>, transform_indices = @transform_1, window_bounds = array<i64: 16, 64>}, {pipeline_mode = #tpu.pipeline_mode<synchronous>, transform_indices = @transform_2, window_bounds = array<i64: 8, 64>}, {transform_indices = @transform_3, window_bounds = array<i64: 128, 64>}]} {
    %c0 = arith.constant 0 : index
    %c0_0 = arith.constant 0 : index
    %0 = vector.load %arg1[%c0, %c0_0] : memref<128x16xbf16, #tpu.memory_space<vmem>>, vector<128x16xbf16>
    %c0_1 = arith.constant 0 : index
    %c0_2 = arith.constant 0 : index
    %1 = vector.load %arg2[%c0_1, %c0_2] : memref<16x64xbf16, #tpu.memory_space<vmem>>, vector<16x64xbf16>
    %cst = arith.constant dense<0.000000e+00> : vector<128x64xf32>
    %2 = tpu.matmul %0, %1, %cst {dimension_numbers = #tpu.dot_dimension_numbers<[1], [0], [0], [1], [0, 0, 1, 1], [], []>} : vector<128x16xbf16>, vector<16x64xbf16>, vector<128x64xf32> -> vector<128x64xf32>
    %c0_3 = arith.constant 0 : index
    %c0_4 = arith.constant 0 : index
    %3 = vector.load %arg3[%c0_3, %c0_4] : memref<8x64xf32, #tpu.memory_space<vmem>>, vector<1x64xf32>
    %4 = vector.broadcast %3 : vector<1x64xf32> to vector<128x64xf32>
    %5 = arith.addf %2, %4 : vector<128x64xf32>
    %cst_5 = arith.constant 0.000000e+00 : f32
    %6 = vector.broadcast %cst_5 : f32 to vector<128x64xf32>
    %7 = arith.cmpf ogt, %5, %6 : vector<128x64xf32>
    %cst_6 = arith.constant 2.000000e-01 : f32
    %8 = vector.broadcast %cst_6 : f32 to vector<128x64xf32>
    %9 = arith.mulf %8, %5 : vector<128x64xf32>
    %10 = arith.select %7, %5, %9 : vector<128x64xi1>, vector<128x64xf32>
    %11 = arith.truncf %10 : vector<128x64xf32> to vector<128x64xbf16>
    %c0_7 = arith.constant 0 : index
    %c0_8 = arith.constant 0 : index
    %12 = vector.load %arg4[%c0_7, %c0_8] : memref<128x64xbf16, #tpu.memory_space<vmem>>, vector<128x64xbf16>
    tpu.vector_store %arg4[%c0_7, %c0_8], %11 {strides = array<i32>} : memref<128x64xbf16, #tpu.memory_space<vmem>>, vector<128x64xbf16>,
    return
  }
  func.func @transform_0(%arg0: i32) -> (i32, i32) {
    %c0_i32 = arith.constant 0 : i32
    %c0_i32_0 = arith.constant 0 : i32
    return %arg0, %c0_i32 : i32, i32
  }
  func.func @transform_1(%arg0: i32) -> (i32, i32) {
    %c0_i32 = arith.constant 0 : i32
    %c0_i32_0 = arith.constant 0 : i32
    %c0_i32_1 = arith.constant 0 : i32
    return %c0_i32, %c0_i32_0 : i32, i32
  }
  func.func @transform_2(%arg0: i32) -> (i32, i32) {
    %c0_i32 = arith.constant 0 : i32
    %c0_i32_0 = arith.constant 0 : i32
    %c0_i32_1 = arith.constant 0 : i32
    return %c0_i32, %c0_i32_0 : i32, i32
  }
  func.func @transform_3(%arg0: i32) -> (i32, i32) {
    %c0_i32 = arith.constant 0 : i32
    %c0_i32_0 = arith.constant 0 : i32
    return %arg0, %c0_i32 : i32, i32
  }
}

module attributes {stable_mosaic.version = 11 : i64} {
  func.func @_fused_gemm_kernel(%arg0: i32, %arg1: memref<32x1024xbf16, #tpu.memory_space<vmem>>, %arg2: memref<1024x128xbf16, #tpu.memory_space<vmem>>, %arg3: memref<8x128xf32, #tpu.memory_space<vmem>>, %arg4: memref<32x128xbf16, #tpu.memory_space<vmem>>) attributes {dimension_semantics = [#tpu.dimension_semantics<parallel>], iteration_bounds = array<i64: 1>, scalar_prefetch = 0 : i64, scratch_operands = 0 : i64, tpu.core_type = #tpu.core_type<tc>, window_params = [{transform_indices = @transform_0, window_bounds = array<i64: 32, 1024>}, {pipeline_mode = #tpu.pipeline_mode<synchronous>, transform_indices = @transform_1, window_bounds = array<i64: 1024, 128>}, {pipeline_mode = #tpu.pipeline_mode<synchronous>, transform_indices = @transform_2, window_bounds = array<i64: 8, 128>}, {transform_indices = @transform_3, window_bounds = array<i64: 32, 128>}]} {
    %c0 = arith.constant 0 : index
    %c0_0 = arith.constant 0 : index
    %0 = vector.load %arg1[%c0, %c0_0] : memref<32x1024xbf16, #tpu.memory_space<vmem>>, vector<32x1024xbf16>
    %c0_1 = arith.constant 0 : index
    %c0_2 = arith.constant 0 : index
    %1 = vector.load %arg2[%c0_1, %c0_2] : memref<1024x128xbf16, #tpu.memory_space<vmem>>, vector<1024x128xbf16>
    %cst = arith.constant dense<0.000000e+00> : vector<32x128xf32>
    %2 = tpu.matmul %0, %1, %cst {dimension_numbers = #tpu.dot_dimension_numbers<[1], [0], [0], [1], [0, 0, 1, 1], [], []>} : vector<32x1024xbf16>, vector<1024x128xbf16>, vector<32x128xf32> -> vector<32x128xf32>
    %c0_3 = arith.constant 0 : index
    %c0_4 = arith.constant 0 : index
    %3 = vector.load %arg3[%c0_3, %c0_4] : memref<8x128xf32, #tpu.memory_space<vmem>>, vector<1x128xf32>
    %4 = vector.broadcast %3 : vector<1x128xf32> to vector<32x128xf32>
    %5 = arith.addf %2, %4 : vector<32x128xf32>
    %cst_5 = arith.constant dense<0.000000e+00> : vector<128xf32>
    %6 = vector.multi_reduction <add>, %5, %cst_5 [0] : vector<32x128xf32> to vector<128xf32>
    %7 = vector.shape_cast %6 : vector<128xf32> to vector<1x128xf32>
    %cst_6 = arith.constant 3.125000e-02 : f32
    %8 = vector.broadcast %cst_6 : f32 to vector<1x128xf32>
    %9 = arith.mulf %7, %8 : vector<1x128xf32>
    %10 = arith.mulf %5, %5 : vector<32x128xf32>
    %cst_7 = arith.constant dense<0.000000e+00> : vector<128xf32>
    %11 = vector.multi_reduction <add>, %10, %cst_7 [0] : vector<32x128xf32> to vector<128xf32>
    %12 = vector.shape_cast %11 : vector<128xf32> to vector<1x128xf32>
    %cst_8 = arith.constant 3.125000e-02 : f32
    %13 = vector.broadcast %cst_8 : f32 to vector<1x128xf32>
    %14 = arith.mulf %12, %13 : vector<1x128xf32>
    %15 = arith.mulf %9, %9 : vector<1x128xf32>
    %16 = arith.subf %14, %15 : vector<1x128xf32>
    %17 = vector.broadcast %9 : vector<1x128xf32> to vector<32x128xf32>
    %18 = arith.subf %5, %17 : vector<32x128xf32>
    %cst_9 = arith.constant 9.99999974E-6 : f32
    %19 = vector.broadcast %cst_9 : f32 to vector<1x128xf32>
    %20 = arith.addf %16, %19 : vector<1x128xf32>
    %21 = math.rsqrt %20 : vector<1x128xf32>
    %c1 = arith.constant 1 : index
    %c0_10 = arith.constant 0 : index
    %22 = vector.load %arg3[%c1, %c0_10] : memref<8x128xf32, #tpu.memory_space<vmem>>, vector<1x128xf32>
    %23 = arith.mulf %21, %22 : vector<1x128xf32>
    %24 = vector.broadcast %23 : vector<1x128xf32> to vector<32x128xf32>
    %25 = arith.mulf %18, %24 : vector<32x128xf32>
    %c2 = arith.constant 2 : index
    %c0_11 = arith.constant 0 : index
    %26 = vector.load %arg3[%c2, %c0_11] : memref<8x128xf32, #tpu.memory_space<vmem>>, vector<1x128xf32>
    %27 = vector.broadcast %26 : vector<1x128xf32> to vector<32x128xf32>
    %28 = arith.addf %25, %27 : vector<32x128xf32>
    %cst_12 = arith.constant 0.000000e+00 : f32
    %29 = vector.broadcast %cst_12 : f32 to vector<32x128xf32>
    %30 = arith.cmpf ogt, %28, %29 : vector<32x128xf32>
    %cst_13 = arith.constant 2.000000e-01 : f32
    %31 = vector.broadcast %cst_13 : f32 to vector<32x128xf32>
    %32 = arith.mulf %31, %28 : vector<32x128xf32>
    %33 = arith.select %30, %28, %32 : vector<32x128xi1>, vector<32x128xf32>
    %34 = arith.truncf %33 : vector<32x128xf32> to vector<32x128xbf16>
    %c0_14 = arith.constant 0 : index
    %c0_15 = arith.constant 0 : index
    %35 = vector.load %arg4[%c0_14, %c0_15] : memref<32x128xbf16, #tpu.memory_space<vmem>>, vector<32x128xbf16>
    tpu.vector_store %arg4[%c0_14, %c0_15], %34 {strides = array<i32>} : memref<32x128xbf16, #tpu.memory_space<vmem>>, vector<32x128xbf16>,
    return
  }
  func.func @transform_0(%arg0: i32) -> (i32, i32) {
    %c0_i32 = arith.constant 0 : i32
    %c0_i32_0 = arith.constant 0 : i32
    return %arg0, %c0_i32 : i32, i32
  }
  func.func @transform_1(%arg0: i32) -> (i32, i32) {
    %c0_i32 = arith.constant 0 : i32
    %c0_i32_0 = arith.constant 0 : i32
    %c0_i32_1 = arith.constant 0 : i32
    return %c0_i32, %c0_i32_0 : i32, i32
  }
  func.func @transform_2(%arg0: i32) -> (i32, i32) {
    %c0_i32 = arith.constant 0 : i32
    %c0_i32_0 = arith.constant 0 : i32
    %c0_i32_1 = arith.constant 0 : i32
    return %c0_i32, %c0_i32_0 : i32, i32
  }
  func.func @transform_3(%arg0: i32) -> (i32, i32) {
    %c0_i32 = arith.constant 0 : i32
    %c0_i32_0 = arith.constant 0 : i32
    return %arg0, %c0_i32 : i32, i32
  }
}

module attributes {stable_mosaic.version = 11 : i64} {
  func.func @_fused_gemm_kernel(%arg0: i32, %arg1: memref<16x2048xbf16, #tpu.memory_space<vmem>>, %arg2: memref<2048x256xbf16, #tpu.memory_space<vmem>>, %arg3: memref<8x256xf32, #tpu.memory_space<vmem>>, %arg4: memref<16x256xbf16, #tpu.memory_space<vmem>>) attributes {dimension_semantics = [#tpu.dimension_semantics<parallel>], iteration_bounds = array<i64: 1>, scalar_prefetch = 0 : i64, scratch_operands = 0 : i64, tpu.core_type = #tpu.core_type<tc>, window_params = [{transform_indices = @transform_0, window_bounds = array<i64: 16, 2048>}, {pipeline_mode = #tpu.pipeline_mode<synchronous>, transform_indices = @transform_1, window_bounds = array<i64: 2048, 256>}, {pipeline_mode = #tpu.pipeline_mode<synchronous>, transform_indices = @transform_2, window_bounds = array<i64: 8, 256>}, {transform_indices = @transform_3, window_bounds = array<i64: 16, 256>}]} {
    %c0 = arith.constant 0 : index
    %c0_0 = arith.constant 0 : index
    %0 = vector.load %arg1[%c0, %c0_0] : memref<16x2048xbf16, #tpu.memory_space<vmem>>, vector<16x2048xbf16>
    %c0_1 = arith.constant 0 : index
    %c0_2 = arith.constant 0 : index
    %1 = vector.load %arg2[%c0_1, %c0_2] : memref<2048x256xbf16, #tpu.memory_space<vmem>>, vector<2048x256xbf16>
    %cst = arith.constant dense<0.000000e+00> : vector<16x256xf32>
    %2 = tpu.matmul %0, %1, %cst {dimension_numbers = #tpu.dot_dimension_numbers<[1], [0], [0], [1], [0, 0, 1, 1], [], []>} : vector<16x2048xbf16>, vector<2048x256xbf16>, vector<16x256xf32> -> vector<16x256xf32>
    %c0_3 = arith.constant 0 : index
    %c0_4 = arith.constant 0 : index
    %3 = vector.load %arg3[%c0_3, %c0_4] : memref<8x256xf32, #tpu.memory_space<vmem>>, vector<1x256xf32>
    %4 = vector.broadcast %3 : vector<1x256xf32> to vector<16x256xf32>
    %5 = arith.addf %2, %4 : vector<16x256xf32>
    %6 = tpu.iota {dimensions = array<i32: 0>} : vector<16x256xi32>
    %c8_i32 = arith.constant 8 : i32
    %7 = vector.broadcast %c8_i32 : i32 to vector<16x256xi32>
    %8 = arith.cmpi slt, %6, %7 : vector<16x256xi32>
    %cst_5 = arith.constant 0.000000e+00 : f32
    %9 = vector.broadcast %cst_5 : f32 to vector<16x256xf32>
    %10 = arith.select %8, %5, %9 : vector<16x256xi1>, vector<16x256xf32>
    %cst_6 = arith.constant dense<0.000000e+00> : vector<256xf32>
    %11 = vector.multi_reduction <add>, %10, %cst_6 [0] : vector<16x256xf32> to vector<256xf32>
    %12 = vector.shape_cast %11 : vector<256xf32> to vector<1x256xf32>
    %cst_7 = arith.constant 1.250000e-01 : f32
    %13 = vector.broadcast %cst_7 : f32 to vector<1x256xf32>
    %14 = arith.mulf %12, %13 : vector<1x256xf32>
    %15 = arith.mulf %10, %10 : vector<16x256xf32>
    %cst_8 = arith.constant dense<0.000000e+00> : vector<256xf32>
    %16 = vector.multi_reduction <add>, %15, %cst_8 [0] : vector<16x256xf32> to vector<256xf32>
    %17 = vector.shape_cast %16 : vector<256xf32> to vector<1x256xf32>
    %cst_9 = arith.constant 1.250000e-01 : f32
    %18 = vector.broadcast %cst_9 : f32 to vector<1x256xf32>
    %19 = arith.mulf %17, %18 : vector<1x256xf32>
    %20 = arith.mulf %14, %14 : vector<1x256xf32>
    %21 = arith.subf %19, %20 : vector<1x256xf32>
    %22 = vector.broadcast %14 : vector<1x256xf32> to vector<16x256xf32>
    %23 = arith.subf %5, %22 : vector<16x256xf32>
    %cst_10 = arith.constant 9.99999974E-6 : f32
    %24 = vector.broadcast %cst_10 : f32 to vector<1x256xf32>
    %25 = arith.addf %21, %24 : vector<1x256xf32>
    %26 = math.rsqrt %25 : vector<1x256xf32>
    %c1 = arith.constant 1 : index
    %c0_11 = arith.constant 0 : index
    %27 = vector.load %arg3[%c1, %c0_11] : memref<8x256xf32, #tpu.memory_space<vmem>>, vector<1x256xf32>
    %28 = arith.mulf %26, %27 : vector<1x256xf32>
    %29 = vector.broadcast %28 : vector<1x256xf32> to vector<16x256xf32>
    %30 = arith.mulf %23, %29 : vector<16x256xf32>
    %c2 = arith.constant 2 : index
    %c0_12 = arith.constant 0 : index
    %31 = vector.load %arg3[%c2, %c0_12] : memref<8x256xf32, #tpu.memory_space<vmem>>, vector<1x256xf32>
    %32 = vector.broadcast %31 : vector<1x256xf32> to vector<16x256xf32>
    %33 = arith.addf %30, %32 : vector<16x256xf32>
    %cst_13 = arith.constant 0.000000e+00 : f32
    %34 = vector.broadcast %cst_13 : f32 to vector<16x256xf32>
    %35 = arith.cmpf ogt, %33, %34 : vector<16x256xf32>
    %cst_14 = arith.constant 2.000000e-01 : f32
    %36 = vector.broadcast %cst_14 : f32 to vector<16x256xf32>
    %37 = arith.mulf %36, %33 : vector<16x256xf32>
    %38 = arith.select %35, %33, %37 : vector<16x256xi1>, vector<16x256xf32>
    %39 = arith.truncf %38 : vector<16x256xf32> to vector<16x256xbf16>
    %c0_15 = arith.constant 0 : index
    %c0_16 = arith.constant 0 : index
    %40 = vector.load %arg4[%c0_15, %c0_16] : memref<16x256xbf16, #tpu.memory_space<vmem>>, vector<16x256xbf16>
    tpu.vector_store %arg4[%c0_15, %c0_16], %39 {strides = array<i32>} : memref<16x256xbf16, #tpu.memory_space<vmem>>, vector<16x256xbf16>,
    return
  }
  func.func @transform_0(%arg0: i32) -> (i32, i32) {
    %c0_i32 = arith.constant 0 : i32
    %c0_i32_0 = arith.constant 0 : i32
    return %arg0, %c0_i32 : i32, i32
  }
  func.func @transform_1(%arg0: i32) -> (i32, i32) {
    %c0_i32 = arith.constant 0 : i32
    %c0_i32_0 = arith.constant 0 : i32
    %c0_i32_1 = arith.constant 0 : i32
    return %c0_i32, %c0_i32_0 : i32, i32
  }
  func.func @transform_2(%arg0: i32) -> (i32, i32) {
    %c0_i32 = arith.constant 0 : i32
    %c0_i32_0 = arith.constant 0 : i32
    %c0_i32_1 = arith.constant 0 : i32
    return %c0_i32, %c0_i32_0 : i32, i32
  }
  func.func @transform_3(%arg0: i32) -> (i32, i32) {
    %c0_i32 = arith.constant 0 : i32
    %c0_i32_0 = arith.constant 0 : i32
    return %arg0, %c0_i32 : i32, i32
  }
}

module attributes {stable_mosaic.version = 11 : i64} {
  func.func @_gemm_pstats_kernel(%arg0: i32, %arg1: memref<16x2304xbf16, #tpu.memory_space<vmem>>, %arg2: memref<2304x512xbf16, #tpu.memory_space<vmem>>, %arg3: memref<8x512xf32, #tpu.memory_space<vmem>>, %arg4: memref<16x512xbf16, #tpu.memory_space<vmem>>, %arg5: memref<8x512xf32, #tpu.memory_space<vmem>>) attributes {dimension_semantics = [#tpu.dimension_semantics<parallel>], iteration_bounds = array<i64: 1>, scalar_prefetch = 0 : i64, scratch_operands = 0 : i64, tpu.core_type = #tpu.core_type<tc>, window_params = [{transform_indices = @transform_0, window_bounds = array<i64: 16, 2304>}, {pipeline_mode = #tpu.pipeline_mode<synchronous>, transform_indices = @transform_1, window_bounds = array<i64: 2304, 512>}, {pipeline_mode = #tpu.pipeline_mode<synchronous>, transform_indices = @transform_2, window_bounds = array<i64: 8, 512>}, {transform_indices = @transform_3, window_bounds = array<i64: 16, 512>}, {transform_indices = @transform_4, window_bounds = array<i64: 8, 512>}]} {
    %c0 = arith.constant 0 : index
    %c0_0 = arith.constant 0 : index
    %0 = vector.load %arg1[%c0, %c0_0] : memref<16x2304xbf16, #tpu.memory_space<vmem>>, vector<16x2304xbf16>
    %c0_1 = arith.constant 0 : index
    %c0_2 = arith.constant 0 : index
    %1 = vector.load %arg2[%c0_1, %c0_2] : memref<2304x512xbf16, #tpu.memory_space<vmem>>, vector<2304x512xbf16>
    %cst = arith.constant dense<0.000000e+00> : vector<16x512xf32>
    %2 = tpu.matmul %0, %1, %cst {dimension_numbers = #tpu.dot_dimension_numbers<[1], [0], [0], [1], [0, 0, 1, 1], [], []>} : vector<16x2304xbf16>, vector<2304x512xbf16>, vector<16x512xf32> -> vector<16x512xf32>
    %c0_3 = arith.constant 0 : index
    %c0_4 = arith.constant 0 : index
    %3 = vector.load %arg3[%c0_3, %c0_4] : memref<8x512xf32, #tpu.memory_space<vmem>>, vector<1x512xf32>
    %4 = vector.broadcast %3 : vector<1x512xf32> to vector<16x512xf32>
    %5 = arith.addf %2, %4 : vector<16x512xf32>
    %6 = arith.truncf %5 : vector<16x512xf32> to vector<16x512xbf16>
    %c0_5 = arith.constant 0 : index
    %c0_6 = arith.constant 0 : index
    %7 = vector.load %arg4[%c0_5, %c0_6] : memref<16x512xbf16, #tpu.memory_space<vmem>>, vector<16x512xbf16>
    tpu.vector_store %arg4[%c0_5, %c0_6], %6 {strides = array<i32>} : memref<16x512xbf16, #tpu.memory_space<vmem>>, vector<16x512xbf16>,
    %8 = tpu.iota {dimensions = array<i32: 0>} : vector<16x512xi32>
    %c16_i32 = arith.constant 16 : i32
    %9 = arith.muli %arg0, %c16_i32 : i32
    %10 = vector.broadcast %9 : i32 to vector<16x512xi32>
    %11 = arith.addi %8, %10 : vector<16x512xi32>
    %c8_i32 = arith.constant 8 : i32
    %12 = vector.broadcast %c8_i32 : i32 to vector<16x512xi32>
    %13 = arith.cmpi slt, %11, %12 : vector<16x512xi32>
    %cst_7 = arith.constant 0.000000e+00 : f32
    %14 = vector.broadcast %cst_7 : f32 to vector<16x512xf32>
    %15 = arith.select %13, %5, %14 : vector<16x512xi1>, vector<16x512xf32>
    %cst_8 = arith.constant dense<0.000000e+00> : vector<512xf32>
    %16 = vector.multi_reduction <add>, %15, %cst_8 [0] : vector<16x512xf32> to vector<512xf32>
    %17 = vector.shape_cast %16 : vector<512xf32> to vector<1x512xf32>
    %c0_9 = arith.constant 0 : index
    %c0_10 = arith.constant 0 : index
    %18 = vector.load %arg5[%c0_9, %c0_10] : memref<8x512xf32, #tpu.memory_space<vmem>>, vector<1x512xf32>
    tpu.vector_store %arg5[%c0_9, %c0_10], %17 {strides = array<i32>} : memref<8x512xf32, #tpu.memory_space<vmem>>, vector<1x512xf32>,
    %19 = arith.mulf %15, %15 : vector<16x512xf32>
    %cst_11 = arith.constant dense<0.000000e+00> : vector<512xf32>
    %20 = vector.multi_reduction <add>, %19, %cst_11 [0] : vector<16x512xf32> to vector<512xf32>
    %21 = vector.shape_cast %20 : vector<512xf32> to vector<1x512xf32>
    %c1 = arith.constant 1 : index
    %c0_12 = arith.constant 0 : index
    %22 = vector.load %arg5[%c1, %c0_12] : memref<8x512xf32, #tpu.memory_space<vmem>>, vector<1x512xf32>
    tpu.vector_store %arg5[%c1, %c0_12], %21 {strides = array<i32>} : memref<8x512xf32, #tpu.memory_space<vmem>>, vector<1x512xf32>,
    %cst_13 = arith.constant 0.000000e+00 : f32
    %23 = vector.broadcast %cst_13 : f32 to vector<6x512xf32>
    %c2 = arith.constant 2 : index
    %c0_14 = arith.constant 0 : index
    %24 = vector.load %arg5[%c2, %c0_14] : memref<8x512xf32, #tpu.memory_space<vmem>>, vector<6x512xf32>
    tpu.vector_store %arg5[%c2, %c0_14], %23 {strides = array<i32>} : memref<8x512xf32, #tpu.memory_space<vmem>>, vector<6x512xf32>,
    return
  }
  func.func @transform_0(%arg0: i32) -> (i32, i32) {
    %c0_i32 = arith.constant 0 : i32
    %c0_i32_0 = arith.constant 0 : i32
    return %arg0, %c0_i32 : i32, i32
  }
  func.func @transform_1(%arg0: i32) -> (i32, i32) {
    %c0_i32 = arith.constant 0 : i32
    %c0_i32_0 = arith.constant 0 : i32
    %c0_i32_1 = arith.constant 0 : i32
    return %c0_i32, %c0_i32_0 : i32, i32
  }
  func.func @transform_2(%arg0: i32) -> (i32, i32) {
    %c0_i32 = arith.constant 0 : i32
    %c0_i32_0 = arith.constant 0 : i32
    %c0_i32_1 = arith.constant 0 : i32
    return %c0_i32, %c0_i32_0 : i32, i32
  }
  func.func @transform_3(%arg0: i32) -> (i32, i32) {
    %c0_i32 = arith.constant 0 : i32
    %c0_i32_0 = arith.constant 0 : i32
    return %arg0, %c0_i32 : i32, i32
  }
  func.func @transform_4(%arg0: i32) -> (i32, i32) {
    %c0_i32 = arith.constant 0 : i32
    %c0_i32_0 = arith.constant 0 : i32
    return %arg0, %c0_i32 : i32, i32
  }
}

module attributes {stable_mosaic.version = 11 : i64} {
  func.func @_bn_act_kernel(%arg0: i32, %arg1: memref<16x512xbf16, #tpu.memory_space<vmem>>, %arg2: memref<8x512xf32, #tpu.memory_space<vmem>>, %arg3: memref<16x512xbf16, #tpu.memory_space<vmem>>) attributes {dimension_semantics = [#tpu.dimension_semantics<parallel>], iteration_bounds = array<i64: 1>, scalar_prefetch = 0 : i64, scratch_operands = 0 : i64, tpu.core_type = #tpu.core_type<tc>, window_params = [{transform_indices = @transform_0, window_bounds = array<i64: 16, 512>}, {pipeline_mode = #tpu.pipeline_mode<synchronous>, transform_indices = @transform_1, window_bounds = array<i64: 8, 512>}, {transform_indices = @transform_2, window_bounds = array<i64: 16, 512>}]} {
    %c0 = arith.constant 0 : index
    %c0_0 = arith.constant 0 : index
    %0 = vector.load %arg2[%c0, %c0_0] : memref<8x512xf32, #tpu.memory_space<vmem>>, vector<1x512xf32>
    %cst = arith.constant 3.125000e-02 : f32
    %1 = vector.broadcast %cst : f32 to vector<1x512xf32>
    %2 = arith.mulf %0, %1 : vector<1x512xf32>
    %c1 = arith.constant 1 : index
    %c0_1 = arith.constant 0 : index
    %3 = vector.load %arg2[%c1, %c0_1] : memref<8x512xf32, #tpu.memory_space<vmem>>, vector<1x512xf32>
    %cst_2 = arith.constant 3.125000e-02 : f32
    %4 = vector.broadcast %cst_2 : f32 to vector<1x512xf32>
    %5 = arith.mulf %3, %4 : vector<1x512xf32>
    %6 = arith.mulf %2, %2 : vector<1x512xf32>
    %7 = arith.subf %5, %6 : vector<1x512xf32>
    %c0_3 = arith.constant 0 : index
    %c0_4 = arith.constant 0 : index
    %8 = vector.load %arg1[%c0_3, %c0_4] : memref<16x512xbf16, #tpu.memory_space<vmem>>, vector<16x512xbf16>
    %9 = arith.extf %8 : vector<16x512xbf16> to vector<16x512xf32>
    %10 = vector.broadcast %2 : vector<1x512xf32> to vector<16x512xf32>
    %11 = arith.subf %9, %10 : vector<16x512xf32>
    %cst_5 = arith.constant 9.99999974E-6 : f32
    %12 = vector.broadcast %cst_5 : f32 to vector<1x512xf32>
    %13 = arith.addf %7, %12 : vector<1x512xf32>
    %14 = math.rsqrt %13 : vector<1x512xf32>
    %c2 = arith.constant 2 : index
    %c0_6 = arith.constant 0 : index
    %15 = vector.load %arg2[%c2, %c0_6] : memref<8x512xf32, #tpu.memory_space<vmem>>, vector<1x512xf32>
    %16 = arith.mulf %14, %15 : vector<1x512xf32>
    %17 = vector.broadcast %16 : vector<1x512xf32> to vector<16x512xf32>
    %18 = arith.mulf %11, %17 : vector<16x512xf32>
    %c3 = arith.constant 3 : index
    %c0_7 = arith.constant 0 : index
    %19 = vector.load %arg2[%c3, %c0_7] : memref<8x512xf32, #tpu.memory_space<vmem>>, vector<1x512xf32>
    %20 = vector.broadcast %19 : vector<1x512xf32> to vector<16x512xf32>
    %21 = arith.addf %18, %20 : vector<16x512xf32>
    %cst_8 = arith.constant 0.000000e+00 : f32
    %22 = vector.broadcast %cst_8 : f32 to vector<16x512xf32>
    %23 = arith.maximumf %21, %22 : vector<16x512xf32>
    %24 = arith.truncf %23 : vector<16x512xf32> to vector<16x512xbf16>
    %c0_9 = arith.constant 0 : index
    %c0_10 = arith.constant 0 : index
    %25 = vector.load %arg3[%c0_9, %c0_10] : memref<16x512xbf16, #tpu.memory_space<vmem>>, vector<16x512xbf16>
    tpu.vector_store %arg3[%c0_9, %c0_10], %24 {strides = array<i32>} : memref<16x512xbf16, #tpu.memory_space<vmem>>, vector<16x512xbf16>,
    return
  }
  func.func @transform_0(%arg0: i32) -> (i32, i32) {
    %c0_i32 = arith.constant 0 : i32
    %c0_i32_0 = arith.constant 0 : i32
    return %arg0, %c0_i32 : i32, i32
  }
  func.func @transform_1(%arg0: i32) -> (i32, i32) {
    %c0_i32 = arith.constant 0 : i32
    %c0_i32_0 = arith.constant 0 : i32
    %c0_i32_1 = arith.constant 0 : i32
    return %c0_i32, %c0_i32_0 : i32, i32
  }
  func.func @transform_2(%arg0: i32) -> (i32, i32) {
    %c0_i32 = arith.constant 0 : i32
    %c0_i32_0 = arith.constant 0 : i32
    return %arg0, %c0_i32 : i32, i32
  }
}

module attributes {stable_mosaic.version = 11 : i64} {
  func.func @_gemm_pstats_kernel(%arg0: i32, %arg1: memref<32x1152xbf16, #tpu.memory_space<vmem>>, %arg2: memref<32x1152xbf16, #tpu.memory_space<vmem>>, %arg3: memref<1152x256xbf16, #tpu.memory_space<vmem>>, %arg4: memref<1152x256xbf16, #tpu.memory_space<vmem>>, %arg5: memref<8x256xf32, #tpu.memory_space<vmem>>, %arg6: memref<32x256xbf16, #tpu.memory_space<vmem>>, %arg7: memref<8x256xf32, #tpu.memory_space<vmem>>) attributes {dimension_semantics = [#tpu.dimension_semantics<parallel>], iteration_bounds = array<i64: 1>, scalar_prefetch = 0 : i64, scratch_operands = 0 : i64, tpu.core_type = #tpu.core_type<tc>, window_params = [{transform_indices = @transform_0, window_bounds = array<i64: 32, 1152>}, {transform_indices = @transform_1, window_bounds = array<i64: 32, 1152>}, {pipeline_mode = #tpu.pipeline_mode<synchronous>, transform_indices = @transform_2, window_bounds = array<i64: 1152, 256>}, {pipeline_mode = #tpu.pipeline_mode<synchronous>, transform_indices = @transform_3, window_bounds = array<i64: 1152, 256>}, {pipeline_mode = #tpu.pipeline_mode<synchronous>, transform_indices = @transform_4, window_bounds = array<i64: 8, 256>}, {transform_indices = @transform_5, window_bounds = array<i64: 32, 256>}, {transform_indices = @transform_6, window_bounds = array<i64: 8, 256>}]} {
    %c0 = arith.constant 0 : index
    %c0_0 = arith.constant 0 : index
    %0 = vector.load %arg1[%c0, %c0_0] : memref<32x1152xbf16, #tpu.memory_space<vmem>>, vector<32x1152xbf16>
    %c0_1 = arith.constant 0 : index
    %c0_2 = arith.constant 0 : index
    %1 = vector.load %arg3[%c0_1, %c0_2] : memref<1152x256xbf16, #tpu.memory_space<vmem>>, vector<1152x256xbf16>
    %cst = arith.constant dense<0.000000e+00> : vector<32x256xf32>
    %2 = tpu.matmul %0, %1, %cst {dimension_numbers = #tpu.dot_dimension_numbers<[1], [0], [0], [1], [0, 0, 1, 1], [], []>} : vector<32x1152xbf16>, vector<1152x256xbf16>, vector<32x256xf32> -> vector<32x256xf32>
    %c0_3 = arith.constant 0 : index
    %c0_4 = arith.constant 0 : index
    %3 = vector.load %arg2[%c0_3, %c0_4] : memref<32x1152xbf16, #tpu.memory_space<vmem>>, vector<32x1152xbf16>
    %c0_5 = arith.constant 0 : index
    %c0_6 = arith.constant 0 : index
    %4 = vector.load %arg4[%c0_5, %c0_6] : memref<1152x256xbf16, #tpu.memory_space<vmem>>, vector<1152x256xbf16>
    %cst_7 = arith.constant dense<0.000000e+00> : vector<32x256xf32>
    %5 = tpu.matmul %3, %4, %cst_7 {dimension_numbers = #tpu.dot_dimension_numbers<[1], [0], [0], [1], [0, 0, 1, 1], [], []>} : vector<32x1152xbf16>, vector<1152x256xbf16>, vector<32x256xf32> -> vector<32x256xf32>
    %6 = arith.addf %2, %5 : vector<32x256xf32>
    %c0_8 = arith.constant 0 : index
    %c0_9 = arith.constant 0 : index
    %7 = vector.load %arg5[%c0_8, %c0_9] : memref<8x256xf32, #tpu.memory_space<vmem>>, vector<1x256xf32>
    %8 = vector.broadcast %7 : vector<1x256xf32> to vector<32x256xf32>
    %9 = arith.addf %6, %8 : vector<32x256xf32>
    %10 = arith.truncf %9 : vector<32x256xf32> to vector<32x256xbf16>
    %c0_10 = arith.constant 0 : index
    %c0_11 = arith.constant 0 : index
    %11 = vector.load %arg6[%c0_10, %c0_11] : memref<32x256xbf16, #tpu.memory_space<vmem>>, vector<32x256xbf16>
    tpu.vector_store %arg6[%c0_10, %c0_11], %10 {strides = array<i32>} : memref<32x256xbf16, #tpu.memory_space<vmem>>, vector<32x256xbf16>,
    %cst_12 = arith.constant dense<0.000000e+00> : vector<256xf32>
    %12 = vector.multi_reduction <add>, %9, %cst_12 [0] : vector<32x256xf32> to vector<256xf32>
    %13 = vector.shape_cast %12 : vector<256xf32> to vector<1x256xf32>
    %c0_13 = arith.constant 0 : index
    %c0_14 = arith.constant 0 : index
    %14 = vector.load %arg7[%c0_13, %c0_14] : memref<8x256xf32, #tpu.memory_space<vmem>>, vector<1x256xf32>
    tpu.vector_store %arg7[%c0_13, %c0_14], %13 {strides = array<i32>} : memref<8x256xf32, #tpu.memory_space<vmem>>, vector<1x256xf32>,
    %15 = arith.mulf %9, %9 : vector<32x256xf32>
    %cst_15 = arith.constant dense<0.000000e+00> : vector<256xf32>
    %16 = vector.multi_reduction <add>, %15, %cst_15 [0] : vector<32x256xf32> to vector<256xf32>
    %17 = vector.shape_cast %16 : vector<256xf32> to vector<1x256xf32>
    %c1 = arith.constant 1 : index
    %c0_16 = arith.constant 0 : index
    %18 = vector.load %arg7[%c1, %c0_16] : memref<8x256xf32, #tpu.memory_space<vmem>>, vector<1x256xf32>
    tpu.vector_store %arg7[%c1, %c0_16], %17 {strides = array<i32>} : memref<8x256xf32, #tpu.memory_space<vmem>>, vector<1x256xf32>,
    %cst_17 = arith.constant 0.000000e+00 : f32
    %19 = vector.broadcast %cst_17 : f32 to vector<6x256xf32>
    %c2 = arith.constant 2 : index
    %c0_18 = arith.constant 0 : index
    %20 = vector.load %arg7[%c2, %c0_18] : memref<8x256xf32, #tpu.memory_space<vmem>>, vector<6x256xf32>
    tpu.vector_store %arg7[%c2, %c0_18], %19 {strides = array<i32>} : memref<8x256xf32, #tpu.memory_space<vmem>>, vector<6x256xf32>,
    return
  }
  func.func @transform_0(%arg0: i32) -> (i32, i32) {
    %c0_i32 = arith.constant 0 : i32
    %c0_i32_0 = arith.constant 0 : i32
    return %arg0, %c0_i32 : i32, i32
  }
  func.func @transform_1(%arg0: i32) -> (i32, i32) {
    %c0_i32 = arith.constant 0 : i32
    %c0_i32_0 = arith.constant 0 : i32
    return %arg0, %c0_i32 : i32, i32
  }
  func.func @transform_2(%arg0: i32) -> (i32, i32) {
    %c0_i32 = arith.constant 0 : i32
    %c0_i32_0 = arith.constant 0 : i32
    %c0_i32_1 = arith.constant 0 : i32
    return %c0_i32, %c0_i32_0 : i32, i32
  }
  func.func @transform_3(%arg0: i32) -> (i32, i32) {
    %c0_i32 = arith.constant 0 : i32
    %c0_i32_0 = arith.constant 0 : i32
    %c0_i32_1 = arith.constant 0 : i32
    return %c0_i32, %c0_i32_0 : i32, i32
  }
  func.func @transform_4(%arg0: i32) -> (i32, i32) {
    %c0_i32 = arith.constant 0 : i32
    %c0_i32_0 = arith.constant 0 : i32
    %c0_i32_1 = arith.constant 0 : i32
    return %c0_i32, %c0_i32_0 : i32, i32
  }
  func.func @transform_5(%arg0: i32) -> (i32, i32) {
    %c0_i32 = arith.constant 0 : i32
    %c0_i32_0 = arith.constant 0 : i32
    return %arg0, %c0_i32 : i32, i32
  }
  func.func @transform_6(%arg0: i32) -> (i32, i32) {
    %c0_i32 = arith.constant 0 : i32
    %c0_i32_0 = arith.constant 0 : i32
    return %arg0, %c0_i32 : i32, i32
  }
}

module attributes {stable_mosaic.version = 11 : i64} {
  func.func @_bn_act_kernel(%arg0: i32, %arg1: memref<32x256xbf16, #tpu.memory_space<vmem>>, %arg2: memref<8x256xf32, #tpu.memory_space<vmem>>, %arg3: memref<32x256xbf16, #tpu.memory_space<vmem>>) attributes {dimension_semantics = [#tpu.dimension_semantics<parallel>], iteration_bounds = array<i64: 1>, scalar_prefetch = 0 : i64, scratch_operands = 0 : i64, tpu.core_type = #tpu.core_type<tc>, window_params = [{transform_indices = @transform_0, window_bounds = array<i64: 32, 256>}, {pipeline_mode = #tpu.pipeline_mode<synchronous>, transform_indices = @transform_1, window_bounds = array<i64: 8, 256>}, {transform_indices = @transform_2, window_bounds = array<i64: 32, 256>}]} {
    %c0 = arith.constant 0 : index
    %c0_0 = arith.constant 0 : index
    %0 = vector.load %arg2[%c0, %c0_0] : memref<8x256xf32, #tpu.memory_space<vmem>>, vector<1x256xf32>
    %cst = arith.constant 7.812500e-03 : f32
    %1 = vector.broadcast %cst : f32 to vector<1x256xf32>
    %2 = arith.mulf %0, %1 : vector<1x256xf32>
    %c1 = arith.constant 1 : index
    %c0_1 = arith.constant 0 : index
    %3 = vector.load %arg2[%c1, %c0_1] : memref<8x256xf32, #tpu.memory_space<vmem>>, vector<1x256xf32>
    %cst_2 = arith.constant 7.812500e-03 : f32
    %4 = vector.broadcast %cst_2 : f32 to vector<1x256xf32>
    %5 = arith.mulf %3, %4 : vector<1x256xf32>
    %6 = arith.mulf %2, %2 : vector<1x256xf32>
    %7 = arith.subf %5, %6 : vector<1x256xf32>
    %c0_3 = arith.constant 0 : index
    %c0_4 = arith.constant 0 : index
    %8 = vector.load %arg1[%c0_3, %c0_4] : memref<32x256xbf16, #tpu.memory_space<vmem>>, vector<32x256xbf16>
    %9 = arith.extf %8 : vector<32x256xbf16> to vector<32x256xf32>
    %10 = vector.broadcast %2 : vector<1x256xf32> to vector<32x256xf32>
    %11 = arith.subf %9, %10 : vector<32x256xf32>
    %cst_5 = arith.constant 9.99999974E-6 : f32
    %12 = vector.broadcast %cst_5 : f32 to vector<1x256xf32>
    %13 = arith.addf %7, %12 : vector<1x256xf32>
    %14 = math.rsqrt %13 : vector<1x256xf32>
    %c2 = arith.constant 2 : index
    %c0_6 = arith.constant 0 : index
    %15 = vector.load %arg2[%c2, %c0_6] : memref<8x256xf32, #tpu.memory_space<vmem>>, vector<1x256xf32>
    %16 = arith.mulf %14, %15 : vector<1x256xf32>
    %17 = vector.broadcast %16 : vector<1x256xf32> to vector<32x256xf32>
    %18 = arith.mulf %11, %17 : vector<32x256xf32>
    %c3 = arith.constant 3 : index
    %c0_7 = arith.constant 0 : index
    %19 = vector.load %arg2[%c3, %c0_7] : memref<8x256xf32, #tpu.memory_space<vmem>>, vector<1x256xf32>
    %20 = vector.broadcast %19 : vector<1x256xf32> to vector<32x256xf32>
    %21 = arith.addf %18, %20 : vector<32x256xf32>
    %cst_8 = arith.constant 0.000000e+00 : f32
    %22 = vector.broadcast %cst_8 : f32 to vector<32x256xf32>
    %23 = arith.maximumf %21, %22 : vector<32x256xf32>
    %24 = arith.truncf %23 : vector<32x256xf32> to vector<32x256xbf16>
    %c0_9 = arith.constant 0 : index
    %c0_10 = arith.constant 0 : index
    %25 = vector.load %arg3[%c0_9, %c0_10] : memref<32x256xbf16, #tpu.memory_space<vmem>>, vector<32x256xbf16>
    tpu.vector_store %arg3[%c0_9, %c0_10], %24 {strides = array<i32>} : memref<32x256xbf16, #tpu.memory_space<vmem>>, vector<32x256xbf16>,
    return
  }
  func.func @transform_0(%arg0: i32) -> (i32, i32) {
    %c0_i32 = arith.constant 0 : i32
    %c0_i32_0 = arith.constant 0 : i32
    return %arg0, %c0_i32 : i32, i32
  }
  func.func @transform_1(%arg0: i32) -> (i32, i32) {
    %c0_i32 = arith.constant 0 : i32
    %c0_i32_0 = arith.constant 0 : i32
    %c0_i32_1 = arith.constant 0 : i32
    return %c0_i32, %c0_i32_0 : i32, i32
  }
  func.func @transform_2(%arg0: i32) -> (i32, i32) {
    %c0_i32 = arith.constant 0 : i32
    %c0_i32_0 = arith.constant 0 : i32
    return %arg0, %c0_i32 : i32, i32
  }
}

module attributes {stable_mosaic.version = 11 : i64} {
  func.func @_fused_gemm_kernel(%arg0: i32, %arg1: memref<128x576xbf16, #tpu.memory_space<vmem>>, %arg2: memref<128x576xbf16, #tpu.memory_space<vmem>>, %arg3: memref<576x128xbf16, #tpu.memory_space<vmem>>, %arg4: memref<576x128xbf16, #tpu.memory_space<vmem>>, %arg5: memref<8x128xf32, #tpu.memory_space<vmem>>, %arg6: memref<128x128xbf16, #tpu.memory_space<vmem>>) attributes {dimension_semantics = [#tpu.dimension_semantics<parallel>], iteration_bounds = array<i64: 1>, scalar_prefetch = 0 : i64, scratch_operands = 0 : i64, tpu.core_type = #tpu.core_type<tc>, window_params = [{transform_indices = @transform_0, window_bounds = array<i64: 128, 576>}, {transform_indices = @transform_1, window_bounds = array<i64: 128, 576>}, {pipeline_mode = #tpu.pipeline_mode<synchronous>, transform_indices = @transform_2, window_bounds = array<i64: 576, 128>}, {pipeline_mode = #tpu.pipeline_mode<synchronous>, transform_indices = @transform_3, window_bounds = array<i64: 576, 128>}, {pipeline_mode = #tpu.pipeline_mode<synchronous>, transform_indices = @transform_4, window_bounds = array<i64: 8, 128>}, {transform_indices = @transform_5, window_bounds = array<i64: 128, 128>}]} {
    %c0 = arith.constant 0 : index
    %c0_0 = arith.constant 0 : index
    %0 = vector.load %arg1[%c0, %c0_0] : memref<128x576xbf16, #tpu.memory_space<vmem>>, vector<128x576xbf16>
    %c0_1 = arith.constant 0 : index
    %c0_2 = arith.constant 0 : index
    %1 = vector.load %arg3[%c0_1, %c0_2] : memref<576x128xbf16, #tpu.memory_space<vmem>>, vector<576x128xbf16>
    %cst = arith.constant dense<0.000000e+00> : vector<128x128xf32>
    %2 = tpu.matmul %0, %1, %cst {dimension_numbers = #tpu.dot_dimension_numbers<[1], [0], [0], [1], [0, 0, 1, 1], [], []>} : vector<128x576xbf16>, vector<576x128xbf16>, vector<128x128xf32> -> vector<128x128xf32>
    %c0_3 = arith.constant 0 : index
    %c0_4 = arith.constant 0 : index
    %3 = vector.load %arg2[%c0_3, %c0_4] : memref<128x576xbf16, #tpu.memory_space<vmem>>, vector<128x576xbf16>
    %c0_5 = arith.constant 0 : index
    %c0_6 = arith.constant 0 : index
    %4 = vector.load %arg4[%c0_5, %c0_6] : memref<576x128xbf16, #tpu.memory_space<vmem>>, vector<576x128xbf16>
    %cst_7 = arith.constant dense<0.000000e+00> : vector<128x128xf32>
    %5 = tpu.matmul %3, %4, %cst_7 {dimension_numbers = #tpu.dot_dimension_numbers<[1], [0], [0], [1], [0, 0, 1, 1], [], []>} : vector<128x576xbf16>, vector<576x128xbf16>, vector<128x128xf32> -> vector<128x128xf32>
    %6 = arith.addf %2, %5 : vector<128x128xf32>
    %c0_8 = arith.constant 0 : index
    %c0_9 = arith.constant 0 : index
    %7 = vector.load %arg5[%c0_8, %c0_9] : memref<8x128xf32, #tpu.memory_space<vmem>>, vector<1x128xf32>
    %8 = vector.broadcast %7 : vector<1x128xf32> to vector<128x128xf32>
    %9 = arith.addf %6, %8 : vector<128x128xf32>
    %10 = math.tanh %9 : vector<128x128xf32>
    %11 = arith.truncf %10 : vector<128x128xf32> to vector<128x128xbf16>
    %c0_10 = arith.constant 0 : index
    %c0_11 = arith.constant 0 : index
    %12 = vector.load %arg6[%c0_10, %c0_11] : memref<128x128xbf16, #tpu.memory_space<vmem>>, vector<128x128xbf16>
    tpu.vector_store %arg6[%c0_10, %c0_11], %11 {strides = array<i32>} : memref<128x128xbf16, #tpu.memory_space<vmem>>, vector<128x128xbf16>,
    return
  }
  func.func @transform_0(%arg0: i32) -> (i32, i32) {
    %c0_i32 = arith.constant 0 : i32
    %c0_i32_0 = arith.constant 0 : i32
    return %arg0, %c0_i32 : i32, i32
  }
  func.func @transform_1(%arg0: i32) -> (i32, i32) {
    %c0_i32 = arith.constant 0 : i32
    %c0_i32_0 = arith.constant 0 : i32
    return %arg0, %c0_i32 : i32, i32
  }
  func.func @transform_2(%arg0: i32) -> (i32, i32) {
    %c0_i32 = arith.constant 0 : i32
    %c0_i32_0 = arith.constant 0 : i32
    %c0_i32_1 = arith.constant 0 : i32
    return %c0_i32, %c0_i32_0 : i32, i32
  }
  func.func @transform_3(%arg0: i32) -> (i32, i32) {
    %c0_i32 = arith.constant 0 : i32
    %c0_i32_0 = arith.constant 0 : i32
    %c0_i32_1 = arith.constant 0 : i32
    return %c0_i32, %c0_i32_0 : i32, i32
  }
  func.func @transform_4(%arg0: i32) -> (i32, i32) {
    %c0_i32 = arith.constant 0 : i32
    %c0_i32_0 = arith.constant 0 : i32
    %c0_i32_1 = arith.constant 0 : i32
    return %c0_i32, %c0_i32_0 : i32, i32
  }
  func.func @transform_5(%arg0: i32) -> (i32, i32) {
    %c0_i32 = arith.constant 0 : i32
    %c0_i32_0 = arith.constant 0 : i32
    return %arg0, %c0_i32 : i32, i32
  }
}

</mosaic_0001>

<llo_original>
// kernel: cgan_forward.8
$region0: #{cgan_forward.8}
  #allocation0 [shape = 'u32[]', space=smem, size = 0x4, offset = 0x4, fixed_abs, tag = 'smem constant byte address 0x4 - core index']
  #allocation1 [shape = 'u32[144,128]{1,0:T(1,128)}', space=vmem, size = 0x12000, scoped, tag = 'internal scratch']
  %s0 = inlined_call_operand.vmem [shape: bf16[128,16], index: 0, kind: input, shape index: {}]
  %s1 = inlined_call_operand.hbm [shape: bf16[16,64], index: 1, kind: input, shape index: {}]
  %s2 = inlined_call_operand.hbm [shape: f32[8,64], index: 2, kind: input, shape index: {}]
  %s3 = inlined_call_operand.vmem [shape: bf16[128,64], index: 3, kind: output, shape index: {}]
  %s4 = sld [smem:[#allocation0]]
  $region30: #{cgan_forward.8} parent=0
    _
  %s6 = ssub.s32 1, %s4
  %s7 = scalar_select 0, %s6, %s4
  $region1: #{cgan_forward.8} parent=0
    #allocation2 [shape = 'u8[4096]{0}', space=vmem, size = 0x1000, scoped, tag = 'input window, operand 1, single buffered']
    #allocation3 [shape = 's32[1]{0}', space=sflag, size = 0x4, scoped, tag = 'scoped memory for cgan_forward.8']
    #allocation4 [shape = 'u8[4096]{0}', space=vmem, size = 0x1000, scoped, tag = 'input window, operand 2, single buffered']
    #allocation5 [shape = 's32[1]{0}', space=sflag, size = 0x4, scoped, tag = 'scoped memory for cgan_forward.8']
    %8 = vsyncpa [#allocation3], 0
    %9 = vsyncpa [#allocation5], 0
    // Predicated region
    $region2: #{cgan_forward.8} parent=1 // pred_check
      _
    $region3: #{cgan_forward.8} parent=1 // pred_check_branch
      %11 = sbr.rel (0) target = $region5
    $region4: #{cgan_forward.8} parent=1 // pred_region
      _
    $region5: #{cgan_forward.8} parent=1 // pred_fallthru
      _
    // Predicated region
    $region6: #{cgan_forward.8} parent=1 // pred_check
      _
    $region7: #{cgan_forward.8} parent=1 // pred_check_branch
      %13 = sbr.rel (0) target = $region9
    $region8: #{cgan_forward.8} parent=1 // pred_region
      %s15 = ssub.s32 128, 128
      %16 = vsyncadd [#allocation3], %s15
      %s17 = sshll.u32 [#allocation2], 4
      %s18 = int_to_ptr.vmem [resolvable:$true] %s17
      %23 = dma.hbm_to_vmem [thread:$0]  %s1, 128, %s18, [#allocation3], 64, 64, 4
    $region9: #{cgan_forward.8} parent=1 // pred_fallthru
      _
    // Predicated region
    $region10: #{cgan_forward.8} parent=1 // pred_check
      _
    $region11: #{cgan_forward.8} parent=1 // pred_check_branch
      %25 = sbr.rel (0) target = $region13
    $region12: #{cgan_forward.8} parent=1 // pred_region
      %s27 = ssub.s32 128, 128
      %28 = vsyncadd [#allocation5], %s27
      %s30 = sshll.u32 [#allocation4], 4
      %s31 = int_to_ptr.vmem [resolvable:$true] %s30
      %33 = dma.hbm_to_vmem [thread:$0]  %s2, 128, %s31, [#allocation5]
    $region13: #{cgan_forward.8} parent=1 // pred_fallthru
      _
    // Predicated region
    $region14: #{cgan_forward.8} parent=1 // pred_check
      _
    $region15: #{cgan_forward.8} parent=1 // pred_check_branch
      %35 = sbr.rel (0) target = $region17
    $region16: #{cgan_forward.8} parent=1 // pred_region
      %36 = dma.done [#allocation3], 128
    $region17: #{cgan_forward.8} parent=1 // pred_fallthru
      _
    // Predicated region
    $region18: #{cgan_forward.8} parent=1 // pred_check
      _
    $region19: #{cgan_forward.8} parent=1 // pred_check_branch
      %38 = sbr.rel (0) target = $region21
    $region20: #{cgan_forward.8} parent=1 // pred_region
      %39 = dma.done [#allocation5], 128
    $region21: #{cgan_forward.8} parent=1 // pred_fallthru
      _
    %v41 = vld [vmem:[%s0] sm:$0xf]
    %v42 = vld [vmem:[%s0 + $0x4] sm:$0xf]
    %v43 = vld [vmem:[%s0 + $0x8] sm:$0xf]
    %v44 = vld [vmem:[%s0 + $0xc] sm:$0xf]
    %v45 = vld [vmem:[%s0 + $0x10] sm:$0xf]
    %v46 = vld [vmem:[%s0 + $0x14] sm:$0xf]
    %v47 = vld [vmem:[%s0 + $0x18] sm:$0xf]
    %v48 = vld [vmem:[%s0 + $0x1c] sm:$0xf]
    %v49 = vld [vmem:[%s0 + $0x20] sm:$0xf]
    %v50 = vld [vmem:[%s0 + $0x24] sm:$0xf]
    %v51 = vld [vmem:[%s0 + $0x28] sm:$0xf]
    %v52 = vld [vmem:[%s0 + $0x2c] sm:$0xf]
    %v53 = vld [vmem:[%s0 + $0x30] sm:$0xf]
    %v54 = vld [vmem:[%s0 + $0x34] sm:$0xf]
    %v55 = vld [vmem:[%s0 + $0x38] sm:$0xf]
    %v56 = vld [vmem:[%s0 + $0x3c] sm:$0xf]
    %v57 = vld [vmem:[#allocation2] sm:$0xf]
    %v58 = vld [vmem:[#allocation2 + $0x4] sm:$0xf]
    %v59 = vld [vmem:[#allocation4] sm:$0x1]
    %v60 = vlaneseq
    %v61 = vshrl.u32 %v60, 7
    %v62 = vsub.s32 0, %v61
    %v63 = vrot.slane %v59, %v62
    %v80 = vunpack.c.l.b16 %v41
    %v81 = vunpack.c.l.b16 %v42
    %v82 = vunpack.c.l.b16 %v43
    %v83 = vunpack.c.l.b16 %v44
    %v84 = vunpack.c.l.b16 %v45
    %v85 = vunpack.c.l.b16 %v46
    %v86 = vunpack.c.l.b16 %v47
    %v87 = vunpack.c.l.b16 %v48
    %v88 = vunpack.c.l.b16 %v49
    %v89 = vunpack.c.l.b16 %v50
    %v90 = vunpack.c.l.b16 %v51
    %v91 = vunpack.c.l.b16 %v52
    %v92 = vunpack.c.l.b16 %v53
    %v93 = vunpack.c.l.b16 %v54
    %v94 = vunpack.c.l.b16 %v55
    %v95 = vunpack.c.l.b16 %v56
    %v96 = vpack.c.b16 %v81, %v80
    %v97 = vpack.c.b16 %v83, %v82
    %v98 = vpack.c.b16 %v85, %v84
    %v99 = vpack.c.b16 %v87, %v86
    %v100 = vpack.c.b16 %v89, %v88
    %v101 = vpack.c.b16 %v91, %v90
    %v102 = vpack.c.b16 %v93, %v92
    %v103 = vpack.c.b16 %v95, %v94
    %v106 = vunpack.c.l.b16 %v57
    %v107 = vunpack.c.l.b16 %v58
    %v108 = vpack.c.b16 %v107, %v106
    %vm110 = vcmask 130048
    %v112 = vsel %vm110, %v96, 0
    %v115 = vsel %vm110, %v97, 0
    %v118 = vsel %vm110, %v98, 0
    %v121 = vsel %vm110, %v99, 0
    %v124 = vsel %vm110, %v100, 0
    %v127 = vsel %vm110, %v101, 0
    %v130 = vsel %vm110, %v102, 0
    %v133 = vsel %vm110, %v103, 0
    %135 = vmatprep.subr.bf16.mxu0 0
    %136 = vmatpush1.bf16.msra.mxu0 0
    %137 = vmatprep.subr.bf16.mxu0 0
    %138 = vmatpush1.bf16.msra.mxu0 0
    %139 = vmatprep.subr.bf16.mxu0 0
    %140 = vmatpush1.bf16.msra.mxu0 0
    %141 = vmatprep.subr.bf16.mxu0 0
    %142 = vmatpush1.bf16.msra.mxu0 0
    %143 = vmatprep.subr.bf16.mxu0 0
    %144 = vmatpush1.bf16.msra.mxu0 0
    %145 = vmatprep.subr.bf16.mxu0 0
    %146 = vmatpush1.bf16.msra.mxu0 0
    %147 = vmatprep.subr.bf16.mxu0 0
    %148 = vmatpush1.bf16.msra.mxu0 0
    %149 = vmatprep.subr.bf16.mxu0 0
    %150 = vmatpush1.bf16.msra.mxu0 %v108
    %151 = vmatprep.subr.bf16.mxu0 0
    %152 = vmatpush2.bf16.msra.mxu0 0
    %153 = vmatprep.subr.bf16.mxu0 0
    %154 = vmatpush2.bf16.msra.mxu0 0
    %155 = vmatprep.subr.bf16.mxu0 0
    %156 = vmatpush2.bf16.msra.mxu0 0
    %157 = vmatprep.subr.bf16.mxu0 0
    %158 = vmatpush2.bf16.msra.mxu0 0
    %159 = vmatprep.subr.bf16.mxu0 0
    %160 = vmatpush2.bf16.msra.mxu0 0
    %161 = vmatprep.subr.bf16.mxu0 0
    %162 = vmatpush2.bf16.msra.mxu0 0
    %163 = vmatprep.subr.bf16.mxu0 0
    %164 = vmatpush2.bf16.msra.mxu0 0
    %165 = vmatprep.subr.bf16.mxu0 0
    %166 = vmatpush2.bf16.msra.mxu0 0
    %167 = vmatprep.mubr.bf16.mxu0 0
    %168 = vmatmul.mubr.bf16.gmra.mxu0 %v112
    %v169 = vpop.f32.mrf.mxu0
    %v170 = vadd.f32 %v63, %v169
    %v171 = vpop.f32.mrf.mxu0
    %v172 = vpop.f32.mrf.mxu0
    %v173 = vadd.f32 %v63, %v172
    %v174 = vpop.f32.mrf.mxu0
    %175 = vmatprep.mubr.bf16.mxu0 0
    %176 = vmatmul.mubr.bf16.gmra.mxu0 %v115
    %v177 = vpop.f32.mrf.mxu0
    %v178 = vadd.f32 %v63, %v177
    %v179 = vpop.f32.mrf.mxu0
    %v180 = vpop.f32.mrf.mxu0
    %v181 = vadd.f32 %v63, %v180
    %v182 = vpop.f32.mrf.mxu0
    %183 = vmatprep.mubr.bf16.mxu0 0
    %184 = vmatmul.mubr.bf16.gmra.mxu0 %v118
    %v185 = vpop.f32.mrf.mxu0
    %v186 = vadd.f32 %v63, %v185
    %v187 = vpop.f32.mrf.mxu0
    %v188 = vpop.f32.mrf.mxu0
    %v189 = vadd.f32 %v63, %v188
    %v190 = vpop.f32.mrf.mxu0
    %191 = vmatprep.mubr.bf16.mxu0 0
    %192 = vmatmul.mubr.bf16.gmra.mxu0 %v121
    %v193 = vpop.f32.mrf.mxu0
    %v194 = vadd.f32 %v63, %v193
    %v195 = vpop.f32.mrf.mxu0
    %v196 = vpop.f32.mrf.mxu0
    %v197 = vadd.f32 %v63, %v196
    %v198 = vpop.f32.mrf.mxu0
    %199 = vmatprep.mubr.bf16.mxu0 0
    %200 = vmatmul.mubr.bf16.gmra.mxu0 %v124
    %v201 = vpop.f32.mrf.mxu0
    %v202 = vadd.f32 %v63, %v201
    %v203 = vpop.f32.mrf.mxu0
    %v204 = vpop.f32.mrf.mxu0
    %v205 = vadd.f32 %v63, %v204
    %v206 = vpop.f32.mrf.mxu0
    %207 = vmatprep.mubr.bf16.mxu0 0
    %208 = vmatmul.mubr.bf16.gmra.mxu0 %v127
    %v209 = vpop.f32.mrf.mxu0
    %v210 = vadd.f32 %v63, %v209
    %v211 = vpop.f32.mrf.mxu0
    %v212 = vpop.f32.mrf.mxu0
    %v213 = vadd.f32 %v63, %v212
    %v214 = vpop.f32.mrf.mxu0
    %215 = vmatprep.mubr.bf16.mxu0 0
    %216 = vmatmul.mubr.bf16.gmra.mxu0 %v130
    %v217 = vpop.f32.mrf.mxu0
    %v218 = vadd.f32 %v63, %v217
    %v219 = vpop.f32.mrf.mxu0
    %v220 = vpop.f32.mrf.mxu0
    %v221 = vadd.f32 %v63, %v220
    %v222 = vpop.f32.mrf.mxu0
    %223 = vmatprep.mubr.bf16.mxu0 0
    %224 = vmatmul.mubr.bf16.gmra.mxu0 %v133
    %v225 = vpop.f32.mrf.mxu0
    %v226 = vadd.f32 %v63, %v225
    %v227 = vpop.f32.mrf.mxu0
    %v228 = vpop.f32.mrf.mxu0
    %v229 = vadd.f32 %v63, %v228
    %v230 = vpop.f32.mrf.mxu0
    %231 = vdwg.mxu0
    %vm232 = vcmp.gt.f32.partialorder %v170, 0.0
    %vm233 = vcmp.gt.f32.partialorder %v173, 0.0
    %vm234 = vcmp.gt.f32.partialorder %v178, 0.0
    %vm235 = vcmp.gt.f32.partialorder %v181, 0.0
    %vm236 = vcmp.gt.f32.partialorder %v186, 0.0
    %vm237 = vcmp.gt.f32.partialorder %v189, 0.0
    %vm238 = vcmp.gt.f32.partialorder %v194, 0.0
    %vm239 = vcmp.gt.f32.partialorder %v197, 0.0
    %vm240 = vcmp.gt.f32.partialorder %v202, 0.0
    %vm241 = vcmp.gt.f32.partialorder %v205, 0.0
    %vm242 = vcmp.gt.f32.partialorder %v210, 0.0
    %vm243 = vcmp.gt.f32.partialorder %v213, 0.0
    %vm244 = vcmp.gt.f32.partialorder %v218, 0.0
    %vm245 = vcmp.gt.f32.partialorder %v221, 0.0
    %vm246 = vcmp.gt.f32.partialorder %v226, 0.0
    %vm247 = vcmp.gt.f32.partialorder %v229, 0.0
    %v248 = vmul.f32 %v170, 0.2
    %v249 = vmul.f32 %v173, 0.2
    %v250 = vmul.f32 %v178, 0.2
    %v251 = vmul.f32 %v181, 0.2
    %v252 = vmul.f32 %v186, 0.2
    %v253 = vmul.f32 %v189, 0.2
    %v254 = vmul.f32 %v194, 0.2
    %v255 = vmul.f32 %v197, 0.2
    %v256 = vmul.f32 %v202, 0.2
    %v257 = vmul.f32 %v205, 0.2
    %v258 = vmul.f32 %v210, 0.2
    %v259 = vmul.f32 %v213, 0.2
    %v260 = vmul.f32 %v218, 0.2
    %v261 = vmul.f32 %v221, 0.2
    %v262 = vmul.f32 %v226, 0.2
    %v263 = vmul.f32 %v229, 0.2
    %v264 = vsel %vm232, %v170, %v248
    %v265 = vsel %vm233, %v173, %v249
    %v266 = vsel %vm234, %v178, %v250
    %v267 = vsel %vm235, %v181, %v251
    %v268 = vsel %vm236, %v186, %v252
    %v269 = vsel %vm237, %v189, %v253
    %v270 = vsel %vm238, %v194, %v254
    %v271 = vsel %vm239, %v197, %v255
    %v272 = vsel %vm240, %v202, %v256
    %v273 = vsel %vm241, %v205, %v257
    %v274 = vsel %vm242, %v210, %v258
    %v275 = vsel %vm243, %v213, %v259
    %v276 = vsel %vm244, %v218, %v260
    %v277 = vsel %vm245, %v221, %v261
    %v278 = vsel %vm246, %v226, %v262
    %v279 = vsel %vm247, %v229, %v263
    %v280 = vpack.c.bf16 %v265, %v264
    %v281 = vpack.c.bf16 %v267, %v266
    %v282 = vpack.c.bf16 %v269, %v268
    %v283 = vpack.c.bf16 %v271, %v270
    %v284 = vpack.c.bf16 %v273, %v272
    %v285 = vpack.c.bf16 %v275, %v274
    %v286 = vpack.c.bf16 %v277, %v276
    %v287 = vpack.c.bf16 %v279, %v278
    %v296 = vunpack.c.l.b16 %v280
    %v297 = vunpack.c.h.b16 %v280
    %v298 = vunpack.c.l.b16 %v281
    %v299 = vunpack.c.h.b16 %v281
    %v300 = vunpack.c.l.b16 %v282
    %v301 = vunpack.c.h.b16 %v282
    %v302 = vunpack.c.l.b16 %v283
    %v303 = vunpack.c.h.b16 %v283
    %v304 = vunpack.c.l.b16 %v284
    %v305 = vunpack.c.h.b16 %v284
    %v306 = vunpack.c.l.b16 %v285
    %v307 = vunpack.c.h.b16 %v285
    %v308 = vunpack.c.l.b16 %v286
    %v309 = vunpack.c.h.b16 %v286
    %v310 = vunpack.c.l.b16 %v287
    %v311 = vunpack.c.h.b16 %v287
    %v312 = vpack.c.b16 %v296, %v296
    %v313 = vpack.c.b16 %v297, %v297
    %v314 = vpack.c.b16 %v298, %v298
    %v315 = vpack.c.b16 %v299, %v299
    %v316 = vpack.c.b16 %v300, %v300
    %v317 = vpack.c.b16 %v301, %v301
    %v318 = vpack.c.b16 %v302, %v302
    %v319 = vpack.c.b16 %v303, %v303
    %v320 = vpack.c.b16 %v304, %v304
    %v321 = vpack.c.b16 %v305, %v305
    %v322 = vpack.c.b16 %v306, %v306
    %v323 = vpack.c.b16 %v307, %v307
    %v324 = vpack.c.b16 %v308, %v308
    %v325 = vpack.c.b16 %v309, %v309
    %v326 = vpack.c.b16 %v310, %v310
    %v327 = vpack.c.b16 %v311, %v311
    %vm344 = vcmask 519168
    %345 = vst.msk [vmem:[%s3] sm:$0xf] %vm344, %v312
    %346 = vst.msk [vmem:[%s3 + $0x4] sm:$0xf] %vm344, %v313
    %347 = vst.msk [vmem:[%s3 + $0x8] sm:$0xf] %vm344, %v314
    %348 = vst.msk [vmem:[%s3 + $0xc] sm:$0xf] %vm344, %v315
    %349 = vst.msk [vmem:[%s3 + $0x10] sm:$0xf] %vm344, %v316
    %350 = vst.msk [vmem:[%s3 + $0x14] sm:$0xf] %vm344, %v317
    %351 = vst.msk [vmem:[%s3 + $0x18] sm:$0xf] %vm344, %v318
    %352 = vst.msk [vmem:[%s3 + $0x1c] sm:$0xf] %vm344, %v319
    %353 = vst.msk [vmem:[%s3 + $0x20] sm:$0xf] %vm344, %v320
    %354 = vst.msk [vmem:[%s3 + $0x24] sm:$0xf] %vm344, %v321
    %355 = vst.msk [vmem:[%s3 + $0x28] sm:$0xf] %vm344, %v322
    %356 = vst.msk [vmem:[%s3 + $0x2c] sm:$0xf] %vm344, %v323
    %357 = vst.msk [vmem:[%s3 + $0x30] sm:$0xf] %vm344, %v324
    %358 = vst.msk [vmem:[%s3 + $0x34] sm:$0xf] %vm344, %v325
    %359 = vst.msk [vmem:[%s3 + $0x38] sm:$0xf] %vm344, %v326
    %360 = vst.msk [vmem:[%s3 + $0x3c] sm:$0xf] %vm344, %v327
    // Predicated region
    $region22: #{cgan_forward.8} parent=1 // pred_check
      _
    $region23: #{cgan_forward.8} parent=1 // pred_check_branch
      %362 = sbr.rel (0) target = $region25
    $region24: #{cgan_forward.8} parent=1 // pred_region
      _
    $region25: #{cgan_forward.8} parent=1 // pred_fallthru
      _
    // Predicated region
    $region26: #{cgan_forward.8} parent=1 // pred_check
      _
    $region27: #{cgan_forward.8} parent=1 // pred_check_branch
      %364 = sbr.rel (0) target = $region29
    $region28: #{cgan_forward.8} parent=1 // pred_region
      _
    $region29: #{cgan_forward.8} parent=1 // pred_fallthru
      _
    %365 = vsyncpa [#allocation3], 1
    %366 = vsyncpa [#allocation5], 1

// kernel: cgan_forward.9
$region0: #{cgan_forward.9}
  #allocation0 [shape = 'u32[]', space=smem, size = 0x4, offset = 0x4, fixed_abs, tag = 'smem constant byte address 0x4 - core index']
  #allocation1 [shape = 'u32[144,128]{1,0:T(1,128)}', space=vmem, size = 0x12000, scoped, tag = 'internal scratch']
  %s0 = inlined_call_operand.vmem [shape: bf16[32,1024], index: 0, kind: input, shape index: {}]
  %s1 = inlined_call_operand.hbm [shape: bf16[1024,128], index: 1, kind: input, shape index: {}]
  %s2 = inlined_call_operand.hbm [shape: f32[8,128], index: 2, kind: input, shape index: {}]
  %s3 = inlined_call_operand.vmem [shape: bf16[32,128], index: 3, kind: output, shape index: {}]
  %s4 = sld [smem:[#allocation0]]
  $region30: #{cgan_forward.9} parent=0
    _
  %s6 = ssub.s32 1, %s4
  %s7 = scalar_select 0, %s6, %s4
  $region1: #{cgan_forward.9} parent=0
    #allocation2 [shape = 'u8[262144]{0}', space=vmem, size = 0x40000, scoped, tag = 'input window, operand 1, single buffered']
    #allocation3 [shape = 's32[1]{0}', space=sflag, size = 0x4, scoped, tag = 'scoped memory for cgan_forward.9']
    #allocation4 [shape = 'u8[4096]{0}', space=vmem, size = 0x1000, scoped, tag = 'input window, operand 2, single buffered']
    #allocation5 [shape = 's32[1]{0}', space=sflag, size = 0x4, scoped, tag = 'scoped memory for cgan_forward.9']
    %8 = vsyncpa [#allocation3], 0
    %9 = vsyncpa [#allocation5], 0
    // Predicated region
    $region2: #{cgan_forward.9} parent=1 // pred_check
      _
    $region3: #{cgan_forward.9} parent=1 // pred_check_branch
      %11 = sbr.rel (0) target = $region5
    $region4: #{cgan_forward.9} parent=1 // pred_region
      _
    $region5: #{cgan_forward.9} parent=1 // pred_fallthru
      _
    // Predicated region
    $region6: #{cgan_forward.9} parent=1 // pred_check
      _
    $region7: #{cgan_forward.9} parent=1 // pred_check_branch
      %13 = sbr.rel (0) target = $region9
    $region8: #{cgan_forward.9} parent=1 // pred_region
      %s15 = ssub.s32 8192, 8192
      %16 = vsyncadd [#allocation3], %s15
      %s17 = sshll.u32 [#allocation2], 4
      %s18 = int_to_ptr.vmem [resolvable:$true] %s17
      %23 = dma.hbm_to_vmem [thread:$0]  %s1, 8192, %s18, [#allocation3], 64, 64, 4
    $region9: #{cgan_forward.9} parent=1 // pred_fallthru
      _
    // Predicated region
    $region10: #{cgan_forward.9} parent=1 // pred_check
      _
    $region11: #{cgan_forward.9} parent=1 // pred_check_branch
      %25 = sbr.rel (0) target = $region13
    $region12: #{cgan_forward.9} parent=1 // pred_region
      %s27 = ssub.s32 128, 128
      %28 = vsyncadd [#allocation5], %s27
      %s30 = sshll.u32 [#allocation4], 4
      %s31 = int_to_ptr.vmem [resolvable:$true] %s30
      %33 = dma.hbm_to_vmem [thread:$0]  %s2, 128, %s31, [#allocation5]
    $region13: #{cgan_forward.9} parent=1 // pred_fallthru
      _
    // Predicated region
    $region14: #{cgan_forward.9} parent=1 // pred_check
      _
    $region15: #{cgan_forward.9} parent=1 // pred_check_branch
      %35 = sbr.rel (0) target = $region17
    $region16: #{cgan_forward.9} parent=1 // pred_region
      %36 = dma.done [#allocation3], 8192
    $region17: #{cgan_forward.9} parent=1 // pred_fallthru
      _
    // Predicated region
    $region18: #{cgan_forward.9} parent=1 // pred_check
      _
    $region19: #{cgan_forward.9} parent=1 // pred_check_branch
      %38 = sbr.rel (0) target = $region21
    $region20: #{cgan_forward.9} parent=1 // pred_region
      %39 = dma.done [#allocation5], 128
    $region21: #{cgan_forward.9} parent=1 // pred_fallthru
      _
    %v41 = vld [vmem:[%s0] sm:$0xff]
    %v42 = vld [vmem:[%s0 + $0x8] sm:$0xff]
    %v43 = vld [vmem:[%s0 + $0x10] sm:$0xff]
    %v44 = vld [vmem:[%s0 + $0x18] sm:$0xff]
    %v45 = vld [vmem:[%s0 + $0x20] sm:$0xff]
    %v46 = vld [vmem:[%s0 + $0x28] sm:$0xff]
    %v47 = vld [vmem:[%s0 + $0x30] sm:$0xff]
    %v48 = vld [vmem:[%s0 + $0x38] sm:$0xff]
    %v49 = vld [vmem:[%s0 + $0x40] sm:$0xff]
    %v50 = vld [vmem:[%s0 + $0x48] sm:$0xff]
    %v51 = vld [vmem:[%s0 + $0x50] sm:$0xff]
    %v52 = vld [vmem:[%s0 + $0x58] sm:$0xff]
    %v53 = vld [vmem:[%s0 + $0x60] sm:$0xff]
    %v54 = vld [vmem:[%s0 + $0x68] sm:$0xff]
    %v55 = vld [vmem:[%s0 + $0x70] sm:$0xff]
    %v56 = vld [vmem:[%s0 + $0x78] sm:$0xff]
    %v57 = vld [vmem:[#allocation2] sm:$0xf]
    %v58 = vld [vmem:[#allocation2 + $0x4] sm:$0xf]
    %v59 = vld [vmem:[#allocation2 + $0x8] sm:$0xf]
    %v60 = vld [vmem:[#allocation2 + $0xc] sm:$0xf]
    %v61 = vld [vmem:[#allocation2 + $0x10] sm:$0xf]
    %v62 = vld [vmem:[#allocation2 + $0x14] sm:$0xf]
    %v63 = vld [vmem:[#allocation2 + $0x18] sm:$0xf]
    %v64 = vld [vmem:[#allocation2 + $0x1c] sm:$0xf]
    %v65 = vld [vmem:[#allocation2 + $0x20] sm:$0xf]
    %v66 = vld [vmem:[#allocation2 + $0x24] sm:$0xf]
    %v67 = vld [vmem:[#allocation2 + $0x28] sm:$0xf]
    %v68 = vld [vmem:[#allocation2 + $0x2c] sm:$0xf]
    %v69 = vld [vmem:[#allocation2 + $0x30] sm:$0xf]
    %v70 = vld [vmem:[#allocation2 + $0x34] sm:$0xf]
    %v71 = vld [vmem:[#allocation2 + $0x38] sm:$0xf]
    %v72 = vld [vmem:[#allocation2 + $0x3c] sm:$0xf]
    %v73 = vld [vmem:[#allocation2 + $0x40] sm:$0xf]
    %v74 = vld [vmem:[#allocation2 + $0x44] sm:$0xf]
    %v75 = vld [vmem:[#allocation2 + $0x48] sm:$0xf]
    %v76 = vld [vmem:[#allocation2 + $0x4c] sm:$0xf]
    %v77 = vld [vmem:[#allocation2 + $0x50] sm:$0xf]
    %v78 = vld [vmem:[#allocation2 + $0x54] sm:$0xf]
    %v79 = vld [vmem:[#allocation2 + $0x58] sm:$0xf]
    %v80 = vld [vmem:[#allocation2 + $0x5c] sm:$0xf]
    %v81 = vld [vmem:[#allocation2 + $0x60] sm:$0xf]
    %v82 = vld [vmem:[#allocation2 + $0x64] sm:$0xf]
    %v83 = vld [vmem:[#allocation2 + $0x68] sm:$0xf]
    %v84 = vld [vmem:[#allocation2 + $0x6c] sm:$0xf]
    %v85 = vld [vmem:[#allocation2 + $0x70] sm:$0xf]
    %v86 = vld [vmem:[#allocation2 + $0x74] sm:$0xf]
    %v87 = vld [vmem:[#allocation2 + $0x78] sm:$0xf]
    %v88 = vld [vmem:[#allocation2 + $0x7c] sm:$0xf]
    %v89 = vld [vmem:[#allocation2 + $0x80] sm:$0xf]
    %v90 = vld [vmem:[#allocation2 + $0x84] sm:$0xf]
    %v91 = vld [vmem:[#allocation2 + $0x88] sm:$0xf]
    %v92 = vld [vmem:[#allocation2 + $0x8c] sm:$0xf]
    %v93 = vld [vmem:[#allocation2 + $0x90] sm:$0xf]
    %v94 = vld [vmem:[#allocation2 + $0x94] sm:$0xf]
    %v95 = vld [vmem:[#allocation2 + $0x98] sm:$0xf]
    %v96 = vld [vmem:[#allocation2 + $0x9c] sm:$0xf]
    %v97 = vld [vmem:[#allocation2 + $0xa0] sm:$0xf]
    %v98 = vld [vmem:[#allocation2 + $0xa4] sm:$0xf]
    %v99 = vld [vmem:[#allocation2 + $0xa8] sm:$0xf]
    %v100 = vld [vmem:[#allocation2 + $0xac] sm:$0xf]
    %v101 = vld [vmem:[#allocation2 + $0xb0] sm:$0xf]
    %v102 = vld [vmem:[#allocation2 + $0xb4] sm:$0xf]
    %v103 = vld [vmem:[#allocation2 + $0xb8] sm:$0xf]
    %v104 = vld [vmem:[#allocation2 + $0xbc] sm:$0xf]
    %v105 = vld [vmem:[#allocation2 + $0xc0] sm:$0xf]
    %v106 = vld [vmem:[#allocation2 + $0xc4] sm:$0xf]
    %v107 = vld [vmem:[#allocation2 + $0xc8] sm:$0xf]
    %v108 = vld [vmem:[#allocation2 + $0xcc] sm:$0xf]
    %v109 = vld [vmem:[#allocation2 + $0xd0] sm:$0xf]
    %v110 = vld [vmem:[#allocation2 + $0xd4] sm:$0xf]
    %v111 = vld [vmem:[#allocation2 + $0xd8] sm:$0xf]
    %v112 = vld [vmem:[#allocation2 + $0xdc] sm:$0xf]
    %v113 = vld [vmem:[#allocation2 + $0xe0] sm:$0xf]
    %v114 = vld [vmem:[#allocation2 + $0xe4] sm:$0xf]
    %v115 = vld [vmem:[#allocation2 + $0xe8] sm:$0xf]
    %v116 = vld [vmem:[#allocation2 + $0xec] sm:$0xf]
    %v117 = vld [vmem:[#allocation2 + $0xf0] sm:$0xf]
    %v118 = vld [vmem:[#allocation2 + $0xf4] sm:$0xf]
    %v119 = vld [vmem:[#allocation2 + $0xf8] sm:$0xf]
    %v120 = vld [vmem:[#allocation2 + $0xfc] sm:$0xf]
    %v121 = vld [vmem:[#allocation2 + $0x100] sm:$0xf]
    %v122 = vld [vmem:[#allocation2 + $0x104] sm:$0xf]
    %v123 = vld [vmem:[#allocation2 + $0x108] sm:$0xf]
    %v124 = vld [vmem:[#allocation2 + $0x10c] sm:$0xf]
    %v125 = vld [vmem:[#allocation2 + $0x110] sm:$0xf]
    %v126 = vld [vmem:[#allocation2 + $0x114] sm:$0xf]
    %v127 = vld [vmem:[#allocation2 + $0x118] sm:$0xf]
    %v128 = vld [vmem:[#allocation2 + $0x11c] sm:$0xf]
    %v129 = vld [vmem:[#allocation2 + $0x120] sm:$0xf]
    %v130 = vld [vmem:[#allocation2 + $0x124] sm:$0xf]
    %v131 = vld [vmem:[#allocation2 + $0x128] sm:$0xf]
    %v132 = vld [vmem:[#allocation2 + $0x12c] sm:$0xf]
    %v133 = vld [vmem:[#allocation2 + $0x130] sm:$0xf]
    %v134 = vld [vmem:[#allocation2 + $0x134] sm:$0xf]
    %v135 = vld [vmem:[#allocation2 + $0x138] sm:$0xf]
    %v136 = vld [vmem:[#allocation2 + $0x13c] sm:$0xf]
    %v137 = vld [vmem:[#allocation2 + $0x140] sm:$0xf]
    %v138 = vld [vmem:[#allocation2 + $0x144] sm:$0xf]
    %v139 = vld [vmem:[#allocation2 + $0x148] sm:$0xf]
    %v140 = vld [vmem:[#allocation2 + $0x14c] sm:$0xf]
    %v141 = vld [vmem:[#allocation2 + $0x150] sm:$0xf]
    %v142 = vld [vmem:[#allocation2 + $0x154] sm:$0xf]
    %v143 = vld [vmem:[#allocation2 + $0x158] sm:$0xf]
    %v144 = vld [vmem:[#allocation2 + $0x15c] sm:$0xf]
    %v145 = vld [vmem:[#allocation2 + $0x160] sm:$0xf]
    %v146 = vld [vmem:[#allocation2 + $0x164] sm:$0xf]
    %v147 = vld [vmem:[#allocation2 + $0x168] sm:$0xf]
    %v148 = vld [vmem:[#allocation2 + $0x16c] sm:$0xf]
    %v149 = vld [vmem:[#allocation2 + $0x170] sm:$0xf]
    %v150 = vld [vmem:[#allocation2 + $0x174] sm:$0xf]
    %v151 = vld [vmem:[#allocation2 + $0x178] sm:$0xf]
    %v152 = vld [vmem:[#allocation2 + $0x17c] sm:$0xf]
    %v153 = vld [vmem:[#allocation2 + $0x180] sm:$0xf]
    %v154 = vld [vmem:[#allocation2 + $0x184] sm:$0xf]
    %v155 = vld [vmem:[#allocation2 + $0x188] sm:$0xf]
    %v156 = vld [vmem:[#allocation2 + $0x18c] sm:$0xf]
    %v157 = vld [vmem:[#allocation2 + $0x190] sm:$0xf]
    %v158 = vld [vmem:[#allocation2 + $0x194] sm:$0xf]
    %v159 = vld [vmem:[#allocation2 + $0x198] sm:$0xf]
    %v160 = vld [vmem:[#allocation2 + $0x19c] sm:$0xf]
    %v161 = vld [vmem:[#allocation2 + $0x1a0] sm:$0xf]
    %v162 = vld [vmem:[#allocation2 + $0x1a4] sm:$0xf]
    %v163 = vld [vmem:[#allocation2 + $0x1a8] sm:$0xf]
    %v164 = vld [vmem:[#allocation2 + $0x1ac] sm:$0xf]
    %v165 = vld [vmem:[#allocation2 + $0x1b0] sm:$0xf]
    %v166 = vld [vmem:[#allocation2 + $0x1b4] sm:$0xf]
    %v167 = vld [vmem:[#allocation2 + $0x1b8] sm:$0xf]
    %v168 = vld [vmem:[#allocation2 + $0x1bc] sm:$0xf]
    %v169 = vld [vmem:[#allocation2 + $0x1c0] sm:$0xf]
    %v170 = vld [vmem:[#allocation2 + $0x1c4] sm:$0xf]
    %v171 = vld [vmem:[#allocation2 + $0x1c8] sm:$0xf]
    %v172 = vld [vmem:[#allocation2 + $0x1cc] sm:$0xf]
    %v173 = vld [vmem:[#allocation2 + $0x1d0] sm:$0xf]
    %v174 = vld [vmem:[#allocation2 + $0x1d4] sm:$0xf]
    %v175 = vld [vmem:[#allocation2 + $0x1d8] sm:$0xf]
    %v176 = vld [vmem:[#allocation2 + $0x1dc] sm:$0xf]
    %v177 = vld [vmem:[#allocation2 + $0x1e0] sm:$0xf]
    %v178 = vld [vmem:[#allocation2 + $0x1e4] sm:$0xf]
    %v179 = vld [vmem:[#allocation2 + $0x1e8] sm:$0xf]
    %v180 = vld [vmem:[#allocation2 + $0x1ec] sm:$0xf]
    %v181 = vld [vmem:[#allocation2 + $0x1f0] sm:$0xf]
    %v182 = vld [vmem:[#allocation2 + $0x1f4] sm:$0xf]
    %v183 = vld [vmem:[#allocation2 + $0x1f8] sm:$0xf]
    %v184 = vld [vmem:[#allocation2 + $0x1fc] sm:$0xf]
    %v185 = vld [vmem:[#allocation4] sm:$0x1]
    %v186 = vlaneseq
    %v187 = vshrl.u32 %v186, 7
    %v188 = vsub.s32 0, %v187
    %v189 = vrot.slane %v185, %v188
    %v206 = vunpack.c.l.b16 %v41
    %v207 = vunpack.c.h.b16 %v41
    %v208 = vunpack.c.l.b16 %v42
    %v209 = vunpack.c.h.b16 %v42
    %v210 = vunpack.c.l.b16 %v43
    %v211 = vunpack.c.h.b16 %v43
    %v212 = vunpack.c.l.b16 %v44
    %v213 = vunpack.c.h.b16 %v44
    %v214 = vunpack.c.l.b16 %v45
    %v215 = vunpack.c.h.b16 %v45
    %v216 = vunpack.c.l.b16 %v46
    %v217 = vunpack.c.h.b16 %v46
    %v218 = vunpack.c.l.b16 %v47
    %v219 = vunpack.c.h.b16 %v47
    %v220 = vunpack.c.l.b16 %v48
    %v221 = vunpack.c.h.b16 %v48
    %v222 = vunpack.c.l.b16 %v49
    %v223 = vunpack.c.h.b16 %v49
    %v224 = vunpack.c.l.b16 %v50
    %v225 = vunpack.c.h.b16 %v50
    %v226 = vunpack.c.l.b16 %v51
    %v227 = vunpack.c.h.b16 %v51
    %v228 = vunpack.c.l.b16 %v52
    %v229 = vunpack.c.h.b16 %v52
    %v230 = vunpack.c.l.b16 %v53
    %v231 = vunpack.c.h.b16 %v53
    %v232 = vunpack.c.l.b16 %v54
    %v233 = vunpack.c.h.b16 %v54
    %v234 = vunpack.c.l.b16 %v55
    %v235 = vunpack.c.h.b16 %v55
    %v236 = vunpack.c.l.b16 %v56
    %v237 = vunpack.c.h.b16 %v56
    %v238 = vpack.c.b16 %v214, %v206
    %v239 = vpack.c.b16 %v215, %v207
    %v240 = vpack.c.b16 %v216, %v208
    %v241 = vpack.c.b16 %v217, %v209
    %v242 = vpack.c.b16 %v218, %v210
    %v243 = vpack.c.b16 %v219, %v211
    %v244 = vpack.c.b16 %v220, %v212
    %v245 = vpack.c.b16 %v221, %v213
    %v246 = vpack.c.b16 %v230, %v222
    %v247 = vpack.c.b16 %v231, %v223
    %v248 = vpack.c.b16 %v232, %v224
    %v249 = vpack.c.b16 %v233, %v225
    %v250 = vpack.c.b16 %v234, %v226
    %v251 = vpack.c.b16 %v235, %v227
    %v252 = vpack.c.b16 %v236, %v228
    %v253 = vpack.c.b16 %v237, %v229
    %v398 = vunpack.c.l.b16 %v57
    %v399 = vunpack.c.l.b16 %v58
    %v400 = vunpack.c.l.b16 %v59
    %v401 = vunpack.c.l.b16 %v60
    %v402 = vunpack.c.l.b16 %v61
    %v403 = vunpack.c.l.b16 %v62
    %v404 = vunpack.c.l.b16 %v63
    %v405 = vunpack.c.l.b16 %v64
    %v406 = vunpack.c.l.b16 %v65
    %v407 = vunpack.c.l.b16 %v66
    %v408 = vunpack.c.l.b16 %v67
    %v409 = vunpack.c.l.b16 %v68
    %v410 = vunpack.c.l.b16 %v69
    %v411 = vunpack.c.l.b16 %v70
    %v412 = vunpack.c.l.b16 %v71
    %v413 = vunpack.c.l.b16 %v72
    %v414 = vunpack.c.l.b16 %v73
    %v415 = vunpack.c.l.b16 %v74
    %v416 = vunpack.c.l.b16 %v75
    %v417 = vunpack.c.l.b16 %v76
    %v418 = vunpack.c.l.b16 %v77
    %v419 = vunpack.c.l.b16 %v78
    %v420 = vunpack.c.l.b16 %v79
    %v421 = vunpack.c.l.b16 %v80
    %v422 = vunpack.c.l.b16 %v81
    %v423 = vunpack.c.l.b16 %v82
    %v424 = vunpack.c.l.b16 %v83
    %v425 = vunpack.c.l.b16 %v84
    %v426 = vunpack.c.l.b16 %v85
    %v427 = vunpack.c.l.b16 %v86
    %v428 = vunpack.c.l.b16 %v87
    %v429 = vunpack.c.l.b16 %v88
    %v430 = vunpack.c.l.b16 %v89
    %v431 = vunpack.c.l.b16 %v90
    %v432 = vunpack.c.l.b16 %v91
    %v433 = vunpack.c.l.b16 %v92
    %v434 = vunpack.c.l.b16 %v93
    %v435 = vunpack.c.l.b16 %v94
    %v436 = vunpack.c.l.b16 %v95
    %v437 = vunpack.c.l.b16 %v96
    %v438 = vunpack.c.l.b16 %v97
    %v439 = vunpack.c.l.b16 %v98
    %v440 = vunpack.c.l.b16 %v99
    %v441 = vunpack.c.l.b16 %v100
    %v442 = vunpack.c.l.b16 %v101
    %v443 = vunpack.c.l.b16 %v102
    %v444 = vunpack.c.l.b16 %v103
    %v445 = vunpack.c.l.b16 %v104
    %v446 = vunpack.c.l.b16 %v105
    %v447 = vunpack.c.l.b16 %v106
    %v448 = vunpack.c.l.b16 %v107
    %v449 = vunpack.c.l.b16 %v108
    %v450 = vunpack.c.l.b16 %v109
    %v451 = vunpack.c.l.b16 %v110
    %v452 = vunpack.c.l.b16 %v111
    %v453 = vunpack.c.l.b16 %v112
    %v454 = vunpack.c.l.b16 %v113
    %v455 = vunpack.c.l.b16 %v114
    %v456 = vunpack.c.l.b16 %v115
    %v457 = vunpack.c.l.b16 %v116
    %v458 = vunpack.c.l.b16 %v117
    %v459 = vunpack.c.l.b16 %v118
    %v460 = vunpack.c.l.b16 %v119
    %v461 = vunpack.c.l.b16 %v120
    %v462 = vunpack.c.l.b16 %v121
    %v463 = vunpack.c.l.b16 %v122
    %v464 = vunpack.c.l.b16 %v123
    %v465 = vunpack.c.l.b16 %v124
    %v466 = vunpack.c.l.b16 %v125
    %v467 = vunpack.c.l.b16 %v126
    %v468 = vunpack.c.l.b16 %v127
    %v469 = vunpack.c.l.b16 %v128
    %v470 = vunpack.c.l.b16 %v129
    %v471 = vunpack.c.l.b16 %v130
    %v472 = vunpack.c.l.b16 %v131
    %v473 = vunpack.c.l.b16 %v132
    %v474 = vunpack.c.l.b16 %v133
    %v475 = vunpack.c.l.b16 %v134
    %v476 = vunpack.c.l.b16 %v135
    %v477 = vunpack.c.l.b16 %v136
    %v478 = vunpack.c.l.b16 %v137
    %v479 = vunpack.c.l.b16 %v138
    %v480 = vunpack.c.l.b16 %v139
    %v481 = vunpack.c.l.b16 %v140
    %v482 = vunpack.c.l.b16 %v141
    %v483 = vunpack.c.l.b16 %v142
    %v484 = vunpack.c.l.b16 %v143
    %v485 = vunpack.c.l.b16 %v144
    %v486 = vunpack.c.l.b16 %v145
    %v487 = vunpack.c.l.b16 %v146
    %v488 = vunpack.c.l.b16 %v147
    %v489 = vunpack.c.l.b16 %v148
    %v490 = vunpack.c.l.b16 %v149
    %v491 = vunpack.c.l.b16 %v150
    %v492 = vunpack.c.l.b16 %v151
    %v493 = vunpack.c.l.b16 %v152
    %v494 = vunpack.c.l.b16 %v153
    %v495 = vunpack.c.l.b16 %v154
    %v496 = vunpack.c.l.b16 %v155
    %v497 = vunpack.c.l.b16 %v156
    %v498 = vunpack.c.l.b16 %v157
    %v499 = vunpack.c.l.b16 %v158
    %v500 = vunpack.c.l.b16 %v159
    %v501 = vunpack.c.l.b16 %v160
    %v502 = vunpack.c.l.b16 %v161
    %v503 = vunpack.c.l.b16 %v162
    %v504 = vunpack.c.l.b16 %v163
    %v505 = vunpack.c.l.b16 %v164
    %v506 = vunpack.c.l.b16 %v165
    %v507 = vunpack.c.l.b16 %v166
    %v508 = vunpack.c.l.b16 %v167
    %v509 = vunpack.c.l.b16 %v168
    %v510 = vunpack.c.l.b16 %v169
    %v511 = vunpack.c.l.b16 %v170
    %v512 = vunpack.c.l.b16 %v171
    %v513 = vunpack.c.l.b16 %v172
    %v514 = vunpack.c.l.b16 %v173
    %v515 = vunpack.c.l.b16 %v174
    %v516 = vunpack.c.l.b16 %v175
    %v517 = vunpack.c.l.b16 %v176
    %v518 = vunpack.c.l.b16 %v177
    %v519 = vunpack.c.l.b16 %v178
    %v520 = vunpack.c.l.b16 %v179
    %v521 = vunpack.c.l.b16 %v180
    %v522 = vunpack.c.l.b16 %v181
    %v523 = vunpack.c.l.b16 %v182
    %v524 = vunpack.c.l.b16 %v183
    %v525 = vunpack.c.l.b16 %v184
    %v526 = vpack.c.b16 %v399, %v398
    %v527 = vpack.c.b16 %v401, %v400
    %v528 = vpack.c.b16 %v403, %v402
    %v529 = vpack.c.b16 %v405, %v404
    %v530 = vpack.c.b16 %v407, %v406
    %v531 = vpack.c.b16 %v409, %v408
    %v532 = vpack.c.b16 %v411, %v410
    %v533 = vpack.c.b16 %v413, %v412
    %v534 = vpack.c.b16 %v415, %v414
    %v535 = vpack.c.b16 %v417, %v416
    %v536 = vpack.c.b16 %v419, %v418
    %v537 = vpack.c.b16 %v421, %v420
    %v538 = vpack.c.b16 %v423, %v422
    %v539 = vpack.c.b16 %v425, %v424
    %v540 = vpack.c.b16 %v427, %v426
    %v541 = vpack.c.b16 %v429, %v428
    %v542 = vpack.c.b16 %v431, %v430
    %v543 = vpack.c.b16 %v433, %v432
    %v544 = vpack.c.b16 %v435, %v434
    %v545 = vpack.c.b16 %v437, %v436
    %v546 = vpack.c.b16 %v439, %v438
    %v547 = vpack.c.b16 %v441, %v440
    %v548 = vpack.c.b16 %v443, %v442
    %v549 = vpack.c.b16 %v445, %v444
    %v550 = vpack.c.b16 %v447, %v446
    %v551 = vpack.c.b16 %v449, %v448
    %v552 = vpack.c.b16 %v451, %v450
    %v553 = vpack.c.b16 %v453, %v452
    %v554 = vpack.c.b16 %v455, %v454
    %v555 = vpack.c.b16 %v457, %v456
    %v556 = vpack.c.b16 %v459, %v458
    %v557 = vpack.c.b16 %v461, %v460
    %v558 = vpack.c.b16 %v463, %v462
    %v559 = vpack.c.b16 %v465, %v464
    %v560 = vpack.c.b16 %v467, %v466
    %v561 = vpack.c.b16 %v469, %v468
    %v562 = vpack.c.b16 %v471, %v470
    %v563 = vpack.c.b16 %v473, %v472
    %v564 = vpack.c.b16 %v475, %v474
    %v565 = vpack.c.b16 %v477, %v476
    %v566 = vpack.c.b16 %v479, %v478
    %v567 = vpack.c.b16 %v481, %v480
    %v568 = vpack.c.b16 %v483, %v482
    %v569 = vpack.c.b16 %v485, %v484
    %v570 = vpack.c.b16 %v487, %v486
    %v571 = vpack.c.b16 %v489, %v488
    %v572 = vpack.c.b16 %v491, %v490
    %v573 = vpack.c.b16 %v493, %v492
    %v574 = vpack.c.b16 %v495, %v494
    %v575 = vpack.c.b16 %v497, %v496
    %v576 = vpack.c.b16 %v499, %v498
    %v577 = vpack.c.b16 %v501, %v500
    %v578 = vpack.c.b16 %v503, %v502
    %v579 = vpack.c.b16 %v505, %v504
    %v580 = vpack.c.b16 %v507, %v506
    %v581 = vpack.c.b16 %v509, %v508
    %v582 = vpack.c.b16 %v511, %v510
    %v583 = vpack.c.b16 %v513, %v512
    %v584 = vpack.c.b16 %v515, %v514
    %v585 = vpack.c.b16 %v517, %v516
    %v586 = vpack.c.b16 %v519, %v518
    %v587 = vpack.c.b16 %v521, %v520
    %v588 = vpack.c.b16 %v523, %v522
    %v589 = vpack.c.b16 %v525, %v524
    %654 = vmatprep.subr.bf16.mxu0 0
    %655 = vmatpush1.bf16.msra.mxu0 %v533
    %656 = vmatprep.subr.bf16.mxu0 0
    %657 = vmatpush1.bf16.msra.mxu0 %v532
    %658 = vmatprep.subr.bf16.mxu0 0
    %659 = vmatpush1.bf16.msra.mxu0 %v531
    %660 = vmatprep.subr.bf16.mxu0 0
    %661 = vmatpush1.bf16.msra.mxu0 %v530
    %662 = vmatprep.subr.bf16.mxu0 0
    %663 = vmatpush1.bf16.msra.mxu0 %v529
    %664 = vmatprep.subr.bf16.mxu0 0
    %665 = vmatpush1.bf16.msra.mxu0 %v528
    %666 = vmatprep.subr.bf16.mxu0 0
    %667 = vmatpush1.bf16.msra.mxu0 %v527
    %668 = vmatprep.subr.bf16.mxu0 0
    %669 = vmatpush1.bf16.msra.mxu0 %v526
    %670 = vmatprep.subr.bf16.mxu0 0
    %671 = vmatpush2.bf16.msra.mxu0 %v541
    %672 = vmatprep.subr.bf16.mxu0 0
    %673 = vmatpush2.bf16.msra.mxu0 %v540
    %674 = vmatprep.subr.bf16.mxu0 0
    %675 = vmatpush2.bf16.msra.mxu0 %v539
    %676 = vmatprep.subr.bf16.mxu0 0
    %677 = vmatpush2.bf16.msra.mxu0 %v538
    %678 = vmatprep.subr.bf16.mxu0 0
    %679 = vmatpush2.bf16.msra.mxu0 %v537
    %680 = vmatprep.subr.bf16.mxu0 0
    %681 = vmatpush2.bf16.msra.mxu0 %v536
    %682 = vmatprep.subr.bf16.mxu0 0
    %683 = vmatpush2.bf16.msra.mxu0 %v535
    %684 = vmatprep.subr.bf16.mxu0 0
    %685 = vmatpush2.bf16.msra.mxu0 %v534
    %686 = vmatprep.mubr.bf16.mxu0 %v239
    %687 = vmatmul.mubr.bf16.gmra.mxu0 %v238
    %v688 = vpop.f32.mrf.mxu0
    %v689 = vadd.f32 %v189, %v688
    %v690 = vpop.f32.mrf.mxu0
    %v691 = vpop.f32.mrf.mxu0
    %v692 = vadd.f32 %v189, %v691
    %v693 = vpop.f32.mrf.mxu0
    %694 = vmatprep.mubr.bf16.mxu0 %v247
    %695 = vmatmul.mubr.bf16.gmra.mxu0 %v246
    %v696 = vpop.f32.mrf.mxu0
    %v697 = vadd.f32 %v189, %v696
    %v698 = vpop.f32.mrf.mxu0
    %v699 = vpop.f32.mrf.mxu0
    %v700 = vadd.f32 %v189, %v699
    %v701 = vpop.f32.mrf.mxu0
    %702 = vdwg.mxu0
    %703 = vmatprep.subr.bf16.mxu0 0
    %704 = vmatpush1.bf16.msra.mxu0 %v549
    %705 = vmatprep.subr.bf16.mxu0 0
    %706 = vmatpush1.bf16.msra.mxu0 %v548
    %707 = vmatprep.subr.bf16.mxu0 0
    %708 = vmatpush1.bf16.msra.mxu0 %v547
    %709 = vmatprep.subr.bf16.mxu0 0
    %710 = vmatpush1.bf16.msra.mxu0 %v546
    %711 = vmatprep.subr.bf16.mxu0 0
    %712 = vmatpush1.bf16.msra.mxu0 %v545
    %713 = vmatprep.subr.bf16.mxu0 0
    %714 = vmatpush1.bf16.msra.mxu0 %v544
    %715 = vmatprep.subr.bf16.mxu0 0
    %716 = vmatpush1.bf16.msra.mxu0 %v543
    %717 = vmatprep.subr.bf16.mxu0 0
    %718 = vmatpush1.bf16.msra.mxu0 %v542
    %719 = vmatprep.subr.bf16.mxu0 0
    %720 = vmatpush2.bf16.msra.mxu0 %v557
    %721 = vmatprep.subr.bf16.mxu0 0
    %722 = vmatpush2.bf16.msra.mxu0 %v556
    %723 = vmatprep.subr.bf16.mxu0 0
    %724 = vmatpush2.bf16.msra.mxu0 %v555
    %725 = vmatprep.subr.bf16.mxu0 0
    %726 = vmatpush2.bf16.msra.mxu0 %v554
    %727 = vmatprep.subr.bf16.mxu0 0
    %728 = vmatpush2.bf16.msra.mxu0 %v553
    %729 = vmatprep.subr.bf16.mxu0 0
    %730 = vmatpush2.bf16.msra.mxu0 %v552
    %731 = vmatprep.subr.bf16.mxu0 0
    %732 = vmatpush2.bf16.msra.mxu0 %v551
    %733 = vmatprep.subr.bf16.mxu0 0
    %734 = vmatpush2.bf16.msra.mxu0 %v550
    %735 = vmatprep.mubr.bf16.mxu0 %v241
    %736 = vmatmul.mubr.bf16.gmra.mxu0 %v240
    %v737 = vpop.f32.mrf.mxu0
    %v738 = vadd.f32 %v689, %v737
    %v739 = vpop.f32.mrf.mxu0
    %v740 = vpop.f32.mrf.mxu0
    %v741 = vadd.f32 %v692, %v740
    %v742 = vpop.f32.mrf.mxu0
    %743 = vmatprep.mubr.bf16.mxu0 %v249
    %744 = vmatmul.mubr.bf16.gmra.mxu0 %v248
    %v745 = vpop.f32.mrf.mxu0
    %v746 = vadd.f32 %v697, %v745
    %v747 = vpop.f32.mrf.mxu0
    %v748 = vpop.f32.mrf.mxu0
    %v749 = vadd.f32 %v700, %v748
    %v750 = vpop.f32.mrf.mxu0
    %751 = vdwg.mxu0
    %752 = vmatprep.subr.bf16.mxu0 0
    %753 = vmatpush1.bf16.msra.mxu0 %v565
    %754 = vmatprep.subr.bf16.mxu0 0
    %755 = vmatpush1.bf16.msra.mxu0 %v564
    %756 = vmatprep.subr.bf16.mxu0 0
    %757 = vmatpush1.bf16.msra.mxu0 %v563
    %758 = vmatprep.subr.bf16.mxu0 0
    %759 = vmatpush1.bf16.msra.mxu0 %v562
    %760 = vmatprep.subr.bf16.mxu0 0
    %761 = vmatpush1.bf16.msra.mxu0 %v561
    %762 = vmatprep.subr.bf16.mxu0 0
    %763 = vmatpush1.bf16.msra.mxu0 %v560
    %764 = vmatprep.subr.bf16.mxu0 0
    %765 = vmatpush1.bf16.msra.mxu0 %v559
    %766 = vmatprep.subr.bf16.mxu0 0
    %767 = vmatpush1.bf16.msra.mxu0 %v558
    %768 = vmatprep.subr.bf16.mxu0 0
    %769 = vmatpush2.bf16.msra.mxu0 %v573
    %770 = vmatprep.subr.bf16.mxu0 0
    %771 = vmatpush2.bf16.msra.mxu0 %v572
    %772 = vmatprep.subr.bf16.mxu0 0
    %773 = vmatpush2.bf16.msra.mxu0 %v571
    %774 = vmatprep.subr.bf16.mxu0 0
    %775 = vmatpush2.bf16.msra.mxu0 %v570
    %776 = vmatprep.subr.bf16.mxu0 0
    %777 = vmatpush2.bf16.msra.mxu0 %v569
    %778 = vmatprep.subr.bf16.mxu0 0
    %779 = vmatpush2.bf16.msra.mxu0 %v568
    %780 = vmatprep.subr.bf16.mxu0 0
    %781 = vmatpush2.bf16.msra.mxu0 %v567
    %782 = vmatprep.subr.bf16.mxu0 0
    %783 = vmatpush2.bf16.msra.mxu0 %v566
    %784 = vmatprep.mubr.bf16.mxu0 %v243
    %785 = vmatmul.mubr.bf16.gmra.mxu0 %v242
    %v786 = vpop.f32.mrf.mxu0
    %v787 = vadd.f32 %v738, %v786
    %v788 = vpop.f32.mrf.mxu0
    %v789 = vpop.f32.mrf.mxu0
    %v790 = vadd.f32 %v741, %v789
    %v791 = vpop.f32.mrf.mxu0
    %792 = vmatprep.mubr.bf16.mxu0 %v251
    %793 = vmatmul.mubr.bf16.gmra.mxu0 %v250
    %v794 = vpop.f32.mrf.mxu0
    %v795 = vadd.f32 %v746, %v794
    %v796 = vpop.f32.mrf.mxu0
    %v797 = vpop.f32.mrf.mxu0
    %v798 = vadd.f32 %v749, %v797
    %v799 = vpop.f32.mrf.mxu0
    %800 = vdwg.mxu0
    %801 = vmatprep.subr.bf16.mxu0 0
    %802 = vmatpush1.bf16.msra.mxu0 %v581
    %803 = vmatprep.subr.bf16.mxu0 0
    %804 = vmatpush1.bf16.msra.mxu0 %v580
    %805 = vmatprep.subr.bf16.mxu0 0
    %806 = vmatpush1.bf16.msra.mxu0 %v579
    %807 = vmatprep.subr.bf16.mxu0 0
    %808 = vmatpush1.bf16.msra.mxu0 %v578
    %809 = vmatprep.subr.bf16.mxu0 0
    %810 = vmatpush1.bf16.msra.mxu0 %v577
    %811 = vmatprep.subr.bf16.mxu0 0
    %812 = vmatpush1.bf16.msra.mxu0 %v576
    %813 = vmatprep.subr.bf16.mxu0 0
    %814 = vmatpush1.bf16.msra.mxu0 %v575
    %815 = vmatprep.subr.bf16.mxu0 0
    %816 = vmatpush1.bf16.msra.mxu0 %v574
    %817 = vmatprep.subr.bf16.mxu0 0
    %818 = vmatpush2.bf16.msra.mxu0 %v589
    %819 = vmatprep.subr.bf16.mxu0 0
    %820 = vmatpush2.bf16.msra.mxu0 %v588
    %821 = vmatprep.subr.bf16.mxu0 0
    %822 = vmatpush2.bf16.msra.mxu0 %v587
    %823 = vmatprep.subr.bf16.mxu0 0
    %824 = vmatpush2.bf16.msra.mxu0 %v586
    %825 = vmatprep.subr.bf16.mxu0 0
    %826 = vmatpush2.bf16.msra.mxu0 %v585
    %827 = vmatprep.subr.bf16.mxu0 0
    %828 = vmatpush2.bf16.msra.mxu0 %v584
    %829 = vmatprep.subr.bf16.mxu0 0
    %830 = vmatpush2.bf16.msra.mxu0 %v583
    %831 = vmatprep.subr.bf16.mxu0 0
    %832 = vmatpush2.bf16.msra.mxu0 %v582
    %833 = vmatprep.mubr.bf16.mxu0 %v245
    %834 = vmatmul.mubr.bf16.gmra.mxu0 %v244
    %v835 = vpop.f32.mrf.mxu0
    %v836 = vadd.f32 %v787, %v835
    %v837 = vpop.f32.mrf.mxu0
    %v838 = vpop.f32.mrf.mxu0
    %v839 = vadd.f32 %v790, %v838
    %v840 = vpop.f32.mrf.mxu0
    %841 = vmatprep.mubr.bf16.mxu0 %v253
    %842 = vmatmul.mubr.bf16.gmra.mxu0 %v252
    %v843 = vpop.f32.mrf.mxu0
    %v844 = vadd.f32 %v795, %v843
    %v845 = vpop.f32.mrf.mxu0
    %v846 = vpop.f32.mrf.mxu0
    %v847 = vadd.f32 %v798, %v846
    %v848 = vpop.f32.mrf.mxu0
    %849 = vdwg.mxu0
    %v850 = vadd.f32 %v836, %v839
    %v851 = vadd.f32 %v850, %v844
    %v852 = vadd.f32 %v851, %v847
    %v853 = vrot.slane %v852, 4
    %v854 = vadd.f32 %v852, %v853
    %v855 = vrot.slane %v854, 2
    %v856 = vadd.f32 %v854, %v855
    %v857 = vrot.slane %v856, 1
    %v858 = vadd.f32 %v856, %v857
    %v859 = vmul.f32 %v858, 0.03125
    %v860 = vmul.f32 %v836, %v836
    %v861 = vmul.f32 %v839, %v839
    %v862 = vmul.f32 %v844, %v844
    %v863 = vmul.f32 %v847, %v847
    %v864 = vadd.f32 %v860, %v861
    %v865 = vadd.f32 %v864, %v862
    %v866 = vadd.f32 %v865, %v863
    %v867 = vrot.slane %v866, 4
    %v868 = vadd.f32 %v866, %v867
    %v869 = vrot.slane %v868, 2
    %v870 = vadd.f32 %v868, %v869
    %v871 = vrot.slane %v870, 1
    %v872 = vadd.f32 %v870, %v871
    %v873 = vmul.f32 %v872, 0.03125
    %v874 = vmul.f32 %v859, %v859
    %v875 = vsub.f32 %v873, %v874
    %v876 = vsub.f32 %v836, %v859
    %v877 = vsub.f32 %v839, %v859
    %v878 = vsub.f32 %v844, %v859
    %v879 = vsub.f32 %v847, %v859
    %v880 = vadd.f32 %v875, 1e-05
    %v881 = vrsqrt.pop %v880
    %v882 = vld [vmem:[#allocation4 + $0x1] sm:$0x1]
    %v883 = vmul.f32 %v881, %v882
    %v884 = vlaneseq
    %v885 = vshrl.u32 %v884, 7
    %v886 = vsub.s32 0, %v885
    %v887 = vrot.slane %v883, %v886
    %v888 = vmul.f32 %v876, %v887
    %v889 = vmul.f32 %v877, %v887
    %v890 = vmul.f32 %v878, %v887
    %v891 = vmul.f32 %v879, %v887
    %v892 = vld [vmem:[#allocation4 + $0x2] sm:$0x1]
    %v893 = vlaneseq
    %v894 = vshrl.u32 %v893, 7
    %v895 = vsub.s32 0, %v894
    %v896 = vrot.slane %v892, %v895
    %v897 = vadd.f32 %v888, %v896
    %v898 = vadd.f32 %v889, %v896
    %v899 = vadd.f32 %v890, %v896
    %v900 = vadd.f32 %v891, %v896
    %vm901 = vcmp.gt.f32.partialorder %v897, 0.0
    %vm902 = vcmp.gt.f32.partialorder %v898, 0.0
    %vm903 = vcmp.gt.f32.partialorder %v899, 0.0
    %vm904 = vcmp.gt.f32.partialorder %v900, 0.0
    %v905 = vmul.f32 %v897, 0.2
    %v906 = vmul.f32 %v898, 0.2
    %v907 = vmul.f32 %v899, 0.2
    %v908 = vmul.f32 %v900, 0.2
    %v909 = vsel %vm901, %v897, %v905
    %v910 = vsel %vm902, %v898, %v906
    %v911 = vsel %vm903, %v899, %v907
    %v912 = vsel %vm904, %v900, %v908
    %v913 = vpack.c.bf16 %v910, %v909
    %v914 = vpack.c.bf16 %v912, %v911
    %v917 = vunpack.c.l.b16 %v913
    %v918 = vunpack.c.h.b16 %v913
    %v919 = vunpack.c.l.b16 %v914
    %v920 = vunpack.c.h.b16 %v914
    %v921 = vpack.c.b16 %v917, %v917
    %v922 = vpack.c.b16 %v918, %v918
    %v923 = vpack.c.b16 %v919, %v919
    %v924 = vpack.c.b16 %v920, %v920
    %929 = vst [vmem:[%s3] sm:$0xf] %v921
    %930 = vst [vmem:[%s3 + $0x4] sm:$0xf] %v922
    %931 = vst [vmem:[%s3 + $0x8] sm:$0xf] %v923
    %932 = vst [vmem:[%s3 + $0xc] sm:$0xf] %v924
    // Predicated region
    $region22: #{cgan_forward.9} parent=1 // pred_check
      _
    $region23: #{cgan_forward.9} parent=1 // pred_check_branch
      %934 = sbr.rel (0) target = $region25
    $region24: #{cgan_forward.9} parent=1 // pred_region
      _
    $region25: #{cgan_forward.9} parent=1 // pred_fallthru
      _
    // Predicated region
    $region26: #{cgan_forward.9} parent=1 // pred_check
      _
    $region27: #{cgan_forward.9} parent=1 // pred_check_branch
      %936 = sbr.rel (0) target = $region29
    $region28: #{cgan_forward.9} parent=1 // pred_region
      _
    $region29: #{cgan_forward.9} parent=1 // pred_fallthru
      _
    %937 = vsyncpa [#allocation3], 1
    %938 = vsyncpa [#allocation5], 1

// kernel: cgan_forward.12
$region0: #{cgan_forward.12}
  #allocation0 [shape = 'u32[]', space=smem, size = 0x4, offset = 0x4, fixed_abs, tag = 'smem constant byte address 0x4 - core index']
  #allocation1 [shape = 'u32[144,128]{1,0:T(1,128)}', space=vmem, size = 0x12000, scoped, tag = 'internal scratch']
  %s0 = inlined_call_operand.vmem [shape: bf16[16,512], index: 0, kind: input, shape index: {}]
  %s1 = inlined_call_operand.vmem [shape: f32[8,512], index: 1, kind: input, shape index: {}]
  %s2 = inlined_call_operand.vmem [shape: bf16[16,512], index: 2, kind: output, shape index: {}]
  %s3 = sld [smem:[#allocation0]]
  $region18: #{cgan_forward.12} parent=0
    _
  %s5 = ssub.s32 1, %s3
  %s6 = scalar_select 0, %s5, %s3
  // Predicated region
  $region2: #{cgan_forward.12} parent=0 // pred_check
    _
  $region3: #{cgan_forward.12} parent=0 // pred_check_branch
    %8 = sbr.rel (0) target = $region5
  $region4: #{cgan_forward.12} parent=0 // pred_region
    _
  $region5: #{cgan_forward.12} parent=0 // pred_fallthru
    _
  // Predicated region
  $region6: #{cgan_forward.12} parent=0 // pred_check
    _
  $region7: #{cgan_forward.12} parent=0 // pred_check_branch
    %10 = sbr.rel (0) target = $region9
  $region8: #{cgan_forward.12} parent=0 // pred_region
    _
  $region9: #{cgan_forward.12} parent=0 // pred_fallthru
    _
  %v11 = vld [vmem:[%s1] ss:$8 sm:$0xf]
  %v12 = vmul.f32 %v11, 0.03125
  %s13 = scalar_lea.vmem %s1, 1
  %v14 = vld [vmem:[%s13] ss:$8 sm:$0xf]
  %v15 = vmul.f32 %v14, 0.03125
  %v16 = vmul.f32 %v12, %v12
  %v17 = vsub.f32 %v15, %v16
  %v18 = vld [vmem:[%s0] sm:$0xff]
  %v19 = vld [vmem:[%s0 + $0x8] sm:$0xff]
  %v20 = vld [vmem:[%s0 + $0x10] sm:$0xff]
  %v21 = vld [vmem:[%s0 + $0x18] sm:$0xff]
  %v22 = vunpack.c.l.bf16 %v18
  %v23 = vunpack.c.h.bf16 %v18
  %v24 = vunpack.c.l.bf16 %v19
  %v25 = vunpack.c.h.bf16 %v19
  %v26 = vunpack.c.l.bf16 %v20
  %v27 = vunpack.c.h.bf16 %v20
  %v28 = vunpack.c.l.bf16 %v21
  %v29 = vunpack.c.h.bf16 %v21
  %v31 = vlaneseq
  %v32 = vshrl.u32 %v31, 7
  %v33 = vsub.s32 0, %v32
  %v34 = vrot.slane %v12, %v33
  %v35 = vlaneseq
  %v36 = vshrl.u32 %v35, 7
  %v37 = vsub.s32 1, %v36
  %v38 = vrot.slane %v12, %v37
  %v39 = vlaneseq
  %v40 = vshrl.u32 %v39, 7
  %v41 = vsub.s32 2, %v40
  %v42 = vrot.slane %v12, %v41
  %v43 = vlaneseq
  %v44 = vshrl.u32 %v43, 7
  %v45 = vsub.s32 3, %v44
  %v46 = vrot.slane %v12, %v45
  %v51 = vsub.f32 %v22, %v34
  %v52 = vsub.f32 %v23, %v38
  %v53 = vsub.f32 %v24, %v42
  %v54 = vsub.f32 %v25, %v46
  %v55 = vsub.f32 %v26, %v34
  %v56 = vsub.f32 %v27, %v38
  %v57 = vsub.f32 %v28, %v42
  %v58 = vsub.f32 %v29, %v46
  %v59 = vadd.f32 %v17, 1e-05
  %v60 = vrsqrt.pop %v59
  %s61 = scalar_lea.vmem %s1, 2
  %v62 = vld [vmem:[%s61] ss:$8 sm:$0xf]
  %v63 = vmul.f32 %v60, %v62
  %v65 = vlaneseq
  %v66 = vshrl.u32 %v65, 7
  %v67 = vsub.s32 0, %v66
  %v68 = vrot.slane %v63, %v67
  %v69 = vlaneseq
  %v70 = vshrl.u32 %v69, 7
  %v71 = vsub.s32 1, %v70
  %v72 = vrot.slane %v63, %v71
  %v73 = vlaneseq
  %v74 = vshrl.u32 %v73, 7
  %v75 = vsub.s32 2, %v74
  %v76 = vrot.slane %v63, %v75
  %v77 = vlaneseq
  %v78 = vshrl.u32 %v77, 7
  %v79 = vsub.s32 3, %v78
  %v80 = vrot.slane %v63, %v79
  %v85 = vmul.f32 %v51, %v68
  %v86 = vmul.f32 %v52, %v72
  %v87 = vmul.f32 %v53, %v76
  %v88 = vmul.f32 %v54, %v80
  %v89 = vmul.f32 %v55, %v68
  %v90 = vmul.f32 %v56, %v72
  %v91 = vmul.f32 %v57, %v76
  %v92 = vmul.f32 %v58, %v80
  %s93 = scalar_lea.vmem %s1, 3
  %v94 = vld [vmem:[%s93] ss:$8 sm:$0xf]
  %v96 = vlaneseq
  %v97 = vshrl.u32 %v96, 7
  %v98 = vsub.s32 0, %v97
  %v99 = vrot.slane %v94, %v98
  %v100 = vlaneseq
  %v101 = vshrl.u32 %v100, 7
  %v102 = vsub.s32 1, %v101
  %v103 = vrot.slane %v94, %v102
  %v104 = vlaneseq
  %v105 = vshrl.u32 %v104, 7
  %v106 = vsub.s32 2, %v105
  %v107 = vrot.slane %v94, %v106
  %v108 = vlaneseq
  %v109 = vshrl.u32 %v108, 7
  %v110 = vsub.s32 3, %v109
  %v111 = vrot.slane %v94, %v110
  %v116 = vadd.f32 %v85, %v99
  %v117 = vadd.f32 %v86, %v103
  %v118 = vadd.f32 %v87, %v107
  %v119 = vadd.f32 %v88, %v111
  %v120 = vadd.f32 %v89, %v99
  %v121 = vadd.f32 %v90, %v103
  %v122 = vadd.f32 %v91, %v107
  %v123 = vadd.f32 %v92, %v111
  %v124 = vmax.f32 %v116, 0.0
  %v125 = vmax.f32 %v117, 0.0
  %v126 = vmax.f32 %v118, 0.0
  %v127 = vmax.f32 %v119, 0.0
  %v128 = vmax.f32 %v120, 0.0
  %v129 = vmax.f32 %v121, 0.0
  %v130 = vmax.f32 %v122, 0.0
  %v131 = vmax.f32 %v123, 0.0
  %v132 = vpack.c.bf16 %v128, %v124
  %v133 = vpack.c.bf16 %v129, %v125
  %v134 = vpack.c.bf16 %v130, %v126
  %v135 = vpack.c.bf16 %v131, %v127
  %v140 = vunpack.c.l.b16 %v132
  %v141 = vunpack.c.l.b16 %v133
  %v142 = vunpack.c.l.b16 %v134
  %v143 = vunpack.c.l.b16 %v135
  %v144 = vunpack.c.h.b16 %v132
  %v145 = vunpack.c.h.b16 %v133
  %v146 = vunpack.c.h.b16 %v134
  %v147 = vunpack.c.h.b16 %v135
  %v148 = vpack.c.b16 %v141, %v140
  %v149 = vpack.c.b16 %v143, %v142
  %v150 = vpack.c.b16 %v145, %v144
  %v151 = vpack.c.b16 %v147, %v146
  %156 = vst [vmem:[%s2] sm:$0xff] %v148
  %157 = vst [vmem:[%s2 + $0x8] sm:$0xff] %v149
  %158 = vst [vmem:[%s2 + $0x10] sm:$0xff] %v150
  %159 = vst [vmem:[%s2 + $0x18] sm:$0xff] %v151
  // Predicated region
  $region10: #{cgan_forward.12} parent=0 // pred_check
    _
  $region11: #{cgan_forward.12} parent=0 // pred_check_branch
    %161 = sbr.rel (0) target = $region13
  $region12: #{cgan_forward.12} parent=0 // pred_region
    _
  $region13: #{cgan_forward.12} parent=0 // pred_fallthru
    _
  // Predicated region
  $region14: #{cgan_forward.12} parent=0 // pred_check
    _
  $region15: #{cgan_forward.12} parent=0 // pred_check_branch
    %163 = sbr.rel (0) target = $region17
  $region16: #{cgan_forward.12} parent=0 // pred_region
    _
  $region17: #{cgan_forward.12} parent=0 // pred_fallthru
    _

// kernel: tile.19
$region0: #{tile.19}
  %s0 = inlined_call_operand.vmem [shape: f32[2,4,64], index: 0, kind: input, shape index: {}]
  %s1 = inlined_call_operand.vmem [shape: f32[2,256], index: 1, kind: output, shape index: {}]
  $region1: #{tile.19} parent=0
    #allocation0 [shape = 'u8[8192]{0}', space=vmem, size = 0x2000, scoped, tag = 'scoped mem for output reshape']
    #allocation1 [shape = 'u8[8192]{0}', space=vmem, size = 0x2000, scoped, tag = 'scoped mem for input reshape']
    %s3 = sshll.u32 1, 4
    %s4 = ssub.s32 %s3, 1
    %s5 = scalar_lea.vmem %s0, 4
    %v6 = vld [vmem:[%s5] sm:%s4]
    %s7 = scalar_lea.vmem [#allocation1], 8
    %8 = vst [vmem:[%s7] sm:%s4] %v6
    %v9 = vld [vmem:[%s0] sm:%s4]
    %10 = vst [vmem:[#allocation1] sm:%s4] %v9
    %s11 = smov 3
    %v12 = vld [vmem:[#allocation1] ss:$2 sm:%s11]
    %vm13 = vcmask 523264
    %14 = vst.msk [vmem:[#allocation0] ss:$8 sm:$0x3] %vm13, %v12
    %s15 = scalar_lea.vmem [#allocation1], 8
    %s16 = smov 3
    %v17 = vld [vmem:[%s15] ss:$2 sm:%s16]
    %vm18 = vcmask 523264
    %s19 = scalar_lea.vmem [#allocation0], 1
    %20 = vst.msk [vmem:[%s19] ss:$8 sm:$0x3] %vm18, %v17
    %s21 = scalar_lea.vmem [#allocation1], 1
    %v22 = vld.sshfl [vmem:[%s21] sm:$0xff pattern:$0xaaaaa280]
    %23 = vrot.lane.b32.xlu0 %v22, 64
    %v24 = vpop.permute.xlu0 %23
    %vm25 = vcmask 1048064
    %26 = vst.msk [vmem:[#allocation0] sm:$0x3] %vm25, %v24
    %s27 = scalar_lea.vmem [#allocation0], 6
    %28 = vst.msk [vmem:[%s27] sm:$0xc] %vm25, %v24
    %s30 = sshll.u32 1, 2
    %s31 = ssub.s32 %s30, 1
    %v33 = vld [vmem:[#allocation0] sm:%s31]
    %s34 = sshll.u32 1, 2
    %s35 = ssub.s32 %s34, 1
    %36 = vst [vmem:[%s1] sm:%s35] %v33
    %s37 = scalar_lea.vmem [#allocation0], 8
    %v38 = vld [vmem:[%s37] sm:%s31]
    %s39 = sshll.u32 1, 2
    %s40 = ssub.s32 %s39, 1
    %s41 = scalar_lea.vmem %s1, 2
    %42 = vst [vmem:[%s41] sm:%s40] %v38

// kernel: cgan_forward.10
$region0: #{cgan_forward.10}
  #allocation0 [shape = 'u32[]', space=smem, size = 0x4, offset = 0x4, fixed_abs, tag = 'smem constant byte address 0x4 - core index']
  #allocation1 [shape = 'u32[144,128]{1,0:T(1,128)}', space=vmem, size = 0x12000, scoped, tag = 'internal scratch']
  %s0 = inlined_call_operand.vmem [shape: bf16[16,2048], index: 0, kind: input, shape index: {}]
  %s1 = inlined_call_operand.hbm [shape: bf16[2048,256], index: 1, kind: input, shape index: {}]
  %s2 = inlined_call_operand.hbm [shape: f32[8,256], index: 2, kind: input, shape index: {}]
  %s3 = inlined_call_operand.vmem [shape: bf16[16,256], index: 3, kind: output, shape index: {}]
  %s4 = sld [smem:[#allocation0]]
  $region30: #{cgan_forward.10} parent=0
    _
  %s6 = ssub.s32 1, %s4
  %s7 = scalar_select 0, %s6, %s4
  $region1: #{cgan_forward.10} parent=0
    #allocation2 [shape = 'u8[1048576]{0}', space=vmem, size = 0x100000, scoped, tag = 'input window, operand 1, single buffered']
    #allocation3 [shape = 's32[1]{0}', space=sflag, size = 0x4, scoped, tag = 'scoped memory for cgan_forward.10']
    #allocation4 [shape = 'u8[8192]{0}', space=vmem, size = 0x2000, scoped, tag = 'input window, operand 2, single buffered']
    #allocation5 [shape = 's32[1]{0}', space=sflag, size = 0x4, scoped, tag = 'scoped memory for cgan_forward.10']
    %8 = vsyncpa [#allocation3], 0
    %9 = vsyncpa [#allocation5], 0
    // Predicated region
    $region2: #{cgan_forward.10} parent=1 // pred_check
      _
    $region3: #{cgan_forward.10} parent=1 // pred_check_branch
      %11 = sbr.rel (0) target = $region5
    $region4: #{cgan_forward.10} parent=1 // pred_region
      _
    $region5: #{cgan_forward.10} parent=1 // pred_fallthru
      _
    // Predicated region
    $region6: #{cgan_forward.10} parent=1 // pred_check
      _
    $region7: #{cgan_forward.10} parent=1 // pred_check_branch
      %13 = sbr.rel (0) target = $region9
    $region8: #{cgan_forward.10} parent=1 // pred_region
      %s15 = ssub.s32 32768, 32768
      %16 = vsyncadd [#allocation3], %s15
      %s17 = sshll.u32 [#allocation2], 4
      %s18 = int_to_ptr.vmem [resolvable:$true] %s17
      %23 = dma.hbm_to_vmem [thread:$0]  %s1, 32768, %s18, [#allocation3], 128, 128, 8
    $region9: #{cgan_forward.10} parent=1 // pred_fallthru
      _
    // Predicated region
    $region10: #{cgan_forward.10} parent=1 // pred_check
      _
    $region11: #{cgan_forward.10} parent=1 // pred_check_branch
      %25 = sbr.rel (0) target = $region13
    $region12: #{cgan_forward.10} parent=1 // pred_region
      %s27 = ssub.s32 256, 256
      %28 = vsyncadd [#allocation5], %s27
      %s30 = sshll.u32 [#allocation4], 4
      %s31 = int_to_ptr.vmem [resolvable:$true] %s30
      %33 = dma.hbm_to_vmem [thread:$0]  %s2, 256, %s31, [#allocation5]
    $region13: #{cgan_forward.10} parent=1 // pred_fallthru
      _
    // Predicated region
    $region14: #{cgan_forward.10} parent=1 // pred_check
      _
    $region15: #{cgan_forward.10} parent=1 // pred_check_branch
      %35 = sbr.rel (0) target = $region17
    $region16: #{cgan_forward.10} parent=1 // pred_region
      %36 = dma.done [#allocation3], 32768
    $region17: #{cgan_forward.10} parent=1 // pred_fallthru
      _
    // Predicated region
    $region18: #{cgan_forward.10} parent=1 // pred_check
      _
    $region19: #{cgan_forward.10} parent=1 // pred_check_branch
      %38 = sbr.rel (0) target = $region21
    $region20: #{cgan_forward.10} parent=1 // pred_region
      %39 = dma.done [#allocation5], 256
    $region21: #{cgan_forward.10} parent=1 // pred_fallthru
      _
    %v40 = vld [vmem:[%s0] sm:$0xff]
    %v41 = vld [vmem:[%s0 + $0x8] sm:$0xff]
    %v42 = vld [vmem:[%s0 + $0x10] sm:$0xff]
    %v43 = vld [vmem:[%s0 + $0x18] sm:$0xff]
    %v44 = vld [vmem:[%s0 + $0x20] sm:$0xff]
    %v45 = vld [vmem:[%s0 + $0x28] sm:$0xff]
    %v46 = vld [vmem:[%s0 + $0x30] sm:$0xff]
    %v47 = vld [vmem:[%s0 + $0x38] sm:$0xff]
    %v48 = vld [vmem:[%s0 + $0x40] sm:$0xff]
    %v49 = vld [vmem:[%s0 + $0x48] sm:$0xff]
    %v50 = vld [vmem:[%s0 + $0x50] sm:$0xff]
    %v51 = vld [vmem:[%s0 + $0x58] sm:$0xff]
    %v52 = vld [vmem:[%s0 + $0x60] sm:$0xff]
    %v53 = vld [vmem:[%s0 + $0x68] sm:$0xff]
    %v54 = vld [vmem:[%s0 + $0x70] sm:$0xff]
    %v55 = vld [vmem:[%s0 + $0x78] sm:$0xff]
    %v56 = vld [vmem:[#allocation2] sm:$0xff]
    %v57 = vld [vmem:[#allocation2 + $0x8] sm:$0xff]
    %v58 = vld [vmem:[#allocation2 + $0x10] sm:$0xff]
    %v59 = vld [vmem:[#allocation2 + $0x18] sm:$0xff]
    %v60 = vld [vmem:[#allocation2 + $0x20] sm:$0xff]
    %v61 = vld [vmem:[#allocation2 + $0x28] sm:$0xff]
    %v62 = vld [vmem:[#allocation2 + $0x30] sm:$0xff]
    %v63 = vld [vmem:[#allocation2 + $0x38] sm:$0xff]
    %v64 = vld [vmem:[#allocation2 + $0x40] sm:$0xff]
    %v65 = vld [vmem:[#allocation2 + $0x48] sm:$0xff]
    %v66 = vld [vmem:[#allocation2 + $0x50] sm:$0xff]
    %v67 = vld [vmem:[#allocation2 + $0x58] sm:$0xff]
    %v68 = vld [vmem:[#allocation2 + $0x60] sm:$0xff]
    %v69 = vld [vmem:[#allocation2 + $0x68] sm:$0xff]
    %v70 = vld [vmem:[#allocation2 + $0x70] sm:$0xff]
    %v71 = vld [vmem:[#allocation2 + $0x78] sm:$0xff]
    %v72 = vld [vmem:[#allocation2 + $0x80] sm:$0xff]
    %v73 = vld [vmem:[#allocation2 + $0x88] sm:$0xff]
    %v74 = vld [vmem:[#allocation2 + $0x90] sm:$0xff]
    %v75 = vld [vmem:[#allocation2 + $0x98] sm:$0xff]
    %v76 = vld [vmem:[#allocation2 + $0xa0] sm:$0xff]
    %v77 = vld [vmem:[#allocation2 + $0xa8] sm:$0xff]
    %v78 = vld [vmem:[#allocation2 + $0xb0] sm:$0xff]
    %v79 = vld [vmem:[#allocation2 + $0xb8] sm:$0xff]
    %v80 = vld [vmem:[#allocation2 + $0xc0] sm:$0xff]
    %v81 = vld [vmem:[#allocation2 + $0xc8] sm:$0xff]
    %v82 = vld [vmem:[#allocation2 + $0xd0] sm:$0xff]
    %v83 = vld [vmem:[#allocation2 + $0xd8] sm:$0xff]
    %v84 = vld [vmem:[#allocation2 + $0xe0] sm:$0xff]
    %v85 = vld [vmem:[#allocation2 + $0xe8] sm:$0xff]
    %v86 = vld [vmem:[#allocation2 + $0xf0] sm:$0xff]
    %v87 = vld [vmem:[#allocation2 + $0xf8] sm:$0xff]
    %v88 = vld [vmem:[#allocation2 + $0x100] sm:$0xff]
    %v89 = vld [vmem:[#allocation2 + $0x108] sm:$0xff]
    %v90 = vld [vmem:[#allocation2 + $0x110] sm:$0xff]
    %v91 = vld [vmem:[#allocation2 + $0x118] sm:$0xff]
    %v92 = vld [vmem:[#allocation2 + $0x120] sm:$0xff]
    %v93 = vld [vmem:[#allocation2 + $0x128] sm:$0xff]
    %v94 = vld [vmem:[#allocation2 + $0x130] sm:$0xff]
    %v95 = vld [vmem:[#allocation2 + $0x138] sm:$0xff]
    %v96 = vld [vmem:[#allocation2 + $0x140] sm:$0xff]
    %v97 = vld [vmem:[#allocation2 + $0x148] sm:$0xff]
    %v98 = vld [vmem:[#allocation2 + $0x150] sm:$0xff]
    %v99 = vld [vmem:[#allocation2 + $0x158] sm:$0xff]
    %v100 = vld [vmem:[#allocation2 + $0x160] sm:$0xff]
    %v101 = vld [vmem:[#allocation2 + $0x168] sm:$0xff]
    %v102 = vld [vmem:[#allocation2 + $0x170] sm:$0xff]
    %v103 = vld [vmem:[#allocation2 + $0x178] sm:$0xff]
    %v104 = vld [vmem:[#allocation2 + $0x180] sm:$0xff]
    %v105 = vld [vmem:[#allocation2 + $0x188] sm:$0xff]
    %v106 = vld [vmem:[#allocation2 + $0x190] sm:$0xff]
    %v107 = vld [vmem:[#allocation2 + $0x198] sm:$0xff]
    %v108 = vld [vmem:[#allocation2 + $0x1a0] sm:$0xff]
    %v109 = vld [vmem:[#allocation2 + $0x1a8] sm:$0xff]
    %v110 = vld [vmem:[#allocation2 + $0x1b0] sm:$0xff]
    %v111 = vld [vmem:[#allocation2 + $0x1b8] sm:$0xff]
    %v112 = vld [vmem:[#allocation2 + $0x1c0] sm:$0xff]
    %v113 = vld [vmem:[#allocation2 + $0x1c8] sm:$0xff]
    %v114 = vld [vmem:[#allocation2 + $0x1d0] sm:$0xff]
    %v115 = vld [vmem:[#allocation2 + $0x1d8] sm:$0xff]
    %v116 = vld [vmem:[#allocation2 + $0x1e0] sm:$0xff]
    %v117 = vld [vmem:[#allocation2 + $0x1e8] sm:$0xff]
    %v118 = vld [vmem:[#allocation2 + $0x1f0] sm:$0xff]
    %v119 = vld [vmem:[#allocation2 + $0x1f8] sm:$0xff]
    %v120 = vld [vmem:[#allocation2 + $0x200] sm:$0xff]
    %v121 = vld [vmem:[#allocation2 + $0x208] sm:$0xff]
    %v122 = vld [vmem:[#allocation2 + $0x210] sm:$0xff]
    %v123 = vld [vmem:[#allocation2 + $0x218] sm:$0xff]
    %v124 = vld [vmem:[#allocation2 + $0x220] sm:$0xff]
    %v125 = vld [vmem:[#allocation2 + $0x228] sm:$0xff]
    %v126 = vld [vmem:[#allocation2 + $0x230] sm:$0xff]
    %v127 = vld [vmem:[#allocation2 + $0x238] sm:$0xff]
    %v128 = vld [vmem:[#allocation2 + $0x240] sm:$0xff]
    %v129 = vld [vmem:[#allocation2 + $0x248] sm:$0xff]
    %v130 = vld [vmem:[#allocation2 + $0x250] sm:$0xff]
    %v131 = vld [vmem:[#allocation2 + $0x258] sm:$0xff]
    %v132 = vld [vmem:[#allocation2 + $0x260] sm:$0xff]
    %v133 = vld [vmem:[#allocation2 + $0x268] sm:$0xff]
    %v134 = vld [vmem:[#allocation2 + $0x270] sm:$0xff]
    %v135 = vld [vmem:[#allocation2 + $0x278] sm:$0xff]
    %v136 = vld [vmem:[#allocation2 + $0x280] sm:$0xff]
    %v137 = vld [vmem:[#allocation2 + $0x288] sm:$0xff]
    %v138 = vld [vmem:[#allocation2 + $0x290] sm:$0xff]
    %v139 = vld [vmem:[#allocation2 + $0x298] sm:$0xff]
    %v140 = vld [vmem:[#allocation2 + $0x2a0] sm:$0xff]
    %v141 = vld [vmem:[#allocation2 + $0x2a8] sm:$0xff]
    %v142 = vld [vmem:[#allocation2 + $0x2b0] sm:$0xff]
    %v143 = vld [vmem:[#allocation2 + $0x2b8] sm:$0xff]
    %v144 = vld [vmem:[#allocation2 + $0x2c0] sm:$0xff]
    %v145 = vld [vmem:[#allocation2 + $0x2c8] sm:$0xff]
    %v146 = vld [vmem:[#allocation2 + $0x2d0] sm:$0xff]
    %v147 = vld [vmem:[#allocation2 + $0x2d8] sm:$0xff]
    %v148 = vld [vmem:[#allocation2 + $0x2e0] sm:$0xff]
    %v149 = vld [vmem:[#allocation2 + $0x2e8] sm:$0xff]
    %v150 = vld [vmem:[#allocation2 + $0x2f0] sm:$0xff]
    %v151 = vld [vmem:[#allocation2 + $0x2f8] sm:$0xff]
    %v152 = vld [vmem:[#allocation2 + $0x300] sm:$0xff]
    %v153 = vld [vmem:[#allocation2 + $0x308] sm:$0xff]
    %v154 = vld [vmem:[#allocation2 + $0x310] sm:$0xff]
    %v155 = vld [vmem:[#allocation2 + $0x318] sm:$0xff]
    %v156 = vld [vmem:[#allocation2 + $0x320] sm:$0xff]
    %v157 = vld [vmem:[#allocation2 + $0x328] sm:$0xff]
    %v158 = vld [vmem:[#allocation2 + $0x330] sm:$0xff]
    %v159 = vld [vmem:[#allocation2 + $0x338] sm:$0xff]
    %v160 = vld [vmem:[#allocation2 + $0x340] sm:$0xff]
    %v161 = vld [vmem:[#allocation2 + $0x348] sm:$0xff]
    %v162 = vld [vmem:[#allocation2 + $0x350] sm:$0xff]
    %v163 = vld [vmem:[#allocation2 + $0x358] sm:$0xff]
    %v164 = vld [vmem:[#allocation2 + $0x360] sm:$0xff]
    %v165 = vld [vmem:[#allocation2 + $0x368] sm:$0xff]
    %v166 = vld [vmem:[#allocation2 + $0x370] sm:$0xff]
    %v167 = vld [vmem:[#allocation2 + $0x378] sm:$0xff]
    %v168 = vld [vmem:[#allocation2 + $0x380] sm:$0xff]
    %v169 = vld [vmem:[#allocation2 + $0x388] sm:$0xff]
    %v170 = vld [vmem:[#allocation2 + $0x390] sm:$0xff]
    %v171 = vld [vmem:[#allocation2 + $0x398] sm:$0xff]
    %v172 = vld [vmem:[#allocation2 + $0x3a0] sm:$0xff]
    %v173 = vld [vmem:[#allocation2 + $0x3a8] sm:$0xff]
    %v174 = vld [vmem:[#allocation2 + $0x3b0] sm:$0xff]
    %v175 = vld [vmem:[#allocation2 + $0x3b8] sm:$0xff]
    %v176 = vld [vmem:[#allocation2 + $0x3c0] sm:$0xff]
    %v177 = vld [vmem:[#allocation2 + $0x3c8] sm:$0xff]
    %v178 = vld [vmem:[#allocation2 + $0x3d0] sm:$0xff]
    %v179 = vld [vmem:[#allocation2 + $0x3d8] sm:$0xff]
    %v180 = vld [vmem:[#allocation2 + $0x3e0] sm:$0xff]
    %v181 = vld [vmem:[#allocation2 + $0x3e8] sm:$0xff]
    %v182 = vld [vmem:[#allocation2 + $0x3f0] sm:$0xff]
    %v183 = vld [vmem:[#allocation2 + $0x3f8] sm:$0xff]
    %v184 = vld [vmem:[#allocation2 + $0x400] sm:$0xff]
    %v185 = vld [vmem:[#allocation2 + $0x408] sm:$0xff]
    %v186 = vld [vmem:[#allocation2 + $0x410] sm:$0xff]
    %v187 = vld [vmem:[#allocation2 + $0x418] sm:$0xff]
    %v188 = vld [vmem:[#allocation2 + $0x420] sm:$0xff]
    %v189 = vld [vmem:[#allocation2 + $0x428] sm:$0xff]
    %v190 = vld [vmem:[#allocation2 + $0x430] sm:$0xff]
    %v191 = vld [vmem:[#allocation2 + $0x438] sm:$0xff]
    %v192 = vld [vmem:[#allocation2 + $0x440] sm:$0xff]
    %v193 = vld [vmem:[#allocation2 + $0x448] sm:$0xff]
    %v194 = vld [vmem:[#allocation2 + $0x450] sm:$0xff]
    %v195 = vld [vmem:[#allocation2 + $0x458] sm:$0xff]
    %v196 = vld [vmem:[#allocation2 + $0x460] sm:$0xff]
    %v197 = vld [vmem:[#allocation2 + $0x468] sm:$0xff]
    %v198 = vld [vmem:[#allocation2 + $0x470] sm:$0xff]
    %v199 = vld [vmem:[#allocation2 + $0x478] sm:$0xff]
    %v200 = vld [vmem:[#allocation2 + $0x480] sm:$0xff]
    %v201 = vld [vmem:[#allocation2 + $0x488] sm:$0xff]
    %v202 = vld [vmem:[#allocation2 + $0x490] sm:$0xff]
    %v203 = vld [vmem:[#allocation2 + $0x498] sm:$0xff]
    %v204 = vld [vmem:[#allocation2 + $0x4a0] sm:$0xff]
    %v205 = vld [vmem:[#allocation2 + $0x4a8] sm:$0xff]
    %v206 = vld [vmem:[#allocation2 + $0x4b0] sm:$0xff]
    %v207 = vld [vmem:[#allocation2 + $0x4b8] sm:$0xff]
    %v208 = vld [vmem:[#allocation2 + $0x4c0] sm:$0xff]
    %v209 = vld [vmem:[#allocation2 + $0x4c8] sm:$0xff]
    %v210 = vld [vmem:[#allocation2 + $0x4d0] sm:$0xff]
    %v211 = vld [vmem:[#allocation2 + $0x4d8] sm:$0xff]
    %v212 = vld [vmem:[#allocation2 + $0x4e0] sm:$0xff]
    %v213 = vld [vmem:[#allocation2 + $0x4e8] sm:$0xff]
    %v214 = vld [vmem:[#allocation2 + $0x4f0] sm:$0xff]
    %v215 = vld [vmem:[#allocation2 + $0x4f8] sm:$0xff]
    %v216 = vld [vmem:[#allocation2 + $0x500] sm:$0xff]
    %v217 = vld [vmem:[#allocation2 + $0x508] sm:$0xff]
    %v218 = vld [vmem:[#allocation2 + $0x510] sm:$0xff]
    %v219 = vld [vmem:[#allocation2 + $0x518] sm:$0xff]
    %v220 = vld [vmem:[#allocation2 + $0x520] sm:$0xff]
    %v221 = vld [vmem:[#allocation2 + $0x528] sm:$0xff]
    %v222 = vld [vmem:[#allocation2 + $0x530] sm:$0xff]
    %v223 = vld [vmem:[#allocation2 + $0x538] sm:$0xff]
    %v224 = vld [vmem:[#allocation2 + $0x540] sm:$0xff]
    %v225 = vld [vmem:[#allocation2 + $0x548] sm:$0xff]
    %v226 = vld [vmem:[#allocation2 + $0x550] sm:$0xff]
    %v227 = vld [vmem:[#allocation2 + $0x558] sm:$0xff]
    %v228 = vld [vmem:[#allocation2 + $0x560] sm:$0xff]
    %v229 = vld [vmem:[#allocation2 + $0x568] sm:$0xff]
    %v230 = vld [vmem:[#allocation2 + $0x570] sm:$0xff]
    %v231 = vld [vmem:[#allocation2 + $0x578] sm:$0xff]
    %v232 = vld [vmem:[#allocation2 + $0x580] sm:$0xff]
    %v233 = vld [vmem:[#allocation2 + $0x588] sm:$0xff]
    %v234 = vld [vmem:[#allocation2 + $0x590] sm:$0xff]
    %v235 = vld [vmem:[#allocation2 + $0x598] sm:$0xff]
    %v236 = vld [vmem:[#allocation2 + $0x5a0] sm:$0xff]
    %v237 = vld [vmem:[#allocation2 + $0x5a8] sm:$0xff]
    %v238 = vld [vmem:[#allocation2 + $0x5b0] sm:$0xff]
    %v239 = vld [vmem:[#allocation2 + $0x5b8] sm:$0xff]
    %v240 = vld [vmem:[#allocation2 + $0x5c0] sm:$0xff]
    %v241 = vld [vmem:[#allocation2 + $0x5c8] sm:$0xff]
    %v242 = vld [vmem:[#allocation2 + $0x5d0] sm:$0xff]
    %v243 = vld [vmem:[#allocation2 + $0x5d8] sm:$0xff]
    %v244 = vld [vmem:[#allocation2 + $0x5e0] sm:$0xff]
    %v245 = vld [vmem:[#allocation2 + $0x5e8] sm:$0xff]
    %v246 = vld [vmem:[#allocation2 + $0x5f0] sm:$0xff]
    %v247 = vld [vmem:[#allocation2 + $0x5f8] sm:$0xff]
    %v248 = vld [vmem:[#allocation2 + $0x600] sm:$0xff]
    %v249 = vld [vmem:[#allocation2 + $0x608] sm:$0xff]
    %v250 = vld [vmem:[#allocation2 + $0x610] sm:$0xff]
    %v251 = vld [vmem:[#allocation2 + $0x618] sm:$0xff]
    %v252 = vld [vmem:[#allocation2 + $0x620] sm:$0xff]
    %v253 = vld [vmem:[#allocation2 + $0x628] sm:$0xff]
    %v254 = vld [vmem:[#allocation2 + $0x630] sm:$0xff]
    %v255 = vld [vmem:[#allocation2 + $0x638] sm:$0xff]
    %v256 = vld [vmem:[#allocation2 + $0x640] sm:$0xff]
    %v257 = vld [vmem:[#allocation2 + $0x648] sm:$0xff]
    %v258 = vld [vmem:[#allocation2 + $0x650] sm:$0xff]
    %v259 = vld [vmem:[#allocation2 + $0x658] sm:$0xff]
    %v260 = vld [vmem:[#allocation2 + $0x660] sm:$0xff]
    %v261 = vld [vmem:[#allocation2 + $0x668] sm:$0xff]
    %v262 = vld [vmem:[#allocation2 + $0x670] sm:$0xff]
    %v263 = vld [vmem:[#allocation2 + $0x678] sm:$0xff]
    %v264 = vld [vmem:[#allocation2 + $0x680] sm:$0xff]
    %v265 = vld [vmem:[#allocation2 + $0x688] sm:$0xff]
    %v266 = vld [vmem:[#allocation2 + $0x690] sm:$0xff]
    %v267 = vld [vmem:[#allocation2 + $0x698] sm:$0xff]
    %v268 = vld [vmem:[#allocation2 + $0x6a0] sm:$0xff]
    %v269 = vld [vmem:[#allocation2 + $0x6a8] sm:$0xff]
    %v270 = vld [vmem:[#allocation2 + $0x6b0] sm:$0xff]
    %v271 = vld [vmem:[#allocation2 + $0x6b8] sm:$0xff]
    %v272 = vld [vmem:[#allocation2 + $0x6c0] sm:$0xff]
    %v273 = vld [vmem:[#allocation2 + $0x6c8] sm:$0xff]
    %v274 = vld [vmem:[#allocation2 + $0x6d0] sm:$0xff]
    %v275 = vld [vmem:[#allocation2 + $0x6d8] sm:$0xff]
    %v276 = vld [vmem:[#allocation2 + $0x6e0] sm:$0xff]
    %v277 = vld [vmem:[#allocation2 + $0x6e8] sm:$0xff]
    %v278 = vld [vmem:[#allocation2 + $0x6f0] sm:$0xff]
    %v279 = vld [vmem:[#allocation2 + $0x6f8] sm:$0xff]
    %v280 = vld [vmem:[#allocation2 + $0x700] sm:$0xff]
    %v281 = vld [vmem:[#allocation2 + $0x708] sm:$0xff]
    %v282 = vld [vmem:[#allocation2 + $0x710] sm:$0xff]
    %v283 = vld [vmem:[#allocation2 + $0x718] sm:$0xff]
    %v284 = vld [vmem:[#allocation2 + $0x720] sm:$0xff]
    %v285 = vld [vmem:[#allocation2 + $0x728] sm:$0xff]
    %v286 = vld [vmem:[#allocation2 + $0x730] sm:$0xff]
    %v287 = vld [vmem:[#allocation2 + $0x738] sm:$0xff]
    %v288 = vld [vmem:[#allocation2 + $0x740] sm:$0xff]
    %v289 = vld [vmem:[#allocation2 + $0x748] sm:$0xff]
    %v290 = vld [vmem:[#allocation2 + $0x750] sm:$0xff]
    %v291 = vld [vmem:[#allocation2 + $0x758] sm:$0xff]
    %v292 = vld [vmem:[#allocation2 + $0x760] sm:$0xff]
    %v293 = vld [vmem:[#allocation2 + $0x768] sm:$0xff]
    %v294 = vld [vmem:[#allocation2 + $0x770] sm:$0xff]
    %v295 = vld [vmem:[#allocation2 + $0x778] sm:$0xff]
    %v296 = vld [vmem:[#allocation2 + $0x780] sm:$0xff]
    %v297 = vld [vmem:[#allocation2 + $0x788] sm:$0xff]
    %v298 = vld [vmem:[#allocation2 + $0x790] sm:$0xff]
    %v299 = vld [vmem:[#allocation2 + $0x798] sm:$0xff]
    %v300 = vld [vmem:[#allocation2 + $0x7a0] sm:$0xff]
    %v301 = vld [vmem:[#allocation2 + $0x7a8] sm:$0xff]
    %v302 = vld [vmem:[#allocation2 + $0x7b0] sm:$0xff]
    %v303 = vld [vmem:[#allocation2 + $0x7b8] sm:$0xff]
    %v304 = vld [vmem:[#allocation2 + $0x7c0] sm:$0xff]
    %v305 = vld [vmem:[#allocation2 + $0x7c8] sm:$0xff]
    %v306 = vld [vmem:[#allocation2 + $0x7d0] sm:$0xff]
    %v307 = vld [vmem:[#allocation2 + $0x7d8] sm:$0xff]
    %v308 = vld [vmem:[#allocation2 + $0x7e0] sm:$0xff]
    %v309 = vld [vmem:[#allocation2 + $0x7e8] sm:$0xff]
    %v310 = vld [vmem:[#allocation2 + $0x7f0] sm:$0xff]
    %v311 = vld [vmem:[#allocation2 + $0x7f8] sm:$0xff]
    %v312 = vld [vmem:[#allocation4] ss:$8 sm:$0x3]
    %v314 = vlaneseq
    %v315 = vshrl.u32 %v314, 7
    %v316 = vsub.s32 0, %v315
    %v317 = vrot.slane %v312, %v316
    %v318 = vlaneseq
    %v319 = vshrl.u32 %v318, 7
    %v320 = vsub.s32 1, %v319
    %v321 = vrot.slane %v312, %v320
    %v340 = vunpack.c.l.b16 %v40
    %v341 = vunpack.c.h.b16 %v40
    %v342 = vunpack.c.l.b16 %v41
    %v343 = vunpack.c.h.b16 %v41
    %v344 = vunpack.c.l.b16 %v42
    %v345 = vunpack.c.h.b16 %v42
    %v346 = vunpack.c.l.b16 %v43
    %v347 = vunpack.c.h.b16 %v43
    %v348 = vunpack.c.l.b16 %v44
    %v349 = vunpack.c.h.b16 %v44
    %v350 = vunpack.c.l.b16 %v45
    %v351 = vunpack.c.h.b16 %v45
    %v352 = vunpack.c.l.b16 %v46
    %v353 = vunpack.c.h.b16 %v46
    %v354 = vunpack.c.l.b16 %v47
    %v355 = vunpack.c.h.b16 %v47
    %v356 = vunpack.c.l.b16 %v48
    %v357 = vunpack.c.h.b16 %v48
    %v358 = vunpack.c.l.b16 %v49
    %v359 = vunpack.c.h.b16 %v49
    %v360 = vunpack.c.l.b16 %v50
    %v361 = vunpack.c.h.b16 %v50
    %v362 = vunpack.c.l.b16 %v51
    %v363 = vunpack.c.h.b16 %v51
    %v364 = vunpack.c.l.b16 %v52
    %v365 = vunpack.c.h.b16 %v52
    %v366 = vunpack.c.l.b16 %v53
    %v367 = vunpack.c.h.b16 %v53
    %v368 = vunpack.c.l.b16 %v54
    %v369 = vunpack.c.h.b16 %v54
    %v370 = vunpack.c.l.b16 %v55
    %v371 = vunpack.c.h.b16 %v55
    %v372 = vpack.c.b16 %v356, %v340
    %v373 = vpack.c.b16 %v357, %v341
    %v374 = vpack.c.b16 %v358, %v342
    %v375 = vpack.c.b16 %v359, %v343
    %v376 = vpack.c.b16 %v360, %v344
    %v377 = vpack.c.b16 %v361, %v345
    %v378 = vpack.c.b16 %v362, %v346
    %v379 = vpack.c.b16 %v363, %v347
    %v380 = vpack.c.b16 %v364, %v348
    %v381 = vpack.c.b16 %v365, %v349
    %v382 = vpack.c.b16 %v366, %v350
    %v383 = vpack.c.b16 %v367, %v351
    %v384 = vpack.c.b16 %v368, %v352
    %v385 = vpack.c.b16 %v369, %v353
    %v386 = vpack.c.b16 %v370, %v354
    %v387 = vpack.c.b16 %v371, %v355
    %v660 = vunpack.c.l.b16 %v56
    %v661 = vunpack.c.h.b16 %v56
    %v662 = vunpack.c.l.b16 %v57
    %v663 = vunpack.c.h.b16 %v57
    %v664 = vunpack.c.l.b16 %v58
    %v665 = vunpack.c.h.b16 %v58
    %v666 = vunpack.c.l.b16 %v59
    %v667 = vunpack.c.h.b16 %v59
    %v668 = vunpack.c.l.b16 %v60
    %v669 = vunpack.c.h.b16 %v60
    %v670 = vunpack.c.l.b16 %v61
    %v671 = vunpack.c.h.b16 %v61
    %v672 = vunpack.c.l.b16 %v62
    %v673 = vunpack.c.h.b16 %v62
    %v674 = vunpack.c.l.b16 %v63
    %v675 = vunpack.c.h.b16 %v63
    %v676 = vunpack.c.l.b16 %v64
    %v677 = vunpack.c.h.b16 %v64
    %v678 = vunpack.c.l.b16 %v65
    %v679 = vunpack.c.h.b16 %v65
    %v680 = vunpack.c.l.b16 %v66
    %v681 = vunpack.c.h.b16 %v66
    %v682 = vunpack.c.l.b16 %v67
    %v683 = vunpack.c.h.b16 %v67
    %v684 = vunpack.c.l.b16 %v68
    %v685 = vunpack.c.h.b16 %v68
    %v686 = vunpack.c.l.b16 %v69
    %v687 = vunpack.c.h.b16 %v69
    %v688 = vunpack.c.l.b16 %v70
    %v689 = vunpack.c.h.b16 %v70
    %v690 = vunpack.c.l.b16 %v71
    %v691 = vunpack.c.h.b16 %v71
    %v692 = vunpack.c.l.b16 %v72
    %v693 = vunpack.c.h.b16 %v72
    %v694 = vunpack.c.l.b16 %v73
    %v695 = vunpack.c.h.b16 %v73
    %v696 = vunpack.c.l.b16 %v74
    %v697 = vunpack.c.h.b16 %v74
    %v698 = vunpack.c.l.b16 %v75
    %v699 = vunpack.c.h.b16 %v75
    %v700 = vunpack.c.l.b16 %v76
    %v701 = vunpack.c.h.b16 %v76
    %v702 = vunpack.c.l.b16 %v77
    %v703 = vunpack.c.h.b16 %v77
    %v704 = vunpack.c.l.b16 %v78
    %v705 = vunpack.c.h.b16 %v78
    %v706 = vunpack.c.l.b16 %v79
    %v707 = vunpack.c.h.b16 %v79
    %v708 = vunpack.c.l.b16 %v80
    %v709 = vunpack.c.h.b16 %v80
    %v710 = vunpack.c.l.b16 %v81
    %v711 = vunpack.c.h.b16 %v81
    %v712 = vunpack.c.l.b16 %v82
    %v713 = vunpack.c.h.b16 %v82
    %v714 = vunpack.c.l.b16 %v83
    %v715 = vunpack.c.h.b16 %v83
    %v716 = vunpack.c.l.b16 %v84
    %v717 = vunpack.c.h.b16 %v84
    %v718 = vunpack.c.l.b16 %v85
    %v719 = vunpack.c.h.b16 %v85
    %v720 = vunpack.c.l.b16 %v86
    %v721 = vunpack.c.h.b16 %v86
    %v722 = vunpack.c.l.b16 %v87
    %v723 = vunpack.c.h.b16 %v87
    %v724 = vunpack.c.l.b16 %v88
    %v725 = vunpack.c.h.b16 %v88
    %v726 = vunpack.c.l.b16 %v89
    %v727 = vunpack.c.h.b16 %v89
    %v728 = vunpack.c.l.b16 %v90
    %v729 = vunpack.c.h.b16 %v90
    %v730 = vunpack.c.l.b16 %v91
    %v731 = vunpack.c.h.b16 %v91
    %v732 = vunpack.c.l.b16 %v92
    %v733 = vunpack.c.h.b16 %v92
    %v734 = vunpack.c.l.b16 %v93
    %v735 = vunpack.c.h.b16 %v93
    %v736 = vunpack.c.l.b16 %v94
    %v737 = vunpack.c.h.b16 %v94
    %v738 = vunpack.c.l.b16 %v95
    %v739 = vunpack.c.h.b16 %v95
    %v740 = vunpack.c.l.b16 %v96
    %v741 = vunpack.c.h.b16 %v96
    %v742 = vunpack.c.l.b16 %v97
    %v743 = vunpack.c.h.b16 %v97
    %v744 = vunpack.c.l.b16 %v98
    %v745 = vunpack.c.h.b16 %v98
    %v746 = vunpack.c.l.b16 %v99
    %v747 = vunpack.c.h.b16 %v99
    %v748 = vunpack.c.l.b16 %v100
    %v749 = vunpack.c.h.b16 %v100
    %v750 = vunpack.c.l.b16 %v101
    %v751 = vunpack.c.h.b16 %v101
    %v752 = vunpack.c.l.b16 %v102
    %v753 = vunpack.c.h.b16 %v102
    %v754 = vunpack.c.l.b16 %v103
    %v755 = vunpack.c.h.b16 %v103
    %v756 = vunpack.c.l.b16 %v104
    %v757 = vunpack.c.h.b16 %v104
    %v758 = vunpack.c.l.b16 %v105
    %v759 = vunpack.c.h.b16 %v105
    %v760 = vunpack.c.l.b16 %v106
    %v761 = vunpack.c.h.b16 %v106
    %v762 = vunpack.c.l.b16 %v107
    %v763 = vunpack.c.h.b16 %v107
    %v764 = vunpack.c.l.b16 %v108
    %v765 = vunpack.c.h.b16 %v108
    %v766 = vunpack.c.l.b16 %v109
    %v767 = vunpack.c.h.b16 %v109
    %v768 = vunpack.c.l.b16 %v110
    %v769 = vunpack.c.h.b16 %v110
    %v770 = vunpack.c.l.b16 %v111
    %v771 = vunpack.c.h.b16 %v111
    %v772 = vunpack.c.l.b16 %v112
    %v773 = vunpack.c.h.b16 %v112
    %v774 = vunpack.c.l.b16 %v113
    %v775 = vunpack.c.h.b16 %v113
    %v776 = vunpack.c.l.b16 %v114
    %v777 = vunpack.c.h.b16 %v114
    %v778 = vunpack.c.l.b16 %v115
    %v779 = vunpack.c.h.b16 %v115
    %v780 = vunpack.c.l.b16 %v116
    %v781 = vunpack.c.h.b16 %v116
    %v782 = vunpack.c.l.b16 %v117
    %v783 = vunpack.c.h.b16 %v117
    %v784 = vunpack.c.l.b16 %v118
    %v785 = vunpack.c.h.b16 %v118
    %v786 = vunpack.c.l.b16 %v119
    %v787 = vunpack.c.h.b16 %v119
    %v788 = vunpack.c.l.b16 %v120
    %v789 = vunpack.c.h.b16 %v120
    %v790 = vunpack.c.l.b16 %v121
    %v791 = vunpack.c.h.b16 %v121
    %v792 = vunpack.c.l.b16 %v122
    %v793 = vunpack.c.h.b16 %v122
    %v794 = vunpack.c.l.b16 %v123
    %v795 = vunpack.c.h.b16 %v123
    %v796 = vunpack.c.l.b16 %v124
    %v797 = vunpack.c.h.b16 %v124
    %v798 = vunpack.c.l.b16 %v125
    %v799 = vunpack.c.h.b16 %v125
    %v800 = vunpack.c.l.b16 %v126
    %v801 = vunpack.c.h.b16 %v126
    %v802 = vunpack.c.l.b16 %v127
    %v803 = vunpack.c.h.b16 %v127
    %v804 = vunpack.c.l.b16 %v128
    %v805 = vunpack.c.h.b16 %v128
    %v806 = vunpack.c.l.b16 %v129
    %v807 = vunpack.c.h.b16 %v129
    %v808 = vunpack.c.l.b16 %v130
    %v809 = vunpack.c.h.b16 %v130
    %v810 = vunpack.c.l.b16 %v131
    %v811 = vunpack.c.h.b16 %v131
    %v812 = vunpack.c.l.b16 %v132
    %v813 = vunpack.c.h.b16 %v132
    %v814 = vunpack.c.l.b16 %v133
    %v815 = vunpack.c.h.b16 %v133
    %v816 = vunpack.c.l.b16 %v134
    %v817 = vunpack.c.h.b16 %v134
    %v818 = vunpack.c.l.b16 %v135
    %v819 = vunpack.c.h.b16 %v135
    %v820 = vunpack.c.l.b16 %v136
    %v821 = vunpack.c.h.b16 %v136
    %v822 = vunpack.c.l.b16 %v137
    %v823 = vunpack.c.h.b16 %v137
    %v824 = vunpack.c.l.b16 %v138
    %v825 = vunpack.c.h.b16 %v138
    %v826 = vunpack.c.l.b16 %v139
    %v827 = vunpack.c.h.b16 %v139
    %v828 = vunpack.c.l.b16 %v140
    %v829 = vunpack.c.h.b16 %v140
    %v830 = vunpack.c.l.b16 %v141
    %v831 = vunpack.c.h.b16 %v141
    %v832 = vunpack.c.l.b16 %v142
    %v833 = vunpack.c.h.b16 %v142
    %v834 = vunpack.c.l.b16 %v143
    %v835 = vunpack.c.h.b16 %v143
    %v836 = vunpack.c.l.b16 %v144
    %v837 = vunpack.c.h.b16 %v144
    %v838 = vunpack.c.l.b16 %v145
    %v839 = vunpack.c.h.b16 %v145
    %v840 = vunpack.c.l.b16 %v146
    %v841 = vunpack.c.h.b16 %v146
    %v842 = vunpack.c.l.b16 %v147
    %v843 = vunpack.c.h.b16 %v147
    %v844 = vunpack.c.l.b16 %v148
    %v845 = vunpack.c.h.b16 %v148
    %v846 = vunpack.c.l.b16 %v149
    %v847 = vunpack.c.h.b16 %v149
    %v848 = vunpack.c.l.b16 %v150
    %v849 = vunpack.c.h.b16 %v150
    %v850 = vunpack.c.l.b16 %v151
    %v851 = vunpack.c.h.b16 %v151
    %v852 = vunpack.c.l.b16 %v152
    %v853 = vunpack.c.h.b16 %v152
    %v854 = vunpack.c.l.b16 %v153
    %v855 = vunpack.c.h.b16 %v153
    %v856 = vunpack.c.l.b16 %v154
    %v857 = vunpack.c.h.b16 %v154
    %v858 = vunpack.c.l.b16 %v155
    %v859 = vunpack.c.h.b16 %v155
    %v860 = vunpack.c.l.b16 %v156
    %v861 = vunpack.c.h.b16 %v156
    %v862 = vunpack.c.l.b16 %v157
    %v863 = vunpack.c.h.b16 %v157
    %v864 = vunpack.c.l.b16 %v158
    %v865 = vunpack.c.h.b16 %v158
    %v866 = vunpack.c.l.b16 %v159
    %v867 = vunpack.c.h.b16 %v159
    %v868 = vunpack.c.l.b16 %v160
    %v869 = vunpack.c.h.b16 %v160
    %v870 = vunpack.c.l.b16 %v161
    %v871 = vunpack.c.h.b16 %v161
    %v872 = vunpack.c.l.b16 %v162
    %v873 = vunpack.c.h.b16 %v162
    %v874 = vunpack.c.l.b16 %v163
    %v875 = vunpack.c.h.b16 %v163
    %v876 = vunpack.c.l.b16 %v164
    %v877 = vunpack.c.h.b16 %v164
    %v878 = vunpack.c.l.b16 %v165
    %v879 = vunpack.c.h.b16 %v165
    %v880 = vunpack.c.l.b16 %v166
    %v881 = vunpack.c.h.b16 %v166
    %v882 = vunpack.c.l.b16 %v167
    %v883 = vunpack.c.h.b16 %v167
    %v884 = vunpack.c.l.b16 %v168
    %v885 = vunpack.c.h.b16 %v168
    %v886 = vunpack.c.l.b16 %v169
    %v887 = vunpack.c.h.b16 %v169
    %v888 = vunpack.c.l.b16 %v170
    %v889 = vunpack.c.h.b16 %v170
    %v890 = vunpack.c.l.b16 %v171
    %v891 = vunpack.c.h.b16 %v171
    %v892 = vunpack.c.l.b16 %v172
    %v893 = vunpack.c.h.b16 %v172
    %v894 = vunpack.c.l.b16 %v173
    %v895 = vunpack.c.h.b16 %v173
    %v896 = vunpack.c.l.b16 %v174
    %v897 = vunpack.c.h.b16 %v174
    %v898 = vunpack.c.l.b16 %v175
    %v899 = vunpack.c.h.b16 %v175
    %v900 = vunpack.c.l.b16 %v176
    %v901 = vunpack.c.h.b16 %v176
    %v902 = vunpack.c.l.b16 %v177
    %v903 = vunpack.c.h.b16 %v177
    %v904 = vunpack.c.l.b16 %v178
    %v905 = vunpack.c.h.b16 %v178
    %v906 = vunpack.c.l.b16 %v179
    %v907 = vunpack.c.h.b16 %v179
    %v908 = vunpack.c.l.b16 %v180
    %v909 = vunpack.c.h.b16 %v180
    %v910 = vunpack.c.l.b16 %v181
    %v911 = vunpack.c.h.b16 %v181
    %v912 = vunpack.c.l.b16 %v182
    %v913 = vunpack.c.h.b16 %v182
    %v914 = vunpack.c.l.b16 %v183
    %v915 = vunpack.c.h.b16 %v183
    %v916 = vunpack.c.l.b16 %v184
    %v917 = vunpack.c.h.b16 %v184
    %v918 = vunpack.c.l.b16 %v185
    %v919 = vunpack.c.h.b16 %v185
    %v920 = vunpack.c.l.b16 %v186
    %v921 = vunpack.c.h.b16 %v186
    %v922 = vunpack.c.l.b16 %v187
    %v923 = vunpack.c.h.b16 %v187
    %v924 = vunpack.c.l.b16 %v188
    %v925 = vunpack.c.h.b16 %v188
    %v926 = vunpack.c.l.b16 %v189
    %v927 = vunpack.c.h.b16 %v189
    %v928 = vunpack.c.l.b16 %v190
    %v929 = vunpack.c.h.b16 %v190
    %v930 = vunpack.c.l.b16 %v191
    %v931 = vunpack.c.h.b16 %v191
    %v932 = vunpack.c.l.b16 %v192
    %v933 = vunpack.c.h.b16 %v192
    %v934 = vunpack.c.l.b16 %v193
    %v935 = vunpack.c.h.b16 %v193
    %v936 = vunpack.c.l.b16 %v194
    %v937 = vunpack.c.h.b16 %v194
    %v938 = vunpack.c.l.b16 %v195
    %v939 = vunpack.c.h.b16 %v195
    %v940 = vunpack.c.l.b16 %v196
    %v941 = vunpack.c.h.b16 %v196
    %v942 = vunpack.c.l.b16 %v197
    %v943 = vunpack.c.h.b16 %v197
    %v944 = vunpack.c.l.b16 %v198
    %v945 = vunpack.c.h.b16 %v198
    %v946 = vunpack.c.l.b16 %v199
    %v947 = vunpack.c.h.b16 %v199
    %v948 = vunpack.c.l.b16 %v200
    %v949 = vunpack.c.h.b16 %v200
    %v950 = vunpack.c.l.b16 %v201
    %v951 = vunpack.c.h.b16 %v201
    %v952 = vunpack.c.l.b16 %v202
    %v953 = vunpack.c.h.b16 %v202
    %v954 = vunpack.c.l.b16 %v203
    %v955 = vunpack.c.h.b16 %v203
    %v956 = vunpack.c.l.b16 %v204
    %v957 = vunpack.c.h.b16 %v204
    %v958 = vunpack.c.l.b16 %v205
    %v959 = vunpack.c.h.b16 %v205
    %v960 = vunpack.c.l.b16 %v206
    %v961 = vunpack.c.h.b16 %v206
    %v962 = vunpack.c.l.b16 %v207
    %v963 = vunpack.c.h.b16 %v207
    %v964 = vunpack.c.l.b16 %v208
    %v965 = vunpack.c.h.b16 %v208
    %v966 = vunpack.c.l.b16 %v209
    %v967 = vunpack.c.h.b16 %v209
    %v968 = vunpack.c.l.b16 %v210
    %v969 = vunpack.c.h.b16 %v210
    %v970 = vunpack.c.l.b16 %v211
    %v971 = vunpack.c.h.b16 %v211
    %v972 = vunpack.c.l.b16 %v212
    %v973 = vunpack.c.h.b16 %v212
    %v974 = vunpack.c.l.b16 %v213
    %v975 = vunpack.c.h.b16 %v213
    %v976 = vunpack.c.l.b16 %v214
    %v977 = vunpack.c.h.b16 %v214
    %v978 = vunpack.c.l.b16 %v215
    %v979 = vunpack.c.h.b16 %v215
    %v980 = vunpack.c.l.b16 %v216
    %v981 = vunpack.c.h.b16 %v216
    %v982 = vunpack.c.l.b16 %v217
    %v983 = vunpack.c.h.b16 %v217
    %v984 = vunpack.c.l.b16 %v218
    %v985 = vunpack.c.h.b16 %v218
    %v986 = vunpack.c.l.b16 %v219
    %v987 = vunpack.c.h.b16 %v219
    %v988 = vunpack.c.l.b16 %v220
    %v989 = vunpack.c.h.b16 %v220
    %v990 = vunpack.c.l.b16 %v221
    %v991 = vunpack.c.h.b16 %v221
    %v992 = vunpack.c.l.b16 %v222
    %v993 = vunpack.c.h.b16 %v222
    %v994 = vunpack.c.l.b16 %v223
    %v995 = vunpack.c.h.b16 %v223
    %v996 = vunpack.c.l.b16 %v224
    %v997 = vunpack.c.h.b16 %v224
    %v998 = vunpack.c.l.b16 %v225
    %v999 = vunpack.c.h.b16 %v225
    %v1000 = vunpack.c.l.b16 %v226
    %v1001 = vunpack.c.h.b16 %v226
    %v1002 = vunpack.c.l.b16 %v227
    %v1003 = vunpack.c.h.b16 %v227
    %v1004 = vunpack.c.l.b16 %v228
    %v1005 = vunpack.c.h.b16 %v228
    %v1006 = vunpack.c.l.b16 %v229
    %v1007 = vunpack.c.h.b16 %v229
    %v1008 = vunpack.c.l.b16 %v230
    %v1009 = vunpack.c.h.b16 %v230
    %v1010 = vunpack.c.l.b16 %v231
    %v1011 = vunpack.c.h.b16 %v231
    %v1012 = vunpack.c.l.b16 %v232
    %v1013 = vunpack.c.h.b16 %v232
    %v1014 = vunpack.c.l.b16 %v233
    %v1015 = vunpack.c.h.b16 %v233
    %v1016 = vunpack.c.l.b16 %v234
    %v1017 = vunpack.c.h.b16 %v234
    %v1018 = vunpack.c.l.b16 %v235
    %v1019 = vunpack.c.h.b16 %v235
    %v1020 = vunpack.c.l.b16 %v236
    %v1021 = vunpack.c.h.b16 %v236
    %v1022 = vunpack.c.l.b16 %v237
    %v1023 = vunpack.c.h.b16 %v237
    %v1024 = vunpack.c.l.b16 %v238
    %v1025 = vunpack.c.h.b16 %v238
    %v1026 = vunpack.c.l.b16 %v239
    %v1027 = vunpack.c.h.b16 %v239
    %v1028 = vunpack.c.l.b16 %v240
    %v1029 = vunpack.c.h.b16 %v240
    %v1030 = vunpack.c.l.b16 %v241
    %v1031 = vunpack.c.h.b16 %v241
    %v1032 = vunpack.c.l.b16 %v242
    %v1033 = vunpack.c.h.b16 %v242
    %v1034 = vunpack.c.l.b16 %v243
    %v1035 = vunpack.c.h.b16 %v243
    %v1036 = vunpack.c.l.b16 %v244
    %v1037 = vunpack.c.h.b16 %v244
    %v1038 = vunpack.c.l.b16 %v245
    %v1039 = vunpack.c.h.b16 %v245
    %v1040 = vunpack.c.l.b16 %v246
    %v1041 = vunpack.c.h.b16 %v246
    %v1042 = vunpack.c.l.b16 %v247
    %v1043 = vunpack.c.h.b16 %v247
    %v1044 = vunpack.c.l.b16 %v248
    %v1045 = vunpack.c.h.b16 %v248
    %v1046 = vunpack.c.l.b16 %v249
    %v1047 = vunpack.c.h.b16 %v249
    %v1048 = vunpack.c.l.b16 %v250
    %v1049 = vunpack.c.h.b16 %v250
    %v1050 = vunpack.c.l.b16 %v251
    %v1051 = vunpack.c.h.b16 %v251
    %v1052 = vunpack.c.l.b16 %v252
    %v1053 = vunpack.c.h.b16 %v252
    %v1054 = vunpack.c.l.b16 %v253
    %v1055 = vunpack.c.h.b16 %v253
    %v1056 = vunpack.c.l.b16 %v254
    %v1057 = vunpack.c.h.b16 %v254
    %v1058 = vunpack.c.l.b16 %v255
    %v1059 = vunpack.c.h.b16 %v255
    %v1060 = vunpack.c.l.b16 %v256
    %v1061 = vunpack.c.h.b16 %v256
    %v1062 = vunpack.c.l.b16 %v257
    %v1063 = vunpack.c.h.b16 %v257
    %v1064 = vunpack.c.l.b16 %v258
    %v1065 = vunpack.c.h.b16 %v258
    %v1066 = vunpack.c.l.b16 %v259
    %v1067 = vunpack.c.h.b16 %v259
    %v1068 = vunpack.c.l.b16 %v260
    %v1069 = vunpack.c.h.b16 %v260
    %v1070 = vunpack.c.l.b16 %v261
    %v1071 = vunpack.c.h.b16 %v261
    %v1072 = vunpack.c.l.b16 %v262
    %v1073 = vunpack.c.h.b16 %v262
    %v1074 = vunpack.c.l.b16 %v263
    %v1075 = vunpack.c.h.b16 %v263
    %v1076 = vunpack.c.l.b16 %v264
    %v1077 = vunpack.c.h.b16 %v264
    %v1078 = vunpack.c.l.b16 %v265
    %v1079 = vunpack.c.h.b16 %v265
    %v1080 = vunpack.c.l.b16 %v266
    %v1081 = vunpack.c.h.b16 %v266
    %v1082 = vunpack.c.l.b16 %v267
    %v1083 = vunpack.c.h.b16 %v267
    %v1084 = vunpack.c.l.b16 %v268
    %v1085 = vunpack.c.h.b16 %v268
    %v1086 = vunpack.c.l.b16 %v269
    %v1087 = vunpack.c.h.b16 %v269
    %v1088 = vunpack.c.l.b16 %v270
    %v1089 = vunpack.c.h.b16 %v270
    %v1090 = vunpack.c.l.b16 %v271
    %v1091 = vunpack.c.h.b16 %v271
    %v1092 = vunpack.c.l.b16 %v272
    %v1093 = vunpack.c.h.b16 %v272
    %v1094 = vunpack.c.l.b16 %v273
    %v1095 = vunpack.c.h.b16 %v273
    %v1096 = vunpack.c.l.b16 %v274
    %v1097 = vunpack.c.h.b16 %v274
    %v1098 = vunpack.c.l.b16 %v275
    %v1099 = vunpack.c.h.b16 %v275
    %v1100 = vunpack.c.l.b16 %v276
    %v1101 = vunpack.c.h.b16 %v276
    %v1102 = vunpack.c.l.b16 %v277
    %v1103 = vunpack.c.h.b16 %v277
    %v1104 = vunpack.c.l.b16 %v278
    %v1105 = vunpack.c.h.b16 %v278
    %v1106 = vunpack.c.l.b16 %v279
    %v1107 = vunpack.c.h.b16 %v279
    %v1108 = vunpack.c.l.b16 %v280
    %v1109 = vunpack.c.h.b16 %v280
    %v1110 = vunpack.c.l.b16 %v281
    %v1111 = vunpack.c.h.b16 %v281
    %v1112 = vunpack.c.l.b16 %v282
    %v1113 = vunpack.c.h.b16 %v282
    %v1114 = vunpack.c.l.b16 %v283
    %v1115 = vunpack.c.h.b16 %v283
    %v1116 = vunpack.c.l.b16 %v284
    %v1117 = vunpack.c.h.b16 %v284
    %v1118 = vunpack.c.l.b16 %v285
    %v1119 = vunpack.c.h.b16 %v285
    %v1120 = vunpack.c.l.b16 %v286
    %v1121 = vunpack.c.h.b16 %v286
    %v1122 = vunpack.c.l.b16 %v287
    %v1123 = vunpack.c.h.b16 %v287
    %v1124 = vunpack.c.l.b16 %v288
    %v1125 = vunpack.c.h.b16 %v288
    %v1126 = vunpack.c.l.b16 %v289
    %v1127 = vunpack.c.h.b16 %v289
    %v1128 = vunpack.c.l.b16 %v290
    %v1129 = vunpack.c.h.b16 %v290
    %v1130 = vunpack.c.l.b16 %v291
    %v1131 = vunpack.c.h.b16 %v291
    %v1132 = vunpack.c.l.b16 %v292
    %v1133 = vunpack.c.h.b16 %v292
    %v1134 = vunpack.c.l.b16 %v293
    %v1135 = vunpack.c.h.b16 %v293
    %v1136 = vunpack.c.l.b16 %v294
    %v1137 = vunpack.c.h.b16 %v294
    %v1138 = vunpack.c.l.b16 %v295
    %v1139 = vunpack.c.h.b16 %v295
    %v1140 = vunpack.c.l.b16 %v296
    %v1141 = vunpack.c.h.b16 %v296
    %v1142 = vunpack.c.l.b16 %v297
    %v1143 = vunpack.c.h.b16 %v297
    %v1144 = vunpack.c.l.b16 %v298
    %v1145 = vunpack.c.h.b16 %v298
    %v1146 = vunpack.c.l.b16 %v299
    %v1147 = vunpack.c.h.b16 %v299
    %v1148 = vunpack.c.l.b16 %v300
    %v1149 = vunpack.c.h.b16 %v300
    %v1150 = vunpack.c.l.b16 %v301
    %v1151 = vunpack.c.h.b16 %v301
    %v1152 = vunpack.c.l.b16 %v302
    %v1153 = vunpack.c.h.b16 %v302
    %v1154 = vunpack.c.l.b16 %v303
    %v1155 = vunpack.c.h.b16 %v303
    %v1156 = vunpack.c.l.b16 %v304
    %v1157 = vunpack.c.h.b16 %v304
    %v1158 = vunpack.c.l.b16 %v305
    %v1159 = vunpack.c.h.b16 %v305
    %v1160 = vunpack.c.l.b16 %v306
    %v1161 = vunpack.c.h.b16 %v306
    %v1162 = vunpack.c.l.b16 %v307
    %v1163 = vunpack.c.h.b16 %v307
    %v1164 = vunpack.c.l.b16 %v308
    %v1165 = vunpack.c.h.b16 %v308
    %v1166 = vunpack.c.l.b16 %v309
    %v1167 = vunpack.c.h.b16 %v309
    %v1168 = vunpack.c.l.b16 %v310
    %v1169 = vunpack.c.h.b16 %v310
    %v1170 = vunpack.c.l.b16 %v311
    %v1171 = vunpack.c.h.b16 %v311
    %v1172 = vpack.c.b16 %v662, %v660
    %v1173 = vpack.c.b16 %v663, %v661
    %v1174 = vpack.c.b16 %v666, %v664
    %v1175 = vpack.c.b16 %v667, %v665
    %v1176 = vpack.c.b16 %v670, %v668
    %v1177 = vpack.c.b16 %v671, %v669
    %v1178 = vpack.c.b16 %v674, %v672
    %v1179 = vpack.c.b16 %v675, %v673
    %v1180 = vpack.c.b16 %v678, %v676
    %v1181 = vpack.c.b16 %v679, %v677
    %v1182 = vpack.c.b16 %v682, %v680
    %v1183 = vpack.c.b16 %v683, %v681
    %v1184 = vpack.c.b16 %v686, %v684
    %v1185 = vpack.c.b16 %v687, %v685
    %v1186 = vpack.c.b16 %v690, %v688
    %v1187 = vpack.c.b16 %v691, %v689
    %v1188 = vpack.c.b16 %v694, %v692
    %v1189 = vpack.c.b16 %v695, %v693
    %v1190 = vpack.c.b16 %v698, %v696
    %v1191 = vpack.c.b16 %v699, %v697
    %v1192 = vpack.c.b16 %v702, %v700
    %v1193 = vpack.c.b16 %v703, %v701
    %v1194 = vpack.c.b16 %v706, %v704
    %v1195 = vpack.c.b16 %v707, %v705
    %v1196 = vpack.c.b16 %v710, %v708
    %v1197 = vpack.c.b16 %v711, %v709
    %v1198 = vpack.c.b16 %v714, %v712
    %v1199 = vpack.c.b16 %v715, %v713
    %v1200 = vpack.c.b16 %v718, %v716
    %v1201 = vpack.c.b16 %v719, %v717
    %v1202 = vpack.c.b16 %v722, %v720
    %v1203 = vpack.c.b16 %v723, %v721
    %v1204 = vpack.c.b16 %v726, %v724
    %v1205 = vpack.c.b16 %v727, %v725
    %v1206 = vpack.c.b16 %v730, %v728
    %v1207 = vpack.c.b16 %v731, %v729
    %v1208 = vpack.c.b16 %v734, %v732
    %v1209 = vpack.c.b16 %v735, %v733
    %v1210 = vpack.c.b16 %v738, %v736
    %v1211 = vpack.c.b16 %v739, %v737
    %v1212 = vpack.c.b16 %v742, %v740
    %v1213 = vpack.c.b16 %v743, %v741
    %v1214 = vpack.c.b16 %v746, %v744
    %v1215 = vpack.c.b16 %v747, %v745
    %v1216 = vpack.c.b16 %v750, %v748
    %v1217 = vpack.c.b16 %v751, %v749
    %v1218 = vpack.c.b16 %v754, %v752
    %v1219 = vpack.c.b16 %v755, %v753
    %v1220 = vpack.c.b16 %v758, %v756
    %v1221 = vpack.c.b16 %v759, %v757
    %v1222 = vpack.c.b16 %v762, %v760
    %v1223 = vpack.c.b16 %v763, %v761
    %v1224 = vpack.c.b16 %v766, %v764
    %v1225 = vpack.c.b16 %v767, %v765
    %v1226 = vpack.c.b16 %v770, %v768
    %v1227 = vpack.c.b16 %v771, %v769
    %v1228 = vpack.c.b16 %v774, %v772
    %v1229 = vpack.c.b16 %v775, %v773
    %v1230 = vpack.c.b16 %v778, %v776
    %v1231 = vpack.c.b16 %v779, %v777
    %v1232 = vpack.c.b16 %v782, %v780
    %v1233 = vpack.c.b16 %v783, %v781
    %v1234 = vpack.c.b16 %v786, %v784
    %v1235 = vpack.c.b16 %v787, %v785
    %v1236 = vpack.c.b16 %v790, %v788
    %v1237 = vpack.c.b16 %v791, %v789
    %v1238 = vpack.c.b16 %v794, %v792
    %v1239 = vpack.c.b16 %v795, %v793
    %v1240 = vpack.c.b16 %v798, %v796
    %v1241 = vpack.c.b16 %v799, %v797
    %v1242 = vpack.c.b16 %v802, %v800
    %v1243 = vpack.c.b16 %v803, %v801
    %v1244 = vpack.c.b16 %v806, %v804
    %v1245 = vpack.c.b16 %v807, %v805
    %v1246 = vpack.c.b16 %v810, %v808
    %v1247 = vpack.c.b16 %v811, %v809
    %v1248 = vpack.c.b16 %v814, %v812
    %v1249 = vpack.c.b16 %v815, %v813
    %v1250 = vpack.c.b16 %v818, %v816
    %v1251 = vpack.c.b16 %v819, %v817
    %v1252 = vpack.c.b16 %v822, %v820
    %v1253 = vpack.c.b16 %v823, %v821
    %v1254 = vpack.c.b16 %v826, %v824
    %v1255 = vpack.c.b16 %v827, %v825
    %v1256 = vpack.c.b16 %v830, %v828
    %v1257 = vpack.c.b16 %v831, %v829
    %v1258 = vpack.c.b16 %v834, %v832
    %v1259 = vpack.c.b16 %v835, %v833
    %v1260 = vpack.c.b16 %v838, %v836
    %v1261 = vpack.c.b16 %v839, %v837
    %v1262 = vpack.c.b16 %v842, %v840
    %v1263 = vpack.c.b16 %v843, %v841
    %v1264 = vpack.c.b16 %v846, %v844
    %v1265 = vpack.c.b16 %v847, %v845
    %v1266 = vpack.c.b16 %v850, %v848
    %v1267 = vpack.c.b16 %v851, %v849
    %v1268 = vpack.c.b16 %v854, %v852
    %v1269 = vpack.c.b16 %v855, %v853
    %v1270 = vpack.c.b16 %v858, %v856
    %v1271 = vpack.c.b16 %v859, %v857
    %v1272 = vpack.c.b16 %v862, %v860
    %v1273 = vpack.c.b16 %v863, %v861
    %v1274 = vpack.c.b16 %v866, %v864
    %v1275 = vpack.c.b16 %v867, %v865
    %v1276 = vpack.c.b16 %v870, %v868
    %v1277 = vpack.c.b16 %v871, %v869
    %v1278 = vpack.c.b16 %v874, %v872
    %v1279 = vpack.c.b16 %v875, %v873
    %v1280 = vpack.c.b16 %v878, %v876
    %v1281 = vpack.c.b16 %v879, %v877
    %v1282 = vpack.c.b16 %v882, %v880
    %v1283 = vpack.c.b16 %v883, %v881
    %v1284 = vpack.c.b16 %v886, %v884
    %v1285 = vpack.c.b16 %v887, %v885
    %v1286 = vpack.c.b16 %v890, %v888
    %v1287 = vpack.c.b16 %v891, %v889
    %v1288 = vpack.c.b16 %v894, %v892
    %v1289 = vpack.c.b16 %v895, %v893
    %v1290 = vpack.c.b16 %v898, %v896
    %v1291 = vpack.c.b16 %v899, %v897
    %v1292 = vpack.c.b16 %v902, %v900
    %v1293 = vpack.c.b16 %v903, %v901
    %v1294 = vpack.c.b16 %v906, %v904
    %v1295 = vpack.c.b16 %v907, %v905
    %v1296 = vpack.c.b16 %v910, %v908
    %v1297 = vpack.c.b16 %v911, %v909
    %v1298 = vpack.c.b16 %v914, %v912
    %v1299 = vpack.c.b16 %v915, %v913
    %v1300 = vpack.c.b16 %v918, %v916
    %v1301 = vpack.c.b16 %v919, %v917
    %v1302 = vpack.c.b16 %v922, %v920
    %v1303 = vpack.c.b16 %v923, %v921
    %v1304 = vpack.c.b16 %v926, %v924
    %v1305 = vpack.c.b16 %v927, %v925
    %v1306 = vpack.c.b16 %v930, %v928
    %v1307 = vpack.c.b16 %v931, %v929
    %v1308 = vpack.c.b16 %v934, %v932
    %v1309 = vpack.c.b16 %v935, %v933
    %v1310 = vpack.c.b16 %v938, %v936
    %v1311 = vpack.c.b16 %v939, %v937
    %v1312 = vpack.c.b16 %v942, %v940
    %v1313 = vpack.c.b16 %v943, %v941
    %v1314 = vpack.c.b16 %v946, %v944
    %v1315 = vpack.c.b16 %v947, %v945
    %v1316 = vpack.c.b16 %v950, %v948
    %v1317 = vpack.c.b16 %v951, %v949
    %v1318 = vpack.c.b16 %v954, %v952
    %v1319 = vpack.c.b16 %v955, %v953
    %v1320 = vpack.c.b16 %v958, %v956
    %v1321 = vpack.c.b16 %v959, %v957
    %v1322 = vpack.c.b16 %v962, %v960
    %v1323 = vpack.c.b16 %v963, %v961
    %v1324 = vpack.c.b16 %v966, %v964
    %v1325 = vpack.c.b16 %v967, %v965
    %v1326 = vpack.c.b16 %v970, %v968
    %v1327 = vpack.c.b16 %v971, %v969
    %v1328 = vpack.c.b16 %v974, %v972
    %v1329 = vpack.c.b16 %v975, %v973
    %v1330 = vpack.c.b16 %v978, %v976
    %v1331 = vpack.c.b16 %v979, %v977
    %v1332 = vpack.c.b16 %v982, %v980
    %v1333 = vpack.c.b16 %v983, %v981
    %v1334 = vpack.c.b16 %v986, %v984
    %v1335 = vpack.c.b16 %v987, %v985
    %v1336 = vpack.c.b16 %v990, %v988
    %v1337 = vpack.c.b16 %v991, %v989
    %v1338 = vpack.c.b16 %v994, %v992
    %v1339 = vpack.c.b16 %v995, %v993
    %v1340 = vpack.c.b16 %v998, %v996
    %v1341 = vpack.c.b16 %v999, %v997
    %v1342 = vpack.c.b16 %v1002, %v1000
    %v1343 = vpack.c.b16 %v1003, %v1001
    %v1344 = vpack.c.b16 %v1006, %v1004
    %v1345 = vpack.c.b16 %v1007, %v1005
    %v1346 = vpack.c.b16 %v1010, %v1008
    %v1347 = vpack.c.b16 %v1011, %v1009
    %v1348 = vpack.c.b16 %v1014, %v1012
    %v1349 = vpack.c.b16 %v1015, %v1013
    %v1350 = vpack.c.b16 %v1018, %v1016
    %v1351 = vpack.c.b16 %v1019, %v1017
    %v1352 = vpack.c.b16 %v1022, %v1020
    %v1353 = vpack.c.b16 %v1023, %v1021
    %v1354 = vpack.c.b16 %v1026, %v1024
    %v1355 = vpack.c.b16 %v1027, %v1025
    %v1356 = vpack.c.b16 %v1030, %v1028
    %v1357 = vpack.c.b16 %v1031, %v1029
    %v1358 = vpack.c.b16 %v1034, %v1032
    %v1359 = vpack.c.b16 %v1035, %v1033
    %v1360 = vpack.c.b16 %v1038, %v1036
    %v1361 = vpack.c.b16 %v1039, %v1037
    %v1362 = vpack.c.b16 %v1042, %v1040
    %v1363 = vpack.c.b16 %v1043, %v1041
    %v1364 = vpack.c.b16 %v1046, %v1044
    %v1365 = vpack.c.b16 %v1047, %v1045
    %v1366 = vpack.c.b16 %v1050, %v1048
    %v1367 = vpack.c.b16 %v1051, %v1049
    %v1368 = vpack.c.b16 %v1054, %v1052
    %v1369 = vpack.c.b16 %v1055, %v1053
    %v1370 = vpack.c.b16 %v1058, %v1056
    %v1371 = vpack.c.b16 %v1059, %v1057
    %v1372 = vpack.c.b16 %v1062, %v1060
    %v1373 = vpack.c.b16 %v1063, %v1061
    %v1374 = vpack.c.b16 %v1066, %v1064
    %v1375 = vpack.c.b16 %v1067, %v1065
    %v1376 = vpack.c.b16 %v1070, %v1068
    %v1377 = vpack.c.b16 %v1071, %v1069
    %v1378 = vpack.c.b16 %v1074, %v1072
    %v1379 = vpack.c.b16 %v1075, %v1073
    %v1380 = vpack.c.b16 %v1078, %v1076
    %v1381 = vpack.c.b16 %v1079, %v1077
    %v1382 = vpack.c.b16 %v1082, %v1080
    %v1383 = vpack.c.b16 %v1083, %v1081
    %v1384 = vpack.c.b16 %v1086, %v1084
    %v1385 = vpack.c.b16 %v1087, %v1085
    %v1386 = vpack.c.b16 %v1090, %v1088
    %v1387 = vpack.c.b16 %v1091, %v1089
    %v1388 = vpack.c.b16 %v1094, %v1092
    %v1389 = vpack.c.b16 %v1095, %v1093
    %v1390 = vpack.c.b16 %v1098, %v1096
    %v1391 = vpack.c.b16 %v1099, %v1097
    %v1392 = vpack.c.b16 %v1102, %v1100
    %v1393 = vpack.c.b16 %v1103, %v1101
    %v1394 = vpack.c.b16 %v1106, %v1104
    %v1395 = vpack.c.b16 %v1107, %v1105
    %v1396 = vpack.c.b16 %v1110, %v1108
    %v1397 = vpack.c.b16 %v1111, %v1109
    %v1398 = vpack.c.b16 %v1114, %v1112
    %v1399 = vpack.c.b16 %v1115, %v1113
    %v1400 = vpack.c.b16 %v1118, %v1116
    %v1401 = vpack.c.b16 %v1119, %v1117
    %v1402 = vpack.c.b16 %v1122, %v1120
    %v1403 = vpack.c.b16 %v1123, %v1121
    %v1404 = vpack.c.b16 %v1126, %v1124
    %v1405 = vpack.c.b16 %v1127, %v1125
    %v1406 = vpack.c.b16 %v1130, %v1128
    %v1407 = vpack.c.b16 %v1131, %v1129
    %v1408 = vpack.c.b16 %v1134, %v1132
    %v1409 = vpack.c.b16 %v1135, %v1133
    %v1410 = vpack.c.b16 %v1138, %v1136
    %v1411 = vpack.c.b16 %v1139, %v1137
    %v1412 = vpack.c.b16 %v1142, %v1140
    %v1413 = vpack.c.b16 %v1143, %v1141
    %v1414 = vpack.c.b16 %v1146, %v1144
    %v1415 = vpack.c.b16 %v1147, %v1145
    %v1416 = vpack.c.b16 %v1150, %v1148
    %v1417 = vpack.c.b16 %v1151, %v1149
    %v1418 = vpack.c.b16 %v1154, %v1152
    %v1419 = vpack.c.b16 %v1155, %v1153
    %v1420 = vpack.c.b16 %v1158, %v1156
    %v1421 = vpack.c.b16 %v1159, %v1157
    %v1422 = vpack.c.b16 %v1162, %v1160
    %v1423 = vpack.c.b16 %v1163, %v1161
    %v1424 = vpack.c.b16 %v1166, %v1164
    %v1425 = vpack.c.b16 %v1167, %v1165
    %v1426 = vpack.c.b16 %v1170, %v1168
    %v1427 = vpack.c.b16 %v1171, %v1169
    %1684 = vmatprep.subr.bf16.mxu0 %v1187
    %1685 = vmatpush1.bf16.msra.mxu0 %v1186
    %1686 = vmatprep.subr.bf16.mxu0 %v1185
    %1687 = vmatpush1.bf16.msra.mxu0 %v1184
    %1688 = vmatprep.subr.bf16.mxu0 %v1183
    %1689 = vmatpush1.bf16.msra.mxu0 %v1182
    %1690 = vmatprep.subr.bf16.mxu0 %v1181
    %1691 = vmatpush1.bf16.msra.mxu0 %v1180
    %1692 = vmatprep.subr.bf16.mxu0 %v1179
    %1693 = vmatpush1.bf16.msra.mxu0 %v1178
    %1694 = vmatprep.subr.bf16.mxu0 %v1177
    %1695 = vmatpush1.bf16.msra.mxu0 %v1176
    %1696 = vmatprep.subr.bf16.mxu0 %v1175
    %1697 = vmatpush1.bf16.msra.mxu0 %v1174
    %1698 = vmatprep.subr.bf16.mxu0 %v1173
    %1699 = vmatpush1.bf16.msra.mxu0 %v1172
    %1700 = vmatprep.subr.bf16.mxu0 %v1203
    %1701 = vmatpush2.bf16.msra.mxu0 %v1202
    %1702 = vmatprep.subr.bf16.mxu0 %v1201
    %1703 = vmatpush2.bf16.msra.mxu0 %v1200
    %1704 = vmatprep.subr.bf16.mxu0 %v1199
    %1705 = vmatpush2.bf16.msra.mxu0 %v1198
    %1706 = vmatprep.subr.bf16.mxu0 %v1197
    %1707 = vmatpush2.bf16.msra.mxu0 %v1196
    %1708 = vmatprep.subr.bf16.mxu0 %v1195
    %1709 = vmatpush2.bf16.msra.mxu0 %v1194
    %1710 = vmatprep.subr.bf16.mxu0 %v1193
    %1711 = vmatpush2.bf16.msra.mxu0 %v1192
    %1712 = vmatprep.subr.bf16.mxu0 %v1191
    %1713 = vmatpush2.bf16.msra.mxu0 %v1190
    %1714 = vmatprep.subr.bf16.mxu0 %v1189
    %1715 = vmatpush2.bf16.msra.mxu0 %v1188
    %1716 = vmatprep.mubr.bf16.mxu0 %v373
    %1717 = vmatmul.mubr.bf16.gmra.mxu0 %v372
    %v1718 = vpop.f32.mrf.mxu0
    %v1719 = vadd.f32 %v317, %v1718
    %v1720 = vpop.f32.mrf.mxu0
    %v1721 = vadd.f32 %v321, %v1720
    %v1722 = vpop.f32.mrf.mxu0
    %v1723 = vadd.f32 %v317, %v1722
    %v1724 = vpop.f32.mrf.mxu0
    %v1725 = vadd.f32 %v321, %v1724
    %1726 = vdwg.mxu0
    %1727 = vmatprep.subr.bf16.mxu0 %v1219
    %1728 = vmatpush1.bf16.msra.mxu0 %v1218
    %1729 = vmatprep.subr.bf16.mxu0 %v1217
    %1730 = vmatpush1.bf16.msra.mxu0 %v1216
    %1731 = vmatprep.subr.bf16.mxu0 %v1215
    %1732 = vmatpush1.bf16.msra.mxu0 %v1214
    %1733 = vmatprep.subr.bf16.mxu0 %v1213
    %1734 = vmatpush1.bf16.msra.mxu0 %v1212
    %1735 = vmatprep.subr.bf16.mxu0 %v1211
    %1736 = vmatpush1.bf16.msra.mxu0 %v1210
    %1737 = vmatprep.subr.bf16.mxu0 %v1209
    %1738 = vmatpush1.bf16.msra.mxu0 %v1208
    %1739 = vmatprep.subr.bf16.mxu0 %v1207
    %1740 = vmatpush1.bf16.msra.mxu0 %v1206
    %1741 = vmatprep.subr.bf16.mxu0 %v1205
    %1742 = vmatpush1.bf16.msra.mxu0 %v1204
    %1743 = vmatprep.subr.bf16.mxu0 %v1235
    %1744 = vmatpush2.bf16.msra.mxu0 %v1234
    %1745 = vmatprep.subr.bf16.mxu0 %v1233
    %1746 = vmatpush2.bf16.msra.mxu0 %v1232
    %1747 = vmatprep.subr.bf16.mxu0 %v1231
    %1748 = vmatpush2.bf16.msra.mxu0 %v1230
    %1749 = vmatprep.subr.bf16.mxu0 %v1229
    %1750 = vmatpush2.bf16.msra.mxu0 %v1228
    %1751 = vmatprep.subr.bf16.mxu0 %v1227
    %1752 = vmatpush2.bf16.msra.mxu0 %v1226
    %1753 = vmatprep.subr.bf16.mxu0 %v1225
    %1754 = vmatpush2.bf16.msra.mxu0 %v1224
    %1755 = vmatprep.subr.bf16.mxu0 %v1223
    %1756 = vmatpush2.bf16.msra.mxu0 %v1222
    %1757 = vmatprep.subr.bf16.mxu0 %v1221
    %1758 = vmatpush2.bf16.msra.mxu0 %v1220
    %1759 = vmatprep.mubr.bf16.mxu0 %v375
    %1760 = vmatmul.mubr.bf16.gmra.mxu0 %v374
    %v1761 = vpop.f32.mrf.mxu0
    %v1762 = vadd.f32 %v1719, %v1761
    %v1763 = vpop.f32.mrf.mxu0
    %v1764 = vadd.f32 %v1721, %v1763
    %v1765 = vpop.f32.mrf.mxu0
    %v1766 = vadd.f32 %v1723, %v1765
    %v1767 = vpop.f32.mrf.mxu0
    %v1768 = vadd.f32 %v1725, %v1767
    %1769 = vdwg.mxu0
    %1770 = vmatprep.subr.bf16.mxu0 %v1251
    %1771 = vmatpush1.bf16.msra.mxu0 %v1250
    %1772 = vmatprep.subr.bf16.mxu0 %v1249
    %1773 = vmatpush1.bf16.msra.mxu0 %v1248
    %1774 = vmatprep.subr.bf16.mxu0 %v1247
    %1775 = vmatpush1.bf16.msra.mxu0 %v1246
    %1776 = vmatprep.subr.bf16.mxu0 %v1245
    %1777 = vmatpush1.bf16.msra.mxu0 %v1244
    %1778 = vmatprep.subr.bf16.mxu0 %v1243
    %1779 = vmatpush1.bf16.msra.mxu0 %v1242
    %1780 = vmatprep.subr.bf16.mxu0 %v1241
    %1781 = vmatpush1.bf16.msra.mxu0 %v1240
    %1782 = vmatprep.subr.bf16.mxu0 %v1239
    %1783 = vmatpush1.bf16.msra.mxu0 %v1238
    %1784 = vmatprep.subr.bf16.mxu0 %v1237
    %1785 = vmatpush1.bf16.msra.mxu0 %v1236
    %1786 = vmatprep.subr.bf16.mxu0 %v1267
    %1787 = vmatpush2.bf16.msra.mxu0 %v1266
    %1788 = vmatprep.subr.bf16.mxu0 %v1265
    %1789 = vmatpush2.bf16.msra.mxu0 %v1264
    %1790 = vmatprep.subr.bf16.mxu0 %v1263
    %1791 = vmatpush2.bf16.msra.mxu0 %v1262
    %1792 = vmatprep.subr.bf16.mxu0 %v1261
    %1793 = vmatpush2.bf16.msra.mxu0 %v1260
    %1794 = vmatprep.subr.bf16.mxu0 %v1259
    %1795 = vmatpush2.bf16.msra.mxu0 %v1258
    %1796 = vmatprep.subr.bf16.mxu0 %v1257
    %1797 = vmatpush2.bf16.msra.mxu0 %v1256
    %1798 = vmatprep.subr.bf16.mxu0 %v1255
    %1799 = vmatpush2.bf16.msra.mxu0 %v1254
    %1800 = vmatprep.subr.bf16.mxu0 %v1253
    %1801 = vmatpush2.bf16.msra.mxu0 %v1252
    %1802 = vmatprep.mubr.bf16.mxu0 %v377
    %1803 = vmatmul.mubr.bf16.gmra.mxu0 %v376
    %v1804 = vpop.f32.mrf.mxu0
    %v1805 = vadd.f32 %v1762, %v1804
    %v1806 = vpop.f32.mrf.mxu0
    %v1807 = vadd.f32 %v1764, %v1806
    %v1808 = vpop.f32.mrf.mxu0
    %v1809 = vadd.f32 %v1766, %v1808
    %v1810 = vpop.f32.mrf.mxu0
    %v1811 = vadd.f32 %v1768, %v1810
    %1812 = vdwg.mxu0
    %1813 = vmatprep.subr.bf16.mxu0 %v1283
    %1814 = vmatpush1.bf16.msra.mxu0 %v1282
    %1815 = vmatprep.subr.bf16.mxu0 %v1281
    %1816 = vmatpush1.bf16.msra.mxu0 %v1280
    %1817 = vmatprep.subr.bf16.mxu0 %v1279
    %1818 = vmatpush1.bf16.msra.mxu0 %v1278
    %1819 = vmatprep.subr.bf16.mxu0 %v1277
    %1820 = vmatpush1.bf16.msra.mxu0 %v1276
    %1821 = vmatprep.subr.bf16.mxu0 %v1275
    %1822 = vmatpush1.bf16.msra.mxu0 %v1274
    %1823 = vmatprep.subr.bf16.mxu0 %v1273
    %1824 = vmatpush1.bf16.msra.mxu0 %v1272
    %1825 = vmatprep.subr.bf16.mxu0 %v1271
    %1826 = vmatpush1.bf16.msra.mxu0 %v1270
    %1827 = vmatprep.subr.bf16.mxu0 %v1269
    %1828 = vmatpush1.bf16.msra.mxu0 %v1268
    %1829 = vmatprep.subr.bf16.mxu0 %v1299
    %1830 = vmatpush2.bf16.msra.mxu0 %v1298
    %1831 = vmatprep.subr.bf16.mxu0 %v1297
    %1832 = vmatpush2.bf16.msra.mxu0 %v1296
    %1833 = vmatprep.subr.bf16.mxu0 %v1295
    %1834 = vmatpush2.bf16.msra.mxu0 %v1294
    %1835 = vmatprep.subr.bf16.mxu0 %v1293
    %1836 = vmatpush2.bf16.msra.mxu0 %v1292
    %1837 = vmatprep.subr.bf16.mxu0 %v1291
    %1838 = vmatpush2.bf16.msra.mxu0 %v1290
    %1839 = vmatprep.subr.bf16.mxu0 %v1289
    %1840 = vmatpush2.bf16.msra.mxu0 %v1288
    %1841 = vmatprep.subr.bf16.mxu0 %v1287
    %1842 = vmatpush2.bf16.msra.mxu0 %v1286
    %1843 = vmatprep.subr.bf16.mxu0 %v1285
    %1844 = vmatpush2.bf16.msra.mxu0 %v1284
    %1845 = vmatprep.mubr.bf16.mxu0 %v379
    %1846 = vmatmul.mubr.bf16.gmra.mxu0 %v378
    %v1847 = vpop.f32.mrf.mxu0
    %v1848 = vadd.f32 %v1805, %v1847
    %v1849 = vpop.f32.mrf.mxu0
    %v1850 = vadd.f32 %v1807, %v1849
    %v1851 = vpop.f32.mrf.mxu0
    %v1852 = vadd.f32 %v1809, %v1851
    %v1853 = vpop.f32.mrf.mxu0
    %v1854 = vadd.f32 %v1811, %v1853
    %1855 = vdwg.mxu0
    %1856 = vmatprep.subr.bf16.mxu0 %v1315
    %1857 = vmatpush1.bf16.msra.mxu0 %v1314
    %1858 = vmatprep.subr.bf16.mxu0 %v1313
    %1859 = vmatpush1.bf16.msra.mxu0 %v1312
    %1860 = vmatprep.subr.bf16.mxu0 %v1311
    %1861 = vmatpush1.bf16.msra.mxu0 %v1310
    %1862 = vmatprep.subr.bf16.mxu0 %v1309
    %1863 = vmatpush1.bf16.msra.mxu0 %v1308
    %1864 = vmatprep.subr.bf16.mxu0 %v1307
    %1865 = vmatpush1.bf16.msra.mxu0 %v1306
    %1866 = vmatprep.subr.bf16.mxu0 %v1305
    %1867 = vmatpush1.bf16.msra.mxu0 %v1304
    %1868 = vmatprep.subr.bf16.mxu0 %v1303
    %1869 = vmatpush1.bf16.msra.mxu0 %v1302
    %1870 = vmatprep.subr.bf16.mxu0 %v1301
    %1871 = vmatpush1.bf16.msra.mxu0 %v1300
    %1872 = vmatprep.subr.bf16.mxu0 %v1331
    %1873 = vmatpush2.bf16.msra.mxu0 %v1330
    %1874 = vmatprep.subr.bf16.mxu0 %v1329
    %1875 = vmatpush2.bf16.msra.mxu0 %v1328
    %1876 = vmatprep.subr.bf16.mxu0 %v1327
    %1877 = vmatpush2.bf16.msra.mxu0 %v1326
    %1878 = vmatprep.subr.bf16.mxu0 %v1325
    %1879 = vmatpush2.bf16.msra.mxu0 %v1324
    %1880 = vmatprep.subr.bf16.mxu0 %v1323
    %1881 = vmatpush2.bf16.msra.mxu0 %v1322
    %1882 = vmatprep.subr.bf16.mxu0 %v1321
    %1883 = vmatpush2.bf16.msra.mxu0 %v1320
    %1884 = vmatprep.subr.bf16.mxu0 %v1319
    %1885 = vmatpush2.bf16.msra.mxu0 %v1318
    %1886 = vmatprep.subr.bf16.mxu0 %v1317
    %1887 = vmatpush2.bf16.msra.mxu0 %v1316
    %1888 = vmatprep.mubr.bf16.mxu0 %v381
    %1889 = vmatmul.mubr.bf16.gmra.mxu0 %v380
    %v1890 = vpop.f32.mrf.mxu0
    %v1891 = vadd.f32 %v1848, %v1890
    %v1892 = vpop.f32.mrf.mxu0
    %v1893 = vadd.f32 %v1850, %v1892
    %v1894 = vpop.f32.mrf.mxu0
    %v1895 = vadd.f32 %v1852, %v1894
    %v1896 = vpop.f32.mrf.mxu0
    %v1897 = vadd.f32 %v1854, %v1896
    %1898 = vdwg.mxu0
    %1899 = vmatprep.subr.bf16.mxu0 %v1347
    %1900 = vmatpush1.bf16.msra.mxu0 %v1346
    %1901 = vmatprep.subr.bf16.mxu0 %v1345
    %1902 = vmatpush1.bf16.msra.mxu0 %v1344
    %1903 = vmatprep.subr.bf16.mxu0 %v1343
    %1904 = vmatpush1.bf16.msra.mxu0 %v1342
    %1905 = vmatprep.subr.bf16.mxu0 %v1341
    %1906 = vmatpush1.bf16.msra.mxu0 %v1340
    %1907 = vmatprep.subr.bf16.mxu0 %v1339
    %1908 = vmatpush1.bf16.msra.mxu0 %v1338
    %1909 = vmatprep.subr.bf16.mxu0 %v1337
    %1910 = vmatpush1.bf16.msra.mxu0 %v1336
    %1911 = vmatprep.subr.bf16.mxu0 %v1335
    %1912 = vmatpush1.bf16.msra.mxu0 %v1334
    %1913 = vmatprep.subr.bf16.mxu0 %v1333
    %1914 = vmatpush1.bf16.msra.mxu0 %v1332
    %1915 = vmatprep.subr.bf16.mxu0 %v1363
    %1916 = vmatpush2.bf16.msra.mxu0 %v1362
    %1917 = vmatprep.subr.bf16.mxu0 %v1361
    %1918 = vmatpush2.bf16.msra.mxu0 %v1360
    %1919 = vmatprep.subr.bf16.mxu0 %v1359
    %1920 = vmatpush2.bf16.msra.mxu0 %v1358
    %1921 = vmatprep.subr.bf16.mxu0 %v1357
    %1922 = vmatpush2.bf16.msra.mxu0 %v1356
    %1923 = vmatprep.subr.bf16.mxu0 %v1355
    %1924 = vmatpush2.bf16.msra.mxu0 %v1354
    %1925 = vmatprep.subr.bf16.mxu0 %v1353
    %1926 = vmatpush2.bf16.msra.mxu0 %v1352
    %1927 = vmatprep.subr.bf16.mxu0 %v1351
    %1928 = vmatpush2.bf16.msra.mxu0 %v1350
    %1929 = vmatprep.subr.bf16.mxu0 %v1349
    %1930 = vmatpush2.bf16.msra.mxu0 %v1348
    %1931 = vmatprep.mubr.bf16.mxu0 %v383
    %1932 = vmatmul.mubr.bf16.gmra.mxu0 %v382
    %v1933 = vpop.f32.mrf.mxu0
    %v1934 = vadd.f32 %v1891, %v1933
    %v1935 = vpop.f32.mrf.mxu0
    %v1936 = vadd.f32 %v1893, %v1935
    %v1937 = vpop.f32.mrf.mxu0
    %v1938 = vadd.f32 %v1895, %v1937
    %v1939 = vpop.f32.mrf.mxu0
    %v1940 = vadd.f32 %v1897, %v1939
    %1941 = vdwg.mxu0
    %1942 = vmatprep.subr.bf16.mxu0 %v1379
    %1943 = vmatpush1.bf16.msra.mxu0 %v1378
    %1944 = vmatprep.subr.bf16.mxu0 %v1377
    %1945 = vmatpush1.bf16.msra.mxu0 %v1376
    %1946 = vmatprep.subr.bf16.mxu0 %v1375
    %1947 = vmatpush1.bf16.msra.mxu0 %v1374
    %1948 = vmatprep.subr.bf16.mxu0 %v1373
    %1949 = vmatpush1.bf16.msra.mxu0 %v1372
    %1950 = vmatprep.subr.bf16.mxu0 %v1371
    %1951 = vmatpush1.bf16.msra.mxu0 %v1370
    %1952 = vmatprep.subr.bf16.mxu0 %v1369
    %1953 = vmatpush1.bf16.msra.mxu0 %v1368
    %1954 = vmatprep.subr.bf16.mxu0 %v1367
    %1955 = vmatpush1.bf16.msra.mxu0 %v1366
    %1956 = vmatprep.subr.bf16.mxu0 %v1365
    %1957 = vmatpush1.bf16.msra.mxu0 %v1364
    %1958 = vmatprep.subr.bf16.mxu0 %v1395
    %1959 = vmatpush2.bf16.msra.mxu0 %v1394
    %1960 = vmatprep.subr.bf16.mxu0 %v1393
    %1961 = vmatpush2.bf16.msra.mxu0 %v1392
    %1962 = vmatprep.subr.bf16.mxu0 %v1391
    %1963 = vmatpush2.bf16.msra.mxu0 %v1390
    %1964 = vmatprep.subr.bf16.mxu0 %v1389
    %1965 = vmatpush2.bf16.msra.mxu0 %v1388
    %1966 = vmatprep.subr.bf16.mxu0 %v1387
    %1967 = vmatpush2.bf16.msra.mxu0 %v1386
    %1968 = vmatprep.subr.bf16.mxu0 %v1385
    %1969 = vmatpush2.bf16.msra.mxu0 %v1384
    %1970 = vmatprep.subr.bf16.mxu0 %v1383
    %1971 = vmatpush2.bf16.msra.mxu0 %v1382
    %1972 = vmatprep.subr.bf16.mxu0 %v1381
    %1973 = vmatpush2.bf16.msra.mxu0 %v1380
    %1974 = vmatprep.mubr.bf16.mxu0 %v385
    %1975 = vmatmul.mubr.bf16.gmra.mxu0 %v384
    %v1976 = vpop.f32.mrf.mxu0
    %v1977 = vadd.f32 %v1934, %v1976
    %v1978 = vpop.f32.mrf.mxu0
    %v1979 = vadd.f32 %v1936, %v1978
    %v1980 = vpop.f32.mrf.mxu0
    %v1981 = vadd.f32 %v1938, %v1980
    %v1982 = vpop.f32.mrf.mxu0
    %v1983 = vadd.f32 %v1940, %v1982
    %1984 = vdwg.mxu0
    %1985 = vmatprep.subr.bf16.mxu0 %v1411
    %1986 = vmatpush1.bf16.msra.mxu0 %v1410
    %1987 = vmatprep.subr.bf16.mxu0 %v1409
    %1988 = vmatpush1.bf16.msra.mxu0 %v1408
    %1989 = vmatprep.subr.bf16.mxu0 %v1407
    %1990 = vmatpush1.bf16.msra.mxu0 %v1406
    %1991 = vmatprep.subr.bf16.mxu0 %v1405
    %1992 = vmatpush1.bf16.msra.mxu0 %v1404
    %1993 = vmatprep.subr.bf16.mxu0 %v1403
    %1994 = vmatpush1.bf16.msra.mxu0 %v1402
    %1995 = vmatprep.subr.bf16.mxu0 %v1401
    %1996 = vmatpush1.bf16.msra.mxu0 %v1400
    %1997 = vmatprep.subr.bf16.mxu0 %v1399
    %1998 = vmatpush1.bf16.msra.mxu0 %v1398
    %1999 = vmatprep.subr.bf16.mxu0 %v1397
    %2000 = vmatpush1.bf16.msra.mxu0 %v1396
    %2001 = vmatprep.subr.bf16.mxu0 %v1427
    %2002 = vmatpush2.bf16.msra.mxu0 %v1426
    %2003 = vmatprep.subr.bf16.mxu0 %v1425
    %2004 = vmatpush2.bf16.msra.mxu0 %v1424
    %2005 = vmatprep.subr.bf16.mxu0 %v1423
    %2006 = vmatpush2.bf16.msra.mxu0 %v1422
    %2007 = vmatprep.subr.bf16.mxu0 %v1421
    %2008 = vmatpush2.bf16.msra.mxu0 %v1420
    %2009 = vmatprep.subr.bf16.mxu0 %v1419
    %2010 = vmatpush2.bf16.msra.mxu0 %v1418
    %2011 = vmatprep.subr.bf16.mxu0 %v1417
    %2012 = vmatpush2.bf16.msra.mxu0 %v1416
    %2013 = vmatprep.subr.bf16.mxu0 %v1415
    %2014 = vmatpush2.bf16.msra.mxu0 %v1414
    %2015 = vmatprep.subr.bf16.mxu0 %v1413
    %2016 = vmatpush2.bf16.msra.mxu0 %v1412
    %2017 = vmatprep.mubr.bf16.mxu0 %v387
    %2018 = vmatmul.mubr.bf16.gmra.mxu0 %v386
    %v2019 = vpop.f32.mrf.mxu0
    %v2020 = vadd.f32 %v1977, %v2019
    %v2021 = vpop.f32.mrf.mxu0
    %v2022 = vadd.f32 %v1979, %v2021
    %v2023 = vpop.f32.mrf.mxu0
    %v2024 = vadd.f32 %v1981, %v2023
    %v2025 = vpop.f32.mrf.mxu0
    %v2026 = vadd.f32 %v1983, %v2025
    %2027 = vdwg.mxu0
    %v2028 = vlaneseq
    %v2029 = vshrl.u32 %v2028, 7
    %v2030 = vadd.s32 %v2029, 8
    %vm2031 = vcmp.lt.s32.totalorder %v2029, 8
    %vm2032 = vcmp.lt.s32.totalorder %v2030, 8
    %v2033 = vsel %vm2031, %v2020, 0.0
    %v2034 = vsel %vm2031, %v2022, 0.0
    %v2035 = vsel %vm2032, %v2024, 0.0
    %v2036 = vsel %vm2032, %v2026, 0.0
    %v2037 = vadd.f32 %v2033, %v2035
    %v2038 = vrot.slane %v2037, 4
    %v2039 = vadd.f32 %v2037, %v2038
    %v2040 = vrot.slane %v2039, 2
    %v2041 = vadd.f32 %v2039, %v2040
    %v2042 = vrot.slane %v2041, 1
    %v2043 = vadd.f32 %v2041, %v2042
    %v2044 = vadd.f32 %v2034, %v2036
    %v2045 = vrot.slane %v2044, 4
    %v2046 = vadd.f32 %v2044, %v2045
    %v2047 = vrot.slane %v2046, 2
    %v2048 = vadd.f32 %v2046, %v2047
    %v2049 = vrot.slane %v2048, 1
    %v2050 = vadd.f32 %v2048, %v2049
    %v2051 = vmul.f32 %v2043, 0.125
    %v2052 = vmul.f32 %v2050, 0.125
    %v2053 = vmul.f32 %v2033, %v2033
    %v2054 = vmul.f32 %v2034, %v2034
    %v2055 = vmul.f32 %v2035, %v2035
    %v2056 = vmul.f32 %v2036, %v2036
    %v2057 = vadd.f32 %v2053, %v2055
    %v2058 = vrot.slane %v2057, 4
    %v2059 = vadd.f32 %v2057, %v2058
    %v2060 = vrot.slane %v2059, 2
    %v2061 = vadd.f32 %v2059, %v2060
    %v2062 = vrot.slane %v2061, 1
    %v2063 = vadd.f32 %v2061, %v2062
    %v2064 = vadd.f32 %v2054, %v2056
    %v2065 = vrot.slane %v2064, 4
    %v2066 = vadd.f32 %v2064, %v2065
    %v2067 = vrot.slane %v2066, 2
    %v2068 = vadd.f32 %v2066, %v2067
    %v2069 = vrot.slane %v2068, 1
    %v2070 = vadd.f32 %v2068, %v2069
    %v2071 = vmul.f32 %v2063, 0.125
    %v2072 = vmul.f32 %v2070, 0.125
    %v2073 = vmul.f32 %v2051, %v2051
    %v2074 = vmul.f32 %v2052, %v2052
    %v2075 = vsub.f32 %v2071, %v2073
    %v2076 = vsub.f32 %v2072, %v2074
    %v2077 = vsub.f32 %v2020, %v2051
    %v2078 = vsub.f32 %v2022, %v2052
    %v2079 = vsub.f32 %v2024, %v2051
    %v2080 = vsub.f32 %v2026, %v2052
    %v2081 = vadd.f32 %v2075, 1e-05
    %v2082 = vadd.f32 %v2076, 1e-05
    %v2083 = vrsqrt.pop %v2081
    %v2084 = vrsqrt.pop %v2082
    %s2085 = scalar_lea.vmem [#allocation4], 1
    %v2086 = vld [vmem:[%s2085] ss:$8 sm:$0x3]
    %v2088 = vlaneseq
    %v2089 = vshrl.u32 %v2088, 7
    %v2090 = vsub.s32 0, %v2089
    %v2091 = vrot.slane %v2086, %v2090
    %v2092 = vlaneseq
    %v2093 = vshrl.u32 %v2092, 7
    %v2094 = vsub.s32 1, %v2093
    %v2095 = vrot.slane %v2086, %v2094
    %v2098 = vmul.f32 %v2083, %v2091
    %v2099 = vmul.f32 %v2084, %v2095
    %v2100 = vlaneseq
    %v2101 = vshrl.u32 %v2100, 7
    %v2102 = vsub.s32 0, %v2101
    %v2103 = vrot.slane %v2098, %v2102
    %v2104 = vlaneseq
    %v2105 = vshrl.u32 %v2104, 7
    %v2106 = vsub.s32 0, %v2105
    %v2107 = vrot.slane %v2099, %v2106
    %v2108 = vmul.f32 %v2077, %v2103
    %v2109 = vmul.f32 %v2078, %v2107
    %v2110 = vmul.f32 %v2079, %v2103
    %v2111 = vmul.f32 %v2080, %v2107
    %s2112 = scalar_lea.vmem [#allocation4], 2
    %v2113 = vld [vmem:[%s2112] ss:$8 sm:$0x3]
    %v2115 = vlaneseq
    %v2116 = vshrl.u32 %v2115, 7
    %v2117 = vsub.s32 0, %v2116
    %v2118 = vrot.slane %v2113, %v2117
    %v2119 = vlaneseq
    %v2120 = vshrl.u32 %v2119, 7
    %v2121 = vsub.s32 1, %v2120
    %v2122 = vrot.slane %v2113, %v2121
    %v2125 = vadd.f32 %v2108, %v2118
    %v2126 = vadd.f32 %v2109, %v2122
    %v2127 = vadd.f32 %v2110, %v2118
    %v2128 = vadd.f32 %v2111, %v2122
    %vm2129 = vcmp.gt.f32.partialorder %v2125, 0.0
    %vm2130 = vcmp.gt.f32.partialorder %v2126, 0.0
    %vm2131 = vcmp.gt.f32.partialorder %v2127, 0.0
    %vm2132 = vcmp.gt.f32.partialorder %v2128, 0.0
    %v2133 = vmul.f32 %v2125, 0.2
    %v2134 = vmul.f32 %v2126, 0.2
    %v2135 = vmul.f32 %v2127, 0.2
    %v2136 = vmul.f32 %v2128, 0.2
    %v2137 = vsel %vm2129, %v2125, %v2133
    %v2138 = vsel %vm2130, %v2126, %v2134
    %v2139 = vsel %vm2131, %v2127, %v2135
    %v2140 = vsel %vm2132, %v2128, %v2136
    %v2141 = vpack.c.bf16 %v2139, %v2137
    %v2142 = vpack.c.bf16 %v2140, %v2138
    %v2145 = vunpack.c.l.b16 %v2141
    %v2146 = vunpack.c.l.b16 %v2142
    %v2147 = vunpack.c.h.b16 %v2141
    %v2148 = vunpack.c.h.b16 %v2142
    %v2149 = vpack.c.b16 %v2146, %v2145
    %v2150 = vpack.c.b16 %v2148, %v2147
    %2153 = vst [vmem:[%s3] sm:$0xff] %v2149
    %2154 = vst [vmem:[%s3 + $0x8] sm:$0xff] %v2150
    // Predicated region
    $region22: #{cgan_forward.10} parent=1 // pred_check
      _
    $region23: #{cgan_forward.10} parent=1 // pred_check_branch
      %2156 = sbr.rel (0) target = $region25
    $region24: #{cgan_forward.10} parent=1 // pred_region
      _
    $region25: #{cgan_forward.10} parent=1 // pred_fallthru
      _
    // Predicated region
    $region26: #{cgan_forward.10} parent=1 // pred_check
      _
    $region27: #{cgan_forward.10} parent=1 // pred_check_branch
      %2158 = sbr.rel (0) target = $region29
    $region28: #{cgan_forward.10} parent=1 // pred_region
      _
    $region29: #{cgan_forward.10} parent=1 // pred_fallthru
      _
    %2159 = vsyncpa [#allocation3], 1
    %2160 = vsyncpa [#allocation5], 1

// kernel: cgan_forward.14
$region0: #{cgan_forward.14}
  #allocation0 [shape = 'u32[]', space=smem, size = 0x4, offset = 0x4, fixed_abs, tag = 'smem constant byte address 0x4 - core index']
  #allocation1 [shape = 'u32[144,128]{1,0:T(1,128)}', space=vmem, size = 0x12000, scoped, tag = 'internal scratch']
  %s0 = inlined_call_operand.vmem [shape: bf16[32,256], index: 0, kind: input, shape index: {}]
  %s1 = inlined_call_operand.vmem [shape: f32[8,256], index: 1, kind: input, shape index: {}]
  %s2 = inlined_call_operand.vmem [shape: bf16[32,256], index: 2, kind: output, shape index: {}]
  %s3 = sld [smem:[#allocation0]]
  $region18: #{cgan_forward.14} parent=0
    _
  %s5 = ssub.s32 1, %s3
  %s6 = scalar_select 0, %s5, %s3
  // Predicated region
  $region2: #{cgan_forward.14} parent=0 // pred_check
    _
  $region3: #{cgan_forward.14} parent=0 // pred_check_branch
    %8 = sbr.rel (0) target = $region5
  $region4: #{cgan_forward.14} parent=0 // pred_region
    _
  $region5: #{cgan_forward.14} parent=0 // pred_fallthru
    _
  // Predicated region
  $region6: #{cgan_forward.14} parent=0 // pred_check
    _
  $region7: #{cgan_forward.14} parent=0 // pred_check_branch
    %10 = sbr.rel (0) target = $region9
  $region8: #{cgan_forward.14} parent=0 // pred_region
    _
  $region9: #{cgan_forward.14} parent=0 // pred_fallthru
    _
  %v11 = vld [vmem:[%s1] ss:$8 sm:$0x3]
  %v12 = vmul.f32 %v11, 0.0078125
  %s13 = scalar_lea.vmem %s1, 1
  %v14 = vld [vmem:[%s13] ss:$8 sm:$0x3]
  %v15 = vmul.f32 %v14, 0.0078125
  %v16 = vmul.f32 %v12, %v12
  %v17 = vsub.f32 %v15, %v16
  %v18 = vld [vmem:[%s0] sm:$0xff]
  %v19 = vld [vmem:[%s0 + $0x8] sm:$0xff]
  %v20 = vld [vmem:[%s0 + $0x10] sm:$0xff]
  %v21 = vld [vmem:[%s0 + $0x18] sm:$0xff]
  %v22 = vunpack.c.l.bf16 %v18
  %v23 = vunpack.c.h.bf16 %v18
  %v24 = vunpack.c.l.bf16 %v19
  %v25 = vunpack.c.h.bf16 %v19
  %v26 = vunpack.c.l.bf16 %v20
  %v27 = vunpack.c.h.bf16 %v20
  %v28 = vunpack.c.l.bf16 %v21
  %v29 = vunpack.c.h.bf16 %v21
  %v31 = vlaneseq
  %v32 = vshrl.u32 %v31, 7
  %v33 = vsub.s32 0, %v32
  %v34 = vrot.slane %v12, %v33
  %v35 = vlaneseq
  %v36 = vshrl.u32 %v35, 7
  %v37 = vsub.s32 1, %v36
  %v38 = vrot.slane %v12, %v37
  %v41 = vsub.f32 %v22, %v34
  %v42 = vsub.f32 %v23, %v38
  %v43 = vsub.f32 %v24, %v34
  %v44 = vsub.f32 %v25, %v38
  %v45 = vsub.f32 %v26, %v34
  %v46 = vsub.f32 %v27, %v38
  %v47 = vsub.f32 %v28, %v34
  %v48 = vsub.f32 %v29, %v38
  %v49 = vadd.f32 %v17, 1e-05
  %v50 = vrsqrt.pop %v49
  %s51 = scalar_lea.vmem %s1, 2
  %v52 = vld [vmem:[%s51] ss:$8 sm:$0x3]
  %v53 = vmul.f32 %v50, %v52
  %v55 = vlaneseq
  %v56 = vshrl.u32 %v55, 7
  %v57 = vsub.s32 0, %v56
  %v58 = vrot.slane %v53, %v57
  %v59 = vlaneseq
  %v60 = vshrl.u32 %v59, 7
  %v61 = vsub.s32 1, %v60
  %v62 = vrot.slane %v53, %v61
  %v65 = vmul.f32 %v41, %v58
  %v66 = vmul.f32 %v42, %v62
  %v67 = vmul.f32 %v43, %v58
  %v68 = vmul.f32 %v44, %v62
  %v69 = vmul.f32 %v45, %v58
  %v70 = vmul.f32 %v46, %v62
  %v71 = vmul.f32 %v47, %v58
  %v72 = vmul.f32 %v48, %v62
  %s73 = scalar_lea.vmem %s1, 3
  %v74 = vld [vmem:[%s73] ss:$8 sm:$0x3]
  %v76 = vlaneseq
  %v77 = vshrl.u32 %v76, 7
  %v78 = vsub.s32 0, %v77
  %v79 = vrot.slane %v74, %v78
  %v80 = vlaneseq
  %v81 = vshrl.u32 %v80, 7
  %v82 = vsub.s32 1, %v81
  %v83 = vrot.slane %v74, %v82
  %v86 = vadd.f32 %v65, %v79
  %v87 = vadd.f32 %v66, %v83
  %v88 = vadd.f32 %v67, %v79
  %v89 = vadd.f32 %v68, %v83
  %v90 = vadd.f32 %v69, %v79
  %v91 = vadd.f32 %v70, %v83
  %v92 = vadd.f32 %v71, %v79
  %v93 = vadd.f32 %v72, %v83
  %v94 = vmax.f32 %v86, 0.0
  %v95 = vmax.f32 %v87, 0.0
  %v96 = vmax.f32 %v88, 0.0
  %v97 = vmax.f32 %v89, 0.0
  %v98 = vmax.f32 %v90, 0.0
  %v99 = vmax.f32 %v91, 0.0
  %v100 = vmax.f32 %v92, 0.0
  %v101 = vmax.f32 %v93, 0.0
  %v102 = vpack.c.bf16 %v96, %v94
  %v103 = vpack.c.bf16 %v97, %v95
  %v104 = vpack.c.bf16 %v100, %v98
  %v105 = vpack.c.bf16 %v101, %v99
  %v110 = vunpack.c.l.b16 %v102
  %v111 = vunpack.c.l.b16 %v103
  %v112 = vunpack.c.h.b16 %v102
  %v113 = vunpack.c.h.b16 %v103
  %v114 = vunpack.c.l.b16 %v104
  %v115 = vunpack.c.l.b16 %v105
  %v116 = vunpack.c.h.b16 %v104
  %v117 = vunpack.c.h.b16 %v105
  %v118 = vpack.c.b16 %v111, %v110
  %v119 = vpack.c.b16 %v113, %v112
  %v120 = vpack.c.b16 %v115, %v114
  %v121 = vpack.c.b16 %v117, %v116
  %126 = vst [vmem:[%s2] sm:$0xff] %v118
  %127 = vst [vmem:[%s2 + $0x8] sm:$0xff] %v119
  %128 = vst [vmem:[%s2 + $0x10] sm:$0xff] %v120
  %129 = vst [vmem:[%s2 + $0x18] sm:$0xff] %v121
  // Predicated region
  $region10: #{cgan_forward.14} parent=0 // pred_check
    _
  $region11: #{cgan_forward.14} parent=0 // pred_check_branch
    %131 = sbr.rel (0) target = $region13
  $region12: #{cgan_forward.14} parent=0 // pred_region
    _
  $region13: #{cgan_forward.14} parent=0 // pred_fallthru
    _
  // Predicated region
  $region14: #{cgan_forward.14} parent=0 // pred_check
    _
  $region15: #{cgan_forward.14} parent=0 // pred_check_branch
    %133 = sbr.rel (0) target = $region17
  $region16: #{cgan_forward.14} parent=0 // pred_region
    _
  $region17: #{cgan_forward.14} parent=0 // pred_fallthru
    _

// kernel: cgan_forward.11
$region0: #{cgan_forward.11}
  #allocation0 [shape = 'u32[]', space=smem, size = 0x4, offset = 0x4, fixed_abs, tag = 'smem constant byte address 0x4 - core index']
  #allocation1 [shape = 'u32[144,128]{1,0:T(1,128)}', space=vmem, size = 0x12000, scoped, tag = 'internal scratch']
  %s0 = inlined_call_operand.vmem [shape: bf16[16,2304], index: 0, kind: input, shape index: {}]
  %s1 = inlined_call_operand.vmem [shape: bf16[2304,512], index: 1, kind: input, shape index: {}]
  %s2 = inlined_call_operand.vmem [shape: f32[8,512], index: 2, kind: input, shape index: {}]
  %s3 = inlined_call_operand.vmem [shape: bf16[16,512], index: 3, kind: output, shape index: {0}]
  %s4 = inlined_call_operand.vmem [shape: f32[8,512], index: 4, kind: output, shape index: {1}]
  %5 = xla_tuple %s3, %s4
  %s6 = sld [smem:[#allocation0]]
  $region30: #{cgan_forward.11} parent=0
    _
  %s8 = ssub.s32 1, %s6
  %s9 = scalar_select 0, %s8, %s6
  // Predicated region
  $region2: #{cgan_forward.11} parent=0 // pred_check
    _
  $region3: #{cgan_forward.11} parent=0 // pred_check_branch
    %11 = sbr.rel (0) target = $region5
  $region4: #{cgan_forward.11} parent=0 // pred_region
    _
  $region5: #{cgan_forward.11} parent=0 // pred_fallthru
    _
  // Predicated region
  $region6: #{cgan_forward.11} parent=0 // pred_check
    _
  $region7: #{cgan_forward.11} parent=0 // pred_check_branch
    %13 = sbr.rel (0) target = $region9
  $region8: #{cgan_forward.11} parent=0 // pred_region
    _
  $region9: #{cgan_forward.11} parent=0 // pred_fallthru
    _
  // Predicated region
  $region10: #{cgan_forward.11} parent=0 // pred_check
    _
  $region11: #{cgan_forward.11} parent=0 // pred_check_branch
    %15 = sbr.rel (0) target = $region13
  $region12: #{cgan_forward.11} parent=0 // pred_region
    _
  $region13: #{cgan_forward.11} parent=0 // pred_fallthru
    _
  %v16 = vld [vmem:[%s0] sm:$0xff]
  %v17 = vld [vmem:[%s0 + $0x8] sm:$0xff]
  %v18 = vld [vmem:[%s0 + $0x10] sm:$0xff]
  %v19 = vld [vmem:[%s0 + $0x18] sm:$0xff]
  %v20 = vld [vmem:[%s0 + $0x20] sm:$0xff]
  %v21 = vld [vmem:[%s0 + $0x28] sm:$0xff]
  %v22 = vld [vmem:[%s0 + $0x30] sm:$0xff]
  %v23 = vld [vmem:[%s0 + $0x38] sm:$0xff]
  %v24 = vld [vmem:[%s0 + $0x40] sm:$0xff]
  %v25 = vld [vmem:[%s0 + $0x48] sm:$0xff]
  %v26 = vld [vmem:[%s0 + $0x50] sm:$0xff]
  %v27 = vld [vmem:[%s0 + $0x58] sm:$0xff]
  %v28 = vld [vmem:[%s0 + $0x60] sm:$0xff]
  %v29 = vld [vmem:[%s0 + $0x68] sm:$0xff]
  %v30 = vld [vmem:[%s0 + $0x70] sm:$0xff]
  %v31 = vld [vmem:[%s0 + $0x78] sm:$0xff]
  %v32 = vld [vmem:[%s0 + $0x80] sm:$0xff]
  %v33 = vld [vmem:[%s0 + $0x88] sm:$0xff]
  %v34 = vld [vmem:[%s1] sm:$0xff]
  %v35 = vld [vmem:[%s1 + $0x8] sm:$0xff]
  %v36 = vld [vmem:[%s1 + $0x10] sm:$0xff]
  %v37 = vld [vmem:[%s1 + $0x18] sm:$0xff]
  %v38 = vld [vmem:[%s1 + $0x20] sm:$0xff]
  %v39 = vld [vmem:[%s1 + $0x28] sm:$0xff]
  %v40 = vld [vmem:[%s1 + $0x30] sm:$0xff]
  %v41 = vld [vmem:[%s1 + $0x38] sm:$0xff]
  %v42 = vld [vmem:[%s1 + $0x40] sm:$0xff]
  %v43 = vld [vmem:[%s1 + $0x48] sm:$0xff]
  %v44 = vld [vmem:[%s1 + $0x50] sm:$0xff]
  %v45 = vld [vmem:[%s1 + $0x58] sm:$0xff]
  %v46 = vld [vmem:[%s1 + $0x60] sm:$0xff]
  %v47 = vld [vmem:[%s1 + $0x68] sm:$0xff]
  %v48 = vld [vmem:[%s1 + $0x70] sm:$0xff]
  %v49 = vld [vmem:[%s1 + $0x78] sm:$0xff]
  %v50 = vld [vmem:[%s1 + $0x80] sm:$0xff]
  %v51 = vld [vmem:[%s1 + $0x88] sm:$0xff]
  %v52 = vld [vmem:[%s1 + $0x90] sm:$0xff]
  %v53 = vld [vmem:[%s1 + $0x98] sm:$0xff]
  %v54 = vld [vmem:[%s1 + $0xa0] sm:$0xff]
  %v55 = vld [vmem:[%s1 + $0xa8] sm:$0xff]
  %v56 = vld [vmem:[%s1 + $0xb0] sm:$0xff]
  %v57 = vld [vmem:[%s1 + $0xb8] sm:$0xff]
  %v58 = vld [vmem:[%s1 + $0xc0] sm:$0xff]
  %v59 = vld [vmem:[%s1 + $0xc8] sm:$0xff]
  %v60 = vld [vmem:[%s1 + $0xd0] sm:$0xff]
  %v61 = vld [vmem:[%s1 + $0xd8] sm:$0xff]
  %v62 = vld [vmem:[%s1 + $0xe0] sm:$0xff]
  %v63 = vld [vmem:[%s1 + $0xe8] sm:$0xff]
  %v64 = vld [vmem:[%s1 + $0xf0] sm:$0xff]
  %v65 = vld [vmem:[%s1 + $0xf8] sm:$0xff]
  %v66 = vld [vmem:[%s1 + $0x100] sm:$0xff]
  %v67 = vld [vmem:[%s1 + $0x108] sm:$0xff]
  %v68 = vld [vmem:[%s1 + $0x110] sm:$0xff]
  %v69 = vld [vmem:[%s1 + $0x118] sm:$0xff]
  %v70 = vld [vmem:[%s1 + $0x120] sm:$0xff]
  %v71 = vld [vmem:[%s1 + $0x128] sm:$0xff]
  %v72 = vld [vmem:[%s1 + $0x130] sm:$0xff]
  %v73 = vld [vmem:[%s1 + $0x138] sm:$0xff]
  %v74 = vld [vmem:[%s1 + $0x140] sm:$0xff]
  %v75 = vld [vmem:[%s1 + $0x148] sm:$0xff]
  %v76 = vld [vmem:[%s1 + $0x150] sm:$0xff]
  %v77 = vld [vmem:[%s1 + $0x158] sm:$0xff]
  %v78 = vld [vmem:[%s1 + $0x160] sm:$0xff]
  %v79 = vld [vmem:[%s1 + $0x168] sm:$0xff]
  %v80 = vld [vmem:[%s1 + $0x170] sm:$0xff]
  %v81 = vld [vmem:[%s1 + $0x178] sm:$0xff]
  %v82 = vld [vmem:[%s1 + $0x180] sm:$0xff]
  %v83 = vld [vmem:[%s1 + $0x188] sm:$0xff]
  %v84 = vld [vmem:[%s1 + $0x190] sm:$0xff]
  %v85 = vld [vmem:[%s1 + $0x198] sm:$0xff]
  %v86 = vld [vmem:[%s1 + $0x1a0] sm:$0xff]
  %v87 = vld [vmem:[%s1 + $0x1a8] sm:$0xff]
  %v88 = vld [vmem:[%s1 + $0x1b0] sm:$0xff]
  %v89 = vld [vmem:[%s1 + $0x1b8] sm:$0xff]
  %v90 = vld [vmem:[%s1 + $0x1c0] sm:$0xff]
  %v91 = vld [vmem:[%s1 + $0x1c8] sm:$0xff]
  %v92 = vld [vmem:[%s1 + $0x1d0] sm:$0xff]
  %v93 = vld [vmem:[%s1 + $0x1d8] sm:$0xff]
  %v94 = vld [vmem:[%s1 + $0x1e0] sm:$0xff]
  %v95 = vld [vmem:[%s1 + $0x1e8] sm:$0xff]
  %v96 = vld [vmem:[%s1 + $0x1f0] sm:$0xff]
  %v97 = vld [vmem:[%s1 + $0x1f8] sm:$0xff]
  %v98 = vld [vmem:[%s1 + $0x200] sm:$0xff]
  %v99 = vld [vmem:[%s1 + $0x208] sm:$0xff]
  %v100 = vld [vmem:[%s1 + $0x210] sm:$0xff]
  %v101 = vld [vmem:[%s1 + $0x218] sm:$0xff]
  %v102 = vld [vmem:[%s1 + $0x220] sm:$0xff]
  %v103 = vld [vmem:[%s1 + $0x228] sm:$0xff]
  %v104 = vld [vmem:[%s1 + $0x230] sm:$0xff]
  %v105 = vld [vmem:[%s1 + $0x238] sm:$0xff]
  %v106 = vld [vmem:[%s1 + $0x240] sm:$0xff]
  %v107 = vld [vmem:[%s1 + $0x248] sm:$0xff]
  %v108 = vld [vmem:[%s1 + $0x250] sm:$0xff]
  %v109 = vld [vmem:[%s1 + $0x258] sm:$0xff]
  %v110 = vld [vmem:[%s1 + $0x260] sm:$0xff]
  %v111 = vld [vmem:[%s1 + $0x268] sm:$0xff]
  %v112 = vld [vmem:[%s1 + $0x270] sm:$0xff]
  %v113 = vld [vmem:[%s1 + $0x278] sm:$0xff]
  %v114 = vld [vmem:[%s1 + $0x280] sm:$0xff]
  %v115 = vld [vmem:[%s1 + $0x288] sm:$0xff]
  %v116 = vld [vmem:[%s1 + $0x290] sm:$0xff]
  %v117 = vld [vmem:[%s1 + $0x298] sm:$0xff]
  %v118 = vld [vmem:[%s1 + $0x2a0] sm:$0xff]
  %v119 = vld [vmem:[%s1 + $0x2a8] sm:$0xff]
  %v120 = vld [vmem:[%s1 + $0x2b0] sm:$0xff]
  %v121 = vld [vmem:[%s1 + $0x2b8] sm:$0xff]
  %v122 = vld [vmem:[%s1 + $0x2c0] sm:$0xff]
  %v123 = vld [vmem:[%s1 + $0x2c8] sm:$0xff]
  %v124 = vld [vmem:[%s1 + $0x2d0] sm:$0xff]
  %v125 = vld [vmem:[%s1 + $0x2d8] sm:$0xff]
  %v126 = vld [vmem:[%s1 + $0x2e0] sm:$0xff]
  %v127 = vld [vmem:[%s1 + $0x2e8] sm:$0xff]
  %v128 = vld [vmem:[%s1 + $0x2f0] sm:$0xff]
  %v129 = vld [vmem:[%s1 + $0x2f8] sm:$0xff]
  %v130 = vld [vmem:[%s1 + $0x300] sm:$0xff]
  %v131 = vld [vmem:[%s1 + $0x308] sm:$0xff]
  %v132 = vld [vmem:[%s1 + $0x310] sm:$0xff]
  %v133 = vld [vmem:[%s1 + $0x318] sm:$0xff]
  %v134 = vld [vmem:[%s1 + $0x320] sm:$0xff]
  %v135 = vld [vmem:[%s1 + $0x328] sm:$0xff]
  %v136 = vld [vmem:[%s1 + $0x330] sm:$0xff]
  %v137 = vld [vmem:[%s1 + $0x338] sm:$0xff]
  %v138 = vld [vmem:[%s1 + $0x340] sm:$0xff]
  %v139 = vld [vmem:[%s1 + $0x348] sm:$0xff]
  %v140 = vld [vmem:[%s1 + $0x350] sm:$0xff]
  %v141 = vld [vmem:[%s1 + $0x358] sm:$0xff]
  %v142 = vld [vmem:[%s1 + $0x360] sm:$0xff]
  %v143 = vld [vmem:[%s1 + $0x368] sm:$0xff]
  %v144 = vld [vmem:[%s1 + $0x370] sm:$0xff]
  %v145 = vld [vmem:[%s1 + $0x378] sm:$0xff]
  %v146 = vld [vmem:[%s1 + $0x380] sm:$0xff]
  %v147 = vld [vmem:[%s1 + $0x388] sm:$0xff]
  %v148 = vld [vmem:[%s1 + $0x390] sm:$0xff]
  %v149 = vld [vmem:[%s1 + $0x398] sm:$0xff]
  %v150 = vld [vmem:[%s1 + $0x3a0] sm:$0xff]
  %v151 = vld [vmem:[%s1 + $0x3a8] sm:$0xff]
  %v152 = vld [vmem:[%s1 + $0x3b0] sm:$0xff]
  %v153 = vld [vmem:[%s1 + $0x3b8] sm:$0xff]
  %v154 = vld [vmem:[%s1 + $0x3c0] sm:$0xff]
  %v155 = vld [vmem:[%s1 + $0x3c8] sm:$0xff]
  %v156 = vld [vmem:[%s1 + $0x3d0] sm:$0xff]
  %v157 = vld [vmem:[%s1 + $0x3d8] sm:$0xff]
  %v158 = vld [vmem:[%s1 + $0x3e0] sm:$0xff]
  %v159 = vld [vmem:[%s1 + $0x3e8] sm:$0xff]
  %v160 = vld [vmem:[%s1 + $0x3f0] sm:$0xff]
  %v161 = vld [vmem:[%s1 + $0x3f8] sm:$0xff]
  %v162 = vld [vmem:[%s1 + $0x400] sm:$0xff]
  %v163 = vld [vmem:[%s1 + $0x408] sm:$0xff]
  %v164 = vld [vmem:[%s1 + $0x410] sm:$0xff]
  %v165 = vld [vmem:[%s1 + $0x418] sm:$0xff]
  %v166 = vld [vmem:[%s1 + $0x420] sm:$0xff]
  %v167 = vld [vmem:[%s1 + $0x428] sm:$0xff]
  %v168 = vld [vmem:[%s1 + $0x430] sm:$0xff]
  %v169 = vld [vmem:[%s1 + $0x438] sm:$0xff]
  %v170 = vld [vmem:[%s1 + $0x440] sm:$0xff]
  %v171 = vld [vmem:[%s1 + $0x448] sm:$0xff]
  %v172 = vld [vmem:[%s1 + $0x450] sm:$0xff]
  %v173 = vld [vmem:[%s1 + $0x458] sm:$0xff]
  %v174 = vld [vmem:[%s1 + $0x460] sm:$0xff]
  %v175 = vld [vmem:[%s1 + $0x468] sm:$0xff]
  %v176 = vld [vmem:[%s1 + $0x470] sm:$0xff]
  %v177 = vld [vmem:[%s1 + $0x478] sm:$0xff]
  %v178 = vld [vmem:[%s1 + $0x480] sm:$0xff]
  %v179 = vld [vmem:[%s1 + $0x488] sm:$0xff]
  %v180 = vld [vmem:[%s1 + $0x490] sm:$0xff]
  %v181 = vld [vmem:[%s1 + $0x498] sm:$0xff]
  %v182 = vld [vmem:[%s1 + $0x4a0] sm:$0xff]
  %v183 = vld [vmem:[%s1 + $0x4a8] sm:$0xff]
  %v184 = vld [vmem:[%s1 + $0x4b0] sm:$0xff]
  %v185 = vld [vmem:[%s1 + $0x4b8] sm:$0xff]
  %v186 = vld [vmem:[%s1 + $0x4c0] sm:$0xff]
  %v187 = vld [vmem:[%s1 + $0x4c8] sm:$0xff]
  %v188 = vld [vmem:[%s1 + $0x4d0] sm:$0xff]
  %v189 = vld [vmem:[%s1 + $0x4d8] sm:$0xff]
  %v190 = vld [vmem:[%s1 + $0x4e0] sm:$0xff]
  %v191 = vld [vmem:[%s1 + $0x4e8] sm:$0xff]
  %v192 = vld [vmem:[%s1 + $0x4f0] sm:$0xff]
  %v193 = vld [vmem:[%s1 + $0x4f8] sm:$0xff]
  %v194 = vld [vmem:[%s1 + $0x500] sm:$0xff]
  %v195 = vld [vmem:[%s1 + $0x508] sm:$0xff]
  %v196 = vld [vmem:[%s1 + $0x510] sm:$0xff]
  %v197 = vld [vmem:[%s1 + $0x518] sm:$0xff]
  %v198 = vld [vmem:[%s1 + $0x520] sm:$0xff]
  %v199 = vld [vmem:[%s1 + $0x528] sm:$0xff]
  %v200 = vld [vmem:[%s1 + $0x530] sm:$0xff]
  %v201 = vld [vmem:[%s1 + $0x538] sm:$0xff]
  %v202 = vld [vmem:[%s1 + $0x540] sm:$0xff]
  %v203 = vld [vmem:[%s1 + $0x548] sm:$0xff]
  %v204 = vld [vmem:[%s1 + $0x550] sm:$0xff]
  %v205 = vld [vmem:[%s1 + $0x558] sm:$0xff]
  %v206 = vld [vmem:[%s1 + $0x560] sm:$0xff]
  %v207 = vld [vmem:[%s1 + $0x568] sm:$0xff]
  %v208 = vld [vmem:[%s1 + $0x570] sm:$0xff]
  %v209 = vld [vmem:[%s1 + $0x578] sm:$0xff]
  %v210 = vld [vmem:[%s1 + $0x580] sm:$0xff]
  %v211 = vld [vmem:[%s1 + $0x588] sm:$0xff]
  %v212 = vld [vmem:[%s1 + $0x590] sm:$0xff]
  %v213 = vld [vmem:[%s1 + $0x598] sm:$0xff]
  %v214 = vld [vmem:[%s1 + $0x5a0] sm:$0xff]
  %v215 = vld [vmem:[%s1 + $0x5a8] sm:$0xff]
  %v216 = vld [vmem:[%s1 + $0x5b0] sm:$0xff]
  %v217 = vld [vmem:[%s1 + $0x5b8] sm:$0xff]
  %v218 = vld [vmem:[%s1 + $0x5c0] sm:$0xff]
  %v219 = vld [vmem:[%s1 + $0x5c8] sm:$0xff]
  %v220 = vld [vmem:[%s1 + $0x5d0] sm:$0xff]
  %v221 = vld [vmem:[%s1 + $0x5d8] sm:$0xff]
  %v222 = vld [vmem:[%s1 + $0x5e0] sm:$0xff]
  %v223 = vld [vmem:[%s1 + $0x5e8] sm:$0xff]
  %v224 = vld [vmem:[%s1 + $0x5f0] sm:$0xff]
  %v225 = vld [vmem:[%s1 + $0x5f8] sm:$0xff]
  %v226 = vld [vmem:[%s1 + $0x600] sm:$0xff]
  %v227 = vld [vmem:[%s1 + $0x608] sm:$0xff]
  %v228 = vld [vmem:[%s1 + $0x610] sm:$0xff]
  %v229 = vld [vmem:[%s1 + $0x618] sm:$0xff]
  %v230 = vld [vmem:[%s1 + $0x620] sm:$0xff]
  %v231 = vld [vmem:[%s1 + $0x628] sm:$0xff]
  %v232 = vld [vmem:[%s1 + $0x630] sm:$0xff]
  %v233 = vld [vmem:[%s1 + $0x638] sm:$0xff]
  %v234 = vld [vmem:[%s1 + $0x640] sm:$0xff]
  %v235 = vld [vmem:[%s1 + $0x648] sm:$0xff]
  %v236 = vld [vmem:[%s1 + $0x650] sm:$0xff]
  %v237 = vld [vmem:[%s1 + $0x658] sm:$0xff]
  %v238 = vld [vmem:[%s1 + $0x660] sm:$0xff]
  %v239 = vld [vmem:[%s1 + $0x668] sm:$0xff]
  %v240 = vld [vmem:[%s1 + $0x670] sm:$0xff]
  %v241 = vld [vmem:[%s1 + $0x678] sm:$0xff]
  %v242 = vld [vmem:[%s1 + $0x680] sm:$0xff]
  %v243 = vld [vmem:[%s1 + $0x688] sm:$0xff]
  %v244 = vld [vmem:[%s1 + $0x690] sm:$0xff]
  %v245 = vld [vmem:[%s1 + $0x698] sm:$0xff]
  %v246 = vld [vmem:[%s1 + $0x6a0] sm:$0xff]
  %v247 = vld [vmem:[%s1 + $0x6a8] sm:$0xff]
  %v248 = vld [vmem:[%s1 + $0x6b0] sm:$0xff]
  %v249 = vld [vmem:[%s1 + $0x6b8] sm:$0xff]
  %v250 = vld [vmem:[%s1 + $0x6c0] sm:$0xff]
  %v251 = vld [vmem:[%s1 + $0x6c8] sm:$0xff]
  %v252 = vld [vmem:[%s1 + $0x6d0] sm:$0xff]
  %v253 = vld [vmem:[%s1 + $0x6d8] sm:$0xff]
  %v254 = vld [vmem:[%s1 + $0x6e0] sm:$0xff]
  %v255 = vld [vmem:[%s1 + $0x6e8] sm:$0xff]
  %v256 = vld [vmem:[%s1 + $0x6f0] sm:$0xff]
  %v257 = vld [vmem:[%s1 + $0x6f8] sm:$0xff]
  %v258 = vld [vmem:[%s1 + $0x700] sm:$0xff]
  %v259 = vld [vmem:[%s1 + $0x708] sm:$0xff]
  %v260 = vld [vmem:[%s1 + $0x710] sm:$0xff]
  %v261 = vld [vmem:[%s1 + $0x718] sm:$0xff]
  %v262 = vld [vmem:[%s1 + $0x720] sm:$0xff]
  %v263 = vld [vmem:[%s1 + $0x728] sm:$0xff]
  %v264 = vld [vmem:[%s1 + $0x730] sm:$0xff]
  %v265 = vld [vmem:[%s1 + $0x738] sm:$0xff]
  %v266 = vld [vmem:[%s1 + $0x740] sm:$0xff]
  %v267 = vld [vmem:[%s1 + $0x748] sm:$0xff]
  %v268 = vld [vmem:[%s1 + $0x750] sm:$0xff]
  %v269 = vld [vmem:[%s1 + $0x758] sm:$0xff]
  %v270 = vld [vmem:[%s1 + $0x760] sm:$0xff]
  %v271 = vld [vmem:[%s1 + $0x768] sm:$0xff]
  %v272 = vld [vmem:[%s1 + $0x770] sm:$0xff]
  %v273 = vld [vmem:[%s1 + $0x778] sm:$0xff]
  %v274 = vld [vmem:[%s1 + $0x780] sm:$0xff]
  %v275 = vld [vmem:[%s1 + $0x788] sm:$0xff]
  %v276 = vld [vmem:[%s1 + $0x790] sm:$0xff]
  %v277 = vld [vmem:[%s1 + $0x798] sm:$0xff]
  %v278 = vld [vmem:[%s1 + $0x7a0] sm:$0xff]
  %v279 = vld [vmem:[%s1 + $0x7a8] sm:$0xff]
  %v280 = vld [vmem:[%s1 + $0x7b0] sm:$0xff]
  %v281 = vld [vmem:[%s1 + $0x7b8] sm:$0xff]
  %v282 = vld [vmem:[%s1 + $0x7c0] sm:$0xff]
  %v283 = vld [vmem:[%s1 + $0x7c8] sm:$0xff]
  %v284 = vld [vmem:[%s1 + $0x7d0] sm:$0xff]
  %v285 = vld [vmem:[%s1 + $0x7d8] sm:$0xff]
  %v286 = vld [vmem:[%s1 + $0x7e0] sm:$0xff]
  %v287 = vld [vmem:[%s1 + $0x7e8] sm:$0xff]
  %v288 = vld [vmem:[%s1 + $0x7f0] sm:$0xff]
  %v289 = vld [vmem:[%s1 + $0x7f8] sm:$0xff]
  %v290 = vld [vmem:[%s1 + $0x800] sm:$0xff]
  %v291 = vld [vmem:[%s1 + $0x808] sm:$0xff]
  %v292 = vld [vmem:[%s1 + $0x810] sm:$0xff]
  %v293 = vld [vmem:[%s1 + $0x818] sm:$0xff]
  %v294 = vld [vmem:[%s1 + $0x820] sm:$0xff]
  %v295 = vld [vmem:[%s1 + $0x828] sm:$0xff]
  %v296 = vld [vmem:[%s1 + $0x830] sm:$0xff]
  %v297 = vld [vmem:[%s1 + $0x838] sm:$0xff]
  %v298 = vld [vmem:[%s1 + $0x840] sm:$0xff]
  %v299 = vld [vmem:[%s1 + $0x848] sm:$0xff]
  %v300 = vld [vmem:[%s1 + $0x850] sm:$0xff]
  %v301 = vld [vmem:[%s1 + $0x858] sm:$0xff]
  %v302 = vld [vmem:[%s1 + $0x860] sm:$0xff]
  %v303 = vld [vmem:[%s1 + $0x868] sm:$0xff]
  %v304 = vld [vmem:[%s1 + $0x870] sm:$0xff]
  %v305 = vld [vmem:[%s1 + $0x878] sm:$0xff]
  %v306 = vld [vmem:[%s1 + $0x880] sm:$0xff]
  %v307 = vld [vmem:[%s1 + $0x888] sm:$0xff]
  %v308 = vld [vmem:[%s1 + $0x890] sm:$0xff]
  %v309 = vld [vmem:[%s1 + $0x898] sm:$0xff]
  %v310 = vld [vmem:[%s1 + $0x8a0] sm:$0xff]
  %v311 = vld [vmem:[%s1 + $0x8a8] sm:$0xff]
  %v312 = vld [vmem:[%s1 + $0x8b0] sm:$0xff]
  %v313 = vld [vmem:[%s1 + $0x8b8] sm:$0xff]
  %v314 = vld [vmem:[%s1 + $0x8c0] sm:$0xff]
  %v315 = vld [vmem:[%s1 + $0x8c8] sm:$0xff]
  %v316 = vld [vmem:[%s1 + $0x8d0] sm:$0xff]
  %v317 = vld [vmem:[%s1 + $0x8d8] sm:$0xff]
  %v318 = vld [vmem:[%s1 + $0x8e0] sm:$0xff]
  %v319 = vld [vmem:[%s1 + $0x8e8] sm:$0xff]
  %v320 = vld [vmem:[%s1 + $0x8f0] sm:$0xff]
  %v321 = vld [vmem:[%s1 + $0x8f8] sm:$0xff]
  %v322 = vld [vmem:[%s1 + $0x900] sm:$0xff]
  %v323 = vld [vmem:[%s1 + $0x908] sm:$0xff]
  %v324 = vld [vmem:[%s1 + $0x910] sm:$0xff]
  %v325 = vld [vmem:[%s1 + $0x918] sm:$0xff]
  %v326 = vld [vmem:[%s1 + $0x920] sm:$0xff]
  %v327 = vld [vmem:[%s1 + $0x928] sm:$0xff]
  %v328 = vld [vmem:[%s1 + $0x930] sm:$0xff]
  %v329 = vld [vmem:[%s1 + $0x938] sm:$0xff]
  %v330 = vld [vmem:[%s1 + $0x940] sm:$0xff]
  %v331 = vld [vmem:[%s1 + $0x948] sm:$0xff]
  %v332 = vld [vmem:[%s1 + $0x950] sm:$0xff]
  %v333 = vld [vmem:[%s1 + $0x958] sm:$0xff]
  %v334 = vld [vmem:[%s1 + $0x960] sm:$0xff]
  %v335 = vld [vmem:[%s1 + $0x968] sm:$0xff]
  %v336 = vld [vmem:[%s1 + $0x970] sm:$0xff]
  %v337 = vld [vmem:[%s1 + $0x978] sm:$0xff]
  %v338 = vld [vmem:[%s1 + $0x980] sm:$0xff]
  %v339 = vld [vmem:[%s1 + $0x988] sm:$0xff]
  %v340 = vld [vmem:[%s1 + $0x990] sm:$0xff]
  %v341 = vld [vmem:[%s1 + $0x998] sm:$0xff]
  %v342 = vld [vmem:[%s1 + $0x9a0] sm:$0xff]
  %v343 = vld [vmem:[%s1 + $0x9a8] sm:$0xff]
  %v344 = vld [vmem:[%s1 + $0x9b0] sm:$0xff]
  %v345 = vld [vmem:[%s1 + $0x9b8] sm:$0xff]
  %v346 = vld [vmem:[%s1 + $0x9c0] sm:$0xff]
  %v347 = vld [vmem:[%s1 + $0x9c8] sm:$0xff]
  %v348 = vld [vmem:[%s1 + $0x9d0] sm:$0xff]
  %v349 = vld [vmem:[%s1 + $0x9d8] sm:$0xff]
  %v350 = vld [vmem:[%s1 + $0x9e0] sm:$0xff]
  %v351 = vld [vmem:[%s1 + $0x9e8] sm:$0xff]
  %v352 = vld [vmem:[%s1 + $0x9f0] sm:$0xff]
  %v353 = vld [vmem:[%s1 + $0x9f8] sm:$0xff]
  %v354 = vld [vmem:[%s1 + $0xa00] sm:$0xff]
  %v355 = vld [vmem:[%s1 + $0xa08] sm:$0xff]
  %v356 = vld [vmem:[%s1 + $0xa10] sm:$0xff]
  %v357 = vld [vmem:[%s1 + $0xa18] sm:$0xff]
  %v358 = vld [vmem:[%s1 + $0xa20] sm:$0xff]
  %v359 = vld [vmem:[%s1 + $0xa28] sm:$0xff]
  %v360 = vld [vmem:[%s1 + $0xa30] sm:$0xff]
  %v361 = vld [vmem:[%s1 + $0xa38] sm:$0xff]
  %v362 = vld [vmem:[%s1 + $0xa40] sm:$0xff]
  %v363 = vld [vmem:[%s1 + $0xa48] sm:$0xff]
  %v364 = vld [vmem:[%s1 + $0xa50] sm:$0xff]
  %v365 = vld [vmem:[%s1 + $0xa58] sm:$0xff]
  %v366 = vld [vmem:[%s1 + $0xa60] sm:$0xff]
  %v367 = vld [vmem:[%s1 + $0xa68] sm:$0xff]
  %v368 = vld [vmem:[%s1 + $0xa70] sm:$0xff]
  %v369 = vld [vmem:[%s1 + $0xa78] sm:$0xff]
  %v370 = vld [vmem:[%s1 + $0xa80] sm:$0xff]
  %v371 = vld [vmem:[%s1 + $0xa88] sm:$0xff]
  %v372 = vld [vmem:[%s1 + $0xa90] sm:$0xff]
  %v373 = vld [vmem:[%s1 + $0xa98] sm:$0xff]
  %v374 = vld [vmem:[%s1 + $0xaa0] sm:$0xff]
  %v375 = vld [vmem:[%s1 + $0xaa8] sm:$0xff]
  %v376 = vld [vmem:[%s1 + $0xab0] sm:$0xff]
  %v377 = vld [vmem:[%s1 + $0xab8] sm:$0xff]
  %v378 = vld [vmem:[%s1 + $0xac0] sm:$0xff]
  %v379 = vld [vmem:[%s1 + $0xac8] sm:$0xff]
  %v380 = vld [vmem:[%s1 + $0xad0] sm:$0xff]
  %v381 = vld [vmem:[%s1 + $0xad8] sm:$0xff]
  %v382 = vld [vmem:[%s1 + $0xae0] sm:$0xff]
  %v383 = vld [vmem:[%s1 + $0xae8] sm:$0xff]
  %v384 = vld [vmem:[%s1 + $0xaf0] sm:$0xff]
  %v385 = vld [vmem:[%s1 + $0xaf8] sm:$0xff]
  %v386 = vld [vmem:[%s1 + $0xb00] sm:$0xff]
  %v387 = vld [vmem:[%s1 + $0xb08] sm:$0xff]
  %v388 = vld [vmem:[%s1 + $0xb10] sm:$0xff]
  %v389 = vld [vmem:[%s1 + $0xb18] sm:$0xff]
  %v390 = vld [vmem:[%s1 + $0xb20] sm:$0xff]
  %v391 = vld [vmem:[%s1 + $0xb28] sm:$0xff]
  %v392 = vld [vmem:[%s1 + $0xb30] sm:$0xff]
  %v393 = vld [vmem:[%s1 + $0xb38] sm:$0xff]
  %v394 = vld [vmem:[%s1 + $0xb40] sm:$0xff]
  %v395 = vld [vmem:[%s1 + $0xb48] sm:$0xff]
  %v396 = vld [vmem:[%s1 + $0xb50] sm:$0xff]
  %v397 = vld [vmem:[%s1 + $0xb58] sm:$0xff]
  %v398 = vld [vmem:[%s1 + $0xb60] sm:$0xff]
  %v399 = vld [vmem:[%s1 + $0xb68] sm:$0xff]
  %v400 = vld [vmem:[%s1 + $0xb70] sm:$0xff]
  %v401 = vld [vmem:[%s1 + $0xb78] sm:$0xff]
  %v402 = vld [vmem:[%s1 + $0xb80] sm:$0xff]
  %v403 = vld [vmem:[%s1 + $0xb88] sm:$0xff]
  %v404 = vld [vmem:[%s1 + $0xb90] sm:$0xff]
  %v405 = vld [vmem:[%s1 + $0xb98] sm:$0xff]
  %v406 = vld [vmem:[%s1 + $0xba0] sm:$0xff]
  %v407 = vld [vmem:[%s1 + $0xba8] sm:$0xff]
  %v408 = vld [vmem:[%s1 + $0xbb0] sm:$0xff]
  %v409 = vld [vmem:[%s1 + $0xbb8] sm:$0xff]
  %v410 = vld [vmem:[%s1 + $0xbc0] sm:$0xff]
  %v411 = vld [vmem:[%s1 + $0xbc8] sm:$0xff]
  %v412 = vld [vmem:[%s1 + $0xbd0] sm:$0xff]
  %v413 = vld [vmem:[%s1 + $0xbd8] sm:$0xff]
  %v414 = vld [vmem:[%s1 + $0xbe0] sm:$0xff]
  %v415 = vld [vmem:[%s1 + $0xbe8] sm:$0xff]
  %v416 = vld [vmem:[%s1 + $0xbf0] sm:$0xff]
  %v417 = vld [vmem:[%s1 + $0xbf8] sm:$0xff]
  %v418 = vld [vmem:[%s1 + $0xc00] sm:$0xff]
  %v419 = vld [vmem:[%s1 + $0xc08] sm:$0xff]
  %v420 = vld [vmem:[%s1 + $0xc10] sm:$0xff]
  %v421 = vld [vmem:[%s1 + $0xc18] sm:$0xff]
  %v422 = vld [vmem:[%s1 + $0xc20] sm:$0xff]
  %v423 = vld [vmem:[%s1 + $0xc28] sm:$0xff]
  %v424 = vld [vmem:[%s1 + $0xc30] sm:$0xff]
  %v425 = vld [vmem:[%s1 + $0xc38] sm:$0xff]
  %v426 = vld [vmem:[%s1 + $0xc40] sm:$0xff]
  %v427 = vld [vmem:[%s1 + $0xc48] sm:$0xff]
  %v428 = vld [vmem:[%s1 + $0xc50] sm:$0xff]
  %v429 = vld [vmem:[%s1 + $0xc58] sm:$0xff]
  %v430 = vld [vmem:[%s1 + $0xc60] sm:$0xff]
  %v431 = vld [vmem:[%s1 + $0xc68] sm:$0xff]
  %v432 = vld [vmem:[%s1 + $0xc70] sm:$0xff]
  %v433 = vld [vmem:[%s1 + $0xc78] sm:$0xff]
  %v434 = vld [vmem:[%s1 + $0xc80] sm:$0xff]
  %v435 = vld [vmem:[%s1 + $0xc88] sm:$0xff]
  %v436 = vld [vmem:[%s1 + $0xc90] sm:$0xff]
  %v437 = vld [vmem:[%s1 + $0xc98] sm:$0xff]
  %v438 = vld [vmem:[%s1 + $0xca0] sm:$0xff]
  %v439 = vld [vmem:[%s1 + $0xca8] sm:$0xff]
  %v440 = vld [vmem:[%s1 + $0xcb0] sm:$0xff]
  %v441 = vld [vmem:[%s1 + $0xcb8] sm:$0xff]
  %v442 = vld [vmem:[%s1 + $0xcc0] sm:$0xff]
  %v443 = vld [vmem:[%s1 + $0xcc8] sm:$0xff]
  %v444 = vld [vmem:[%s1 + $0xcd0] sm:$0xff]
  %v445 = vld [vmem:[%s1 + $0xcd8] sm:$0xff]
  %v446 = vld [vmem:[%s1 + $0xce0] sm:$0xff]
  %v447 = vld [vmem:[%s1 + $0xce8] sm:$0xff]
  %v448 = vld [vmem:[%s1 + $0xcf0] sm:$0xff]
  %v449 = vld [vmem:[%s1 + $0xcf8] sm:$0xff]
  %v450 = vld [vmem:[%s1 + $0xd00] sm:$0xff]
  %v451 = vld [vmem:[%s1 + $0xd08] sm:$0xff]
  %v452 = vld [vmem:[%s1 + $0xd10] sm:$0xff]
  %v453 = vld [vmem:[%s1 + $0xd18] sm:$0xff]
  %v454 = vld [vmem:[%s1 + $0xd20] sm:$0xff]
  %v455 = vld [vmem:[%s1 + $0xd28] sm:$0xff]
  %v456 = vld [vmem:[%s1 + $0xd30] sm:$0xff]
  %v457 = vld [vmem:[%s1 + $0xd38] sm:$0xff]
  %v458 = vld [vmem:[%s1 + $0xd40] sm:$0xff]
  %v459 = vld [vmem:[%s1 + $0xd48] sm:$0xff]
  %v460 = vld [vmem:[%s1 + $0xd50] sm:$0xff]
  %v461 = vld [vmem:[%s1 + $0xd58] sm:$0xff]
  %v462 = vld [vmem:[%s1 + $0xd60] sm:$0xff]
  %v463 = vld [vmem:[%s1 + $0xd68] sm:$0xff]
  %v464 = vld [vmem:[%s1 + $0xd70] sm:$0xff]
  %v465 = vld [vmem:[%s1 + $0xd78] sm:$0xff]
  %v466 = vld [vmem:[%s1 + $0xd80] sm:$0xff]
  %v467 = vld [vmem:[%s1 + $0xd88] sm:$0xff]
  %v468 = vld [vmem:[%s1 + $0xd90] sm:$0xff]
  %v469 = vld [vmem:[%s1 + $0xd98] sm:$0xff]
  %v470 = vld [vmem:[%s1 + $0xda0] sm:$0xff]
  %v471 = vld [vmem:[%s1 + $0xda8] sm:$0xff]
  %v472 = vld [vmem:[%s1 + $0xdb0] sm:$0xff]
  %v473 = vld [vmem:[%s1 + $0xdb8] sm:$0xff]
  %v474 = vld [vmem:[%s1 + $0xdc0] sm:$0xff]
  %v475 = vld [vmem:[%s1 + $0xdc8] sm:$0xff]
  %v476 = vld [vmem:[%s1 + $0xdd0] sm:$0xff]
  %v477 = vld [vmem:[%s1 + $0xdd8] sm:$0xff]
  %v478 = vld [vmem:[%s1 + $0xde0] sm:$0xff]
  %v479 = vld [vmem:[%s1 + $0xde8] sm:$0xff]
  %v480 = vld [vmem:[%s1 + $0xdf0] sm:$0xff]
  %v481 = vld [vmem:[%s1 + $0xdf8] sm:$0xff]
  %v482 = vld [vmem:[%s1 + $0xe00] sm:$0xff]
  %v483 = vld [vmem:[%s1 + $0xe08] sm:$0xff]
  %v484 = vld [vmem:[%s1 + $0xe10] sm:$0xff]
  %v485 = vld [vmem:[%s1 + $0xe18] sm:$0xff]
  %v486 = vld [vmem:[%s1 + $0xe20] sm:$0xff]
  %v487 = vld [vmem:[%s1 + $0xe28] sm:$0xff]
  %v488 = vld [vmem:[%s1 + $0xe30] sm:$0xff]
  %v489 = vld [vmem:[%s1 + $0xe38] sm:$0xff]
  %v490 = vld [vmem:[%s1 + $0xe40] sm:$0xff]
  %v491 = vld [vmem:[%s1 + $0xe48] sm:$0xff]
  %v492 = vld [vmem:[%s1 + $0xe50] sm:$0xff]
  %v493 = vld [vmem:[%s1 + $0xe58] sm:$0xff]
  %v494 = vld [vmem:[%s1 + $0xe60] sm:$0xff]
  %v495 = vld [vmem:[%s1 + $0xe68] sm:$0xff]
  %v496 = vld [vmem:[%s1 + $0xe70] sm:$0xff]
  %v497 = vld [vmem:[%s1 + $0xe78] sm:$0xff]
  %v498 = vld [vmem:[%s1 + $0xe80] sm:$0xff]
  %v499 = vld [vmem:[%s1 + $0xe88] sm:$0xff]
  %v500 = vld [vmem:[%s1 + $0xe90] sm:$0xff]
  %v501 = vld [vmem:[%s1 + $0xe98] sm:$0xff]
  %v502 = vld [vmem:[%s1 + $0xea0] sm:$0xff]
  %v503 = vld [vmem:[%s1 + $0xea8] sm:$0xff]
  %v504 = vld [vmem:[%s1 + $0xeb0] sm:$0xff]
  %v505 = vld [vmem:[%s1 + $0xeb8] sm:$0xff]
  %v506 = vld [vmem:[%s1 + $0xec0] sm:$0xff]
  %v507 = vld [vmem:[%s1 + $0xec8] sm:$0xff]
  %v508 = vld [vmem:[%s1 + $0xed0] sm:$0xff]
  %v509 = vld [vmem:[%s1 + $0xed8] sm:$0xff]
  %v510 = vld [vmem:[%s1 + $0xee0] sm:$0xff]
  %v511 = vld [vmem:[%s1 + $0xee8] sm:$0xff]
  %v512 = vld [vmem:[%s1 + $0xef0] sm:$0xff]
  %v513 = vld [vmem:[%s1 + $0xef8] sm:$0xff]
  %v514 = vld [vmem:[%s1 + $0xf00] sm:$0xff]
  %v515 = vld [vmem:[%s1 + $0xf08] sm:$0xff]
  %v516 = vld [vmem:[%s1 + $0xf10] sm:$0xff]
  %v517 = vld [vmem:[%s1 + $0xf18] sm:$0xff]
  %v518 = vld [vmem:[%s1 + $0xf20] sm:$0xff]
  %v519 = vld [vmem:[%s1 + $0xf28] sm:$0xff]
  %v520 = vld [vmem:[%s1 + $0xf30] sm:$0xff]
  %v521 = vld [vmem:[%s1 + $0xf38] sm:$0xff]
  %v522 = vld [vmem:[%s1 + $0xf40] sm:$0xff]
  %v523 = vld [vmem:[%s1 + $0xf48] sm:$0xff]
  %v524 = vld [vmem:[%s1 + $0xf50] sm:$0xff]
  %v525 = vld [vmem:[%s1 + $0xf58] sm:$0xff]
  %v526 = vld [vmem:[%s1 + $0xf60] sm:$0xff]
  %v527 = vld [vmem:[%s1 + $0xf68] sm:$0xff]
  %v528 = vld [vmem:[%s1 + $0xf70] sm:$0xff]
  %v529 = vld [vmem:[%s1 + $0xf78] sm:$0xff]
  %v530 = vld [vmem:[%s1 + $0xf80] sm:$0xff]
  %v531 = vld [vmem:[%s1 + $0xf88] sm:$0xff]
  %v532 = vld [vmem:[%s1 + $0xf90] sm:$0xff]
  %v533 = vld [vmem:[%s1 + $0xf98] sm:$0xff]
  %v534 = vld [vmem:[%s1 + $0xfa0] sm:$0xff]
  %v535 = vld [vmem:[%s1 + $0xfa8] sm:$0xff]
  %v536 = vld [vmem:[%s1 + $0xfb0] sm:$0xff]
  %v537 = vld [vmem:[%s1 + $0xfb8] sm:$0xff]
  %v538 = vld [vmem:[%s1 + $0xfc0] sm:$0xff]
  %v539 = vld [vmem:[%s1 + $0xfc8] sm:$0xff]
  %v540 = vld [vmem:[%s1 + $0xfd0] sm:$0xff]
  %v541 = vld [vmem:[%s1 + $0xfd8] sm:$0xff]
  %v542 = vld [vmem:[%s1 + $0xfe0] sm:$0xff]
  %v543 = vld [vmem:[%s1 + $0xfe8] sm:$0xff]
  %v544 = vld [vmem:[%s1 + $0xff0] sm:$0xff]
  %v545 = vld [vmem:[%s1 + $0xff8] sm:$0xff]
  %v546 = vld [vmem:[%s1 + $0x1000] sm:$0xff]
  %v547 = vld [vmem:[%s1 + $0x1008] sm:$0xff]
  %v548 = vld [vmem:[%s1 + $0x1010] sm:$0xff]
  %v549 = vld [vmem:[%s1 + $0x1018] sm:$0xff]
  %v550 = vld [vmem:[%s1 + $0x1020] sm:$0xff]
  %v551 = vld [vmem:[%s1 + $0x1028] sm:$0xff]
  %v552 = vld [vmem:[%s1 + $0x1030] sm:$0xff]
  %v553 = vld [vmem:[%s1 + $0x1038] sm:$0xff]
  %v554 = vld [vmem:[%s1 + $0x1040] sm:$0xff]
  %v555 = vld [vmem:[%s1 + $0x1048] sm:$0xff]
  %v556 = vld [vmem:[%s1 + $0x1050] sm:$0xff]
  %v557 = vld [vmem:[%s1 + $0x1058] sm:$0xff]
  %v558 = vld [vmem:[%s1 + $0x1060] sm:$0xff]
  %v559 = vld [vmem:[%s1 + $0x1068] sm:$0xff]
  %v560 = vld [vmem:[%s1 + $0x1070] sm:$0xff]
  %v561 = vld [vmem:[%s1 + $0x1078] sm:$0xff]
  %v562 = vld [vmem:[%s1 + $0x1080] sm:$0xff]
  %v563 = vld [vmem:[%s1 + $0x1088] sm:$0xff]
  %v564 = vld [vmem:[%s1 + $0x1090] sm:$0xff]
  %v565 = vld [vmem:[%s1 + $0x1098] sm:$0xff]
  %v566 = vld [vmem:[%s1 + $0x10a0] sm:$0xff]
  %v567 = vld [vmem:[%s1 + $0x10a8] sm:$0xff]
  %v568 = vld [vmem:[%s1 + $0x10b0] sm:$0xff]
  %v569 = vld [vmem:[%s1 + $0x10b8] sm:$0xff]
  %v570 = vld [vmem:[%s1 + $0x10c0] sm:$0xff]
  %v571 = vld [vmem:[%s1 + $0x10c8] sm:$0xff]
  %v572 = vld [vmem:[%s1 + $0x10d0] sm:$0xff]
  %v573 = vld [vmem:[%s1 + $0x10d8] sm:$0xff]
  %v574 = vld [vmem:[%s1 + $0x10e0] sm:$0xff]
  %v575 = vld [vmem:[%s1 + $0x10e8] sm:$0xff]
  %v576 = vld [vmem:[%s1 + $0x10f0] sm:$0xff]
  %v577 = vld [vmem:[%s1 + $0x10f8] sm:$0xff]
  %v578 = vld [vmem:[%s1 + $0x1100] sm:$0xff]
  %v579 = vld [vmem:[%s1 + $0x1108] sm:$0xff]
  %v580 = vld [vmem:[%s1 + $0x1110] sm:$0xff]
  %v581 = vld [vmem:[%s1 + $0x1118] sm:$0xff]
  %v582 = vld [vmem:[%s1 + $0x1120] sm:$0xff]
  %v583 = vld [vmem:[%s1 + $0x1128] sm:$0xff]
  %v584 = vld [vmem:[%s1 + $0x1130] sm:$0xff]
  %v585 = vld [vmem:[%s1 + $0x1138] sm:$0xff]
  %v586 = vld [vmem:[%s1 + $0x1140] sm:$0xff]
  %v587 = vld [vmem:[%s1 + $0x1148] sm:$0xff]
  %v588 = vld [vmem:[%s1 + $0x1150] sm:$0xff]
  %v589 = vld [vmem:[%s1 + $0x1158] sm:$0xff]
  %v590 = vld [vmem:[%s1 + $0x1160] sm:$0xff]
  %v591 = vld [vmem:[%s1 + $0x1168] sm:$0xff]
  %v592 = vld [vmem:[%s1 + $0x1170] sm:$0xff]
  %v593 = vld [vmem:[%s1 + $0x1178] sm:$0xff]
  %v594 = vld [vmem:[%s1 + $0x1180] sm:$0xff]
  %v595 = vld [vmem:[%s1 + $0x1188] sm:$0xff]
  %v596 = vld [vmem:[%s1 + $0x1190] sm:$0xff]
  %v597 = vld [vmem:[%s1 + $0x1198] sm:$0xff]
  %v598 = vld [vmem:[%s1 + $0x11a0] sm:$0xff]
  %v599 = vld [vmem:[%s1 + $0x11a8] sm:$0xff]
  %v600 = vld [vmem:[%s1 + $0x11b0] sm:$0xff]
  %v601 = vld [vmem:[%s1 + $0x11b8] sm:$0xff]
  %v602 = vld [vmem:[%s1 + $0x11c0] sm:$0xff]
  %v603 = vld [vmem:[%s1 + $0x11c8] sm:$0xff]
  %v604 = vld [vmem:[%s1 + $0x11d0] sm:$0xff]
  %v605 = vld [vmem:[%s1 + $0x11d8] sm:$0xff]
  %v606 = vld [vmem:[%s1 + $0x11e0] sm:$0xff]
  %v607 = vld [vmem:[%s1 + $0x11e8] sm:$0xff]
  %v608 = vld [vmem:[%s1 + $0x11f0] sm:$0xff]
  %v609 = vld [vmem:[%s1 + $0x11f8] sm:$0xff]
  %v610 = vld [vmem:[%s2] ss:$8 sm:$0xf]
  %v612 = vlaneseq
  %v613 = vshrl.u32 %v612, 7
  %v614 = vsub.s32 0, %v613
  %v615 = vrot.slane %v610, %v614
  %v616 = vlaneseq
  %v617 = vshrl.u32 %v616, 7
  %v618 = vsub.s32 1, %v617
  %v619 = vrot.slane %v610, %v618
  %v620 = vlaneseq
  %v621 = vshrl.u32 %v620, 7
  %v622 = vsub.s32 2, %v621
  %v623 = vrot.slane %v610, %v622
  %v624 = vlaneseq
  %v625 = vshrl.u32 %v624, 7
  %v626 = vsub.s32 3, %v625
  %v627 = vrot.slane %v610, %v626
  %v650 = vunpack.c.l.b16 %v16
  %v651 = vunpack.c.h.b16 %v16
  %v652 = vunpack.c.l.b16 %v17
  %v653 = vunpack.c.h.b16 %v17
  %v654 = vunpack.c.l.b16 %v18
  %v655 = vunpack.c.h.b16 %v18
  %v656 = vunpack.c.l.b16 %v19
  %v657 = vunpack.c.h.b16 %v19
  %v658 = vunpack.c.l.b16 %v20
  %v659 = vunpack.c.h.b16 %v20
  %v660 = vunpack.c.l.b16 %v21
  %v661 = vunpack.c.h.b16 %v21
  %v662 = vunpack.c.l.b16 %v22
  %v663 = vunpack.c.h.b16 %v22
  %v664 = vunpack.c.l.b16 %v23
  %v665 = vunpack.c.h.b16 %v23
  %v666 = vunpack.c.l.b16 %v24
  %v667 = vunpack.c.h.b16 %v24
  %v668 = vunpack.c.l.b16 %v25
  %v669 = vunpack.c.h.b16 %v25
  %v670 = vunpack.c.l.b16 %v26
  %v671 = vunpack.c.h.b16 %v26
  %v672 = vunpack.c.l.b16 %v27
  %v673 = vunpack.c.h.b16 %v27
  %v674 = vunpack.c.l.b16 %v28
  %v675 = vunpack.c.h.b16 %v28
  %v676 = vunpack.c.l.b16 %v29
  %v677 = vunpack.c.h.b16 %v29
  %v678 = vunpack.c.l.b16 %v30
  %v679 = vunpack.c.h.b16 %v30
  %v680 = vunpack.c.l.b16 %v31
  %v681 = vunpack.c.h.b16 %v31
  %v682 = vunpack.c.l.b16 %v32
  %v683 = vunpack.c.h.b16 %v32
  %v684 = vunpack.c.l.b16 %v33
  %v685 = vunpack.c.h.b16 %v33
  %v686 = vpack.c.b16 %v668, %v650
  %v687 = vpack.c.b16 %v669, %v651
  %v688 = vpack.c.b16 %v670, %v652
  %v689 = vpack.c.b16 %v671, %v653
  %v690 = vpack.c.b16 %v672, %v654
  %v691 = vpack.c.b16 %v673, %v655
  %v692 = vpack.c.b16 %v674, %v656
  %v693 = vpack.c.b16 %v675, %v657
  %v694 = vpack.c.b16 %v676, %v658
  %v695 = vpack.c.b16 %v677, %v659
  %v696 = vpack.c.b16 %v678, %v660
  %v697 = vpack.c.b16 %v679, %v661
  %v698 = vpack.c.b16 %v680, %v662
  %v699 = vpack.c.b16 %v681, %v663
  %v700 = vpack.c.b16 %v682, %v664
  %v701 = vpack.c.b16 %v683, %v665
  %v702 = vpack.c.b16 %v684, %v666
  %v703 = vpack.c.b16 %v685, %v667
  %v1298 = vunpack.c.l.b16 %v34
  %v1299 = vunpack.c.h.b16 %v34
  %v1300 = vunpack.c.l.b16 %v35
  %v1301 = vunpack.c.h.b16 %v35
  %v1302 = vunpack.c.l.b16 %v36
  %v1303 = vunpack.c.h.b16 %v36
  %v1304 = vunpack.c.l.b16 %v37
  %v1305 = vunpack.c.h.b16 %v37
  %v1306 = vunpack.c.l.b16 %v38
  %v1307 = vunpack.c.h.b16 %v38
  %v1308 = vunpack.c.l.b16 %v39
  %v1309 = vunpack.c.h.b16 %v39
  %v1310 = vunpack.c.l.b16 %v40
  %v1311 = vunpack.c.h.b16 %v40
  %v1312 = vunpack.c.l.b16 %v41
  %v1313 = vunpack.c.h.b16 %v41
  %v1314 = vunpack.c.l.b16 %v42
  %v1315 = vunpack.c.h.b16 %v42
  %v1316 = vunpack.c.l.b16 %v43
  %v1317 = vunpack.c.h.b16 %v43
  %v1318 = vunpack.c.l.b16 %v44
  %v1319 = vunpack.c.h.b16 %v44
  %v1320 = vunpack.c.l.b16 %v45
  %v1321 = vunpack.c.h.b16 %v45
  %v1322 = vunpack.c.l.b16 %v46
  %v1323 = vunpack.c.h.b16 %v46
  %v1324 = vunpack.c.l.b16 %v47
  %v1325 = vunpack.c.h.b16 %v47
  %v1326 = vunpack.c.l.b16 %v48
  %v1327 = vunpack.c.h.b16 %v48
  %v1328 = vunpack.c.l.b16 %v49
  %v1329 = vunpack.c.h.b16 %v49
  %v1330 = vunpack.c.l.b16 %v50
  %v1331 = vunpack.c.h.b16 %v50
  %v1332 = vunpack.c.l.b16 %v51
  %v1333 = vunpack.c.h.b16 %v51
  %v1334 = vunpack.c.l.b16 %v52
  %v1335 = vunpack.c.h.b16 %v52
  %v1336 = vunpack.c.l.b16 %v53
  %v1337 = vunpack.c.h.b16 %v53
  %v1338 = vunpack.c.l.b16 %v54
  %v1339 = vunpack.c.h.b16 %v54
  %v1340 = vunpack.c.l.b16 %v55
  %v1341 = vunpack.c.h.b16 %v55
  %v1342 = vunpack.c.l.b16 %v56
  %v1343 = vunpack.c.h.b16 %v56
  %v1344 = vunpack.c.l.b16 %v57
  %v1345 = vunpack.c.h.b16 %v57
  %v1346 = vunpack.c.l.b16 %v58
  %v1347 = vunpack.c.h.b16 %v58
  %v1348 = vunpack.c.l.b16 %v59
  %v1349 = vunpack.c.h.b16 %v59
  %v1350 = vunpack.c.l.b16 %v60
  %v1351 = vunpack.c.h.b16 %v60
  %v1352 = vunpack.c.l.b16 %v61
  %v1353 = vunpack.c.h.b16 %v61
  %v1354 = vunpack.c.l.b16 %v62
  %v1355 = vunpack.c.h.b16 %v62
  %v1356 = vunpack.c.l.b16 %v63
  %v1357 = vunpack.c.h.b16 %v63
  %v1358 = vunpack.c.l.b16 %v64
  %v1359 = vunpack.c.h.b16 %v64
  %v1360 = vunpack.c.l.b16 %v65
  %v1361 = vunpack.c.h.b16 %v65
  %v1362 = vunpack.c.l.b16 %v66
  %v1363 = vunpack.c.h.b16 %v66
  %v1364 = vunpack.c.l.b16 %v67
  %v1365 = vunpack.c.h.b16 %v67
  %v1366 = vunpack.c.l.b16 %v68
  %v1367 = vunpack.c.h.b16 %v68
  %v1368 = vunpack.c.l.b16 %v69
  %v1369 = vunpack.c.h.b16 %v69
  %v1370 = vunpack.c.l.b16 %v70
  %v1371 = vunpack.c.h.b16 %v70
  %v1372 = vunpack.c.l.b16 %v71
  %v1373 = vunpack.c.h.b16 %v71
  %v1374 = vunpack.c.l.b16 %v72
  %v1375 = vunpack.c.h.b16 %v72
  %v1376 = vunpack.c.l.b16 %v73
  %v1377 = vunpack.c.h.b16 %v73
  %v1378 = vunpack.c.l.b16 %v74
  %v1379 = vunpack.c.h.b16 %v74
  %v1380 = vunpack.c.l.b16 %v75
  %v1381 = vunpack.c.h.b16 %v75
  %v1382 = vunpack.c.l.b16 %v76
  %v1383 = vunpack.c.h.b16 %v76
  %v1384 = vunpack.c.l.b16 %v77
  %v1385 = vunpack.c.h.b16 %v77
  %v1386 = vunpack.c.l.b16 %v78
  %v1387 = vunpack.c.h.b16 %v78
  %v1388 = vunpack.c.l.b16 %v79
  %v1389 = vunpack.c.h.b16 %v79
  %v1390 = vunpack.c.l.b16 %v80
  %v1391 = vunpack.c.h.b16 %v80
  %v1392 = vunpack.c.l.b16 %v81
  %v1393 = vunpack.c.h.b16 %v81
  %v1394 = vunpack.c.l.b16 %v82
  %v1395 = vunpack.c.h.b16 %v82
  %v1396 = vunpack.c.l.b16 %v83
  %v1397 = vunpack.c.h.b16 %v83
  %v1398 = vunpack.c.l.b16 %v84
  %v1399 = vunpack.c.h.b16 %v84
  %v1400 = vunpack.c.l.b16 %v85
  %v1401 = vunpack.c.h.b16 %v85
  %v1402 = vunpack.c.l.b16 %v86
  %v1403 = vunpack.c.h.b16 %v86
  %v1404 = vunpack.c.l.b16 %v87
  %v1405 = vunpack.c.h.b16 %v87
  %v1406 = vunpack.c.l.b16 %v88
  %v1407 = vunpack.c.h.b16 %v88
  %v1408 = vunpack.c.l.b16 %v89
  %v1409 = vunpack.c.h.b16 %v89
  %v1410 = vunpack.c.l.b16 %v90
  %v1411 = vunpack.c.h.b16 %v90
  %v1412 = vunpack.c.l.b16 %v91
  %v1413 = vunpack.c.h.b16 %v91
  %v1414 = vunpack.c.l.b16 %v92
  %v1415 = vunpack.c.h.b16 %v92
  %v1416 = vunpack.c.l.b16 %v93
  %v1417 = vunpack.c.h.b16 %v93
  %v1418 = vunpack.c.l.b16 %v94
  %v1419 = vunpack.c.h.b16 %v94
  %v1420 = vunpack.c.l.b16 %v95
  %v1421 = vunpack.c.h.b16 %v95
  %v1422 = vunpack.c.l.b16 %v96
  %v1423 = vunpack.c.h.b16 %v96
  %v1424 = vunpack.c.l.b16 %v97
  %v1425 = vunpack.c.h.b16 %v97
  %v1426 = vunpack.c.l.b16 %v98
  %v1427 = vunpack.c.h.b16 %v98
  %v1428 = vunpack.c.l.b16 %v99
  %v1429 = vunpack.c.h.b16 %v99
  %v1430 = vunpack.c.l.b16 %v100
  %v1431 = vunpack.c.h.b16 %v100
  %v1432 = vunpack.c.l.b16 %v101
  %v1433 = vunpack.c.h.b16 %v101
  %v1434 = vunpack.c.l.b16 %v102
  %v1435 = vunpack.c.h.b16 %v102
  %v1436 = vunpack.c.l.b16 %v103
  %v1437 = vunpack.c.h.b16 %v103
  %v1438 = vunpack.c.l.b16 %v104
  %v1439 = vunpack.c.h.b16 %v104
  %v1440 = vunpack.c.l.b16 %v105
  %v1441 = vunpack.c.h.b16 %v105
  %v1442 = vunpack.c.l.b16 %v106
  %v1443 = vunpack.c.h.b16 %v106
  %v1444 = vunpack.c.l.b16 %v107
  %v1445 = vunpack.c.h.b16 %v107
  %v1446 = vunpack.c.l.b16 %v108
  %v1447 = vunpack.c.h.b16 %v108
  %v1448 = vunpack.c.l.b16 %v109
  %v1449 = vunpack.c.h.b16 %v109
  %v1450 = vunpack.c.l.b16 %v110
  %v1451 = vunpack.c.h.b16 %v110
  %v1452 = vunpack.c.l.b16 %v111
  %v1453 = vunpack.c.h.b16 %v111
  %v1454 = vunpack.c.l.b16 %v112
  %v1455 = vunpack.c.h.b16 %v112
  %v1456 = vunpack.c.l.b16 %v113
  %v1457 = vunpack.c.h.b16 %v113
  %v1458 = vunpack.c.l.b16 %v114
  %v1459 = vunpack.c.h.b16 %v114
  %v1460 = vunpack.c.l.b16 %v115
  %v1461 = vunpack.c.h.b16 %v115
  %v1462 = vunpack.c.l.b16 %v116
  %v1463 = vunpack.c.h.b16 %v116
  %v1464 = vunpack.c.l.b16 %v117
  %v1465 = vunpack.c.h.b16 %v117
  %v1466 = vunpack.c.l.b16 %v118
  %v1467 = vunpack.c.h.b16 %v118
  %v1468 = vunpack.c.l.b16 %v119
  %v1469 = vunpack.c.h.b16 %v119
  %v1470 = vunpack.c.l.b16 %v120
  %v1471 = vunpack.c.h.b16 %v120
  %v1472 = vunpack.c.l.b16 %v121
  %v1473 = vunpack.c.h.b16 %v121
  %v1474 = vunpack.c.l.b16 %v122
  %v1475 = vunpack.c.h.b16 %v122
  %v1476 = vunpack.c.l.b16 %v123
  %v1477 = vunpack.c.h.b16 %v123
  %v1478 = vunpack.c.l.b16 %v124
  %v1479 = vunpack.c.h.b16 %v124
  %v1480 = vunpack.c.l.b16 %v125
  %v1481 = vunpack.c.h.b16 %v125
  %v1482 = vunpack.c.l.b16 %v126
  %v1483 = vunpack.c.h.b16 %v126
  %v1484 = vunpack.c.l.b16 %v127
  %v1485 = vunpack.c.h.b16 %v127
  %v1486 = vunpack.c.l.b16 %v128
  %v1487 = vunpack.c.h.b16 %v128
  %v1488 = vunpack.c.l.b16 %v129
  %v1489 = vunpack.c.h.b16 %v129
  %v1490 = vunpack.c.l.b16 %v130
  %v1491 = vunpack.c.h.b16 %v130
  %v1492 = vunpack.c.l.b16 %v131
  %v1493 = vunpack.c.h.b16 %v131
  %v1494 = vunpack.c.l.b16 %v132
  %v1495 = vunpack.c.h.b16 %v132
  %v1496 = vunpack.c.l.b16 %v133
  %v1497 = vunpack.c.h.b16 %v133
  %v1498 = vunpack.c.l.b16 %v134
  %v1499 = vunpack.c.h.b16 %v134
  %v1500 = vunpack.c.l.b16 %v135
  %v1501 = vunpack.c.h.b16 %v135
  %v1502 = vunpack.c.l.b16 %v136
  %v1503 = vunpack.c.h.b16 %v136
  %v1504 = vunpack.c.l.b16 %v137
  %v1505 = vunpack.c.h.b16 %v137
  %v1506 = vunpack.c.l.b16 %v138
  %v1507 = vunpack.c.h.b16 %v138
  %v1508 = vunpack.c.l.b16 %v139
  %v1509 = vunpack.c.h.b16 %v139
  %v1510 = vunpack.c.l.b16 %v140
  %v1511 = vunpack.c.h.b16 %v140
  %v1512 = vunpack.c.l.b16 %v141
  %v1513 = vunpack.c.h.b16 %v141
  %v1514 = vunpack.c.l.b16 %v142
  %v1515 = vunpack.c.h.b16 %v142
  %v1516 = vunpack.c.l.b16 %v143
  %v1517 = vunpack.c.h.b16 %v143
  %v1518 = vunpack.c.l.b16 %v144
  %v1519 = vunpack.c.h.b16 %v144
  %v1520 = vunpack.c.l.b16 %v145
  %v1521 = vunpack.c.h.b16 %v145
  %v1522 = vunpack.c.l.b16 %v146
  %v1523 = vunpack.c.h.b16 %v146
  %v1524 = vunpack.c.l.b16 %v147
  %v1525 = vunpack.c.h.b16 %v147
  %v1526 = vunpack.c.l.b16 %v148
  %v1527 = vunpack.c.h.b16 %v148
  %v1528 = vunpack.c.l.b16 %v149
  %v1529 = vunpack.c.h.b16 %v149
  %v1530 = vunpack.c.l.b16 %v150
  %v1531 = vunpack.c.h.b16 %v150
  %v1532 = vunpack.c.l.b16 %v151
  %v1533 = vunpack.c.h.b16 %v151
  %v1534 = vunpack.c.l.b16 %v152
  %v1535 = vunpack.c.h.b16 %v152
  %v1536 = vunpack.c.l.b16 %v153
  %v1537 = vunpack.c.h.b16 %v153
  %v1538 = vunpack.c.l.b16 %v154
  %v1539 = vunpack.c.h.b16 %v154
  %v1540 = vunpack.c.l.b16 %v155
  %v1541 = vunpack.c.h.b16 %v155
  %v1542 = vunpack.c.l.b16 %v156
  %v1543 = vunpack.c.h.b16 %v156
  %v1544 = vunpack.c.l.b16 %v157
  %v1545 = vunpack.c.h.b16 %v157
  %v1546 = vunpack.c.l.b16 %v158
  %v1547 = vunpack.c.h.b16 %v158
  %v1548 = vunpack.c.l.b16 %v159
  %v1549 = vunpack.c.h.b16 %v159
  %v1550 = vunpack.c.l.b16 %v160
  %v1551 = vunpack.c.h.b16 %v160
  %v1552 = vunpack.c.l.b16 %v161
  %v1553 = vunpack.c.h.b16 %v161
  %v1554 = vunpack.c.l.b16 %v162
  %v1555 = vunpack.c.h.b16 %v162
  %v1556 = vunpack.c.l.b16 %v163
  %v1557 = vunpack.c.h.b16 %v163
  %v1558 = vunpack.c.l.b16 %v164
  %v1559 = vunpack.c.h.b16 %v164
  %v1560 = vunpack.c.l.b16 %v165
  %v1561 = vunpack.c.h.b16 %v165
  %v1562 = vunpack.c.l.b16 %v166
  %v1563 = vunpack.c.h.b16 %v166
  %v1564 = vunpack.c.l.b16 %v167
  %v1565 = vunpack.c.h.b16 %v167
  %v1566 = vunpack.c.l.b16 %v168
  %v1567 = vunpack.c.h.b16 %v168
  %v1568 = vunpack.c.l.b16 %v169
  %v1569 = vunpack.c.h.b16 %v169
  %v1570 = vunpack.c.l.b16 %v170
  %v1571 = vunpack.c.h.b16 %v170
  %v1572 = vunpack.c.l.b16 %v171
  %v1573 = vunpack.c.h.b16 %v171
  %v1574 = vunpack.c.l.b16 %v172
  %v1575 = vunpack.c.h.b16 %v172
  %v1576 = vunpack.c.l.b16 %v173
  %v1577 = vunpack.c.h.b16 %v173
  %v1578 = vunpack.c.l.b16 %v174
  %v1579 = vunpack.c.h.b16 %v174
  %v1580 = vunpack.c.l.b16 %v175
  %v1581 = vunpack.c.h.b16 %v175
  %v1582 = vunpack.c.l.b16 %v176
  %v1583 = vunpack.c.h.b16 %v176
  %v1584 = vunpack.c.l.b16 %v177
  %v1585 = vunpack.c.h.b16 %v177
  %v1586 = vunpack.c.l.b16 %v178
  %v1587 = vunpack.c.h.b16 %v178
  %v1588 = vunpack.c.l.b16 %v179
  %v1589 = vunpack.c.h.b16 %v179
  %v1590 = vunpack.c.l.b16 %v180
  %v1591 = vunpack.c.h.b16 %v180
  %v1592 = vunpack.c.l.b16 %v181
  %v1593 = vunpack.c.h.b16 %v181
  %v1594 = vunpack.c.l.b16 %v182
  %v1595 = vunpack.c.h.b16 %v182
  %v1596 = vunpack.c.l.b16 %v183
  %v1597 = vunpack.c.h.b16 %v183
  %v1598 = vunpack.c.l.b16 %v184
  %v1599 = vunpack.c.h.b16 %v184
  %v1600 = vunpack.c.l.b16 %v185
  %v1601 = vunpack.c.h.b16 %v185
  %v1602 = vunpack.c.l.b16 %v186
  %v1603 = vunpack.c.h.b16 %v186
  %v1604 = vunpack.c.l.b16 %v187
  %v1605 = vunpack.c.h.b16 %v187
  %v1606 = vunpack.c.l.b16 %v188
  %v1607 = vunpack.c.h.b16 %v188
  %v1608 = vunpack.c.l.b16 %v189
  %v1609 = vunpack.c.h.b16 %v189
  %v1610 = vunpack.c.l.b16 %v190
  %v1611 = vunpack.c.h.b16 %v190
  %v1612 = vunpack.c.l.b16 %v191
  %v1613 = vunpack.c.h.b16 %v191
  %v1614 = vunpack.c.l.b16 %v192
  %v1615 = vunpack.c.h.b16 %v192
  %v1616 = vunpack.c.l.b16 %v193
  %v1617 = vunpack.c.h.b16 %v193
  %v1618 = vunpack.c.l.b16 %v194
  %v1619 = vunpack.c.h.b16 %v194
  %v1620 = vunpack.c.l.b16 %v195
  %v1621 = vunpack.c.h.b16 %v195
  %v1622 = vunpack.c.l.b16 %v196
  %v1623 = vunpack.c.h.b16 %v196
  %v1624 = vunpack.c.l.b16 %v197
  %v1625 = vunpack.c.h.b16 %v197
  %v1626 = vunpack.c.l.b16 %v198
  %v1627 = vunpack.c.h.b16 %v198
  %v1628 = vunpack.c.l.b16 %v199
  %v1629 = vunpack.c.h.b16 %v199
  %v1630 = vunpack.c.l.b16 %v200
  %v1631 = vunpack.c.h.b16 %v200
  %v1632 = vunpack.c.l.b16 %v201
  %v1633 = vunpack.c.h.b16 %v201
  %v1634 = vunpack.c.l.b16 %v202
  %v1635 = vunpack.c.h.b16 %v202
  %v1636 = vunpack.c.l.b16 %v203
  %v1637 = vunpack.c.h.b16 %v203
  %v1638 = vunpack.c.l.b16 %v204
  %v1639 = vunpack.c.h.b16 %v204
  %v1640 = vunpack.c.l.b16 %v205
  %v1641 = vunpack.c.h.b16 %v205
  %v1642 = vunpack.c.l.b16 %v206
  %v1643 = vunpack.c.h.b16 %v206
  %v1644 = vunpack.c.l.b16 %v207
  %v1645 = vunpack.c.h.b16 %v207
  %v1646 = vunpack.c.l.b16 %v208
  %v1647 = vunpack.c.h.b16 %v208
  %v1648 = vunpack.c.l.b16 %v209
  %v1649 = vunpack.c.h.b16 %v209
  %v1650 = vunpack.c.l.b16 %v210
  %v1651 = vunpack.c.h.b16 %v210
  %v1652 = vunpack.c.l.b16 %v211
  %v1653 = vunpack.c.h.b16 %v211
  %v1654 = vunpack.c.l.b16 %v212
  %v1655 = vunpack.c.h.b16 %v212
  %v1656 = vunpack.c.l.b16 %v213
  %v1657 = vunpack.c.h.b16 %v213
  %v1658 = vunpack.c.l.b16 %v214
  %v1659 = vunpack.c.h.b16 %v214
  %v1660 = vunpack.c.l.b16 %v215
  %v1661 = vunpack.c.h.b16 %v215
  %v1662 = vunpack.c.l.b16 %v216
  %v1663 = vunpack.c.h.b16 %v216
  %v1664 = vunpack.c.l.b16 %v217
  %v1665 = vunpack.c.h.b16 %v217
  %v1666 = vunpack.c.l.b16 %v218
  %v1667 = vunpack.c.h.b16 %v218
  %v1668 = vunpack.c.l.b16 %v219
  %v1669 = vunpack.c.h.b16 %v219
  %v1670 = vunpack.c.l.b16 %v220
  %v1671 = vunpack.c.h.b16 %v220
  %v1672 = vunpack.c.l.b16 %v221
  %v1673 = vunpack.c.h.b16 %v221
  %v1674 = vunpack.c.l.b16 %v222
  %v1675 = vunpack.c.h.b16 %v222
  %v1676 = vunpack.c.l.b16 %v223
  %v1677 = vunpack.c.h.b16 %v223
  %v1678 = vunpack.c.l.b16 %v224
  %v1679 = vunpack.c.h.b16 %v224
  %v1680 = vunpack.c.l.b16 %v225
  %v1681 = vunpack.c.h.b16 %v225
  %v1682 = vunpack.c.l.b16 %v226
  %v1683 = vunpack.c.h.b16 %v226
  %v1684 = vunpack.c.l.b16 %v227
  %v1685 = vunpack.c.h.b16 %v227
  %v1686 = vunpack.c.l.b16 %v228
  %v1687 = vunpack.c.h.b16 %v228
  %v1688 = vunpack.c.l.b16 %v229
  %v1689 = vunpack.c.h.b16 %v229
  %v1690 = vunpack.c.l.b16 %v230
  %v1691 = vunpack.c.h.b16 %v230
  %v1692 = vunpack.c.l.b16 %v231
  %v1693 = vunpack.c.h.b16 %v231
  %v1694 = vunpack.c.l.b16 %v232
  %v1695 = vunpack.c.h.b16 %v232
  %v1696 = vunpack.c.l.b16 %v233
  %v1697 = vunpack.c.h.b16 %v233
  %v1698 = vunpack.c.l.b16 %v234
  %v1699 = vunpack.c.h.b16 %v234
  %v1700 = vunpack.c.l.b16 %v235
  %v1701 = vunpack.c.h.b16 %v235
  %v1702 = vunpack.c.l.b16 %v236
  %v1703 = vunpack.c.h.b16 %v236
  %v1704 = vunpack.c.l.b16 %v237
  %v1705 = vunpack.c.h.b16 %v237
  %v1706 = vunpack.c.l.b16 %v238
  %v1707 = vunpack.c.h.b16 %v238
  %v1708 = vunpack.c.l.b16 %v239
  %v1709 = vunpack.c.h.b16 %v239
  %v1710 = vunpack.c.l.b16 %v240
  %v1711 = vunpack.c.h.b16 %v240
  %v1712 = vunpack.c.l.b16 %v241
  %v1713 = vunpack.c.h.b16 %v241
  %v1714 = vunpack.c.l.b16 %v242
  %v1715 = vunpack.c.h.b16 %v242
  %v1716 = vunpack.c.l.b16 %v243
  %v1717 = vunpack.c.h.b16 %v243
  %v1718 = vunpack.c.l.b16 %v244
  %v1719 = vunpack.c.h.b16 %v244
  %v1720 = vunpack.c.l.b16 %v245
  %v1721 = vunpack.c.h.b16 %v245
  %v1722 = vunpack.c.l.b16 %v246
  %v1723 = vunpack.c.h.b16 %v246
  %v1724 = vunpack.c.l.b16 %v247
  %v1725 = vunpack.c.h.b16 %v247
  %v1726 = vunpack.c.l.b16 %v248
  %v1727 = vunpack.c.h.b16 %v248
  %v1728 = vunpack.c.l.b16 %v249
  %v1729 = vunpack.c.h.b16 %v249
  %v1730 = vunpack.c.l.b16 %v250
  %v1731 = vunpack.c.h.b16 %v250
  %v1732 = vunpack.c.l.b16 %v251
  %v1733 = vunpack.c.h.b16 %v251
  %v1734 = vunpack.c.l.b16 %v252
  %v1735 = vunpack.c.h.b16 %v252
  %v1736 = vunpack.c.l.b16 %v253
  %v1737 = vunpack.c.h.b16 %v253
  %v1738 = vunpack.c.l.b16 %v254
  %v1739 = vunpack.c.h.b16 %v254
  %v1740 = vunpack.c.l.b16 %v255
  %v1741 = vunpack.c.h.b16 %v255
  %v1742 = vunpack.c.l.b16 %v256
  %v1743 = vunpack.c.h.b16 %v256
  %v1744 = vunpack.c.l.b16 %v257
  %v1745 = vunpack.c.h.b16 %v257
  %v1746 = vunpack.c.l.b16 %v258
  %v1747 = vunpack.c.h.b16 %v258
  %v1748 = vunpack.c.l.b16 %v259
  %v1749 = vunpack.c.h.b16 %v259
  %v1750 = vunpack.c.l.b16 %v260
  %v1751 = vunpack.c.h.b16 %v260
  %v1752 = vunpack.c.l.b16 %v261
  %v1753 = vunpack.c.h.b16 %v261
  %v1754 = vunpack.c.l.b16 %v262
  %v1755 = vunpack.c.h.b16 %v262
  %v1756 = vunpack.c.l.b16 %v263
  %v1757 = vunpack.c.h.b16 %v263
  %v1758 = vunpack.c.l.b16 %v264
  %v1759 = vunpack.c.h.b16 %v264
  %v1760 = vunpack.c.l.b16 %v265
  %v1761 = vunpack.c.h.b16 %v265
  %v1762 = vunpack.c.l.b16 %v266
  %v1763 = vunpack.c.h.b16 %v266
  %v1764 = vunpack.c.l.b16 %v267
  %v1765 = vunpack.c.h.b16 %v267
  %v1766 = vunpack.c.l.b16 %v268
  %v1767 = vunpack.c.h.b16 %v268
  %v1768 = vunpack.c.l.b16 %v269
  %v1769 = vunpack.c.h.b16 %v269
  %v1770 = vunpack.c.l.b16 %v270
  %v1771 = vunpack.c.h.b16 %v270
  %v1772 = vunpack.c.l.b16 %v271
  %v1773 = vunpack.c.h.b16 %v271
  %v1774 = vunpack.c.l.b16 %v272
  %v1775 = vunpack.c.h.b16 %v272
  %v1776 = vunpack.c.l.b16 %v273
  %v1777 = vunpack.c.h.b16 %v273
  %v1778 = vunpack.c.l.b16 %v274
  %v1779 = vunpack.c.h.b16 %v274
  %v1780 = vunpack.c.l.b16 %v275
  %v1781 = vunpack.c.h.b16 %v275
  %v1782 = vunpack.c.l.b16 %v276
  %v1783 = vunpack.c.h.b16 %v276
  %v1784 = vunpack.c.l.b16 %v277
  %v1785 = vunpack.c.h.b16 %v277
  %v1786 = vunpack.c.l.b16 %v278
  %v1787 = vunpack.c.h.b16 %v278
  %v1788 = vunpack.c.l.b16 %v279
  %v1789 = vunpack.c.h.b16 %v279
  %v1790 = vunpack.c.l.b16 %v280
  %v1791 = vunpack.c.h.b16 %v280
  %v1792 = vunpack.c.l.b16 %v281
  %v1793 = vunpack.c.h.b16 %v281
  %v1794 = vunpack.c.l.b16 %v282
  %v1795 = vunpack.c.h.b16 %v282
  %v1796 = vunpack.c.l.b16 %v283
  %v1797 = vunpack.c.h.b16 %v283
  %v1798 = vunpack.c.l.b16 %v284
  %v1799 = vunpack.c.h.b16 %v284
  %v1800 = vunpack.c.l.b16 %v285
  %v1801 = vunpack.c.h.b16 %v285
  %v1802 = vunpack.c.l.b16 %v286
  %v1803 = vunpack.c.h.b16 %v286
  %v1804 = vunpack.c.l.b16 %v287
  %v1805 = vunpack.c.h.b16 %v287
  %v1806 = vunpack.c.l.b16 %v288
  %v1807 = vunpack.c.h.b16 %v288
  %v1808 = vunpack.c.l.b16 %v289
  %v1809 = vunpack.c.h.b16 %v289
  %v1810 = vunpack.c.l.b16 %v290
  %v1811 = vunpack.c.h.b16 %v290
  %v1812 = vunpack.c.l.b16 %v291
  %v1813 = vunpack.c.h.b16 %v291
  %v1814 = vunpack.c.l.b16 %v292
  %v1815 = vunpack.c.h.b16 %v292
  %v1816 = vunpack.c.l.b16 %v293
  %v1817 = vunpack.c.h.b16 %v293
  %v1818 = vunpack.c.l.b16 %v294
  %v1819 = vunpack.c.h.b16 %v294
  %v1820 = vunpack.c.l.b16 %v295
  %v1821 = vunpack.c.h.b16 %v295
  %v1822 = vunpack.c.l.b16 %v296
  %v1823 = vunpack.c.h.b16 %v296
  %v1824 = vunpack.c.l.b16 %v297
  %v1825 = vunpack.c.h.b16 %v297
  %v1826 = vunpack.c.l.b16 %v298
  %v1827 = vunpack.c.h.b16 %v298
  %v1828 = vunpack.c.l.b16 %v299
  %v1829 = vunpack.c.h.b16 %v299
  %v1830 = vunpack.c.l.b16 %v300
  %v1831 = vunpack.c.h.b16 %v300
  %v1832 = vunpack.c.l.b16 %v301
  %v1833 = vunpack.c.h.b16 %v301
  %v1834 = vunpack.c.l.b16 %v302
  %v1835 = vunpack.c.h.b16 %v302
  %v1836 = vunpack.c.l.b16 %v303
  %v1837 = vunpack.c.h.b16 %v303
  %v1838 = vunpack.c.l.b16 %v304
  %v1839 = vunpack.c.h.b16 %v304
  %v1840 = vunpack.c.l.b16 %v305
  %v1841 = vunpack.c.h.b16 %v305
  %v1842 = vunpack.c.l.b16 %v306
  %v1843 = vunpack.c.h.b16 %v306
  %v1844 = vunpack.c.l.b16 %v307
  %v1845 = vunpack.c.h.b16 %v307
  %v1846 = vunpack.c.l.b16 %v308
  %v1847 = vunpack.c.h.b16 %v308
  %v1848 = vunpack.c.l.b16 %v309
  %v1849 = vunpack.c.h.b16 %v309
  %v1850 = vunpack.c.l.b16 %v310
  %v1851 = vunpack.c.h.b16 %v310
  %v1852 = vunpack.c.l.b16 %v311
  %v1853 = vunpack.c.h.b16 %v311
  %v1854 = vunpack.c.l.b16 %v312
  %v1855 = vunpack.c.h.b16 %v312
  %v1856 = vunpack.c.l.b16 %v313
  %v1857 = vunpack.c.h.b16 %v313
  %v1858 = vunpack.c.l.b16 %v314
  %v1859 = vunpack.c.h.b16 %v314
  %v1860 = vunpack.c.l.b16 %v315
  %v1861 = vunpack.c.h.b16 %v315
  %v1862 = vunpack.c.l.b16 %v316
  %v1863 = vunpack.c.h.b16 %v316
  %v1864 = vunpack.c.l.b16 %v317
  %v1865 = vunpack.c.h.b16 %v317
  %v1866 = vunpack.c.l.b16 %v318
  %v1867 = vunpack.c.h.b16 %v318
  %v1868 = vunpack.c.l.b16 %v319
  %v1869 = vunpack.c.h.b16 %v319
  %v1870 = vunpack.c.l.b16 %v320
  %v1871 = vunpack.c.h.b16 %v320
  %v1872 = vunpack.c.l.b16 %v321
  %v1873 = vunpack.c.h.b16 %v321
  %v1874 = vunpack.c.l.b16 %v322
  %v1875 = vunpack.c.h.b16 %v322
  %v1876 = vunpack.c.l.b16 %v323
  %v1877 = vunpack.c.h.b16 %v323
  %v1878 = vunpack.c.l.b16 %v324
  %v1879 = vunpack.c.h.b16 %v324
  %v1880 = vunpack.c.l.b16 %v325
  %v1881 = vunpack.c.h.b16 %v325
  %v1882 = vunpack.c.l.b16 %v326
  %v1883 = vunpack.c.h.b16 %v326
  %v1884 = vunpack.c.l.b16 %v327
  %v1885 = vunpack.c.h.b16 %v327
  %v1886 = vunpack.c.l.b16 %v328
  %v1887 = vunpack.c.h.b16 %v328
  %v1888 = vunpack.c.l.b16 %v329
  %v1889 = vunpack.c.h.b16 %v329
  %v1890 = vunpack.c.l.b16 %v330
  %v1891 = vunpack.c.h.b16 %v330
  %v1892 = vunpack.c.l.b16 %v331
  %v1893 = vunpack.c.h.b16 %v331
  %v1894 = vunpack.c.l.b16 %v332
  %v1895 = vunpack.c.h.b16 %v332
  %v1896 = vunpack.c.l.b16 %v333
  %v1897 = vunpack.c.h.b16 %v333
  %v1898 = vunpack.c.l.b16 %v334
  %v1899 = vunpack.c.h.b16 %v334
  %v1900 = vunpack.c.l.b16 %v335
  %v1901 = vunpack.c.h.b16 %v335
  %v1902 = vunpack.c.l.b16 %v336
  %v1903 = vunpack.c.h.b16 %v336
  %v1904 = vunpack.c.l.b16 %v337
  %v1905 = vunpack.c.h.b16 %v337
  %v1906 = vunpack.c.l.b16 %v338
  %v1907 = vunpack.c.h.b16 %v338
  %v1908 = vunpack.c.l.b16 %v339
  %v1909 = vunpack.c.h.b16 %v339
  %v1910 = vunpack.c.l.b16 %v340
  %v1911 = vunpack.c.h.b16 %v340
  %v1912 = vunpack.c.l.b16 %v341
  %v1913 = vunpack.c.h.b16 %v341
  %v1914 = vunpack.c.l.b16 %v342
  %v1915 = vunpack.c.h.b16 %v342
  %v1916 = vunpack.c.l.b16 %v343
  %v1917 = vunpack.c.h.b16 %v343
  %v1918 = vunpack.c.l.b16 %v344
  %v1919 = vunpack.c.h.b16 %v344
  %v1920 = vunpack.c.l.b16 %v345
  %v1921 = vunpack.c.h.b16 %v345
  %v1922 = vunpack.c.l.b16 %v346
  %v1923 = vunpack.c.h.b16 %v346
  %v1924 = vunpack.c.l.b16 %v347
  %v1925 = vunpack.c.h.b16 %v347
  %v1926 = vunpack.c.l.b16 %v348
  %v1927 = vunpack.c.h.b16 %v348
  %v1928 = vunpack.c.l.b16 %v349
  %v1929 = vunpack.c.h.b16 %v349
  %v1930 = vunpack.c.l.b16 %v350
  %v1931 = vunpack.c.h.b16 %v350
  %v1932 = vunpack.c.l.b16 %v351
  %v1933 = vunpack.c.h.b16 %v351
  %v1934 = vunpack.c.l.b16 %v352
  %v1935 = vunpack.c.h.b16 %v352
  %v1936 = vunpack.c.l.b16 %v353
  %v1937 = vunpack.c.h.b16 %v353
  %v1938 = vunpack.c.l.b16 %v354
  %v1939 = vunpack.c.h.b16 %v354
  %v1940 = vunpack.c.l.b16 %v355
  %v1941 = vunpack.c.h.b16 %v355
  %v1942 = vunpack.c.l.b16 %v356
  %v1943 = vunpack.c.h.b16 %v356
  %v1944 = vunpack.c.l.b16 %v357
  %v1945 = vunpack.c.h.b16 %v357
  %v1946 = vunpack.c.l.b16 %v358
  %v1947 = vunpack.c.h.b16 %v358
  %v1948 = vunpack.c.l.b16 %v359
  %v1949 = vunpack.c.h.b16 %v359
  %v1950 = vunpack.c.l.b16 %v360
  %v1951 = vunpack.c.h.b16 %v360
  %v1952 = vunpack.c.l.b16 %v361
  %v1953 = vunpack.c.h.b16 %v361
  %v1954 = vunpack.c.l.b16 %v362
  %v1955 = vunpack.c.h.b16 %v362
  %v1956 = vunpack.c.l.b16 %v363
  %v1957 = vunpack.c.h.b16 %v363
  %v1958 = vunpack.c.l.b16 %v364
  %v1959 = vunpack.c.h.b16 %v364
  %v1960 = vunpack.c.l.b16 %v365
  %v1961 = vunpack.c.h.b16 %v365
  %v1962 = vunpack.c.l.b16 %v366
  %v1963 = vunpack.c.h.b16 %v366
  %v1964 = vunpack.c.l.b16 %v367
  %v1965 = vunpack.c.h.b16 %v367
  %v1966 = vunpack.c.l.b16 %v368
  %v1967 = vunpack.c.h.b16 %v368
  %v1968 = vunpack.c.l.b16 %v369
  %v1969 = vunpack.c.h.b16 %v369
  %v1970 = vunpack.c.l.b16 %v370
  %v1971 = vunpack.c.h.b16 %v370
  %v1972 = vunpack.c.l.b16 %v371
  %v1973 = vunpack.c.h.b16 %v371
  %v1974 = vunpack.c.l.b16 %v372
  %v1975 = vunpack.c.h.b16 %v372
  %v1976 = vunpack.c.l.b16 %v373
  %v1977 = vunpack.c.h.b16 %v373
  %v1978 = vunpack.c.l.b16 %v374
  %v1979 = vunpack.c.h.b16 %v374
  %v1980 = vunpack.c.l.b16 %v375
  %v1981 = vunpack.c.h.b16 %v375
  %v1982 = vunpack.c.l.b16 %v376
  %v1983 = vunpack.c.h.b16 %v376
  %v1984 = vunpack.c.l.b16 %v377
  %v1985 = vunpack.c.h.b16 %v377
  %v1986 = vunpack.c.l.b16 %v378
  %v1987 = vunpack.c.h.b16 %v378
  %v1988 = vunpack.c.l.b16 %v379
  %v1989 = vunpack.c.h.b16 %v379
  %v1990 = vunpack.c.l.b16 %v380
  %v1991 = vunpack.c.h.b16 %v380
  %v1992 = vunpack.c.l.b16 %v381
  %v1993 = vunpack.c.h.b16 %v381
  %v1994 = vunpack.c.l.b16 %v382
  %v1995 = vunpack.c.h.b16 %v382
  %v1996 = vunpack.c.l.b16 %v383
  %v1997 = vunpack.c.h.b16 %v383
  %v1998 = vunpack.c.l.b16 %v384
  %v1999 = vunpack.c.h.b16 %v384
  %v2000 = vunpack.c.l.b16 %v385
  %v2001 = vunpack.c.h.b16 %v385
  %v2002 = vunpack.c.l.b16 %v386
  %v2003 = vunpack.c.h.b16 %v386
  %v2004 = vunpack.c.l.b16 %v387
  %v2005 = vunpack.c.h.b16 %v387
  %v2006 = vunpack.c.l.b16 %v388
  %v2007 = vunpack.c.h.b16 %v388
  %v2008 = vunpack.c.l.b16 %v389
  %v2009 = vunpack.c.h.b16 %v389
  %v2010 = vunpack.c.l.b16 %v390
  %v2011 = vunpack.c.h.b16 %v390
  %v2012 = vunpack.c.l.b16 %v391
  %v2013 = vunpack.c.h.b16 %v391
  %v2014 = vunpack.c.l.b16 %v392
  %v2015 = vunpack.c.h.b16 %v392
  %v2016 = vunpack.c.l.b16 %v393
  %v2017 = vunpack.c.h.b16 %v393
  %v2018 = vunpack.c.l.b16 %v394
  %v2019 = vunpack.c.h.b16 %v394
  %v2020 = vunpack.c.l.b16 %v395
  %v2021 = vunpack.c.h.b16 %v395
  %v2022 = vunpack.c.l.b16 %v396
  %v2023 = vunpack.c.h.b16 %v396
  %v2024 = vunpack.c.l.b16 %v397
  %v2025 = vunpack.c.h.b16 %v397
  %v2026 = vunpack.c.l.b16 %v398
  %v2027 = vunpack.c.h.b16 %v398
  %v2028 = vunpack.c.l.b16 %v399
  %v2029 = vunpack.c.h.b16 %v399
  %v2030 = vunpack.c.l.b16 %v400
  %v2031 = vunpack.c.h.b16 %v400
  %v2032 = vunpack.c.l.b16 %v401
  %v2033 = vunpack.c.h.b16 %v401
  %v2034 = vunpack.c.l.b16 %v402
  %v2035 = vunpack.c.h.b16 %v402
  %v2036 = vunpack.c.l.b16 %v403
  %v2037 = vunpack.c.h.b16 %v403
  %v2038 = vunpack.c.l.b16 %v404
  %v2039 = vunpack.c.h.b16 %v404
  %v2040 = vunpack.c.l.b16 %v405
  %v2041 = vunpack.c.h.b16 %v405
  %v2042 = vunpack.c.l.b16 %v406
  %v2043 = vunpack.c.h.b16 %v406
  %v2044 = vunpack.c.l.b16 %v407
  %v2045 = vunpack.c.h.b16 %v407
  %v2046 = vunpack.c.l.b16 %v408
  %v2047 = vunpack.c.h.b16 %v408
  %v2048 = vunpack.c.l.b16 %v409
  %v2049 = vunpack.c.h.b16 %v409
  %v2050 = vunpack.c.l.b16 %v410
  %v2051 = vunpack.c.h.b16 %v410
  %v2052 = vunpack.c.l.b16 %v411
  %v2053 = vunpack.c.h.b16 %v411
  %v2054 = vunpack.c.l.b16 %v412
  %v2055 = vunpack.c.h.b16 %v412
  %v2056 = vunpack.c.l.b16 %v413
  %v2057 = vunpack.c.h.b16 %v413
  %v2058 = vunpack.c.l.b16 %v414
  %v2059 = vunpack.c.h.b16 %v414
  %v2060 = vunpack.c.l.b16 %v415
  %v2061 = vunpack.c.h.b16 %v415
  %v2062 = vunpack.c.l.b16 %v416
  %v2063 = vunpack.c.h.b16 %v416
  %v2064 = vunpack.c.l.b16 %v417
  %v2065 = vunpack.c.h.b16 %v417
  %v2066 = vunpack.c.l.b16 %v418
  %v2067 = vunpack.c.h.b16 %v418
  %v2068 = vunpack.c.l.b16 %v419
  %v2069 = vunpack.c.h.b16 %v419
  %v2070 = vunpack.c.l.b16 %v420
  %v2071 = vunpack.c.h.b16 %v420
  %v2072 = vunpack.c.l.b16 %v421
  %v2073 = vunpack.c.h.b16 %v421
  %v2074 = vunpack.c.l.b16 %v422
  %v2075 = vunpack.c.h.b16 %v422
  %v2076 = vunpack.c.l.b16 %v423
  %v2077 = vunpack.c.h.b16 %v423
  %v2078 = vunpack.c.l.b16 %v424
  %v2079 = vunpack.c.h.b16 %v424
  %v2080 = vunpack.c.l.b16 %v425
  %v2081 = vunpack.c.h.b16 %v425
  %v2082 = vunpack.c.l.b16 %v426
  %v2083 = vunpack.c.h.b16 %v426
  %v2084 = vunpack.c.l.b16 %v427
  %v2085 = vunpack.c.h.b16 %v427
  %v2086 = vunpack.c.l.b16 %v428
  %v2087 = vunpack.c.h.b16 %v428
  %v2088 = vunpack.c.l.b16 %v429
  %v2089 = vunpack.c.h.b16 %v429
  %v2090 = vunpack.c.l.b16 %v430
  %v2091 = vunpack.c.h.b16 %v430
  %v2092 = vunpack.c.l.b16 %v431
  %v2093 = vunpack.c.h.b16 %v431
  %v2094 = vunpack.c.l.b16 %v432
  %v2095 = vunpack.c.h.b16 %v432
  %v2096 = vunpack.c.l.b16 %v433
  %v2097 = vunpack.c.h.b16 %v433
  %v2098 = vunpack.c.l.b16 %v434
  %v2099 = vunpack.c.h.b16 %v434
  %v2100 = vunpack.c.l.b16 %v435
  %v2101 = vunpack.c.h.b16 %v435
  %v2102 = vunpack.c.l.b16 %v436
  %v2103 = vunpack.c.h.b16 %v436
  %v2104 = vunpack.c.l.b16 %v437
  %v2105 = vunpack.c.h.b16 %v437
  %v2106 = vunpack.c.l.b16 %v438
  %v2107 = vunpack.c.h.b16 %v438
  %v2108 = vunpack.c.l.b16 %v439
  %v2109 = vunpack.c.h.b16 %v439
  %v2110 = vunpack.c.l.b16 %v440
  %v2111 = vunpack.c.h.b16 %v440
  %v2112 = vunpack.c.l.b16 %v441
  %v2113 = vunpack.c.h.b16 %v441
  %v2114 = vunpack.c.l.b16 %v442
  %v2115 = vunpack.c.h.b16 %v442
  %v2116 = vunpack.c.l.b16 %v443
  %v2117 = vunpack.c.h.b16 %v443
  %v2118 = vunpack.c.l.b16 %v444
  %v2119 = vunpack.c.h.b16 %v444
  %v2120 = vunpack.c.l.b16 %v445
  %v2121 = vunpack.c.h.b16 %v445
  %v2122 = vunpack.c.l.b16 %v446
  %v2123 = vunpack.c.h.b16 %v446
  %v2124 = vunpack.c.l.b16 %v447
  %v2125 = vunpack.c.h.b16 %v447
  %v2126 = vunpack.c.l.b16 %v448
  %v2127 = vunpack.c.h.b16 %v448
  %v2128 = vunpack.c.l.b16 %v449
  %v2129 = vunpack.c.h.b16 %v449
  %v2130 = vunpack.c.l.b16 %v450
  %v2131 = vunpack.c.h.b16 %v450
  %v2132 = vunpack.c.l.b16 %v451
  %v2133 = vunpack.c.h.b16 %v451
  %v2134 = vunpack.c.l.b16 %v452
  %v2135 = vunpack.c.h.b16 %v452
  %v2136 = vunpack.c.l.b16 %v453
  %v2137 = vunpack.c.h.b16 %v453
  %v2138 = vunpack.c.l.b16 %v454
  %v2139 = vunpack.c.h.b16 %v454
  %v2140 = vunpack.c.l.b16 %v455
  %v2141 = vunpack.c.h.b16 %v455
  %v2142 = vunpack.c.l.b16 %v456
  %v2143 = vunpack.c.h.b16 %v456
  %v2144 = vunpack.c.l.b16 %v457
  %v2145 = vunpack.c.h.b16 %v457
  %v2146 = vunpack.c.l.b16 %v458
  %v2147 = vunpack.c.h.b16 %v458
  %v2148 = vunpack.c.l.b16 %v459
  %v2149 = vunpack.c.h.b16 %v459
  %v2150 = vunpack.c.l.b16 %v460
  %v2151 = vunpack.c.h.b16 %v460
  %v2152 = vunpack.c.l.b16 %v461
  %v2153 = vunpack.c.h.b16 %v461
  %v2154 = vunpack.c.l.b16 %v462
  %v2155 = vunpack.c.h.b16 %v462
  %v2156 = vunpack.c.l.b16 %v463
  %v2157 = vunpack.c.h.b16 %v463
  %v2158 = vunpack.c.l.b16 %v464
  %v2159 = vunpack.c.h.b16 %v464
  %v2160 = vunpack.c.l.b16 %v465
  %v2161 = vunpack.c.h.b16 %v465
  %v2162 = vunpack.c.l.b16 %v466
  %v2163 = vunpack.c.h.b16 %v466
  %v2164 = vunpack.c.l.b16 %v467
  %v2165 = vunpack.c.h.b16 %v467
  %v2166 = vunpack.c.l.b16 %v468
  %v2167 = vunpack.c.h.b16 %v468
  %v2168 = vunpack.c.l.b16 %v469
  %v2169 = vunpack.c.h.b16 %v469
  %v2170 = vunpack.c.l.b16 %v470
  %v2171 = vunpack.c.h.b16 %v470
  %v2172 = vunpack.c.l.b16 %v471
  %v2173 = vunpack.c.h.b16 %v471
  %v2174 = vunpack.c.l.b16 %v472
  %v2175 = vunpack.c.h.b16 %v472
  %v2176 = vunpack.c.l.b16 %v473
  %v2177 = vunpack.c.h.b16 %v473
  %v2178 = vunpack.c.l.b16 %v474
  %v2179 = vunpack.c.h.b16 %v474
  %v2180 = vunpack.c.l.b16 %v475
  %v2181 = vunpack.c.h.b16 %v475
  %v2182 = vunpack.c.l.b16 %v476
  %v2183 = vunpack.c.h.b16 %v476
  %v2184 = vunpack.c.l.b16 %v477
  %v2185 = vunpack.c.h.b16 %v477
  %v2186 = vunpack.c.l.b16 %v478
  %v2187 = vunpack.c.h.b16 %v478
  %v2188 = vunpack.c.l.b16 %v479
  %v2189 = vunpack.c.h.b16 %v479
  %v2190 = vunpack.c.l.b16 %v480
  %v2191 = vunpack.c.h.b16 %v480
  %v2192 = vunpack.c.l.b16 %v481
  %v2193 = vunpack.c.h.b16 %v481
  %v2194 = vunpack.c.l.b16 %v482
  %v2195 = vunpack.c.h.b16 %v482
  %v2196 = vunpack.c.l.b16 %v483
  %v2197 = vunpack.c.h.b16 %v483
  %v2198 = vunpack.c.l.b16 %v484
  %v2199 = vunpack.c.h.b16 %v484
  %v2200 = vunpack.c.l.b16 %v485
  %v2201 = vunpack.c.h.b16 %v485
  %v2202 = vunpack.c.l.b16 %v486
  %v2203 = vunpack.c.h.b16 %v486
  %v2204 = vunpack.c.l.b16 %v487
  %v2205 = vunpack.c.h.b16 %v487
  %v2206 = vunpack.c.l.b16 %v488
  %v2207 = vunpack.c.h.b16 %v488
  %v2208 = vunpack.c.l.b16 %v489
  %v2209 = vunpack.c.h.b16 %v489
  %v2210 = vunpack.c.l.b16 %v490
  %v2211 = vunpack.c.h.b16 %v490
  %v2212 = vunpack.c.l.b16 %v491
  %v2213 = vunpack.c.h.b16 %v491
  %v2214 = vunpack.c.l.b16 %v492
  %v2215 = vunpack.c.h.b16 %v492
  %v2216 = vunpack.c.l.b16 %v493
  %v2217 = vunpack.c.h.b16 %v493
  %v2218 = vunpack.c.l.b16 %v494
  %v2219 = vunpack.c.h.b16 %v494
  %v2220 = vunpack.c.l.b16 %v495
  %v2221 = vunpack.c.h.b16 %v495
  %v2222 = vunpack.c.l.b16 %v496
  %v2223 = vunpack.c.h.b16 %v496
  %v2224 = vunpack.c.l.b16 %v497
  %v2225 = vunpack.c.h.b16 %v497
  %v2226 = vunpack.c.l.b16 %v498
  %v2227 = vunpack.c.h.b16 %v498
  %v2228 = vunpack.c.l.b16 %v499
  %v2229 = vunpack.c.h.b16 %v499
  %v2230 = vunpack.c.l.b16 %v500
  %v2231 = vunpack.c.h.b16 %v500
  %v2232 = vunpack.c.l.b16 %v501
  %v2233 = vunpack.c.h.b16 %v501
  %v2234 = vunpack.c.l.b16 %v502
  %v2235 = vunpack.c.h.b16 %v502
  %v2236 = vunpack.c.l.b16 %v503
  %v2237 = vunpack.c.h.b16 %v503
  %v2238 = vunpack.c.l.b16 %v504
  %v2239 = vunpack.c.h.b16 %v504
  %v2240 = vunpack.c.l.b16 %v505
  %v2241 = vunpack.c.h.b16 %v505
  %v2242 = vunpack.c.l.b16 %v506
  %v2243 = vunpack.c.h.b16 %v506
  %v2244 = vunpack.c.l.b16 %v507
  %v2245 = vunpack.c.h.b16 %v507
  %v2246 = vunpack.c.l.b16 %v508
  %v2247 = vunpack.c.h.b16 %v508
  %v2248 = vunpack.c.l.b16 %v509
  %v2249 = vunpack.c.h.b16 %v509
  %v2250 = vunpack.c.l.b16 %v510
  %v2251 = vunpack.c.h.b16 %v510
  %v2252 = vunpack.c.l.b16 %v511
  %v2253 = vunpack.c.h.b16 %v511
  %v2254 = vunpack.c.l.b16 %v512
  %v2255 = vunpack.c.h.b16 %v512
  %v2256 = vunpack.c.l.b16 %v513
  %v2257 = vunpack.c.h.b16 %v513
  %v2258 = vunpack.c.l.b16 %v514
  %v2259 = vunpack.c.h.b16 %v514
  %v2260 = vunpack.c.l.b16 %v515
  %v2261 = vunpack.c.h.b16 %v515
  %v2262 = vunpack.c.l.b16 %v516
  %v2263 = vunpack.c.h.b16 %v516
  %v2264 = vunpack.c.l.b16 %v517
  %v2265 = vunpack.c.h.b16 %v517
  %v2266 = vunpack.c.l.b16 %v518
  %v2267 = vunpack.c.h.b16 %v518
  %v2268 = vunpack.c.l.b16 %v519
  %v2269 = vunpack.c.h.b16 %v519
  %v2270 = vunpack.c.l.b16 %v520
  %v2271 = vunpack.c.h.b16 %v520
  %v2272 = vunpack.c.l.b16 %v521
  %v2273 = vunpack.c.h.b16 %v521
  %v2274 = vunpack.c.l.b16 %v522
  %v2275 = vunpack.c.h.b16 %v522
  %v2276 = vunpack.c.l.b16 %v523
  %v2277 = vunpack.c.h.b16 %v523
  %v2278 = vunpack.c.l.b16 %v524
  %v2279 = vunpack.c.h.b16 %v524
  %v2280 = vunpack.c.l.b16 %v525
  %v2281 = vunpack.c.h.b16 %v525
  %v2282 = vunpack.c.l.b16 %v526
  %v2283 = vunpack.c.h.b16 %v526
  %v2284 = vunpack.c.l.b16 %v527
  %v2285 = vunpack.c.h.b16 %v527
  %v2286 = vunpack.c.l.b16 %v528
  %v2287 = vunpack.c.h.b16 %v528
  %v2288 = vunpack.c.l.b16 %v529
  %v2289 = vunpack.c.h.b16 %v529
  %v2290 = vunpack.c.l.b16 %v530
  %v2291 = vunpack.c.h.b16 %v530
  %v2292 = vunpack.c.l.b16 %v531
  %v2293 = vunpack.c.h.b16 %v531
  %v2294 = vunpack.c.l.b16 %v532
  %v2295 = vunpack.c.h.b16 %v532
  %v2296 = vunpack.c.l.b16 %v533
  %v2297 = vunpack.c.h.b16 %v533
  %v2298 = vunpack.c.l.b16 %v534
  %v2299 = vunpack.c.h.b16 %v534
  %v2300 = vunpack.c.l.b16 %v535
  %v2301 = vunpack.c.h.b16 %v535
  %v2302 = vunpack.c.l.b16 %v536
  %v2303 = vunpack.c.h.b16 %v536
  %v2304 = vunpack.c.l.b16 %v537
  %v2305 = vunpack.c.h.b16 %v537
  %v2306 = vunpack.c.l.b16 %v538
  %v2307 = vunpack.c.h.b16 %v538
  %v2308 = vunpack.c.l.b16 %v539
  %v2309 = vunpack.c.h.b16 %v539
  %v2310 = vunpack.c.l.b16 %v540
  %v2311 = vunpack.c.h.b16 %v540
  %v2312 = vunpack.c.l.b16 %v541
  %v2313 = vunpack.c.h.b16 %v541
  %v2314 = vunpack.c.l.b16 %v542
  %v2315 = vunpack.c.h.b16 %v542
  %v2316 = vunpack.c.l.b16 %v543
  %v2317 = vunpack.c.h.b16 %v543
  %v2318 = vunpack.c.l.b16 %v544
  %v2319 = vunpack.c.h.b16 %v544
  %v2320 = vunpack.c.l.b16 %v545
  %v2321 = vunpack.c.h.b16 %v545
  %v2322 = vunpack.c.l.b16 %v546
  %v2323 = vunpack.c.h.b16 %v546
  %v2324 = vunpack.c.l.b16 %v547
  %v2325 = vunpack.c.h.b16 %v547
  %v2326 = vunpack.c.l.b16 %v548
  %v2327 = vunpack.c.h.b16 %v548
  %v2328 = vunpack.c.l.b16 %v549
  %v2329 = vunpack.c.h.b16 %v549
  %v2330 = vunpack.c.l.b16 %v550
  %v2331 = vunpack.c.h.b16 %v550
  %v2332 = vunpack.c.l.b16 %v551
  %v2333 = vunpack.c.h.b16 %v551
  %v2334 = vunpack.c.l.b16 %v552
  %v2335 = vunpack.c.h.b16 %v552
  %v2336 = vunpack.c.l.b16 %v553
  %v2337 = vunpack.c.h.b16 %v553
  %v2338 = vunpack.c.l.b16 %v554
  %v2339 = vunpack.c.h.b16 %v554
  %v2340 = vunpack.c.l.b16 %v555
  %v2341 = vunpack.c.h.b16 %v555
  %v2342 = vunpack.c.l.b16 %v556
  %v2343 = vunpack.c.h.b16 %v556
  %v2344 = vunpack.c.l.b16 %v557
  %v2345 = vunpack.c.h.b16 %v557
  %v2346 = vunpack.c.l.b16 %v558
  %v2347 = vunpack.c.h.b16 %v558
  %v2348 = vunpack.c.l.b16 %v559
  %v2349 = vunpack.c.h.b16 %v559
  %v2350 = vunpack.c.l.b16 %v560
  %v2351 = vunpack.c.h.b16 %v560
  %v2352 = vunpack.c.l.b16 %v561
  %v2353 = vunpack.c.h.b16 %v561
  %v2354 = vunpack.c.l.b16 %v562
  %v2355 = vunpack.c.h.b16 %v562
  %v2356 = vunpack.c.l.b16 %v563
  %v2357 = vunpack.c.h.b16 %v563
  %v2358 = vunpack.c.l.b16 %v564
  %v2359 = vunpack.c.h.b16 %v564
  %v2360 = vunpack.c.l.b16 %v565
  %v2361 = vunpack.c.h.b16 %v565
  %v2362 = vunpack.c.l.b16 %v566
  %v2363 = vunpack.c.h.b16 %v566
  %v2364 = vunpack.c.l.b16 %v567
  %v2365 = vunpack.c.h.b16 %v567
  %v2366 = vunpack.c.l.b16 %v568
  %v2367 = vunpack.c.h.b16 %v568
  %v2368 = vunpack.c.l.b16 %v569
  %v2369 = vunpack.c.h.b16 %v569
  %v2370 = vunpack.c.l.b16 %v570
  %v2371 = vunpack.c.h.b16 %v570
  %v2372 = vunpack.c.l.b16 %v571
  %v2373 = vunpack.c.h.b16 %v571
  %v2374 = vunpack.c.l.b16 %v572
  %v2375 = vunpack.c.h.b16 %v572
  %v2376 = vunpack.c.l.b16 %v573
  %v2377 = vunpack.c.h.b16 %v573
  %v2378 = vunpack.c.l.b16 %v574
  %v2379 = vunpack.c.h.b16 %v574
  %v2380 = vunpack.c.l.b16 %v575
  %v2381 = vunpack.c.h.b16 %v575
  %v2382 = vunpack.c.l.b16 %v576
  %v2383 = vunpack.c.h.b16 %v576
  %v2384 = vunpack.c.l.b16 %v577
  %v2385 = vunpack.c.h.b16 %v577
  %v2386 = vunpack.c.l.b16 %v578
  %v2387 = vunpack.c.h.b16 %v578
  %v2388 = vunpack.c.l.b16 %v579
  %v2389 = vunpack.c.h.b16 %v579
  %v2390 = vunpack.c.l.b16 %v580
  %v2391 = vunpack.c.h.b16 %v580
  %v2392 = vunpack.c.l.b16 %v581
  %v2393 = vunpack.c.h.b16 %v581
  %v2394 = vunpack.c.l.b16 %v582
  %v2395 = vunpack.c.h.b16 %v582
  %v2396 = vunpack.c.l.b16 %v583
  %v2397 = vunpack.c.h.b16 %v583
  %v2398 = vunpack.c.l.b16 %v584
  %v2399 = vunpack.c.h.b16 %v584
  %v2400 = vunpack.c.l.b16 %v585
  %v2401 = vunpack.c.h.b16 %v585
  %v2402 = vunpack.c.l.b16 %v586
  %v2403 = vunpack.c.h.b16 %v586
  %v2404 = vunpack.c.l.b16 %v587
  %v2405 = vunpack.c.h.b16 %v587
  %v2406 = vunpack.c.l.b16 %v588
  %v2407 = vunpack.c.h.b16 %v588
  %v2408 = vunpack.c.l.b16 %v589
  %v2409 = vunpack.c.h.b16 %v589
  %v2410 = vunpack.c.l.b16 %v590
  %v2411 = vunpack.c.h.b16 %v590
  %v2412 = vunpack.c.l.b16 %v591
  %v2413 = vunpack.c.h.b16 %v591
  %v2414 = vunpack.c.l.b16 %v592
  %v2415 = vunpack.c.h.b16 %v592
  %v2416 = vunpack.c.l.b16 %v593
  %v2417 = vunpack.c.h.b16 %v593
  %v2418 = vunpack.c.l.b16 %v594
  %v2419 = vunpack.c.h.b16 %v594
  %v2420 = vunpack.c.l.b16 %v595
  %v2421 = vunpack.c.h.b16 %v595
  %v2422 = vunpack.c.l.b16 %v596
  %v2423 = vunpack.c.h.b16 %v596
  %v2424 = vunpack.c.l.b16 %v597
  %v2425 = vunpack.c.h.b16 %v597
  %v2426 = vunpack.c.l.b16 %v598
  %v2427 = vunpack.c.h.b16 %v598
  %v2428 = vunpack.c.l.b16 %v599
  %v2429 = vunpack.c.h.b16 %v599
  %v2430 = vunpack.c.l.b16 %v600
  %v2431 = vunpack.c.h.b16 %v600
  %v2432 = vunpack.c.l.b16 %v601
  %v2433 = vunpack.c.h.b16 %v601
  %v2434 = vunpack.c.l.b16 %v602
  %v2435 = vunpack.c.h.b16 %v602
  %v2436 = vunpack.c.l.b16 %v603
  %v2437 = vunpack.c.h.b16 %v603
  %v2438 = vunpack.c.l.b16 %v604
  %v2439 = vunpack.c.h.b16 %v604
  %v2440 = vunpack.c.l.b16 %v605
  %v2441 = vunpack.c.h.b16 %v605
  %v2442 = vunpack.c.l.b16 %v606
  %v2443 = vunpack.c.h.b16 %v606
  %v2444 = vunpack.c.l.b16 %v607
  %v2445 = vunpack.c.h.b16 %v607
  %v2446 = vunpack.c.l.b16 %v608
  %v2447 = vunpack.c.h.b16 %v608
  %v2448 = vunpack.c.l.b16 %v609
  %v2449 = vunpack.c.h.b16 %v609
  %v2450 = vpack.c.b16 %v1302, %v1298
  %v2451 = vpack.c.b16 %v1303, %v1299
  %v2452 = vpack.c.b16 %v1304, %v1300
  %v2453 = vpack.c.b16 %v1305, %v1301
  %v2454 = vpack.c.b16 %v1310, %v1306
  %v2455 = vpack.c.b16 %v1311, %v1307
  %v2456 = vpack.c.b16 %v1312, %v1308
  %v2457 = vpack.c.b16 %v1313, %v1309
  %v2458 = vpack.c.b16 %v1318, %v1314
  %v2459 = vpack.c.b16 %v1319, %v1315
  %v2460 = vpack.c.b16 %v1320, %v1316
  %v2461 = vpack.c.b16 %v1321, %v1317
  %v2462 = vpack.c.b16 %v1326, %v1322
  %v2463 = vpack.c.b16 %v1327, %v1323
  %v2464 = vpack.c.b16 %v1328, %v1324
  %v2465 = vpack.c.b16 %v1329, %v1325
  %v2466 = vpack.c.b16 %v1334, %v1330
  %v2467 = vpack.c.b16 %v1335, %v1331
  %v2468 = vpack.c.b16 %v1336, %v1332
  %v2469 = vpack.c.b16 %v1337, %v1333
  %v2470 = vpack.c.b16 %v1342, %v1338
  %v2471 = vpack.c.b16 %v1343, %v1339
  %v2472 = vpack.c.b16 %v1344, %v1340
  %v2473 = vpack.c.b16 %v1345, %v1341
  %v2474 = vpack.c.b16 %v1350, %v1346
  %v2475 = vpack.c.b16 %v1351, %v1347
  %v2476 = vpack.c.b16 %v1352, %v1348
  %v2477 = vpack.c.b16 %v1353, %v1349
  %v2478 = vpack.c.b16 %v1358, %v1354
  %v2479 = vpack.c.b16 %v1359, %v1355
  %v2480 = vpack.c.b16 %v1360, %v1356
  %v2481 = vpack.c.b16 %v1361, %v1357
  %v2482 = vpack.c.b16 %v1366, %v1362
  %v2483 = vpack.c.b16 %v1367, %v1363
  %v2484 = vpack.c.b16 %v1368, %v1364
  %v2485 = vpack.c.b16 %v1369, %v1365
  %v2486 = vpack.c.b16 %v1374, %v1370
  %v2487 = vpack.c.b16 %v1375, %v1371
  %v2488 = vpack.c.b16 %v1376, %v1372
  %v2489 = vpack.c.b16 %v1377, %v1373
  %v2490 = vpack.c.b16 %v1382, %v1378
  %v2491 = vpack.c.b16 %v1383, %v1379
  %v2492 = vpack.c.b16 %v1384, %v1380
  %v2493 = vpack.c.b16 %v1385, %v1381
  %v2494 = vpack.c.b16 %v1390, %v1386
  %v2495 = vpack.c.b16 %v1391, %v1387
  %v2496 = vpack.c.b16 %v1392, %v1388
  %v2497 = vpack.c.b16 %v1393, %v1389
  %v2498 = vpack.c.b16 %v1398, %v1394
  %v2499 = vpack.c.b16 %v1399, %v1395
  %v2500 = vpack.c.b16 %v1400, %v1396
  %v2501 = vpack.c.b16 %v1401, %v1397
  %v2502 = vpack.c.b16 %v1406, %v1402
  %v2503 = vpack.c.b16 %v1407, %v1403
  %v2504 = vpack.c.b16 %v1408, %v1404
  %v2505 = vpack.c.b16 %v1409, %v1405
  %v2506 = vpack.c.b16 %v1414, %v1410
  %v2507 = vpack.c.b16 %v1415, %v1411
  %v2508 = vpack.c.b16 %v1416, %v1412
  %v2509 = vpack.c.b16 %v1417, %v1413
  %v2510 = vpack.c.b16 %v1422, %v1418
  %v2511 = vpack.c.b16 %v1423, %v1419
  %v2512 = vpack.c.b16 %v1424, %v1420
  %v2513 = vpack.c.b16 %v1425, %v1421
  %v2514 = vpack.c.b16 %v1430, %v1426
  %v2515 = vpack.c.b16 %v1431, %v1427
  %v2516 = vpack.c.b16 %v1432, %v1428
  %v2517 = vpack.c.b16 %v1433, %v1429
  %v2518 = vpack.c.b16 %v1438, %v1434
  %v2519 = vpack.c.b16 %v1439, %v1435
  %v2520 = vpack.c.b16 %v1440, %v1436
  %v2521 = vpack.c.b16 %v1441, %v1437
  %v2522 = vpack.c.b16 %v1446, %v1442
  %v2523 = vpack.c.b16 %v1447, %v1443
  %v2524 = vpack.c.b16 %v1448, %v1444
  %v2525 = vpack.c.b16 %v1449, %v1445
  %v2526 = vpack.c.b16 %v1454, %v1450
  %v2527 = vpack.c.b16 %v1455, %v1451
  %v2528 = vpack.c.b16 %v1456, %v1452
  %v2529 = vpack.c.b16 %v1457, %v1453
  %v2530 = vpack.c.b16 %v1462, %v1458
  %v2531 = vpack.c.b16 %v1463, %v1459
  %v2532 = vpack.c.b16 %v1464, %v1460
  %v2533 = vpack.c.b16 %v1465, %v1461
  %v2534 = vpack.c.b16 %v1470, %v1466
  %v2535 = vpack.c.b16 %v1471, %v1467
  %v2536 = vpack.c.b16 %v1472, %v1468
  %v2537 = vpack.c.b16 %v1473, %v1469
  %v2538 = vpack.c.b16 %v1478, %v1474
  %v2539 = vpack.c.b16 %v1479, %v1475
  %v2540 = vpack.c.b16 %v1480, %v1476
  %v2541 = vpack.c.b16 %v1481, %v1477
  %v2542 = vpack.c.b16 %v1486, %v1482
  %v2543 = vpack.c.b16 %v1487, %v1483
  %v2544 = vpack.c.b16 %v1488, %v1484
  %v2545 = vpack.c.b16 %v1489, %v1485
  %v2546 = vpack.c.b16 %v1494, %v1490
  %v2547 = vpack.c.b16 %v1495, %v1491
  %v2548 = vpack.c.b16 %v1496, %v1492
  %v2549 = vpack.c.b16 %v1497, %v1493
  %v2550 = vpack.c.b16 %v1502, %v1498
  %v2551 = vpack.c.b16 %v1503, %v1499
  %v2552 = vpack.c.b16 %v1504, %v1500
  %v2553 = vpack.c.b16 %v1505, %v1501
  %v2554 = vpack.c.b16 %v1510, %v1506
  %v2555 = vpack.c.b16 %v1511, %v1507
  %v2556 = vpack.c.b16 %v1512, %v1508
  %v2557 = vpack.c.b16 %v1513, %v1509
  %v2558 = vpack.c.b16 %v1518, %v1514
  %v2559 = vpack.c.b16 %v1519, %v1515
  %v2560 = vpack.c.b16 %v1520, %v1516
  %v2561 = vpack.c.b16 %v1521, %v1517
  %v2562 = vpack.c.b16 %v1526, %v1522
  %v2563 = vpack.c.b16 %v1527, %v1523
  %v2564 = vpack.c.b16 %v1528, %v1524
  %v2565 = vpack.c.b16 %v1529, %v1525
  %v2566 = vpack.c.b16 %v1534, %v1530
  %v2567 = vpack.c.b16 %v1535, %v1531
  %v2568 = vpack.c.b16 %v1536, %v1532
  %v2569 = vpack.c.b16 %v1537, %v1533
  %v2570 = vpack.c.b16 %v1542, %v1538
  %v2571 = vpack.c.b16 %v1543, %v1539
  %v2572 = vpack.c.b16 %v1544, %v1540
  %v2573 = vpack.c.b16 %v1545, %v1541
  %v2574 = vpack.c.b16 %v1550, %v1546
  %v2575 = vpack.c.b16 %v1551, %v1547
  %v2576 = vpack.c.b16 %v1552, %v1548
  %v2577 = vpack.c.b16 %v1553, %v1549
  %v2578 = vpack.c.b16 %v1558, %v1554
  %v2579 = vpack.c.b16 %v1559, %v1555
  %v2580 = vpack.c.b16 %v1560, %v1556
  %v2581 = vpack.c.b16 %v1561, %v1557
  %v2582 = vpack.c.b16 %v1566, %v1562
  %v2583 = vpack.c.b16 %v1567, %v1563
  %v2584 = vpack.c.b16 %v1568, %v1564
  %v2585 = vpack.c.b16 %v1569, %v1565
  %v2586 = vpack.c.b16 %v1574, %v1570
  %v2587 = vpack.c.b16 %v1575, %v1571
  %v2588 = vpack.c.b16 %v1576, %v1572
  %v2589 = vpack.c.b16 %v1577, %v1573
  %v2590 = vpack.c.b16 %v1582, %v1578
  %v2591 = vpack.c.b16 %v1583, %v1579
  %v2592 = vpack.c.b16 %v1584, %v1580
  %v2593 = vpack.c.b16 %v1585, %v1581
  %v2594 = vpack.c.b16 %v1590, %v1586
  %v2595 = vpack.c.b16 %v1591, %v1587
  %v2596 = vpack.c.b16 %v1592, %v1588
  %v2597 = vpack.c.b16 %v1593, %v1589
  %v2598 = vpack.c.b16 %v1598, %v1594
  %v2599 = vpack.c.b16 %v1599, %v1595
  %v2600 = vpack.c.b16 %v1600, %v1596
  %v2601 = vpack.c.b16 %v1601, %v1597
  %v2602 = vpack.c.b16 %v1606, %v1602
  %v2603 = vpack.c.b16 %v1607, %v1603
  %v2604 = vpack.c.b16 %v1608, %v1604
  %v2605 = vpack.c.b16 %v1609, %v1605
  %v2606 = vpack.c.b16 %v1614, %v1610
  %v2607 = vpack.c.b16 %v1615, %v1611
  %v2608 = vpack.c.b16 %v1616, %v1612
  %v2609 = vpack.c.b16 %v1617, %v1613
  %v2610 = vpack.c.b16 %v1622, %v1618
  %v2611 = vpack.c.b16 %v1623, %v1619
  %v2612 = vpack.c.b16 %v1624, %v1620
  %v2613 = vpack.c.b16 %v1625, %v1621
  %v2614 = vpack.c.b16 %v1630, %v1626
  %v2615 = vpack.c.b16 %v1631, %v1627
  %v2616 = vpack.c.b16 %v1632, %v1628
  %v2617 = vpack.c.b16 %v1633, %v1629
  %v2618 = vpack.c.b16 %v1638, %v1634
  %v2619 = vpack.c.b16 %v1639, %v1635
  %v2620 = vpack.c.b16 %v1640, %v1636
  %v2621 = vpack.c.b16 %v1641, %v1637
  %v2622 = vpack.c.b16 %v1646, %v1642
  %v2623 = vpack.c.b16 %v1647, %v1643
  %v2624 = vpack.c.b16 %v1648, %v1644
  %v2625 = vpack.c.b16 %v1649, %v1645
  %v2626 = vpack.c.b16 %v1654, %v1650
  %v2627 = vpack.c.b16 %v1655, %v1651
  %v2628 = vpack.c.b16 %v1656, %v1652
  %v2629 = vpack.c.b16 %v1657, %v1653
  %v2630 = vpack.c.b16 %v1662, %v1658
  %v2631 = vpack.c.b16 %v1663, %v1659
  %v2632 = vpack.c.b16 %v1664, %v1660
  %v2633 = vpack.c.b16 %v1665, %v1661
  %v2634 = vpack.c.b16 %v1670, %v1666
  %v2635 = vpack.c.b16 %v1671, %v1667
  %v2636 = vpack.c.b16 %v1672, %v1668
  %v2637 = vpack.c.b16 %v1673, %v1669
  %v2638 = vpack.c.b16 %v1678, %v1674
  %v2639 = vpack.c.b16 %v1679, %v1675
  %v2640 = vpack.c.b16 %v1680, %v1676
  %v2641 = vpack.c.b16 %v1681, %v1677
  %v2642 = vpack.c.b16 %v1686, %v1682
  %v2643 = vpack.c.b16 %v1687, %v1683
  %v2644 = vpack.c.b16 %v1688, %v1684
  %v2645 = vpack.c.b16 %v1689, %v1685
  %v2646 = vpack.c.b16 %v1694, %v1690
  %v2647 = vpack.c.b16 %v1695, %v1691
  %v2648 = vpack.c.b16 %v1696, %v1692
  %v2649 = vpack.c.b16 %v1697, %v1693
  %v2650 = vpack.c.b16 %v1702, %v1698
  %v2651 = vpack.c.b16 %v1703, %v1699
  %v2652 = vpack.c.b16 %v1704, %v1700
  %v2653 = vpack.c.b16 %v1705, %v1701
  %v2654 = vpack.c.b16 %v1710, %v1706
  %v2655 = vpack.c.b16 %v1711, %v1707
  %v2656 = vpack.c.b16 %v1712, %v1708
  %v2657 = vpack.c.b16 %v1713, %v1709
  %v2658 = vpack.c.b16 %v1718, %v1714
  %v2659 = vpack.c.b16 %v1719, %v1715
  %v2660 = vpack.c.b16 %v1720, %v1716
  %v2661 = vpack.c.b16 %v1721, %v1717
  %v2662 = vpack.c.b16 %v1726, %v1722
  %v2663 = vpack.c.b16 %v1727, %v1723
  %v2664 = vpack.c.b16 %v1728, %v1724
  %v2665 = vpack.c.b16 %v1729, %v1725
  %v2666 = vpack.c.b16 %v1734, %v1730
  %v2667 = vpack.c.b16 %v1735, %v1731
  %v2668 = vpack.c.b16 %v1736, %v1732
  %v2669 = vpack.c.b16 %v1737, %v1733
  %v2670 = vpack.c.b16 %v1742, %v1738
  %v2671 = vpack.c.b16 %v1743, %v1739
  %v2672 = vpack.c.b16 %v1744, %v1740
  %v2673 = vpack.c.b16 %v1745, %v1741
  %v2674 = vpack.c.b16 %v1750, %v1746
  %v2675 = vpack.c.b16 %v1751, %v1747
  %v2676 = vpack.c.b16 %v1752, %v1748
  %v2677 = vpack.c.b16 %v1753, %v1749
  %v2678 = vpack.c.b16 %v1758, %v1754
  %v2679 = vpack.c.b16 %v1759, %v1755
  %v2680 = vpack.c.b16 %v1760, %v1756
  %v2681 = vpack.c.b16 %v1761, %v1757
  %v2682 = vpack.c.b16 %v1766, %v1762
  %v2683 = vpack.c.b16 %v1767, %v1763
  %v2684 = vpack.c.b16 %v1768, %v1764
  %v2685 = vpack.c.b16 %v1769, %v1765
  %v2686 = vpack.c.b16 %v1774, %v1770
  %v2687 = vpack.c.b16 %v1775, %v1771
  %v2688 = vpack.c.b16 %v1776, %v1772
  %v2689 = vpack.c.b16 %v1777, %v1773
  %v2690 = vpack.c.b16 %v1782, %v1778
  %v2691 = vpack.c.b16 %v1783, %v1779
  %v2692 = vpack.c.b16 %v1784, %v1780
  %v2693 = vpack.c.b16 %v1785, %v1781
  %v2694 = vpack.c.b16 %v1790, %v1786
  %v2695 = vpack.c.b16 %v1791, %v1787
  %v2696 = vpack.c.b16 %v1792, %v1788
  %v2697 = vpack.c.b16 %v1793, %v1789
  %v2698 = vpack.c.b16 %v1798, %v1794
  %v2699 = vpack.c.b16 %v1799, %v1795
  %v2700 = vpack.c.b16 %v1800, %v1796
  %v2701 = vpack.c.b16 %v1801, %v1797
  %v2702 = vpack.c.b16 %v1806, %v1802
  %v2703 = vpack.c.b16 %v1807, %v1803
  %v2704 = vpack.c.b16 %v1808, %v1804
  %v2705 = vpack.c.b16 %v1809, %v1805
  %v2706 = vpack.c.b16 %v1814, %v1810
  %v2707 = vpack.c.b16 %v1815, %v1811
  %v2708 = vpack.c.b16 %v1816, %v1812
  %v2709 = vpack.c.b16 %v1817, %v1813
  %v2710 = vpack.c.b16 %v1822, %v1818
  %v2711 = vpack.c.b16 %v1823, %v1819
  %v2712 = vpack.c.b16 %v1824, %v1820
  %v2713 = vpack.c.b16 %v1825, %v1821
  %v2714 = vpack.c.b16 %v1830, %v1826
  %v2715 = vpack.c.b16 %v1831, %v1827
  %v2716 = vpack.c.b16 %v1832, %v1828
  %v2717 = vpack.c.b16 %v1833, %v1829
  %v2718 = vpack.c.b16 %v1838, %v1834
  %v2719 = vpack.c.b16 %v1839, %v1835
  %v2720 = vpack.c.b16 %v1840, %v1836
  %v2721 = vpack.c.b16 %v1841, %v1837
  %v2722 = vpack.c.b16 %v1846, %v1842
  %v2723 = vpack.c.b16 %v1847, %v1843
  %v2724 = vpack.c.b16 %v1848, %v1844
  %v2725 = vpack.c.b16 %v1849, %v1845
  %v2726 = vpack.c.b16 %v1854, %v1850
  %v2727 = vpack.c.b16 %v1855, %v1851
  %v2728 = vpack.c.b16 %v1856, %v1852
  %v2729 = vpack.c.b16 %v1857, %v1853
  %v2730 = vpack.c.b16 %v1862, %v1858
  %v2731 = vpack.c.b16 %v1863, %v1859
  %v2732 = vpack.c.b16 %v1864, %v1860
  %v2733 = vpack.c.b16 %v1865, %v1861
  %v2734 = vpack.c.b16 %v1870, %v1866
  %v2735 = vpack.c.b16 %v1871, %v1867
  %v2736 = vpack.c.b16 %v1872, %v1868
  %v2737 = vpack.c.b16 %v1873, %v1869
  %v2738 = vpack.c.b16 %v1878, %v1874
  %v2739 = vpack.c.b16 %v1879, %v1875
  %v2740 = vpack.c.b16 %v1880, %v1876
  %v2741 = vpack.c.b16 %v1881, %v1877
  %v2742 = vpack.c.b16 %v1886, %v1882
  %v2743 = vpack.c.b16 %v1887, %v1883
  %v2744 = vpack.c.b16 %v1888, %v1884
  %v2745 = vpack.c.b16 %v1889, %v1885
  %v2746 = vpack.c.b16 %v1894, %v1890
  %v2747 = vpack.c.b16 %v1895, %v1891
  %v2748 = vpack.c.b16 %v1896, %v1892
  %v2749 = vpack.c.b16 %v1897, %v1893
  %v2750 = vpack.c.b16 %v1902, %v1898
  %v2751 = vpack.c.b16 %v1903, %v1899
  %v2752 = vpack.c.b16 %v1904, %v1900
  %v2753 = vpack.c.b16 %v1905, %v1901
  %v2754 = vpack.c.b16 %v1910, %v1906
  %v2755 = vpack.c.b16 %v1911, %v1907
  %v2756 = vpack.c.b16 %v1912, %v1908
  %v2757 = vpack.c.b16 %v1913, %v1909
  %v2758 = vpack.c.b16 %v1918, %v1914
  %v2759 = vpack.c.b16 %v1919, %v1915
  %v2760 = vpack.c.b16 %v1920, %v1916
  %v2761 = vpack.c.b16 %v1921, %v1917
  %v2762 = vpack.c.b16 %v1926, %v1922
  %v2763 = vpack.c.b16 %v1927, %v1923
  %v2764 = vpack.c.b16 %v1928, %v1924
  %v2765 = vpack.c.b16 %v1929, %v1925
  %v2766 = vpack.c.b16 %v1934, %v1930
  %v2767 = vpack.c.b16 %v1935, %v1931
  %v2768 = vpack.c.b16 %v1936, %v1932
  %v2769 = vpack.c.b16 %v1937, %v1933
  %v2770 = vpack.c.b16 %v1942, %v1938
  %v2771 = vpack.c.b16 %v1943, %v1939
  %v2772 = vpack.c.b16 %v1944, %v1940
  %v2773 = vpack.c.b16 %v1945, %v1941
  %v2774 = vpack.c.b16 %v1950, %v1946
  %v2775 = vpack.c.b16 %v1951, %v1947
  %v2776 = vpack.c.b16 %v1952, %v1948
  %v2777 = vpack.c.b16 %v1953, %v1949
  %v2778 = vpack.c.b16 %v1958, %v1954
  %v2779 = vpack.c.b16 %v1959, %v1955
  %v2780 = vpack.c.b16 %v1960, %v1956
  %v2781 = vpack.c.b16 %v1961, %v1957
  %v2782 = vpack.c.b16 %v1966, %v1962
  %v2783 = vpack.c.b16 %v1967, %v1963
  %v2784 = vpack.c.b16 %v1968, %v1964
  %v2785 = vpack.c.b16 %v1969, %v1965
  %v2786 = vpack.c.b16 %v1974, %v1970
  %v2787 = vpack.c.b16 %v1975, %v1971
  %v2788 = vpack.c.b16 %v1976, %v1972
  %v2789 = vpack.c.b16 %v1977, %v1973
  %v2790 = vpack.c.b16 %v1982, %v1978
  %v2791 = vpack.c.b16 %v1983, %v1979
  %v2792 = vpack.c.b16 %v1984, %v1980
  %v2793 = vpack.c.b16 %v1985, %v1981
  %v2794 = vpack.c.b16 %v1990, %v1986
  %v2795 = vpack.c.b16 %v1991, %v1987
  %v2796 = vpack.c.b16 %v1992, %v1988
  %v2797 = vpack.c.b16 %v1993, %v1989
  %v2798 = vpack.c.b16 %v1998, %v1994
  %v2799 = vpack.c.b16 %v1999, %v1995
  %v2800 = vpack.c.b16 %v2000, %v1996
  %v2801 = vpack.c.b16 %v2001, %v1997
  %v2802 = vpack.c.b16 %v2006, %v2002
  %v2803 = vpack.c.b16 %v2007, %v2003
  %v2804 = vpack.c.b16 %v2008, %v2004
  %v2805 = vpack.c.b16 %v2009, %v2005
  %v2806 = vpack.c.b16 %v2014, %v2010
  %v2807 = vpack.c.b16 %v2015, %v2011
  %v2808 = vpack.c.b16 %v2016, %v2012
  %v2809 = vpack.c.b16 %v2017, %v2013
  %v2810 = vpack.c.b16 %v2022, %v2018
  %v2811 = vpack.c.b16 %v2023, %v2019
  %v2812 = vpack.c.b16 %v2024, %v2020
  %v2813 = vpack.c.b16 %v2025, %v2021
  %v2814 = vpack.c.b16 %v2030, %v2026
  %v2815 = vpack.c.b16 %v2031, %v2027
  %v2816 = vpack.c.b16 %v2032, %v2028
  %v2817 = vpack.c.b16 %v2033, %v2029
  %v2818 = vpack.c.b16 %v2038, %v2034
  %v2819 = vpack.c.b16 %v2039, %v2035
  %v2820 = vpack.c.b16 %v2040, %v2036
  %v2821 = vpack.c.b16 %v2041, %v2037
  %v2822 = vpack.c.b16 %v2046, %v2042
  %v2823 = vpack.c.b16 %v2047, %v2043
  %v2824 = vpack.c.b16 %v2048, %v2044
  %v2825 = vpack.c.b16 %v2049, %v2045
  %v2826 = vpack.c.b16 %v2054, %v2050
  %v2827 = vpack.c.b16 %v2055, %v2051
  %v2828 = vpack.c.b16 %v2056, %v2052
  %v2829 = vpack.c.b16 %v2057, %v2053
  %v2830 = vpack.c.b16 %v2062, %v2058
  %v2831 = vpack.c.b16 %v2063, %v2059
  %v2832 = vpack.c.b16 %v2064, %v2060
  %v2833 = vpack.c.b16 %v2065, %v2061
  %v2834 = vpack.c.b16 %v2070, %v2066
  %v2835 = vpack.c.b16 %v2071, %v2067
  %v2836 = vpack.c.b16 %v2072, %v2068
  %v2837 = vpack.c.b16 %v2073, %v2069
  %v2838 = vpack.c.b16 %v2078, %v2074
  %v2839 = vpack.c.b16 %v2079, %v2075
  %v2840 = vpack.c.b16 %v2080, %v2076
  %v2841 = vpack.c.b16 %v2081, %v2077
  %v2842 = vpack.c.b16 %v2086, %v2082
  %v2843 = vpack.c.b16 %v2087, %v2083
  %v2844 = vpack.c.b16 %v2088, %v2084
  %v2845 = vpack.c.b16 %v2089, %v2085
  %v2846 = vpack.c.b16 %v2094, %v2090
  %v2847 = vpack.c.b16 %v2095, %v2091
  %v2848 = vpack.c.b16 %v2096, %v2092
  %v2849 = vpack.c.b16 %v2097, %v2093
  %v2850 = vpack.c.b16 %v2102, %v2098
  %v2851 = vpack.c.b16 %v2103, %v2099
  %v2852 = vpack.c.b16 %v2104, %v2100
  %v2853 = vpack.c.b16 %v2105, %v2101
  %v2854 = vpack.c.b16 %v2110, %v2106
  %v2855 = vpack.c.b16 %v2111, %v2107
  %v2856 = vpack.c.b16 %v2112, %v2108
  %v2857 = vpack.c.b16 %v2113, %v2109
  %v2858 = vpack.c.b16 %v2118, %v2114
  %v2859 = vpack.c.b16 %v2119, %v2115
  %v2860 = vpack.c.b16 %v2120, %v2116
  %v2861 = vpack.c.b16 %v2121, %v2117
  %v2862 = vpack.c.b16 %v2126, %v2122
  %v2863 = vpack.c.b16 %v2127, %v2123
  %v2864 = vpack.c.b16 %v2128, %v2124
  %v2865 = vpack.c.b16 %v2129, %v2125
  %v2866 = vpack.c.b16 %v2134, %v2130
  %v2867 = vpack.c.b16 %v2135, %v2131
  %v2868 = vpack.c.b16 %v2136, %v2132
  %v2869 = vpack.c.b16 %v2137, %v2133
  %v2870 = vpack.c.b16 %v2142, %v2138
  %v2871 = vpack.c.b16 %v2143, %v2139
  %v2872 = vpack.c.b16 %v2144, %v2140
  %v2873 = vpack.c.b16 %v2145, %v2141
  %v2874 = vpack.c.b16 %v2150, %v2146
  %v2875 = vpack.c.b16 %v2151, %v2147
  %v2876 = vpack.c.b16 %v2152, %v2148
  %v2877 = vpack.c.b16 %v2153, %v2149
  %v2878 = vpack.c.b16 %v2158, %v2154
  %v2879 = vpack.c.b16 %v2159, %v2155
  %v2880 = vpack.c.b16 %v2160, %v2156
  %v2881 = vpack.c.b16 %v2161, %v2157
  %v2882 = vpack.c.b16 %v2166, %v2162
  %v2883 = vpack.c.b16 %v2167, %v2163
  %v2884 = vpack.c.b16 %v2168, %v2164
  %v2885 = vpack.c.b16 %v2169, %v2165
  %v2886 = vpack.c.b16 %v2174, %v2170
  %v2887 = vpack.c.b16 %v2175, %v2171
  %v2888 = vpack.c.b16 %v2176, %v2172
  %v2889 = vpack.c.b16 %v2177, %v2173
  %v2890 = vpack.c.b16 %v2182, %v2178
  %v2891 = vpack.c.b16 %v2183, %v2179
  %v2892 = vpack.c.b16 %v2184, %v2180
  %v2893 = vpack.c.b16 %v2185, %v2181
  %v2894 = vpack.c.b16 %v2190, %v2186
  %v2895 = vpack.c.b16 %v2191, %v2187
  %v2896 = vpack.c.b16 %v2192, %v2188
  %v2897 = vpack.c.b16 %v2193, %v2189
  %v2898 = vpack.c.b16 %v2198, %v2194
  %v2899 = vpack.c.b16 %v2199, %v2195
  %v2900 = vpack.c.b16 %v2200, %v2196
  %v2901 = vpack.c.b16 %v2201, %v2197
  %v2902 = vpack.c.b16 %v2206, %v2202
  %v2903 = vpack.c.b16 %v2207, %v2203
  %v2904 = vpack.c.b16 %v2208, %v2204
  %v2905 = vpack.c.b16 %v2209, %v2205
  %v2906 = vpack.c.b16 %v2214, %v2210
  %v2907 = vpack.c.b16 %v2215, %v2211
  %v2908 = vpack.c.b16 %v2216, %v2212
  %v2909 = vpack.c.b16 %v2217, %v2213
  %v2910 = vpack.c.b16 %v2222, %v2218
  %v2911 = vpack.c.b16 %v2223, %v2219
  %v2912 = vpack.c.b16 %v2224, %v2220
  %v2913 = vpack.c.b16 %v2225, %v2221
  %v2914 = vpack.c.b16 %v2230, %v2226
  %v2915 = vpack.c.b16 %v2231, %v2227
  %v2916 = vpack.c.b16 %v2232, %v2228
  %v2917 = vpack.c.b16 %v2233, %v2229
  %v2918 = vpack.c.b16 %v2238, %v2234
  %v2919 = vpack.c.b16 %v2239, %v2235
  %v2920 = vpack.c.b16 %v2240, %v2236
  %v2921 = vpack.c.b16 %v2241, %v2237
  %v2922 = vpack.c.b16 %v2246, %v2242
  %v2923 = vpack.c.b16 %v2247, %v2243
  %v2924 = vpack.c.b16 %v2248, %v2244
  %v2925 = vpack.c.b16 %v2249, %v2245
  %v2926 = vpack.c.b16 %v2254, %v2250
  %v2927 = vpack.c.b16 %v2255, %v2251
  %v2928 = vpack.c.b16 %v2256, %v2252
  %v2929 = vpack.c.b16 %v2257, %v2253
  %v2930 = vpack.c.b16 %v2262, %v2258
  %v2931 = vpack.c.b16 %v2263, %v2259
  %v2932 = vpack.c.b16 %v2264, %v2260
  %v2933 = vpack.c.b16 %v2265, %v2261
  %v2934 = vpack.c.b16 %v2270, %v2266
  %v2935 = vpack.c.b16 %v2271, %v2267
  %v2936 = vpack.c.b16 %v2272, %v2268
  %v2937 = vpack.c.b16 %v2273, %v2269
  %v2938 = vpack.c.b16 %v2278, %v2274
  %v2939 = vpack.c.b16 %v2279, %v2275
  %v2940 = vpack.c.b16 %v2280, %v2276
  %v2941 = vpack.c.b16 %v2281, %v2277
  %v2942 = vpack.c.b16 %v2286, %v2282
  %v2943 = vpack.c.b16 %v2287, %v2283
  %v2944 = vpack.c.b16 %v2288, %v2284
  %v2945 = vpack.c.b16 %v2289, %v2285
  %v2946 = vpack.c.b16 %v2294, %v2290
  %v2947 = vpack.c.b16 %v2295, %v2291
  %v2948 = vpack.c.b16 %v2296, %v2292
  %v2949 = vpack.c.b16 %v2297, %v2293
  %v2950 = vpack.c.b16 %v2302, %v2298
  %v2951 = vpack.c.b16 %v2303, %v2299
  %v2952 = vpack.c.b16 %v2304, %v2300
  %v2953 = vpack.c.b16 %v2305, %v2301
  %v2954 = vpack.c.b16 %v2310, %v2306
  %v2955 = vpack.c.b16 %v2311, %v2307
  %v2956 = vpack.c.b16 %v2312, %v2308
  %v2957 = vpack.c.b16 %v2313, %v2309
  %v2958 = vpack.c.b16 %v2318, %v2314
  %v2959 = vpack.c.b16 %v2319, %v2315
  %v2960 = vpack.c.b16 %v2320, %v2316
  %v2961 = vpack.c.b16 %v2321, %v2317
  %v2962 = vpack.c.b16 %v2326, %v2322
  %v2963 = vpack.c.b16 %v2327, %v2323
  %v2964 = vpack.c.b16 %v2328, %v2324
  %v2965 = vpack.c.b16 %v2329, %v2325
  %v2966 = vpack.c.b16 %v2334, %v2330
  %v2967 = vpack.c.b16 %v2335, %v2331
  %v2968 = vpack.c.b16 %v2336, %v2332
  %v2969 = vpack.c.b16 %v2337, %v2333
  %v2970 = vpack.c.b16 %v2342, %v2338
  %v2971 = vpack.c.b16 %v2343, %v2339
  %v2972 = vpack.c.b16 %v2344, %v2340
  %v2973 = vpack.c.b16 %v2345, %v2341
  %v2974 = vpack.c.b16 %v2350, %v2346
  %v2975 = vpack.c.b16 %v2351, %v2347
  %v2976 = vpack.c.b16 %v2352, %v2348
  %v2977 = vpack.c.b16 %v2353, %v2349
  %v2978 = vpack.c.b16 %v2358, %v2354
  %v2979 = vpack.c.b16 %v2359, %v2355
  %v2980 = vpack.c.b16 %v2360, %v2356
  %v2981 = vpack.c.b16 %v2361, %v2357
  %v2982 = vpack.c.b16 %v2366, %v2362
  %v2983 = vpack.c.b16 %v2367, %v2363
  %v2984 = vpack.c.b16 %v2368, %v2364
  %v2985 = vpack.c.b16 %v2369, %v2365
  %v2986 = vpack.c.b16 %v2374, %v2370
  %v2987 = vpack.c.b16 %v2375, %v2371
  %v2988 = vpack.c.b16 %v2376, %v2372
  %v2989 = vpack.c.b16 %v2377, %v2373
  %v2990 = vpack.c.b16 %v2382, %v2378
  %v2991 = vpack.c.b16 %v2383, %v2379
  %v2992 = vpack.c.b16 %v2384, %v2380
  %v2993 = vpack.c.b16 %v2385, %v2381
  %v2994 = vpack.c.b16 %v2390, %v2386
  %v2995 = vpack.c.b16 %v2391, %v2387
  %v2996 = vpack.c.b16 %v2392, %v2388
  %v2997 = vpack.c.b16 %v2393, %v2389
  %v2998 = vpack.c.b16 %v2398, %v2394
  %v2999 = vpack.c.b16 %v2399, %v2395
  %v3000 = vpack.c.b16 %v2400, %v2396
  %v3001 = vpack.c.b16 %v2401, %v2397
  %v3002 = vpack.c.b16 %v2406, %v2402
  %v3003 = vpack.c.b16 %v2407, %v2403
  %v3004 = vpack.c.b16 %v2408, %v2404
  %v3005 = vpack.c.b16 %v2409, %v2405
  %v3006 = vpack.c.b16 %v2414, %v2410
  %v3007 = vpack.c.b16 %v2415, %v2411
  %v3008 = vpack.c.b16 %v2416, %v2412
  %v3009 = vpack.c.b16 %v2417, %v2413
  %v3010 = vpack.c.b16 %v2422, %v2418
  %v3011 = vpack.c.b16 %v2423, %v2419
  %v3012 = vpack.c.b16 %v2424, %v2420
  %v3013 = vpack.c.b16 %v2425, %v2421
  %v3014 = vpack.c.b16 %v2430, %v2426
  %v3015 = vpack.c.b16 %v2431, %v2427
  %v3016 = vpack.c.b16 %v2432, %v2428
  %v3017 = vpack.c.b16 %v2433, %v2429
  %v3018 = vpack.c.b16 %v2438, %v2434
  %v3019 = vpack.c.b16 %v2439, %v2435
  %v3020 = vpack.c.b16 %v2440, %v2436
  %v3021 = vpack.c.b16 %v2441, %v2437
  %v3022 = vpack.c.b16 %v2446, %v2442
  %v3023 = vpack.c.b16 %v2447, %v2443
  %v3024 = vpack.c.b16 %v2448, %v2444
  %v3025 = vpack.c.b16 %v2449, %v2445
  %3602 = vmatprep.subr.bf16.mxu0 %v2479
  %3603 = vmatpush1.bf16.msra.mxu0 %v2478
  %3604 = vmatprep.subr.bf16.mxu0 %v2475
  %3605 = vmatpush1.bf16.msra.mxu0 %v2474
  %3606 = vmatprep.subr.bf16.mxu0 %v2471
  %3607 = vmatpush1.bf16.msra.mxu0 %v2470
  %3608 = vmatprep.subr.bf16.mxu0 %v2467
  %3609 = vmatpush1.bf16.msra.mxu0 %v2466
  %3610 = vmatprep.subr.bf16.mxu0 %v2463
  %3611 = vmatpush1.bf16.msra.mxu0 %v2462
  %3612 = vmatprep.subr.bf16.mxu0 %v2459
  %3613 = vmatpush1.bf16.msra.mxu0 %v2458
  %3614 = vmatprep.subr.bf16.mxu0 %v2455
  %3615 = vmatpush1.bf16.msra.mxu0 %v2454
  %3616 = vmatprep.subr.bf16.mxu0 %v2451
  %3617 = vmatpush1.bf16.msra.mxu0 %v2450
  %3618 = vmatprep.subr.bf16.mxu0 %v2511
  %3619 = vmatpush2.bf16.msra.mxu0 %v2510
  %3620 = vmatprep.subr.bf16.mxu0 %v2507
  %3621 = vmatpush2.bf16.msra.mxu0 %v2506
  %3622 = vmatprep.subr.bf16.mxu0 %v2503
  %3623 = vmatpush2.bf16.msra.mxu0 %v2502
  %3624 = vmatprep.subr.bf16.mxu0 %v2499
  %3625 = vmatpush2.bf16.msra.mxu0 %v2498
  %3626 = vmatprep.subr.bf16.mxu0 %v2495
  %3627 = vmatpush2.bf16.msra.mxu0 %v2494
  %3628 = vmatprep.subr.bf16.mxu0 %v2491
  %3629 = vmatpush2.bf16.msra.mxu0 %v2490
  %3630 = vmatprep.subr.bf16.mxu0 %v2487
  %3631 = vmatpush2.bf16.msra.mxu0 %v2486
  %3632 = vmatprep.subr.bf16.mxu0 %v2483
  %3633 = vmatpush2.bf16.msra.mxu0 %v2482
  %3634 = vmatprep.mubr.bf16.mxu0 %v687
  %3635 = vmatmul.mubr.bf16.gmra.mxu0 %v686
  %v3636 = vpop.f32.mrf.mxu0
  %v3637 = vadd.f32 %v615, %v3636
  %v3638 = vpop.f32.mrf.mxu0
  %v3639 = vadd.f32 %v619, %v3638
  %v3640 = vpop.f32.mrf.mxu0
  %v3641 = vadd.f32 %v615, %v3640
  %v3642 = vpop.f32.mrf.mxu0
  %v3643 = vadd.f32 %v619, %v3642
  %3644 = vdwg.mxu0
  %3645 = vmatprep.subr.bf16.mxu0 %v2543
  %3646 = vmatpush1.bf16.msra.mxu0 %v2542
  %3647 = vmatprep.subr.bf16.mxu0 %v2539
  %3648 = vmatpush1.bf16.msra.mxu0 %v2538
  %3649 = vmatprep.subr.bf16.mxu0 %v2535
  %3650 = vmatpush1.bf16.msra.mxu0 %v2534
  %3651 = vmatprep.subr.bf16.mxu0 %v2531
  %3652 = vmatpush1.bf16.msra.mxu0 %v2530
  %3653 = vmatprep.subr.bf16.mxu0 %v2527
  %3654 = vmatpush1.bf16.msra.mxu0 %v2526
  %3655 = vmatprep.subr.bf16.mxu0 %v2523
  %3656 = vmatpush1.bf16.msra.mxu0 %v2522
  %3657 = vmatprep.subr.bf16.mxu0 %v2519
  %3658 = vmatpush1.bf16.msra.mxu0 %v2518
  %3659 = vmatprep.subr.bf16.mxu0 %v2515
  %3660 = vmatpush1.bf16.msra.mxu0 %v2514
  %3661 = vmatprep.subr.bf16.mxu0 %v2575
  %3662 = vmatpush2.bf16.msra.mxu0 %v2574
  %3663 = vmatprep.subr.bf16.mxu0 %v2571
  %3664 = vmatpush2.bf16.msra.mxu0 %v2570
  %3665 = vmatprep.subr.bf16.mxu0 %v2567
  %3666 = vmatpush2.bf16.msra.mxu0 %v2566
  %3667 = vmatprep.subr.bf16.mxu0 %v2563
  %3668 = vmatpush2.bf16.msra.mxu0 %v2562
  %3669 = vmatprep.subr.bf16.mxu0 %v2559
  %3670 = vmatpush2.bf16.msra.mxu0 %v2558
  %3671 = vmatprep.subr.bf16.mxu0 %v2555
  %3672 = vmatpush2.bf16.msra.mxu0 %v2554
  %3673 = vmatprep.subr.bf16.mxu0 %v2551
  %3674 = vmatpush2.bf16.msra.mxu0 %v2550
  %3675 = vmatprep.subr.bf16.mxu0 %v2547
  %3676 = vmatpush2.bf16.msra.mxu0 %v2546
  %3677 = vmatprep.mubr.bf16.mxu0 %v689
  %3678 = vmatmul.mubr.bf16.gmra.mxu0 %v688
  %v3679 = vpop.f32.mrf.mxu0
  %v3680 = vadd.f32 %v3637, %v3679
  %v3681 = vpop.f32.mrf.mxu0
  %v3682 = vadd.f32 %v3639, %v3681
  %v3683 = vpop.f32.mrf.mxu0
  %v3684 = vadd.f32 %v3641, %v3683
  %v3685 = vpop.f32.mrf.mxu0
  %v3686 = vadd.f32 %v3643, %v3685
  %3687 = vdwg.mxu0
  %3688 = vmatprep.subr.bf16.mxu0 %v2607
  %3689 = vmatpush1.bf16.msra.mxu0 %v2606
  %3690 = vmatprep.subr.bf16.mxu0 %v2603
  %3691 = vmatpush1.bf16.msra.mxu0 %v2602
  %3692 = vmatprep.subr.bf16.mxu0 %v2599
  %3693 = vmatpush1.bf16.msra.mxu0 %v2598
  %3694 = vmatprep.subr.bf16.mxu0 %v2595
  %3695 = vmatpush1.bf16.msra.mxu0 %v2594
  %3696 = vmatprep.subr.bf16.mxu0 %v2591
  %3697 = vmatpush1.bf16.msra.mxu0 %v2590
  %3698 = vmatprep.subr.bf16.mxu0 %v2587
  %3699 = vmatpush1.bf16.msra.mxu0 %v2586
  %3700 = vmatprep.subr.bf16.mxu0 %v2583
  %3701 = vmatpush1.bf16.msra.mxu0 %v2582
  %3702 = vmatprep.subr.bf16.mxu0 %v2579
  %3703 = vmatpush1.bf16.msra.mxu0 %v2578
  %3704 = vmatprep.subr.bf16.mxu0 %v2639
  %3705 = vmatpush2.bf16.msra.mxu0 %v2638
  %3706 = vmatprep.subr.bf16.mxu0 %v2635
  %3707 = vmatpush2.bf16.msra.mxu0 %v2634
  %3708 = vmatprep.subr.bf16.mxu0 %v2631
  %3709 = vmatpush2.bf16.msra.mxu0 %v2630
  %3710 = vmatprep.subr.bf16.mxu0 %v2627
  %3711 = vmatpush2.bf16.msra.mxu0 %v2626
  %3712 = vmatprep.subr.bf16.mxu0 %v2623
  %3713 = vmatpush2.bf16.msra.mxu0 %v2622
  %3714 = vmatprep.subr.bf16.mxu0 %v2619
  %3715 = vmatpush2.bf16.msra.mxu0 %v2618
  %3716 = vmatprep.subr.bf16.mxu0 %v2615
  %3717 = vmatpush2.bf16.msra.mxu0 %v2614
  %3718 = vmatprep.subr.bf16.mxu0 %v2611
  %3719 = vmatpush2.bf16.msra.mxu0 %v2610
  %3720 = vmatprep.mubr.bf16.mxu0 %v691
  %3721 = vmatmul.mubr.bf16.gmra.mxu0 %v690
  %v3722 = vpop.f32.mrf.mxu0
  %v3723 = vadd.f32 %v3680, %v3722
  %v3724 = vpop.f32.mrf.mxu0
  %v3725 = vadd.f32 %v3682, %v3724
  %v3726 = vpop.f32.mrf.mxu0
  %v3727 = vadd.f32 %v3684, %v3726
  %v3728 = vpop.f32.mrf.mxu0
  %v3729 = vadd.f32 %v3686, %v3728
  %3730 = vdwg.mxu0
  %3731 = vmatprep.subr.bf16.mxu0 %v2671
  %3732 = vmatpush1.bf16.msra.mxu0 %v2670
  %3733 = vmatprep.subr.bf16.mxu0 %v2667
  %3734 = vmatpush1.bf16.msra.mxu0 %v2666
  %3735 = vmatprep.subr.bf16.mxu0 %v2663
  %3736 = vmatpush1.bf16.msra.mxu0 %v2662
  %3737 = vmatprep.subr.bf16.mxu0 %v2659
  %3738 = vmatpush1.bf16.msra.mxu0 %v2658
  %3739 = vmatprep.subr.bf16.mxu0 %v2655
  %3740 = vmatpush1.bf16.msra.mxu0 %v2654
  %3741 = vmatprep.subr.bf16.mxu0 %v2651
  %3742 = vmatpush1.bf16.msra.mxu0 %v2650
  %3743 = vmatprep.subr.bf16.mxu0 %v2647
  %3744 = vmatpush1.bf16.msra.mxu0 %v2646
  %3745 = vmatprep.subr.bf16.mxu0 %v2643
  %3746 = vmatpush1.bf16.msra.mxu0 %v2642
  %3747 = vmatprep.subr.bf16.mxu0 %v2703
  %3748 = vmatpush2.bf16.msra.mxu0 %v2702
  %3749 = vmatprep.subr.bf16.mxu0 %v2699
  %3750 = vmatpush2.bf16.msra.mxu0 %v2698
  %3751 = vmatprep.subr.bf16.mxu0 %v2695
  %3752 = vmatpush2.bf16.msra.mxu0 %v2694
  %3753 = vmatprep.subr.bf16.mxu0 %v2691
  %3754 = vmatpush2.bf16.msra.mxu0 %v2690
  %3755 = vmatprep.subr.bf16.mxu0 %v2687
  %3756 = vmatpush2.bf16.msra.mxu0 %v2686
  %3757 = vmatprep.subr.bf16.mxu0 %v2683
  %3758 = vmatpush2.bf16.msra.mxu0 %v2682
  %3759 = vmatprep.subr.bf16.mxu0 %v2679
  %3760 = vmatpush2.bf16.msra.mxu0 %v2678
  %3761 = vmatprep.subr.bf16.mxu0 %v2675
  %3762 = vmatpush2.bf16.msra.mxu0 %v2674
  %3763 = vmatprep.mubr.bf16.mxu0 %v693
  %3764 = vmatmul.mubr.bf16.gmra.mxu0 %v692
  %v3765 = vpop.f32.mrf.mxu0
  %v3766 = vadd.f32 %v3723, %v3765
  %v3767 = vpop.f32.mrf.mxu0
  %v3768 = vadd.f32 %v3725, %v3767
  %v3769 = vpop.f32.mrf.mxu0
  %v3770 = vadd.f32 %v3727, %v3769
  %v3771 = vpop.f32.mrf.mxu0
  %v3772 = vadd.f32 %v3729, %v3771
  %3773 = vdwg.mxu0
  %3774 = vmatprep.subr.bf16.mxu0 %v2735
  %3775 = vmatpush1.bf16.msra.mxu0 %v2734
  %3776 = vmatprep.subr.bf16.mxu0 %v2731
  %3777 = vmatpush1.bf16.msra.mxu0 %v2730
  %3778 = vmatprep.subr.bf16.mxu0 %v2727
  %3779 = vmatpush1.bf16.msra.mxu0 %v2726
  %3780 = vmatprep.subr.bf16.mxu0 %v2723
  %3781 = vmatpush1.bf16.msra.mxu0 %v2722
  %3782 = vmatprep.subr.bf16.mxu0 %v2719
  %3783 = vmatpush1.bf16.msra.mxu0 %v2718
  %3784 = vmatprep.subr.bf16.mxu0 %v2715
  %3785 = vmatpush1.bf16.msra.mxu0 %v2714
  %3786 = vmatprep.subr.bf16.mxu0 %v2711
  %3787 = vmatpush1.bf16.msra.mxu0 %v2710
  %3788 = vmatprep.subr.bf16.mxu0 %v2707
  %3789 = vmatpush1.bf16.msra.mxu0 %v2706
  %3790 = vmatprep.subr.bf16.mxu0 %v2767
  %3791 = vmatpush2.bf16.msra.mxu0 %v2766
  %3792 = vmatprep.subr.bf16.mxu0 %v2763
  %3793 = vmatpush2.bf16.msra.mxu0 %v2762
  %3794 = vmatprep.subr.bf16.mxu0 %v2759
  %3795 = vmatpush2.bf16.msra.mxu0 %v2758
  %3796 = vmatprep.subr.bf16.mxu0 %v2755
  %3797 = vmatpush2.bf16.msra.mxu0 %v2754
  %3798 = vmatprep.subr.bf16.mxu0 %v2751
  %3799 = vmatpush2.bf16.msra.mxu0 %v2750
  %3800 = vmatprep.subr.bf16.mxu0 %v2747
  %3801 = vmatpush2.bf16.msra.mxu0 %v2746
  %3802 = vmatprep.subr.bf16.mxu0 %v2743
  %3803 = vmatpush2.bf16.msra.mxu0 %v2742
  %3804 = vmatprep.subr.bf16.mxu0 %v2739
  %3805 = vmatpush2.bf16.msra.mxu0 %v2738
  %3806 = vmatprep.mubr.bf16.mxu0 %v695
  %3807 = vmatmul.mubr.bf16.gmra.mxu0 %v694
  %v3808 = vpop.f32.mrf.mxu0
  %v3809 = vadd.f32 %v3766, %v3808
  %v3810 = vpop.f32.mrf.mxu0
  %v3811 = vadd.f32 %v3768, %v3810
  %v3812 = vpop.f32.mrf.mxu0
  %v3813 = vadd.f32 %v3770, %v3812
  %v3814 = vpop.f32.mrf.mxu0
  %v3815 = vadd.f32 %v3772, %v3814
  %3816 = vdwg.mxu0
  %3817 = vmatprep.subr.bf16.mxu0 %v2799
  %3818 = vmatpush1.bf16.msra.mxu0 %v2798
  %3819 = vmatprep.subr.bf16.mxu0 %v2795
  %3820 = vmatpush1.bf16.msra.mxu0 %v2794
  %3821 = vmatprep.subr.bf16.mxu0 %v2791
  %3822 = vmatpush1.bf16.msra.mxu0 %v2790
  %3823 = vmatprep.subr.bf16.mxu0 %v2787
  %3824 = vmatpush1.bf16.msra.mxu0 %v2786
  %3825 = vmatprep.subr.bf16.mxu0 %v2783
  %3826 = vmatpush1.bf16.msra.mxu0 %v2782
  %3827 = vmatprep.subr.bf16.mxu0 %v2779
  %3828 = vmatpush1.bf16.msra.mxu0 %v2778
  %3829 = vmatprep.subr.bf16.mxu0 %v2775
  %3830 = vmatpush1.bf16.msra.mxu0 %v2774
  %3831 = vmatprep.subr.bf16.mxu0 %v2771
  %3832 = vmatpush1.bf16.msra.mxu0 %v2770
  %3833 = vmatprep.subr.bf16.mxu0 %v2831
  %3834 = vmatpush2.bf16.msra.mxu0 %v2830
  %3835 = vmatprep.subr.bf16.mxu0 %v2827
  %3836 = vmatpush2.bf16.msra.mxu0 %v2826
  %3837 = vmatprep.subr.bf16.mxu0 %v2823
  %3838 = vmatpush2.bf16.msra.mxu0 %v2822
  %3839 = vmatprep.subr.bf16.mxu0 %v2819
  %3840 = vmatpush2.bf16.msra.mxu0 %v2818
  %3841 = vmatprep.subr.bf16.mxu0 %v2815
  %3842 = vmatpush2.bf16.msra.mxu0 %v2814
  %3843 = vmatprep.subr.bf16.mxu0 %v2811
  %3844 = vmatpush2.bf16.msra.mxu0 %v2810
  %3845 = vmatprep.subr.bf16.mxu0 %v2807
  %3846 = vmatpush2.bf16.msra.mxu0 %v2806
  %3847 = vmatprep.subr.bf16.mxu0 %v2803
  %3848 = vmatpush2.bf16.msra.mxu0 %v2802
  %3849 = vmatprep.mubr.bf16.mxu0 %v697
  %3850 = vmatmul.mubr.bf16.gmra.mxu0 %v696
  %v3851 = vpop.f32.mrf.mxu0
  %v3852 = vadd.f32 %v3809, %v3851
  %v3853 = vpop.f32.mrf.mxu0
  %v3854 = vadd.f32 %v3811, %v3853
  %v3855 = vpop.f32.mrf.mxu0
  %v3856 = vadd.f32 %v3813, %v3855
  %v3857 = vpop.f32.mrf.mxu0
  %v3858 = vadd.f32 %v3815, %v3857
  %3859 = vdwg.mxu0
  %3860 = vmatprep.subr.bf16.mxu0 %v2863
  %3861 = vmatpush1.bf16.msra.mxu0 %v2862
  %3862 = vmatprep.subr.bf16.mxu0 %v2859
  %3863 = vmatpush1.bf16.msra.mxu0 %v2858
  %3864 = vmatprep.subr.bf16.mxu0 %v2855
  %3865 = vmatpush1.bf16.msra.mxu0 %v2854
  %3866 = vmatprep.subr.bf16.mxu0 %v2851
  %3867 = vmatpush1.bf16.msra.mxu0 %v2850
  %3868 = vmatprep.subr.bf16.mxu0 %v2847
  %3869 = vmatpush1.bf16.msra.mxu0 %v2846
  %3870 = vmatprep.subr.bf16.mxu0 %v2843
  %3871 = vmatpush1.bf16.msra.mxu0 %v2842
  %3872 = vmatprep.subr.bf16.mxu0 %v2839
  %3873 = vmatpush1.bf16.msra.mxu0 %v2838
  %3874 = vmatprep.subr.bf16.mxu0 %v2835
  %3875 = vmatpush1.bf16.msra.mxu0 %v2834
  %3876 = vmatprep.subr.bf16.mxu0 %v2895
  %3877 = vmatpush2.bf16.msra.mxu0 %v2894
  %3878 = vmatprep.subr.bf16.mxu0 %v2891
  %3879 = vmatpush2.bf16.msra.mxu0 %v2890
  %3880 = vmatprep.subr.bf16.mxu0 %v2887
  %3881 = vmatpush2.bf16.msra.mxu0 %v2886
  %3882 = vmatprep.subr.bf16.mxu0 %v2883
  %3883 = vmatpush2.bf16.msra.mxu0 %v2882
  %3884 = vmatprep.subr.bf16.mxu0 %v2879
  %3885 = vmatpush2.bf16.msra.mxu0 %v2878
  %3886 = vmatprep.subr.bf16.mxu0 %v2875
  %3887 = vmatpush2.bf16.msra.mxu0 %v2874
  %3888 = vmatprep.subr.bf16.mxu0 %v2871
  %3889 = vmatpush2.bf16.msra.mxu0 %v2870
  %3890 = vmatprep.subr.bf16.mxu0 %v2867
  %3891 = vmatpush2.bf16.msra.mxu0 %v2866
  %3892 = vmatprep.mubr.bf16.mxu0 %v699
  %3893 = vmatmul.mubr.bf16.gmra.mxu0 %v698
  %v3894 = vpop.f32.mrf.mxu0
  %v3895 = vadd.f32 %v3852, %v3894
  %v3896 = vpop.f32.mrf.mxu0
  %v3897 = vadd.f32 %v3854, %v3896
  %v3898 = vpop.f32.mrf.mxu0
  %v3899 = vadd.f32 %v3856, %v3898
  %v3900 = vpop.f32.mrf.mxu0
  %v3901 = vadd.f32 %v3858, %v3900
  %3902 = vdwg.mxu0
  %3903 = vmatprep.subr.bf16.mxu0 %v2927
  %3904 = vmatpush1.bf16.msra.mxu0 %v2926
  %3905 = vmatprep.subr.bf16.mxu0 %v2923
  %3906 = vmatpush1.bf16.msra.mxu0 %v2922
  %3907 = vmatprep.subr.bf16.mxu0 %v2919
  %3908 = vmatpush1.bf16.msra.mxu0 %v2918
  %3909 = vmatprep.subr.bf16.mxu0 %v2915
  %3910 = vmatpush1.bf16.msra.mxu0 %v2914
  %3911 = vmatprep.subr.bf16.mxu0 %v2911
  %3912 = vmatpush1.bf16.msra.mxu0 %v2910
  %3913 = vmatprep.subr.bf16.mxu0 %v2907
  %3914 = vmatpush1.bf16.msra.mxu0 %v2906
  %3915 = vmatprep.subr.bf16.mxu0 %v2903
  %3916 = vmatpush1.bf16.msra.mxu0 %v2902
  %3917 = vmatprep.subr.bf16.mxu0 %v2899
  %3918 = vmatpush1.bf16.msra.mxu0 %v2898
  %3919 = vmatprep.subr.bf16.mxu0 %v2959
  %3920 = vmatpush2.bf16.msra.mxu0 %v2958
  %3921 = vmatprep.subr.bf16.mxu0 %v2955
  %3922 = vmatpush2.bf16.msra.mxu0 %v2954
  %3923 = vmatprep.subr.bf16.mxu0 %v2951
  %3924 = vmatpush2.bf16.msra.mxu0 %v2950
  %3925 = vmatprep.subr.bf16.mxu0 %v2947
  %3926 = vmatpush2.bf16.msra.mxu0 %v2946
  %3927 = vmatprep.subr.bf16.mxu0 %v2943
  %3928 = vmatpush2.bf16.msra.mxu0 %v2942
  %3929 = vmatprep.subr.bf16.mxu0 %v2939
  %3930 = vmatpush2.bf16.msra.mxu0 %v2938
  %3931 = vmatprep.subr.bf16.mxu0 %v2935
  %3932 = vmatpush2.bf16.msra.mxu0 %v2934
  %3933 = vmatprep.subr.bf16.mxu0 %v2931
  %3934 = vmatpush2.bf16.msra.mxu0 %v2930
  %3935 = vmatprep.mubr.bf16.mxu0 %v701
  %3936 = vmatmul.mubr.bf16.gmra.mxu0 %v700
  %v3937 = vpop.f32.mrf.mxu0
  %v3938 = vadd.f32 %v3895, %v3937
  %v3939 = vpop.f32.mrf.mxu0
  %v3940 = vadd.f32 %v3897, %v3939
  %v3941 = vpop.f32.mrf.mxu0
  %v3942 = vadd.f32 %v3899, %v3941
  %v3943 = vpop.f32.mrf.mxu0
  %v3944 = vadd.f32 %v3901, %v3943
  %3945 = vdwg.mxu0
  %3946 = vmatprep.subr.bf16.mxu0 %v2991
  %3947 = vmatpush1.bf16.msra.mxu0 %v2990
  %3948 = vmatprep.subr.bf16.mxu0 %v2987
  %3949 = vmatpush1.bf16.msra.mxu0 %v2986
  %3950 = vmatprep.subr.bf16.mxu0 %v2983
  %3951 = vmatpush1.bf16.msra.mxu0 %v2982
  %3952 = vmatprep.subr.bf16.mxu0 %v2979
  %3953 = vmatpush1.bf16.msra.mxu0 %v2978
  %3954 = vmatprep.subr.bf16.mxu0 %v2975
  %3955 = vmatpush1.bf16.msra.mxu0 %v2974
  %3956 = vmatprep.subr.bf16.mxu0 %v2971
  %3957 = vmatpush1.bf16.msra.mxu0 %v2970
  %3958 = vmatprep.subr.bf16.mxu0 %v2967
  %3959 = vmatpush1.bf16.msra.mxu0 %v2966
  %3960 = vmatprep.subr.bf16.mxu0 %v2963
  %3961 = vmatpush1.bf16.msra.mxu0 %v2962
  %3962 = vmatprep.subr.bf16.mxu0 %v3023
  %3963 = vmatpush2.bf16.msra.mxu0 %v3022
  %3964 = vmatprep.subr.bf16.mxu0 %v3019
  %3965 = vmatpush2.bf16.msra.mxu0 %v3018
  %3966 = vmatprep.subr.bf16.mxu0 %v3015
  %3967 = vmatpush2.bf16.msra.mxu0 %v3014
  %3968 = vmatprep.subr.bf16.mxu0 %v3011
  %3969 = vmatpush2.bf16.msra.mxu0 %v3010
  %3970 = vmatprep.subr.bf16.mxu0 %v3007
  %3971 = vmatpush2.bf16.msra.mxu0 %v3006
  %3972 = vmatprep.subr.bf16.mxu0 %v3003
  %3973 = vmatpush2.bf16.msra.mxu0 %v3002
  %3974 = vmatprep.subr.bf16.mxu0 %v2999
  %3975 = vmatpush2.bf16.msra.mxu0 %v2998
  %3976 = vmatprep.subr.bf16.mxu0 %v2995
  %3977 = vmatpush2.bf16.msra.mxu0 %v2994
  %3978 = vmatprep.mubr.bf16.mxu0 %v703
  %3979 = vmatmul.mubr.bf16.gmra.mxu0 %v702
  %v3980 = vpop.f32.mrf.mxu0
  %v3981 = vadd.f32 %v3938, %v3980
  %v3982 = vpop.f32.mrf.mxu0
  %v3983 = vadd.f32 %v3940, %v3982
  %v3984 = vpop.f32.mrf.mxu0
  %v3985 = vadd.f32 %v3942, %v3984
  %v3986 = vpop.f32.mrf.mxu0
  %v3987 = vadd.f32 %v3944, %v3986
  %3988 = vdwg.mxu0
  %3989 = vmatprep.subr.bf16.mxu0 %v2481
  %3990 = vmatpush1.bf16.msra.mxu0 %v2480
  %3991 = vmatprep.subr.bf16.mxu0 %v2477
  %3992 = vmatpush1.bf16.msra.mxu0 %v2476
  %3993 = vmatprep.subr.bf16.mxu0 %v2473
  %3994 = vmatpush1.bf16.msra.mxu0 %v2472
  %3995 = vmatprep.subr.bf16.mxu0 %v2469
  %3996 = vmatpush1.bf16.msra.mxu0 %v2468
  %3997 = vmatprep.subr.bf16.mxu0 %v2465
  %3998 = vmatpush1.bf16.msra.mxu0 %v2464
  %3999 = vmatprep.subr.bf16.mxu0 %v2461
  %4000 = vmatpush1.bf16.msra.mxu0 %v2460
  %4001 = vmatprep.subr.bf16.mxu0 %v2457
  %4002 = vmatpush1.bf16.msra.mxu0 %v2456
  %4003 = vmatprep.subr.bf16.mxu0 %v2453
  %4004 = vmatpush1.bf16.msra.mxu0 %v2452
  %4005 = vmatprep.subr.bf16.mxu0 %v2513
  %4006 = vmatpush2.bf16.msra.mxu0 %v2512
  %4007 = vmatprep.subr.bf16.mxu0 %v2509
  %4008 = vmatpush2.bf16.msra.mxu0 %v2508
  %4009 = vmatprep.subr.bf16.mxu0 %v2505
  %4010 = vmatpush2.bf16.msra.mxu0 %v2504
  %4011 = vmatprep.subr.bf16.mxu0 %v2501
  %4012 = vmatpush2.bf16.msra.mxu0 %v2500
  %4013 = vmatprep.subr.bf16.mxu0 %v2497
  %4014 = vmatpush2.bf16.msra.mxu0 %v2496
  %4015 = vmatprep.subr.bf16.mxu0 %v2493
  %4016 = vmatpush2.bf16.msra.mxu0 %v2492
  %4017 = vmatprep.subr.bf16.mxu0 %v2489
  %4018 = vmatpush2.bf16.msra.mxu0 %v2488
  %4019 = vmatprep.subr.bf16.mxu0 %v2485
  %4020 = vmatpush2.bf16.msra.mxu0 %v2484
  %4021 = vmatprep.mubr.bf16.mxu0 %v687
  %4022 = vmatmul.mubr.bf16.gmra.mxu0 %v686
  %v4023 = vpop.f32.mrf.mxu0
  %v4024 = vadd.f32 %v623, %v4023
  %v4025 = vpop.f32.mrf.mxu0
  %v4026 = vadd.f32 %v627, %v4025
  %v4027 = vpop.f32.mrf.mxu0
  %v4028 = vadd.f32 %v623, %v4027
  %v4029 = vpop.f32.mrf.mxu0
  %v4030 = vadd.f32 %v627, %v4029
  %4031 = vdwg.mxu0
  %4032 = vmatprep.subr.bf16.mxu0 %v2545
  %4033 = vmatpush1.bf16.msra.mxu0 %v2544
  %4034 = vmatprep.subr.bf16.mxu0 %v2541
  %4035 = vmatpush1.bf16.msra.mxu0 %v2540
  %4036 = vmatprep.subr.bf16.mxu0 %v2537
  %4037 = vmatpush1.bf16.msra.mxu0 %v2536
  %4038 = vmatprep.subr.bf16.mxu0 %v2533
  %4039 = vmatpush1.bf16.msra.mxu0 %v2532
  %4040 = vmatprep.subr.bf16.mxu0 %v2529
  %4041 = vmatpush1.bf16.msra.mxu0 %v2528
  %4042 = vmatprep.subr.bf16.mxu0 %v2525
  %4043 = vmatpush1.bf16.msra.mxu0 %v2524
  %4044 = vmatprep.subr.bf16.mxu0 %v2521
  %4045 = vmatpush1.bf16.msra.mxu0 %v2520
  %4046 = vmatprep.subr.bf16.mxu0 %v2517
  %4047 = vmatpush1.bf16.msra.mxu0 %v2516
  %4048 = vmatprep.subr.bf16.mxu0 %v2577
  %4049 = vmatpush2.bf16.msra.mxu0 %v2576
  %4050 = vmatprep.subr.bf16.mxu0 %v2573
  %4051 = vmatpush2.bf16.msra.mxu0 %v2572
  %4052 = vmatprep.subr.bf16.mxu0 %v2569
  %4053 = vmatpush2.bf16.msra.mxu0 %v2568
  %4054 = vmatprep.subr.bf16.mxu0 %v2565
  %4055 = vmatpush2.bf16.msra.mxu0 %v2564
  %4056 = vmatprep.subr.bf16.mxu0 %v2561
  %4057 = vmatpush2.bf16.msra.mxu0 %v2560
  %4058 = vmatprep.subr.bf16.mxu0 %v2557
  %4059 = vmatpush2.bf16.msra.mxu0 %v2556
  %4060 = vmatprep.subr.bf16.mxu0 %v2553
  %4061 = vmatpush2.bf16.msra.mxu0 %v2552
  %4062 = vmatprep.subr.bf16.mxu0 %v2549
  %4063 = vmatpush2.bf16.msra.mxu0 %v2548
  %4064 = vmatprep.mubr.bf16.mxu0 %v689
  %4065 = vmatmul.mubr.bf16.gmra.mxu0 %v688
  %v4066 = vpop.f32.mrf.mxu0
  %v4067 = vadd.f32 %v4024, %v4066
  %v4068 = vpop.f32.mrf.mxu0
  %v4069 = vadd.f32 %v4026, %v4068
  %v4070 = vpop.f32.mrf.mxu0
  %v4071 = vadd.f32 %v4028, %v4070
  %v4072 = vpop.f32.mrf.mxu0
  %v4073 = vadd.f32 %v4030, %v4072
  %4074 = vdwg.mxu0
  %4075 = vmatprep.subr.bf16.mxu0 %v2609
  %4076 = vmatpush1.bf16.msra.mxu0 %v2608
  %4077 = vmatprep.subr.bf16.mxu0 %v2605
  %4078 = vmatpush1.bf16.msra.mxu0 %v2604
  %4079 = vmatprep.subr.bf16.mxu0 %v2601
  %4080 = vmatpush1.bf16.msra.mxu0 %v2600
  %4081 = vmatprep.subr.bf16.mxu0 %v2597
  %4082 = vmatpush1.bf16.msra.mxu0 %v2596
  %4083 = vmatprep.subr.bf16.mxu0 %v2593
  %4084 = vmatpush1.bf16.msra.mxu0 %v2592
  %4085 = vmatprep.subr.bf16.mxu0 %v2589
  %4086 = vmatpush1.bf16.msra.mxu0 %v2588
  %4087 = vmatprep.subr.bf16.mxu0 %v2585
  %4088 = vmatpush1.bf16.msra.mxu0 %v2584
  %4089 = vmatprep.subr.bf16.mxu0 %v2581
  %4090 = vmatpush1.bf16.msra.mxu0 %v2580
  %4091 = vmatprep.subr.bf16.mxu0 %v2641
  %4092 = vmatpush2.bf16.msra.mxu0 %v2640
  %4093 = vmatprep.subr.bf16.mxu0 %v2637
  %4094 = vmatpush2.bf16.msra.mxu0 %v2636
  %4095 = vmatprep.subr.bf16.mxu0 %v2633
  %4096 = vmatpush2.bf16.msra.mxu0 %v2632
  %4097 = vmatprep.subr.bf16.mxu0 %v2629
  %4098 = vmatpush2.bf16.msra.mxu0 %v2628
  %4099 = vmatprep.subr.bf16.mxu0 %v2625
  %4100 = vmatpush2.bf16.msra.mxu0 %v2624
  %4101 = vmatprep.subr.bf16.mxu0 %v2621
  %4102 = vmatpush2.bf16.msra.mxu0 %v2620
  %4103 = vmatprep.subr.bf16.mxu0 %v2617
  %4104 = vmatpush2.bf16.msra.mxu0 %v2616
  %4105 = vmatprep.subr.bf16.mxu0 %v2613
  %4106 = vmatpush2.bf16.msra.mxu0 %v2612
  %4107 = vmatprep.mubr.bf16.mxu0 %v691
  %4108 = vmatmul.mubr.bf16.gmra.mxu0 %v690
  %v4109 = vpop.f32.mrf.mxu0
  %v4110 = vadd.f32 %v4067, %v4109
  %v4111 = vpop.f32.mrf.mxu0
  %v4112 = vadd.f32 %v4069, %v4111
  %v4113 = vpop.f32.mrf.mxu0
  %v4114 = vadd.f32 %v4071, %v4113
  %v4115 = vpop.f32.mrf.mxu0
  %v4116 = vadd.f32 %v4073, %v4115
  %4117 = vdwg.mxu0
  %4118 = vmatprep.subr.bf16.mxu0 %v2673
  %4119 = vmatpush1.bf16.msra.mxu0 %v2672
  %4120 = vmatprep.subr.bf16.mxu0 %v2669
  %4121 = vmatpush1.bf16.msra.mxu0 %v2668
  %4122 = vmatprep.subr.bf16.mxu0 %v2665
  %4123 = vmatpush1.bf16.msra.mxu0 %v2664
  %4124 = vmatprep.subr.bf16.mxu0 %v2661
  %4125 = vmatpush1.bf16.msra.mxu0 %v2660
  %4126 = vmatprep.subr.bf16.mxu0 %v2657
  %4127 = vmatpush1.bf16.msra.mxu0 %v2656
  %4128 = vmatprep.subr.bf16.mxu0 %v2653
  %4129 = vmatpush1.bf16.msra.mxu0 %v2652
  %4130 = vmatprep.subr.bf16.mxu0 %v2649
  %4131 = vmatpush1.bf16.msra.mxu0 %v2648
  %4132 = vmatprep.subr.bf16.mxu0 %v2645
  %4133 = vmatpush1.bf16.msra.mxu0 %v2644
  %4134 = vmatprep.subr.bf16.mxu0 %v2705
  %4135 = vmatpush2.bf16.msra.mxu0 %v2704
  %4136 = vmatprep.subr.bf16.mxu0 %v2701
  %4137 = vmatpush2.bf16.msra.mxu0 %v2700
  %4138 = vmatprep.subr.bf16.mxu0 %v2697
  %4139 = vmatpush2.bf16.msra.mxu0 %v2696
  %4140 = vmatprep.subr.bf16.mxu0 %v2693
  %4141 = vmatpush2.bf16.msra.mxu0 %v2692
  %4142 = vmatprep.subr.bf16.mxu0 %v2689
  %4143 = vmatpush2.bf16.msra.mxu0 %v2688
  %4144 = vmatprep.subr.bf16.mxu0 %v2685
  %4145 = vmatpush2.bf16.msra.mxu0 %v2684
  %4146 = vmatprep.subr.bf16.mxu0 %v2681
  %4147 = vmatpush2.bf16.msra.mxu0 %v2680
  %4148 = vmatprep.subr.bf16.mxu0 %v2677
  %4149 = vmatpush2.bf16.msra.mxu0 %v2676
  %4150 = vmatprep.mubr.bf16.mxu0 %v693
  %4151 = vmatmul.mubr.bf16.gmra.mxu0 %v692
  %v4152 = vpop.f32.mrf.mxu0
  %v4153 = vadd.f32 %v4110, %v4152
  %v4154 = vpop.f32.mrf.mxu0
  %v4155 = vadd.f32 %v4112, %v4154
  %v4156 = vpop.f32.mrf.mxu0
  %v4157 = vadd.f32 %v4114, %v4156
  %v4158 = vpop.f32.mrf.mxu0
  %v4159 = vadd.f32 %v4116, %v4158
  %4160 = vdwg.mxu0
  %4161 = vmatprep.subr.bf16.mxu0 %v2737
  %4162 = vmatpush1.bf16.msra.mxu0 %v2736
  %4163 = vmatprep.subr.bf16.mxu0 %v2733
  %4164 = vmatpush1.bf16.msra.mxu0 %v2732
  %4165 = vmatprep.subr.bf16.mxu0 %v2729
  %4166 = vmatpush1.bf16.msra.mxu0 %v2728
  %4167 = vmatprep.subr.bf16.mxu0 %v2725
  %4168 = vmatpush1.bf16.msra.mxu0 %v2724
  %4169 = vmatprep.subr.bf16.mxu0 %v2721
  %4170 = vmatpush1.bf16.msra.mxu0 %v2720
  %4171 = vmatprep.subr.bf16.mxu0 %v2717
  %4172 = vmatpush1.bf16.msra.mxu0 %v2716
  %4173 = vmatprep.subr.bf16.mxu0 %v2713
  %4174 = vmatpush1.bf16.msra.mxu0 %v2712
  %4175 = vmatprep.subr.bf16.mxu0 %v2709
  %4176 = vmatpush1.bf16.msra.mxu0 %v2708
  %4177 = vmatprep.subr.bf16.mxu0 %v2769
  %4178 = vmatpush2.bf16.msra.mxu0 %v2768
  %4179 = vmatprep.subr.bf16.mxu0 %v2765
  %4180 = vmatpush2.bf16.msra.mxu0 %v2764
  %4181 = vmatprep.subr.bf16.mxu0 %v2761
  %4182 = vmatpush2.bf16.msra.mxu0 %v2760
  %4183 = vmatprep.subr.bf16.mxu0 %v2757
  %4184 = vmatpush2.bf16.msra.mxu0 %v2756
  %4185 = vmatprep.subr.bf16.mxu0 %v2753
  %4186 = vmatpush2.bf16.msra.mxu0 %v2752
  %4187 = vmatprep.subr.bf16.mxu0 %v2749
  %4188 = vmatpush2.bf16.msra.mxu0 %v2748
  %4189 = vmatprep.subr.bf16.mxu0 %v2745
  %4190 = vmatpush2.bf16.msra.mxu0 %v2744
  %4191 = vmatprep.subr.bf16.mxu0 %v2741
  %4192 = vmatpush2.bf16.msra.mxu0 %v2740
  %4193 = vmatprep.mubr.bf16.mxu0 %v695
  %4194 = vmatmul.mubr.bf16.gmra.mxu0 %v694
  %v4195 = vpop.f32.mrf.mxu0
  %v4196 = vadd.f32 %v4153, %v4195
  %v4197 = vpop.f32.mrf.mxu0
  %v4198 = vadd.f32 %v4155, %v4197
  %v4199 = vpop.f32.mrf.mxu0
  %v4200 = vadd.f32 %v4157, %v4199
  %v4201 = vpop.f32.mrf.mxu0
  %v4202 = vadd.f32 %v4159, %v4201
  %4203 = vdwg.mxu0
  %4204 = vmatprep.subr.bf16.mxu0 %v2801
  %4205 = vmatpush1.bf16.msra.mxu0 %v2800
  %4206 = vmatprep.subr.bf16.mxu0 %v2797
  %4207 = vmatpush1.bf16.msra.mxu0 %v2796
  %4208 = vmatprep.subr.bf16.mxu0 %v2793
  %4209 = vmatpush1.bf16.msra.mxu0 %v2792
  %4210 = vmatprep.subr.bf16.mxu0 %v2789
  %4211 = vmatpush1.bf16.msra.mxu0 %v2788
  %4212 = vmatprep.subr.bf16.mxu0 %v2785
  %4213 = vmatpush1.bf16.msra.mxu0 %v2784
  %4214 = vmatprep.subr.bf16.mxu0 %v2781
  %4215 = vmatpush1.bf16.msra.mxu0 %v2780
  %4216 = vmatprep.subr.bf16.mxu0 %v2777
  %4217 = vmatpush1.bf16.msra.mxu0 %v2776
  %4218 = vmatprep.subr.bf16.mxu0 %v2773
  %4219 = vmatpush1.bf16.msra.mxu0 %v2772
  %4220 = vmatprep.subr.bf16.mxu0 %v2833
  %4221 = vmatpush2.bf16.msra.mxu0 %v2832
  %4222 = vmatprep.subr.bf16.mxu0 %v2829
  %4223 = vmatpush2.bf16.msra.mxu0 %v2828
  %4224 = vmatprep.subr.bf16.mxu0 %v2825
  %4225 = vmatpush2.bf16.msra.mxu0 %v2824
  %4226 = vmatprep.subr.bf16.mxu0 %v2821
  %4227 = vmatpush2.bf16.msra.mxu0 %v2820
  %4228 = vmatprep.subr.bf16.mxu0 %v2817
  %4229 = vmatpush2.bf16.msra.mxu0 %v2816
  %4230 = vmatprep.subr.bf16.mxu0 %v2813
  %4231 = vmatpush2.bf16.msra.mxu0 %v2812
  %4232 = vmatprep.subr.bf16.mxu0 %v2809
  %4233 = vmatpush2.bf16.msra.mxu0 %v2808
  %4234 = vmatprep.subr.bf16.mxu0 %v2805
  %4235 = vmatpush2.bf16.msra.mxu0 %v2804
  %4236 = vmatprep.mubr.bf16.mxu0 %v697
  %4237 = vmatmul.mubr.bf16.gmra.mxu0 %v696
  %v4238 = vpop.f32.mrf.mxu0
  %v4239 = vadd.f32 %v4196, %v4238
  %v4240 = vpop.f32.mrf.mxu0
  %v4241 = vadd.f32 %v4198, %v4240
  %v4242 = vpop.f32.mrf.mxu0
  %v4243 = vadd.f32 %v4200, %v4242
  %v4244 = vpop.f32.mrf.mxu0
  %v4245 = vadd.f32 %v4202, %v4244
  %4246 = vdwg.mxu0
  %4247 = vmatprep.subr.bf16.mxu0 %v2865
  %4248 = vmatpush1.bf16.msra.mxu0 %v2864
  %4249 = vmatprep.subr.bf16.mxu0 %v2861
  %4250 = vmatpush1.bf16.msra.mxu0 %v2860
  %4251 = vmatprep.subr.bf16.mxu0 %v2857
  %4252 = vmatpush1.bf16.msra.mxu0 %v2856
  %4253 = vmatprep.subr.bf16.mxu0 %v2853
  %4254 = vmatpush1.bf16.msra.mxu0 %v2852
  %4255 = vmatprep.subr.bf16.mxu0 %v2849
  %4256 = vmatpush1.bf16.msra.mxu0 %v2848
  %4257 = vmatprep.subr.bf16.mxu0 %v2845
  %4258 = vmatpush1.bf16.msra.mxu0 %v2844
  %4259 = vmatprep.subr.bf16.mxu0 %v2841
  %4260 = vmatpush1.bf16.msra.mxu0 %v2840
  %4261 = vmatprep.subr.bf16.mxu0 %v2837
  %4262 = vmatpush1.bf16.msra.mxu0 %v2836
  %4263 = vmatprep.subr.bf16.mxu0 %v2897
  %4264 = vmatpush2.bf16.msra.mxu0 %v2896
  %4265 = vmatprep.subr.bf16.mxu0 %v2893
  %4266 = vmatpush2.bf16.msra.mxu0 %v2892
  %4267 = vmatprep.subr.bf16.mxu0 %v2889
  %4268 = vmatpush2.bf16.msra.mxu0 %v2888
  %4269 = vmatprep.subr.bf16.mxu0 %v2885
  %4270 = vmatpush2.bf16.msra.mxu0 %v2884
  %4271 = vmatprep.subr.bf16.mxu0 %v2881
  %4272 = vmatpush2.bf16.msra.mxu0 %v2880
  %4273 = vmatprep.subr.bf16.mxu0 %v2877
  %4274 = vmatpush2.bf16.msra.mxu0 %v2876
  %4275 = vmatprep.subr.bf16.mxu0 %v2873
  %4276 = vmatpush2.bf16.msra.mxu0 %v2872
  %4277 = vmatprep.subr.bf16.mxu0 %v2869
  %4278 = vmatpush2.bf16.msra.mxu0 %v2868
  %4279 = vmatprep.mubr.bf16.mxu0 %v699
  %4280 = vmatmul.mubr.bf16.gmra.mxu0 %v698
  %v4281 = vpop.f32.mrf.mxu0
  %v4282 = vadd.f32 %v4239, %v4281
  %v4283 = vpop.f32.mrf.mxu0
  %v4284 = vadd.f32 %v4241, %v4283
  %v4285 = vpop.f32.mrf.mxu0
  %v4286 = vadd.f32 %v4243, %v4285
  %v4287 = vpop.f32.mrf.mxu0
  %v4288 = vadd.f32 %v4245, %v4287
  %4289 = vdwg.mxu0
  %4290 = vmatprep.subr.bf16.mxu0 %v2929
  %4291 = vmatpush1.bf16.msra.mxu0 %v2928
  %4292 = vmatprep.subr.bf16.mxu0 %v2925
  %4293 = vmatpush1.bf16.msra.mxu0 %v2924
  %4294 = vmatprep.subr.bf16.mxu0 %v2921
  %4295 = vmatpush1.bf16.msra.mxu0 %v2920
  %4296 = vmatprep.subr.bf16.mxu0 %v2917
  %4297 = vmatpush1.bf16.msra.mxu0 %v2916
  %4298 = vmatprep.subr.bf16.mxu0 %v2913
  %4299 = vmatpush1.bf16.msra.mxu0 %v2912
  %4300 = vmatprep.subr.bf16.mxu0 %v2909
  %4301 = vmatpush1.bf16.msra.mxu0 %v2908
  %4302 = vmatprep.subr.bf16.mxu0 %v2905
  %4303 = vmatpush1.bf16.msra.mxu0 %v2904
  %4304 = vmatprep.subr.bf16.mxu0 %v2901
  %4305 = vmatpush1.bf16.msra.mxu0 %v2900
  %4306 = vmatprep.subr.bf16.mxu0 %v2961
  %4307 = vmatpush2.bf16.msra.mxu0 %v2960
  %4308 = vmatprep.subr.bf16.mxu0 %v2957
  %4309 = vmatpush2.bf16.msra.mxu0 %v2956
  %4310 = vmatprep.subr.bf16.mxu0 %v2953
  %4311 = vmatpush2.bf16.msra.mxu0 %v2952
  %4312 = vmatprep.subr.bf16.mxu0 %v2949
  %4313 = vmatpush2.bf16.msra.mxu0 %v2948
  %4314 = vmatprep.subr.bf16.mxu0 %v2945
  %4315 = vmatpush2.bf16.msra.mxu0 %v2944
  %4316 = vmatprep.subr.bf16.mxu0 %v2941
  %4317 = vmatpush2.bf16.msra.mxu0 %v2940
  %4318 = vmatprep.subr.bf16.mxu0 %v2937
  %4319 = vmatpush2.bf16.msra.mxu0 %v2936
  %4320 = vmatprep.subr.bf16.mxu0 %v2933
  %4321 = vmatpush2.bf16.msra.mxu0 %v2932
  %4322 = vmatprep.mubr.bf16.mxu0 %v701
  %4323 = vmatmul.mubr.bf16.gmra.mxu0 %v700
  %v4324 = vpop.f32.mrf.mxu0
  %v4325 = vadd.f32 %v4282, %v4324
  %v4326 = vpop.f32.mrf.mxu0
  %v4327 = vadd.f32 %v4284, %v4326
  %v4328 = vpop.f32.mrf.mxu0
  %v4329 = vadd.f32 %v4286, %v4328
  %v4330 = vpop.f32.mrf.mxu0
  %v4331 = vadd.f32 %v4288, %v4330
  %4332 = vdwg.mxu0
  %4333 = vmatprep.subr.bf16.mxu0 %v2993
  %4334 = vmatpush1.bf16.msra.mxu0 %v2992
  %4335 = vmatprep.subr.bf16.mxu0 %v2989
  %4336 = vmatpush1.bf16.msra.mxu0 %v2988
  %4337 = vmatprep.subr.bf16.mxu0 %v2985
  %4338 = vmatpush1.bf16.msra.mxu0 %v2984
  %4339 = vmatprep.subr.bf16.mxu0 %v2981
  %4340 = vmatpush1.bf16.msra.mxu0 %v2980
  %4341 = vmatprep.subr.bf16.mxu0 %v2977
  %4342 = vmatpush1.bf16.msra.mxu0 %v2976
  %4343 = vmatprep.subr.bf16.mxu0 %v2973
  %4344 = vmatpush1.bf16.msra.mxu0 %v2972
  %4345 = vmatprep.subr.bf16.mxu0 %v2969
  %4346 = vmatpush1.bf16.msra.mxu0 %v2968
  %4347 = vmatprep.subr.bf16.mxu0 %v2965
  %4348 = vmatpush1.bf16.msra.mxu0 %v2964
  %4349 = vmatprep.subr.bf16.mxu0 %v3025
  %4350 = vmatpush2.bf16.msra.mxu0 %v3024
  %4351 = vmatprep.subr.bf16.mxu0 %v3021
  %4352 = vmatpush2.bf16.msra.mxu0 %v3020
  %4353 = vmatprep.subr.bf16.mxu0 %v3017
  %4354 = vmatpush2.bf16.msra.mxu0 %v3016
  %4355 = vmatprep.subr.bf16.mxu0 %v3013
  %4356 = vmatpush2.bf16.msra.mxu0 %v3012
  %4357 = vmatprep.subr.bf16.mxu0 %v3009
  %4358 = vmatpush2.bf16.msra.mxu0 %v3008
  %4359 = vmatprep.subr.bf16.mxu0 %v3005
  %4360 = vmatpush2.bf16.msra.mxu0 %v3004
  %4361 = vmatprep.subr.bf16.mxu0 %v3001
  %4362 = vmatpush2.bf16.msra.mxu0 %v3000
  %4363 = vmatprep.subr.bf16.mxu0 %v2997
  %4364 = vmatpush2.bf16.msra.mxu0 %v2996
  %4365 = vmatprep.mubr.bf16.mxu0 %v703
  %4366 = vmatmul.mubr.bf16.gmra.mxu0 %v702
  %v4367 = vpop.f32.mrf.mxu0
  %v4368 = vadd.f32 %v4325, %v4367
  %v4369 = vpop.f32.mrf.mxu0
  %v4370 = vadd.f32 %v4327, %v4369
  %v4371 = vpop.f32.mrf.mxu0
  %v4372 = vadd.f32 %v4329, %v4371
  %v4373 = vpop.f32.mrf.mxu0
  %v4374 = vadd.f32 %v4331, %v4373
  %4375 = vdwg.mxu0
  %v4376 = vpack.c.bf16 %v3985, %v3981
  %v4377 = vpack.c.bf16 %v3987, %v3983
  %v4378 = vpack.c.bf16 %v4372, %v4368
  %v4379 = vpack.c.bf16 %v4374, %v4370
  %v4384 = vunpack.c.l.b16 %v4376
  %v4385 = vunpack.c.l.b16 %v4377
  %v4386 = vunpack.c.l.b16 %v4378
  %v4387 = vunpack.c.l.b16 %v4379
  %v4388 = vunpack.c.h.b16 %v4376
  %v4389 = vunpack.c.h.b16 %v4377
  %v4390 = vunpack.c.h.b16 %v4378
  %v4391 = vunpack.c.h.b16 %v4379
  %v4392 = vpack.c.b16 %v4385, %v4384
  %v4393 = vpack.c.b16 %v4387, %v4386
  %v4394 = vpack.c.b16 %v4389, %v4388
  %v4395 = vpack.c.b16 %v4391, %v4390
  %4400 = vst [vmem:[%s3] sm:$0xff] %v4392
  %4401 = vst [vmem:[%s3 + $0x8] sm:$0xff] %v4393
  %4402 = vst [vmem:[%s3 + $0x10] sm:$0xff] %v4394
  %4403 = vst [vmem:[%s3 + $0x18] sm:$0xff] %v4395
  %v4404 = vlaneseq
  %v4405 = vshrl.u32 %v4404, 7
  %v4406 = vadd.s32 %v4405, 8
  %s4407 = smul.u32 0, 16
  %v4408 = vstv %s4407
  %v4409 = vadd.s32 %v4405, %v4408
  %v4410 = vadd.s32 %v4406, %v4408
  %vm4411 = vcmp.lt.s32.totalorder %v4409, 8
  %vm4412 = vcmp.lt.s32.totalorder %v4410, 8
  %v4413 = vsel %vm4411, %v3981, 0.0
  %v4414 = vsel %vm4411, %v3983, 0.0
  %v4415 = vsel %vm4411, %v4368, 0.0
  %v4416 = vsel %vm4411, %v4370, 0.0
  %v4417 = vsel %vm4412, %v3985, 0.0
  %v4418 = vsel %vm4412, %v3987, 0.0
  %v4419 = vsel %vm4412, %v4372, 0.0
  %v4420 = vsel %vm4412, %v4374, 0.0
  %v4421 = vadd.f32 %v4413, %v4417
  %v4422 = vrot.slane %v4421, 4
  %v4423 = vadd.f32 %v4421, %v4422
  %v4424 = vrot.slane %v4423, 2
  %v4425 = vadd.f32 %v4423, %v4424
  %v4426 = vrot.slane %v4425, 1
  %v4427 = vadd.f32 %v4425, %v4426
  %v4428 = vadd.f32 %v4414, %v4418
  %v4429 = vrot.slane %v4428, 4
  %v4430 = vadd.f32 %v4428, %v4429
  %v4431 = vrot.slane %v4430, 2
  %v4432 = vadd.f32 %v4430, %v4431
  %v4433 = vrot.slane %v4432, 1
  %v4434 = vadd.f32 %v4432, %v4433
  %v4435 = vadd.f32 %v4415, %v4419
  %v4436 = vrot.slane %v4435, 4
  %v4437 = vadd.f32 %v4435, %v4436
  %v4438 = vrot.slane %v4437, 2
  %v4439 = vadd.f32 %v4437, %v4438
  %v4440 = vrot.slane %v4439, 1
  %v4441 = vadd.f32 %v4439, %v4440
  %v4442 = vadd.f32 %v4416, %v4420
  %v4443 = vrot.slane %v4442, 4
  %v4444 = vadd.f32 %v4442, %v4443
  %v4445 = vrot.slane %v4444, 2
  %v4446 = vadd.f32 %v4444, %v4445
  %v4447 = vrot.slane %v4446, 1
  %v4448 = vadd.f32 %v4446, %v4447
  %v4453 = vcombine.low %v4427, %v4434
  %v4454 = vcombine.low %v4441, %v4448
  %v4456 = vunpack.c.l.s4 1966171168
  %v4457 = vunpack.c.0.s8 %v4456
  %v4458 = vlaneseq
  %v4459 = vshrl.u32 %v4458, 7
  %v4460 = vsub.s32 %v4457, %v4459
  %v4461 = vrot.slane %v4453, %v4460
  %v4463 = vunpack.c.l.s4 1966171168
  %v4464 = vunpack.c.0.s8 %v4463
  %v4465 = vlaneseq
  %v4466 = vshrl.u32 %v4465, 7
  %v4467 = vsub.s32 %v4464, %v4466
  %v4468 = vrot.slane %v4454, %v4467
  %v4469 = vcombine.low %v4461, %v4468
  %v4471 = vunpack.c.l.s4 1966171168
  %v4472 = vunpack.c.0.s8 %v4471
  %v4473 = vlaneseq
  %v4474 = vshrl.u32 %v4473, 7
  %v4475 = vsub.s32 %v4472, %v4474
  %v4476 = vrot.slane %v4469, %v4475
  %v4478 = vlaneseq
  %vm4479 = vcmp.ge.s32.totalorder %v4478, 0
  %vm4480 = vcmp.lt.s32.totalorder %v4478, 512
  %vm4481 = vmand %vm4479, %vm4480
  %4482 = vst.msk [vmem:[%s4] ss:$8 sm:$0xf] %vm4481, %v4476
  %4483 = vst.msk [vmem:[%s4] ss:$8 sm:$0x0] %vm4481, %v4476
  %v4484 = vmul.f32 %v4413, %v4413
  %v4485 = vmul.f32 %v4414, %v4414
  %v4486 = vmul.f32 %v4415, %v4415
  %v4487 = vmul.f32 %v4416, %v4416
  %v4488 = vmul.f32 %v4417, %v4417
  %v4489 = vmul.f32 %v4418, %v4418
  %v4490 = vmul.f32 %v4419, %v4419
  %v4491 = vmul.f32 %v4420, %v4420
  %v4492 = vadd.f32 %v4484, %v4488
  %v4493 = vrot.slane %v4492, 4
  %v4494 = vadd.f32 %v4492, %v4493
  %v4495 = vrot.slane %v4494, 2
  %v4496 = vadd.f32 %v4494, %v4495
  %v4497 = vrot.slane %v4496, 1
  %v4498 = vadd.f32 %v4496, %v4497
  %v4499 = vadd.f32 %v4485, %v4489
  %v4500 = vrot.slane %v4499, 4
  %v4501 = vadd.f32 %v4499, %v4500
  %v4502 = vrot.slane %v4501, 2
  %v4503 = vadd.f32 %v4501, %v4502
  %v4504 = vrot.slane %v4503, 1
  %v4505 = vadd.f32 %v4503, %v4504
  %v4506 = vadd.f32 %v4486, %v4490
  %v4507 = vrot.slane %v4506, 4
  %v4508 = vadd.f32 %v4506, %v4507
  %v4509 = vrot.slane %v4508, 2
  %v4510 = vadd.f32 %v4508, %v4509
  %v4511 = vrot.slane %v4510, 1
  %v4512 = vadd.f32 %v4510, %v4511
  %v4513 = vadd.f32 %v4487, %v4491
  %v4514 = vrot.slane %v4513, 4
  %v4515 = vadd.f32 %v4513, %v4514
  %v4516 = vrot.slane %v4515, 2
  %v4517 = vadd.f32 %v4515, %v4516
  %v4518 = vrot.slane %v4517, 1
  %v4519 = vadd.f32 %v4517, %v4518
  %v4524 = vcombine.low %v4498, %v4505
  %v4525 = vcombine.low %v4512, %v4519
  %v4527 = vunpack.c.l.s4 1966171168
  %v4528 = vunpack.c.0.s8 %v4527
  %v4529 = vlaneseq
  %v4530 = vshrl.u32 %v4529, 7
  %v4531 = vsub.s32 %v4528, %v4530
  %v4532 = vrot.slane %v4524, %v4531
  %v4534 = vunpack.c.l.s4 1966171168
  %v4535 = vunpack.c.0.s8 %v4534
  %v4536 = vlaneseq
  %v4537 = vshrl.u32 %v4536, 7
  %v4538 = vsub.s32 %v4535, %v4537
  %v4539 = vrot.slane %v4525, %v4538
  %v4540 = vcombine.low %v4532, %v4539
  %v4542 = vunpack.c.l.s4 1966171168
  %v4543 = vunpack.c.0.s8 %v4542
  %v4544 = vlaneseq
  %v4545 = vshrl.u32 %v4544, 7
  %v4546 = vsub.s32 %v4543, %v4545
  %v4547 = vrot.slane %v4540, %v4546
  %s4549 = scalar_lea.vmem %s4, 1
  %4550 = vst.msk [vmem:[%s4549] ss:$8 sm:$0xf] %vm4481, %v4547
  %4551 = vst.msk [vmem:[%s4549] ss:$8 sm:$0x0] %vm4481, %v4547
  %4552 = vst [vmem:[%s4] sm:$0xfc] 0.0
  %4553 = vst [vmem:[%s4 + $0x8] sm:$0xfc] 0.0
  %4554 = vst [vmem:[%s4 + $0x10] sm:$0xfc] 0.0
  %4555 = vst [vmem:[%s4 + $0x18] sm:$0xfc] 0.0
  // Predicated region
  $region14: #{cgan_forward.11} parent=0 // pred_check
    _
  $region15: #{cgan_forward.11} parent=0 // pred_check_branch
    %4557 = sbr.rel (0) target = $region17
  $region16: #{cgan_forward.11} parent=0 // pred_region
    _
  $region17: #{cgan_forward.11} parent=0 // pred_fallthru
    _
  // Predicated region
  $region18: #{cgan_forward.11} parent=0 // pred_check
    _
  $region19: #{cgan_forward.11} parent=0 // pred_check_branch
    %4559 = sbr.rel (0) target = $region21
  $region20: #{cgan_forward.11} parent=0 // pred_region
    _
  $region21: #{cgan_forward.11} parent=0 // pred_fallthru
    _
  // Predicated region
  $region22: #{cgan_forward.11} parent=0 // pred_check
    _
  $region23: #{cgan_forward.11} parent=0 // pred_check_branch
    %4561 = sbr.rel (0) target = $region25
  $region24: #{cgan_forward.11} parent=0 // pred_region
    _
  $region25: #{cgan_forward.11} parent=0 // pred_fallthru
    _
  // Predicated region
  $region26: #{cgan_forward.11} parent=0 // pred_check
    _
  $region27: #{cgan_forward.11} parent=0 // pred_check_branch
    %4563 = sbr.rel (0) target = $region29
  $region28: #{cgan_forward.11} parent=0 // pred_region
    _
  $region29: #{cgan_forward.11} parent=0 // pred_fallthru
    _

// kernel: cgan_forward.13
$region0: #{cgan_forward.13}
  #allocation0 [shape = 'u32[]', space=smem, size = 0x4, offset = 0x4, fixed_abs, tag = 'smem constant byte address 0x4 - core index']
  #allocation1 [shape = 'u32[144,128]{1,0:T(1,128)}', space=vmem, size = 0x12000, scoped, tag = 'internal scratch']
  %s0 = inlined_call_operand.vmem [shape: bf16[32,1152], index: 0, kind: input, shape index: {}]
  %s1 = inlined_call_operand.vmem [shape: bf16[32,1152], index: 1, kind: input, shape index: {}]
  %s2 = inlined_call_operand.vmem [shape: bf16[1152,256], index: 2, kind: input, shape index: {}]
  %s3 = inlined_call_operand.vmem [shape: bf16[1152,256], index: 3, kind: input, shape index: {}]
  %s4 = inlined_call_operand.vmem [shape: f32[8,256], index: 4, kind: input, shape index: {}]
  %s5 = inlined_call_operand.vmem [shape: bf16[32,256], index: 5, kind: output, shape index: {0}]
  %s6 = inlined_call_operand.vmem [shape: f32[8,256], index: 6, kind: output, shape index: {1}]
  %7 = xla_tuple %s5, %s6
  %s8 = sld [smem:[#allocation0]]
  $region38: #{cgan_forward.13} parent=0
    _
  %s10 = ssub.s32 1, %s8
  %s11 = scalar_select 0, %s10, %s8
  // Predicated region
  $region2: #{cgan_forward.13} parent=0 // pred_check
    _
  $region3: #{cgan_forward.13} parent=0 // pred_check_branch
    %13 = sbr.rel (0) target = $region5
  $region4: #{cgan_forward.13} parent=0 // pred_region
    _
  $region5: #{cgan_forward.13} parent=0 // pred_fallthru
    _
  // Predicated region
  $region6: #{cgan_forward.13} parent=0 // pred_check
    _
  $region7: #{cgan_forward.13} parent=0 // pred_check_branch
    %15 = sbr.rel (0) target = $region9
  $region8: #{cgan_forward.13} parent=0 // pred_region
    _
  $region9: #{cgan_forward.13} parent=0 // pred_fallthru
    _
  // Predicated region
  $region10: #{cgan_forward.13} parent=0 // pred_check
    _
  $region11: #{cgan_forward.13} parent=0 // pred_check_branch
    %17 = sbr.rel (0) target = $region13
  $region12: #{cgan_forward.13} parent=0 // pred_region
    _
  $region13: #{cgan_forward.13} parent=0 // pred_fallthru
    _
  // Predicated region
  $region14: #{cgan_forward.13} parent=0 // pred_check
    _
  $region15: #{cgan_forward.13} parent=0 // pred_check_branch
    %19 = sbr.rel (0) target = $region17
  $region16: #{cgan_forward.13} parent=0 // pred_region
    _
  $region17: #{cgan_forward.13} parent=0 // pred_fallthru
    _
  // Predicated region
  $region18: #{cgan_forward.13} parent=0 // pred_check
    _
  $region19: #{cgan_forward.13} parent=0 // pred_check_branch
    %21 = sbr.rel (0) target = $region21
  $region20: #{cgan_forward.13} parent=0 // pred_region
    _
  $region21: #{cgan_forward.13} parent=0 // pred_fallthru
    _
  %v23 = vld [vmem:[%s0] sm:$0xff]
  %v24 = vld [vmem:[%s0 + $0x8] sm:$0xff]
  %v25 = vld [vmem:[%s0 + $0x10] sm:$0xff]
  %v26 = vld [vmem:[%s0 + $0x18] sm:$0xff]
  %v27 = vld [vmem:[%s0 + $0x20] sm:$0xf]
  %v28 = vld [vmem:[%s0 + $0x24] sm:$0xff]
  %v29 = vld [vmem:[%s0 + $0x2c] sm:$0xff]
  %v30 = vld [vmem:[%s0 + $0x34] sm:$0xff]
  %v31 = vld [vmem:[%s0 + $0x3c] sm:$0xff]
  %v32 = vld [vmem:[%s0 + $0x44] sm:$0xf]
  %v33 = vld [vmem:[%s0 + $0x48] sm:$0xff]
  %v34 = vld [vmem:[%s0 + $0x50] sm:$0xff]
  %v35 = vld [vmem:[%s0 + $0x58] sm:$0xff]
  %v36 = vld [vmem:[%s0 + $0x60] sm:$0xff]
  %v37 = vld [vmem:[%s0 + $0x68] sm:$0xf]
  %v38 = vld [vmem:[%s0 + $0x6c] sm:$0xff]
  %v39 = vld [vmem:[%s0 + $0x74] sm:$0xff]
  %v40 = vld [vmem:[%s0 + $0x7c] sm:$0xff]
  %v41 = vld [vmem:[%s0 + $0x84] sm:$0xff]
  %v42 = vld [vmem:[%s0 + $0x8c] sm:$0xf]
  %v43 = vld [vmem:[%s2] sm:$0xff]
  %v44 = vld [vmem:[%s2 + $0x8] sm:$0xff]
  %v45 = vld [vmem:[%s2 + $0x10] sm:$0xff]
  %v46 = vld [vmem:[%s2 + $0x18] sm:$0xff]
  %v47 = vld [vmem:[%s2 + $0x20] sm:$0xff]
  %v48 = vld [vmem:[%s2 + $0x28] sm:$0xff]
  %v49 = vld [vmem:[%s2 + $0x30] sm:$0xff]
  %v50 = vld [vmem:[%s2 + $0x38] sm:$0xff]
  %v51 = vld [vmem:[%s2 + $0x40] sm:$0xff]
  %v52 = vld [vmem:[%s2 + $0x48] sm:$0xff]
  %v53 = vld [vmem:[%s2 + $0x50] sm:$0xff]
  %v54 = vld [vmem:[%s2 + $0x58] sm:$0xff]
  %v55 = vld [vmem:[%s2 + $0x60] sm:$0xff]
  %v56 = vld [vmem:[%s2 + $0x68] sm:$0xff]
  %v57 = vld [vmem:[%s2 + $0x70] sm:$0xff]
  %v58 = vld [vmem:[%s2 + $0x78] sm:$0xff]
  %v59 = vld [vmem:[%s2 + $0x80] sm:$0xff]
  %v60 = vld [vmem:[%s2 + $0x88] sm:$0xff]
  %v61 = vld [vmem:[%s2 + $0x90] sm:$0xff]
  %v62 = vld [vmem:[%s2 + $0x98] sm:$0xff]
  %v63 = vld [vmem:[%s2 + $0xa0] sm:$0xff]
  %v64 = vld [vmem:[%s2 + $0xa8] sm:$0xff]
  %v65 = vld [vmem:[%s2 + $0xb0] sm:$0xff]
  %v66 = vld [vmem:[%s2 + $0xb8] sm:$0xff]
  %v67 = vld [vmem:[%s2 + $0xc0] sm:$0xff]
  %v68 = vld [vmem:[%s2 + $0xc8] sm:$0xff]
  %v69 = vld [vmem:[%s2 + $0xd0] sm:$0xff]
  %v70 = vld [vmem:[%s2 + $0xd8] sm:$0xff]
  %v71 = vld [vmem:[%s2 + $0xe0] sm:$0xff]
  %v72 = vld [vmem:[%s2 + $0xe8] sm:$0xff]
  %v73 = vld [vmem:[%s2 + $0xf0] sm:$0xff]
  %v74 = vld [vmem:[%s2 + $0xf8] sm:$0xff]
  %v75 = vld [vmem:[%s2 + $0x100] sm:$0xff]
  %v76 = vld [vmem:[%s2 + $0x108] sm:$0xff]
  %v77 = vld [vmem:[%s2 + $0x110] sm:$0xff]
  %v78 = vld [vmem:[%s2 + $0x118] sm:$0xff]
  %v79 = vld [vmem:[%s2 + $0x120] sm:$0xff]
  %v80 = vld [vmem:[%s2 + $0x128] sm:$0xff]
  %v81 = vld [vmem:[%s2 + $0x130] sm:$0xff]
  %v82 = vld [vmem:[%s2 + $0x138] sm:$0xff]
  %v83 = vld [vmem:[%s2 + $0x140] sm:$0xff]
  %v84 = vld [vmem:[%s2 + $0x148] sm:$0xff]
  %v85 = vld [vmem:[%s2 + $0x150] sm:$0xff]
  %v86 = vld [vmem:[%s2 + $0x158] sm:$0xff]
  %v87 = vld [vmem:[%s2 + $0x160] sm:$0xff]
  %v88 = vld [vmem:[%s2 + $0x168] sm:$0xff]
  %v89 = vld [vmem:[%s2 + $0x170] sm:$0xff]
  %v90 = vld [vmem:[%s2 + $0x178] sm:$0xff]
  %v91 = vld [vmem:[%s2 + $0x180] sm:$0xff]
  %v92 = vld [vmem:[%s2 + $0x188] sm:$0xff]
  %v93 = vld [vmem:[%s2 + $0x190] sm:$0xff]
  %v94 = vld [vmem:[%s2 + $0x198] sm:$0xff]
  %v95 = vld [vmem:[%s2 + $0x1a0] sm:$0xff]
  %v96 = vld [vmem:[%s2 + $0x1a8] sm:$0xff]
  %v97 = vld [vmem:[%s2 + $0x1b0] sm:$0xff]
  %v98 = vld [vmem:[%s2 + $0x1b8] sm:$0xff]
  %v99 = vld [vmem:[%s2 + $0x1c0] sm:$0xff]
  %v100 = vld [vmem:[%s2 + $0x1c8] sm:$0xff]
  %v101 = vld [vmem:[%s2 + $0x1d0] sm:$0xff]
  %v102 = vld [vmem:[%s2 + $0x1d8] sm:$0xff]
  %v103 = vld [vmem:[%s2 + $0x1e0] sm:$0xff]
  %v104 = vld [vmem:[%s2 + $0x1e8] sm:$0xff]
  %v105 = vld [vmem:[%s2 + $0x1f0] sm:$0xff]
  %v106 = vld [vmem:[%s2 + $0x1f8] sm:$0xff]
  %v107 = vld [vmem:[%s2 + $0x200] sm:$0xff]
  %v108 = vld [vmem:[%s2 + $0x208] sm:$0xff]
  %v109 = vld [vmem:[%s2 + $0x210] sm:$0xff]
  %v110 = vld [vmem:[%s2 + $0x218] sm:$0xff]
  %v111 = vld [vmem:[%s2 + $0x220] sm:$0xff]
  %v112 = vld [vmem:[%s2 + $0x228] sm:$0xff]
  %v113 = vld [vmem:[%s2 + $0x230] sm:$0xff]
  %v114 = vld [vmem:[%s2 + $0x238] sm:$0xff]
  %v115 = vld [vmem:[%s2 + $0x240] sm:$0xff]
  %v116 = vld [vmem:[%s2 + $0x248] sm:$0xff]
  %v117 = vld [vmem:[%s2 + $0x250] sm:$0xff]
  %v118 = vld [vmem:[%s2 + $0x258] sm:$0xff]
  %v119 = vld [vmem:[%s2 + $0x260] sm:$0xff]
  %v120 = vld [vmem:[%s2 + $0x268] sm:$0xff]
  %v121 = vld [vmem:[%s2 + $0x270] sm:$0xff]
  %v122 = vld [vmem:[%s2 + $0x278] sm:$0xff]
  %v123 = vld [vmem:[%s2 + $0x280] sm:$0xff]
  %v124 = vld [vmem:[%s2 + $0x288] sm:$0xff]
  %v125 = vld [vmem:[%s2 + $0x290] sm:$0xff]
  %v126 = vld [vmem:[%s2 + $0x298] sm:$0xff]
  %v127 = vld [vmem:[%s2 + $0x2a0] sm:$0xff]
  %v128 = vld [vmem:[%s2 + $0x2a8] sm:$0xff]
  %v129 = vld [vmem:[%s2 + $0x2b0] sm:$0xff]
  %v130 = vld [vmem:[%s2 + $0x2b8] sm:$0xff]
  %v131 = vld [vmem:[%s2 + $0x2c0] sm:$0xff]
  %v132 = vld [vmem:[%s2 + $0x2c8] sm:$0xff]
  %v133 = vld [vmem:[%s2 + $0x2d0] sm:$0xff]
  %v134 = vld [vmem:[%s2 + $0x2d8] sm:$0xff]
  %v135 = vld [vmem:[%s2 + $0x2e0] sm:$0xff]
  %v136 = vld [vmem:[%s2 + $0x2e8] sm:$0xff]
  %v137 = vld [vmem:[%s2 + $0x2f0] sm:$0xff]
  %v138 = vld [vmem:[%s2 + $0x2f8] sm:$0xff]
  %v139 = vld [vmem:[%s2 + $0x300] sm:$0xff]
  %v140 = vld [vmem:[%s2 + $0x308] sm:$0xff]
  %v141 = vld [vmem:[%s2 + $0x310] sm:$0xff]
  %v142 = vld [vmem:[%s2 + $0x318] sm:$0xff]
  %v143 = vld [vmem:[%s2 + $0x320] sm:$0xff]
  %v144 = vld [vmem:[%s2 + $0x328] sm:$0xff]
  %v145 = vld [vmem:[%s2 + $0x330] sm:$0xff]
  %v146 = vld [vmem:[%s2 + $0x338] sm:$0xff]
  %v147 = vld [vmem:[%s2 + $0x340] sm:$0xff]
  %v148 = vld [vmem:[%s2 + $0x348] sm:$0xff]
  %v149 = vld [vmem:[%s2 + $0x350] sm:$0xff]
  %v150 = vld [vmem:[%s2 + $0x358] sm:$0xff]
  %v151 = vld [vmem:[%s2 + $0x360] sm:$0xff]
  %v152 = vld [vmem:[%s2 + $0x368] sm:$0xff]
  %v153 = vld [vmem:[%s2 + $0x370] sm:$0xff]
  %v154 = vld [vmem:[%s2 + $0x378] sm:$0xff]
  %v155 = vld [vmem:[%s2 + $0x380] sm:$0xff]
  %v156 = vld [vmem:[%s2 + $0x388] sm:$0xff]
  %v157 = vld [vmem:[%s2 + $0x390] sm:$0xff]
  %v158 = vld [vmem:[%s2 + $0x398] sm:$0xff]
  %v159 = vld [vmem:[%s2 + $0x3a0] sm:$0xff]
  %v160 = vld [vmem:[%s2 + $0x3a8] sm:$0xff]
  %v161 = vld [vmem:[%s2 + $0x3b0] sm:$0xff]
  %v162 = vld [vmem:[%s2 + $0x3b8] sm:$0xff]
  %v163 = vld [vmem:[%s2 + $0x3c0] sm:$0xff]
  %v164 = vld [vmem:[%s2 + $0x3c8] sm:$0xff]
  %v165 = vld [vmem:[%s2 + $0x3d0] sm:$0xff]
  %v166 = vld [vmem:[%s2 + $0x3d8] sm:$0xff]
  %v167 = vld [vmem:[%s2 + $0x3e0] sm:$0xff]
  %v168 = vld [vmem:[%s2 + $0x3e8] sm:$0xff]
  %v169 = vld [vmem:[%s2 + $0x3f0] sm:$0xff]
  %v170 = vld [vmem:[%s2 + $0x3f8] sm:$0xff]
  %v171 = vld [vmem:[%s2 + $0x400] sm:$0xff]
  %v172 = vld [vmem:[%s2 + $0x408] sm:$0xff]
  %v173 = vld [vmem:[%s2 + $0x410] sm:$0xff]
  %v174 = vld [vmem:[%s2 + $0x418] sm:$0xff]
  %v175 = vld [vmem:[%s2 + $0x420] sm:$0xff]
  %v176 = vld [vmem:[%s2 + $0x428] sm:$0xff]
  %v177 = vld [vmem:[%s2 + $0x430] sm:$0xff]
  %v178 = vld [vmem:[%s2 + $0x438] sm:$0xff]
  %v179 = vld [vmem:[%s2 + $0x440] sm:$0xff]
  %v180 = vld [vmem:[%s2 + $0x448] sm:$0xff]
  %v181 = vld [vmem:[%s2 + $0x450] sm:$0xff]
  %v182 = vld [vmem:[%s2 + $0x458] sm:$0xff]
  %v183 = vld [vmem:[%s2 + $0x460] sm:$0xff]
  %v184 = vld [vmem:[%s2 + $0x468] sm:$0xff]
  %v185 = vld [vmem:[%s2 + $0x470] sm:$0xff]
  %v186 = vld [vmem:[%s2 + $0x478] sm:$0xff]
  %v187 = vld [vmem:[%s1] sm:$0xff]
  %v188 = vld [vmem:[%s1 + $0x8] sm:$0xff]
  %v189 = vld [vmem:[%s1 + $0x10] sm:$0xff]
  %v190 = vld [vmem:[%s1 + $0x18] sm:$0xff]
  %v191 = vld [vmem:[%s1 + $0x20] sm:$0xf]
  %v192 = vld [vmem:[%s1 + $0x24] sm:$0xff]
  %v193 = vld [vmem:[%s1 + $0x2c] sm:$0xff]
  %v194 = vld [vmem:[%s1 + $0x34] sm:$0xff]
  %v195 = vld [vmem:[%s1 + $0x3c] sm:$0xff]
  %v196 = vld [vmem:[%s1 + $0x44] sm:$0xf]
  %v197 = vld [vmem:[%s1 + $0x48] sm:$0xff]
  %v198 = vld [vmem:[%s1 + $0x50] sm:$0xff]
  %v199 = vld [vmem:[%s1 + $0x58] sm:$0xff]
  %v200 = vld [vmem:[%s1 + $0x60] sm:$0xff]
  %v201 = vld [vmem:[%s1 + $0x68] sm:$0xf]
  %v202 = vld [vmem:[%s1 + $0x6c] sm:$0xff]
  %v203 = vld [vmem:[%s1 + $0x74] sm:$0xff]
  %v204 = vld [vmem:[%s1 + $0x7c] sm:$0xff]
  %v205 = vld [vmem:[%s1 + $0x84] sm:$0xff]
  %v206 = vld [vmem:[%s1 + $0x8c] sm:$0xf]
  %v207 = vld [vmem:[%s3] sm:$0xff]
  %v208 = vld [vmem:[%s3 + $0x8] sm:$0xff]
  %v209 = vld [vmem:[%s3 + $0x10] sm:$0xff]
  %v210 = vld [vmem:[%s3 + $0x18] sm:$0xff]
  %v211 = vld [vmem:[%s3 + $0x20] sm:$0xff]
  %v212 = vld [vmem:[%s3 + $0x28] sm:$0xff]
  %v213 = vld [vmem:[%s3 + $0x30] sm:$0xff]
  %v214 = vld [vmem:[%s3 + $0x38] sm:$0xff]
  %v215 = vld [vmem:[%s3 + $0x40] sm:$0xff]
  %v216 = vld [vmem:[%s3 + $0x48] sm:$0xff]
  %v217 = vld [vmem:[%s3 + $0x50] sm:$0xff]
  %v218 = vld [vmem:[%s3 + $0x58] sm:$0xff]
  %v219 = vld [vmem:[%s3 + $0x60] sm:$0xff]
  %v220 = vld [vmem:[%s3 + $0x68] sm:$0xff]
  %v221 = vld [vmem:[%s3 + $0x70] sm:$0xff]
  %v222 = vld [vmem:[%s3 + $0x78] sm:$0xff]
  %v223 = vld [vmem:[%s3 + $0x80] sm:$0xff]
  %v224 = vld [vmem:[%s3 + $0x88] sm:$0xff]
  %v225 = vld [vmem:[%s3 + $0x90] sm:$0xff]
  %v226 = vld [vmem:[%s3 + $0x98] sm:$0xff]
  %v227 = vld [vmem:[%s3 + $0xa0] sm:$0xff]
  %v228 = vld [vmem:[%s3 + $0xa8] sm:$0xff]
  %v229 = vld [vmem:[%s3 + $0xb0] sm:$0xff]
  %v230 = vld [vmem:[%s3 + $0xb8] sm:$0xff]
  %v231 = vld [vmem:[%s3 + $0xc0] sm:$0xff]
  %v232 = vld [vmem:[%s3 + $0xc8] sm:$0xff]
  %v233 = vld [vmem:[%s3 + $0xd0] sm:$0xff]
  %v234 = vld [vmem:[%s3 + $0xd8] sm:$0xff]
  %v235 = vld [vmem:[%s3 + $0xe0] sm:$0xff]
  %v236 = vld [vmem:[%s3 + $0xe8] sm:$0xff]
  %v237 = vld [vmem:[%s3 + $0xf0] sm:$0xff]
  %v238 = vld [vmem:[%s3 + $0xf8] sm:$0xff]
  %v239 = vld [vmem:[%s3 + $0x100] sm:$0xff]
  %v240 = vld [vmem:[%s3 + $0x108] sm:$0xff]
  %v241 = vld [vmem:[%s3 + $0x110] sm:$0xff]
  %v242 = vld [vmem:[%s3 + $0x118] sm:$0xff]
  %v243 = vld [vmem:[%s3 + $0x120] sm:$0xff]
  %v244 = vld [vmem:[%s3 + $0x128] sm:$0xff]
  %v245 = vld [vmem:[%s3 + $0x130] sm:$0xff]
  %v246 = vld [vmem:[%s3 + $0x138] sm:$0xff]
  %v247 = vld [vmem:[%s3 + $0x140] sm:$0xff]
  %v248 = vld [vmem:[%s3 + $0x148] sm:$0xff]
  %v249 = vld [vmem:[%s3 + $0x150] sm:$0xff]
  %v250 = vld [vmem:[%s3 + $0x158] sm:$0xff]
  %v251 = vld [vmem:[%s3 + $0x160] sm:$0xff]
  %v252 = vld [vmem:[%s3 + $0x168] sm:$0xff]
  %v253 = vld [vmem:[%s3 + $0x170] sm:$0xff]
  %v254 = vld [vmem:[%s3 + $0x178] sm:$0xff]
  %v255 = vld [vmem:[%s3 + $0x180] sm:$0xff]
  %v256 = vld [vmem:[%s3 + $0x188] sm:$0xff]
  %v257 = vld [vmem:[%s3 + $0x190] sm:$0xff]
  %v258 = vld [vmem:[%s3 + $0x198] sm:$0xff]
  %v259 = vld [vmem:[%s3 + $0x1a0] sm:$0xff]
  %v260 = vld [vmem:[%s3 + $0x1a8] sm:$0xff]
  %v261 = vld [vmem:[%s3 + $0x1b0] sm:$0xff]
  %v262 = vld [vmem:[%s3 + $0x1b8] sm:$0xff]
  %v263 = vld [vmem:[%s3 + $0x1c0] sm:$0xff]
  %v264 = vld [vmem:[%s3 + $0x1c8] sm:$0xff]
  %v265 = vld [vmem:[%s3 + $0x1d0] sm:$0xff]
  %v266 = vld [vmem:[%s3 + $0x1d8] sm:$0xff]
  %v267 = vld [vmem:[%s3 + $0x1e0] sm:$0xff]
  %v268 = vld [vmem:[%s3 + $0x1e8] sm:$0xff]
  %v269 = vld [vmem:[%s3 + $0x1f0] sm:$0xff]
  %v270 = vld [vmem:[%s3 + $0x1f8] sm:$0xff]
  %v271 = vld [vmem:[%s3 + $0x200] sm:$0xff]
  %v272 = vld [vmem:[%s3 + $0x208] sm:$0xff]
  %v273 = vld [vmem:[%s3 + $0x210] sm:$0xff]
  %v274 = vld [vmem:[%s3 + $0x218] sm:$0xff]
  %v275 = vld [vmem:[%s3 + $0x220] sm:$0xff]
  %v276 = vld [vmem:[%s3 + $0x228] sm:$0xff]
  %v277 = vld [vmem:[%s3 + $0x230] sm:$0xff]
  %v278 = vld [vmem:[%s3 + $0x238] sm:$0xff]
  %v279 = vld [vmem:[%s3 + $0x240] sm:$0xff]
  %v280 = vld [vmem:[%s3 + $0x248] sm:$0xff]
  %v281 = vld [vmem:[%s3 + $0x250] sm:$0xff]
  %v282 = vld [vmem:[%s3 + $0x258] sm:$0xff]
  %v283 = vld [vmem:[%s3 + $0x260] sm:$0xff]
  %v284 = vld [vmem:[%s3 + $0x268] sm:$0xff]
  %v285 = vld [vmem:[%s3 + $0x270] sm:$0xff]
  %v286 = vld [vmem:[%s3 + $0x278] sm:$0xff]
  %v287 = vld [vmem:[%s3 + $0x280] sm:$0xff]
  %v288 = vld [vmem:[%s3 + $0x288] sm:$0xff]
  %v289 = vld [vmem:[%s3 + $0x290] sm:$0xff]
  %v290 = vld [vmem:[%s3 + $0x298] sm:$0xff]
  %v291 = vld [vmem:[%s3 + $0x2a0] sm:$0xff]
  %v292 = vld [vmem:[%s3 + $0x2a8] sm:$0xff]
  %v293 = vld [vmem:[%s3 + $0x2b0] sm:$0xff]
  %v294 = vld [vmem:[%s3 + $0x2b8] sm:$0xff]
  %v295 = vld [vmem:[%s3 + $0x2c0] sm:$0xff]
  %v296 = vld [vmem:[%s3 + $0x2c8] sm:$0xff]
  %v297 = vld [vmem:[%s3 + $0x2d0] sm:$0xff]
  %v298 = vld [vmem:[%s3 + $0x2d8] sm:$0xff]
  %v299 = vld [vmem:[%s3 + $0x2e0] sm:$0xff]
  %v300 = vld [vmem:[%s3 + $0x2e8] sm:$0xff]
  %v301 = vld [vmem:[%s3 + $0x2f0] sm:$0xff]
  %v302 = vld [vmem:[%s3 + $0x2f8] sm:$0xff]
  %v303 = vld [vmem:[%s3 + $0x300] sm:$0xff]
  %v304 = vld [vmem:[%s3 + $0x308] sm:$0xff]
  %v305 = vld [vmem:[%s3 + $0x310] sm:$0xff]
  %v306 = vld [vmem:[%s3 + $0x318] sm:$0xff]
  %v307 = vld [vmem:[%s3 + $0x320] sm:$0xff]
  %v308 = vld [vmem:[%s3 + $0x328] sm:$0xff]
  %v309 = vld [vmem:[%s3 + $0x330] sm:$0xff]
  %v310 = vld [vmem:[%s3 + $0x338] sm:$0xff]
  %v311 = vld [vmem:[%s3 + $0x340] sm:$0xff]
  %v312 = vld [vmem:[%s3 + $0x348] sm:$0xff]
  %v313 = vld [vmem:[%s3 + $0x350] sm:$0xff]
  %v314 = vld [vmem:[%s3 + $0x358] sm:$0xff]
  %v315 = vld [vmem:[%s3 + $0x360] sm:$0xff]
  %v316 = vld [vmem:[%s3 + $0x368] sm:$0xff]
  %v317 = vld [vmem:[%s3 + $0x370] sm:$0xff]
  %v318 = vld [vmem:[%s3 + $0x378] sm:$0xff]
  %v319 = vld [vmem:[%s3 + $0x380] sm:$0xff]
  %v320 = vld [vmem:[%s3 + $0x388] sm:$0xff]
  %v321 = vld [vmem:[%s3 + $0x390] sm:$0xff]
  %v322 = vld [vmem:[%s3 + $0x398] sm:$0xff]
  %v323 = vld [vmem:[%s3 + $0x3a0] sm:$0xff]
  %v324 = vld [vmem:[%s3 + $0x3a8] sm:$0xff]
  %v325 = vld [vmem:[%s3 + $0x3b0] sm:$0xff]
  %v326 = vld [vmem:[%s3 + $0x3b8] sm:$0xff]
  %v327 = vld [vmem:[%s3 + $0x3c0] sm:$0xff]
  %v328 = vld [vmem:[%s3 + $0x3c8] sm:$0xff]
  %v329 = vld [vmem:[%s3 + $0x3d0] sm:$0xff]
  %v330 = vld [vmem:[%s3 + $0x3d8] sm:$0xff]
  %v331 = vld [vmem:[%s3 + $0x3e0] sm:$0xff]
  %v332 = vld [vmem:[%s3 + $0x3e8] sm:$0xff]
  %v333 = vld [vmem:[%s3 + $0x3f0] sm:$0xff]
  %v334 = vld [vmem:[%s3 + $0x3f8] sm:$0xff]
  %v335 = vld [vmem:[%s3 + $0x400] sm:$0xff]
  %v336 = vld [vmem:[%s3 + $0x408] sm:$0xff]
  %v337 = vld [vmem:[%s3 + $0x410] sm:$0xff]
  %v338 = vld [vmem:[%s3 + $0x418] sm:$0xff]
  %v339 = vld [vmem:[%s3 + $0x420] sm:$0xff]
  %v340 = vld [vmem:[%s3 + $0x428] sm:$0xff]
  %v341 = vld [vmem:[%s3 + $0x430] sm:$0xff]
  %v342 = vld [vmem:[%s3 + $0x438] sm:$0xff]
  %v343 = vld [vmem:[%s3 + $0x440] sm:$0xff]
  %v344 = vld [vmem:[%s3 + $0x448] sm:$0xff]
  %v345 = vld [vmem:[%s3 + $0x450] sm:$0xff]
  %v346 = vld [vmem:[%s3 + $0x458] sm:$0xff]
  %v347 = vld [vmem:[%s3 + $0x460] sm:$0xff]
  %v348 = vld [vmem:[%s3 + $0x468] sm:$0xff]
  %v349 = vld [vmem:[%s3 + $0x470] sm:$0xff]
  %v350 = vld [vmem:[%s3 + $0x478] sm:$0xff]
  %v371 = vunpack.c.l.b16 %v187
  %v372 = vunpack.c.h.b16 %v187
  %v373 = vunpack.c.l.b16 %v188
  %v374 = vunpack.c.h.b16 %v188
  %v375 = vunpack.c.l.b16 %v189
  %v376 = vunpack.c.h.b16 %v189
  %v377 = vunpack.c.l.b16 %v190
  %v378 = vunpack.c.h.b16 %v190
  %v379 = vunpack.c.l.b16 %v191
  %v380 = vunpack.c.l.b16 %v192
  %v381 = vunpack.c.h.b16 %v192
  %v382 = vunpack.c.l.b16 %v193
  %v383 = vunpack.c.h.b16 %v193
  %v384 = vunpack.c.l.b16 %v194
  %v385 = vunpack.c.h.b16 %v194
  %v386 = vunpack.c.l.b16 %v195
  %v387 = vunpack.c.h.b16 %v195
  %v388 = vunpack.c.l.b16 %v196
  %v389 = vunpack.c.l.b16 %v197
  %v390 = vunpack.c.h.b16 %v197
  %v391 = vunpack.c.l.b16 %v198
  %v392 = vunpack.c.h.b16 %v198
  %v393 = vunpack.c.l.b16 %v199
  %v394 = vunpack.c.h.b16 %v199
  %v395 = vunpack.c.l.b16 %v200
  %v396 = vunpack.c.h.b16 %v200
  %v397 = vunpack.c.l.b16 %v201
  %v398 = vunpack.c.l.b16 %v202
  %v399 = vunpack.c.h.b16 %v202
  %v400 = vunpack.c.l.b16 %v203
  %v401 = vunpack.c.h.b16 %v203
  %v402 = vunpack.c.l.b16 %v204
  %v403 = vunpack.c.h.b16 %v204
  %v404 = vunpack.c.l.b16 %v205
  %v405 = vunpack.c.h.b16 %v205
  %v406 = vunpack.c.l.b16 %v206
  %v407 = vpack.c.b16 %v380, %v371
  %v408 = vpack.c.b16 %v381, %v372
  %v409 = vpack.c.b16 %v382, %v373
  %v410 = vpack.c.b16 %v383, %v374
  %v411 = vpack.c.b16 %v384, %v375
  %v412 = vpack.c.b16 %v385, %v376
  %v413 = vpack.c.b16 %v386, %v377
  %v414 = vpack.c.b16 %v387, %v378
  %v415 = vpack.c.b16 %v388, %v379
  %v416 = vpack.c.b16 %v398, %v389
  %v417 = vpack.c.b16 %v399, %v390
  %v418 = vpack.c.b16 %v400, %v391
  %v419 = vpack.c.b16 %v401, %v392
  %v420 = vpack.c.b16 %v402, %v393
  %v421 = vpack.c.b16 %v403, %v394
  %v422 = vpack.c.b16 %v404, %v395
  %v423 = vpack.c.b16 %v405, %v396
  %v424 = vpack.c.b16 %v406, %v397
  %v587 = vunpack.c.l.b16 %v207
  %v588 = vunpack.c.h.b16 %v207
  %v589 = vunpack.c.l.b16 %v208
  %v590 = vunpack.c.h.b16 %v208
  %v591 = vunpack.c.l.b16 %v209
  %v592 = vunpack.c.h.b16 %v209
  %v593 = vunpack.c.l.b16 %v210
  %v594 = vunpack.c.h.b16 %v210
  %v595 = vunpack.c.l.b16 %v211
  %v596 = vunpack.c.h.b16 %v211
  %v597 = vunpack.c.l.b16 %v212
  %v598 = vunpack.c.h.b16 %v212
  %v599 = vunpack.c.l.b16 %v213
  %v600 = vunpack.c.h.b16 %v213
  %v601 = vunpack.c.l.b16 %v214
  %v602 = vunpack.c.h.b16 %v214
  %v603 = vunpack.c.l.b16 %v215
  %v604 = vunpack.c.h.b16 %v215
  %v605 = vunpack.c.l.b16 %v216
  %v606 = vunpack.c.h.b16 %v216
  %v607 = vunpack.c.l.b16 %v217
  %v608 = vunpack.c.h.b16 %v217
  %v609 = vunpack.c.l.b16 %v218
  %v610 = vunpack.c.h.b16 %v218
  %v611 = vunpack.c.l.b16 %v219
  %v612 = vunpack.c.h.b16 %v219
  %v613 = vunpack.c.l.b16 %v220
  %v614 = vunpack.c.h.b16 %v220
  %v615 = vunpack.c.l.b16 %v221
  %v616 = vunpack.c.h.b16 %v221
  %v617 = vunpack.c.l.b16 %v222
  %v618 = vunpack.c.h.b16 %v222
  %v619 = vunpack.c.l.b16 %v223
  %v620 = vunpack.c.h.b16 %v223
  %v621 = vunpack.c.l.b16 %v224
  %v622 = vunpack.c.h.b16 %v224
  %v623 = vunpack.c.l.b16 %v225
  %v624 = vunpack.c.h.b16 %v225
  %v625 = vunpack.c.l.b16 %v226
  %v626 = vunpack.c.h.b16 %v226
  %v627 = vunpack.c.l.b16 %v227
  %v628 = vunpack.c.h.b16 %v227
  %v629 = vunpack.c.l.b16 %v228
  %v630 = vunpack.c.h.b16 %v228
  %v631 = vunpack.c.l.b16 %v229
  %v632 = vunpack.c.h.b16 %v229
  %v633 = vunpack.c.l.b16 %v230
  %v634 = vunpack.c.h.b16 %v230
  %v635 = vunpack.c.l.b16 %v231
  %v636 = vunpack.c.h.b16 %v231
  %v637 = vunpack.c.l.b16 %v232
  %v638 = vunpack.c.h.b16 %v232
  %v639 = vunpack.c.l.b16 %v233
  %v640 = vunpack.c.h.b16 %v233
  %v641 = vunpack.c.l.b16 %v234
  %v642 = vunpack.c.h.b16 %v234
  %v643 = vunpack.c.l.b16 %v235
  %v644 = vunpack.c.h.b16 %v235
  %v645 = vunpack.c.l.b16 %v236
  %v646 = vunpack.c.h.b16 %v236
  %v647 = vunpack.c.l.b16 %v237
  %v648 = vunpack.c.h.b16 %v237
  %v649 = vunpack.c.l.b16 %v238
  %v650 = vunpack.c.h.b16 %v238
  %v651 = vunpack.c.l.b16 %v239
  %v652 = vunpack.c.h.b16 %v239
  %v653 = vunpack.c.l.b16 %v240
  %v654 = vunpack.c.h.b16 %v240
  %v655 = vunpack.c.l.b16 %v241
  %v656 = vunpack.c.h.b16 %v241
  %v657 = vunpack.c.l.b16 %v242
  %v658 = vunpack.c.h.b16 %v242
  %v659 = vunpack.c.l.b16 %v243
  %v660 = vunpack.c.h.b16 %v243
  %v661 = vunpack.c.l.b16 %v244
  %v662 = vunpack.c.h.b16 %v244
  %v663 = vunpack.c.l.b16 %v245
  %v664 = vunpack.c.h.b16 %v245
  %v665 = vunpack.c.l.b16 %v246
  %v666 = vunpack.c.h.b16 %v246
  %v667 = vunpack.c.l.b16 %v247
  %v668 = vunpack.c.h.b16 %v247
  %v669 = vunpack.c.l.b16 %v248
  %v670 = vunpack.c.h.b16 %v248
  %v671 = vunpack.c.l.b16 %v249
  %v672 = vunpack.c.h.b16 %v249
  %v673 = vunpack.c.l.b16 %v250
  %v674 = vunpack.c.h.b16 %v250
  %v675 = vunpack.c.l.b16 %v251
  %v676 = vunpack.c.h.b16 %v251
  %v677 = vunpack.c.l.b16 %v252
  %v678 = vunpack.c.h.b16 %v252
  %v679 = vunpack.c.l.b16 %v253
  %v680 = vunpack.c.h.b16 %v253
  %v681 = vunpack.c.l.b16 %v254
  %v682 = vunpack.c.h.b16 %v254
  %v683 = vunpack.c.l.b16 %v255
  %v684 = vunpack.c.h.b16 %v255
  %v685 = vunpack.c.l.b16 %v256
  %v686 = vunpack.c.h.b16 %v256
  %v687 = vunpack.c.l.b16 %v257
  %v688 = vunpack.c.h.b16 %v257
  %v689 = vunpack.c.l.b16 %v258
  %v690 = vunpack.c.h.b16 %v258
  %v691 = vunpack.c.l.b16 %v259
  %v692 = vunpack.c.h.b16 %v259
  %v693 = vunpack.c.l.b16 %v260
  %v694 = vunpack.c.h.b16 %v260
  %v695 = vunpack.c.l.b16 %v261
  %v696 = vunpack.c.h.b16 %v261
  %v697 = vunpack.c.l.b16 %v262
  %v698 = vunpack.c.h.b16 %v262
  %v699 = vunpack.c.l.b16 %v263
  %v700 = vunpack.c.h.b16 %v263
  %v701 = vunpack.c.l.b16 %v264
  %v702 = vunpack.c.h.b16 %v264
  %v703 = vunpack.c.l.b16 %v265
  %v704 = vunpack.c.h.b16 %v265
  %v705 = vunpack.c.l.b16 %v266
  %v706 = vunpack.c.h.b16 %v266
  %v707 = vunpack.c.l.b16 %v267
  %v708 = vunpack.c.h.b16 %v267
  %v709 = vunpack.c.l.b16 %v268
  %v710 = vunpack.c.h.b16 %v268
  %v711 = vunpack.c.l.b16 %v269
  %v712 = vunpack.c.h.b16 %v269
  %v713 = vunpack.c.l.b16 %v270
  %v714 = vunpack.c.h.b16 %v270
  %v715 = vunpack.c.l.b16 %v271
  %v716 = vunpack.c.h.b16 %v271
  %v717 = vunpack.c.l.b16 %v272
  %v718 = vunpack.c.h.b16 %v272
  %v719 = vunpack.c.l.b16 %v273
  %v720 = vunpack.c.h.b16 %v273
  %v721 = vunpack.c.l.b16 %v274
  %v722 = vunpack.c.h.b16 %v274
  %v723 = vunpack.c.l.b16 %v275
  %v724 = vunpack.c.h.b16 %v275
  %v725 = vunpack.c.l.b16 %v276
  %v726 = vunpack.c.h.b16 %v276
  %v727 = vunpack.c.l.b16 %v277
  %v728 = vunpack.c.h.b16 %v277
  %v729 = vunpack.c.l.b16 %v278
  %v730 = vunpack.c.h.b16 %v278
  %v731 = vunpack.c.l.b16 %v279
  %v732 = vunpack.c.h.b16 %v279
  %v733 = vunpack.c.l.b16 %v280
  %v734 = vunpack.c.h.b16 %v280
  %v735 = vunpack.c.l.b16 %v281
  %v736 = vunpack.c.h.b16 %v281
  %v737 = vunpack.c.l.b16 %v282
  %v738 = vunpack.c.h.b16 %v282
  %v739 = vunpack.c.l.b16 %v283
  %v740 = vunpack.c.h.b16 %v283
  %v741 = vunpack.c.l.b16 %v284
  %v742 = vunpack.c.h.b16 %v284
  %v743 = vunpack.c.l.b16 %v285
  %v744 = vunpack.c.h.b16 %v285
  %v745 = vunpack.c.l.b16 %v286
  %v746 = vunpack.c.h.b16 %v286
  %v747 = vunpack.c.l.b16 %v287
  %v748 = vunpack.c.h.b16 %v287
  %v749 = vunpack.c.l.b16 %v288
  %v750 = vunpack.c.h.b16 %v288
  %v751 = vunpack.c.l.b16 %v289
  %v752 = vunpack.c.h.b16 %v289
  %v753 = vunpack.c.l.b16 %v290
  %v754 = vunpack.c.h.b16 %v290
  %v755 = vunpack.c.l.b16 %v291
  %v756 = vunpack.c.h.b16 %v291
  %v757 = vunpack.c.l.b16 %v292
  %v758 = vunpack.c.h.b16 %v292
  %v759 = vunpack.c.l.b16 %v293
  %v760 = vunpack.c.h.b16 %v293
  %v761 = vunpack.c.l.b16 %v294
  %v762 = vunpack.c.h.b16 %v294
  %v763 = vunpack.c.l.b16 %v295
  %v764 = vunpack.c.h.b16 %v295
  %v765 = vunpack.c.l.b16 %v296
  %v766 = vunpack.c.h.b16 %v296
  %v767 = vunpack.c.l.b16 %v297
  %v768 = vunpack.c.h.b16 %v297
  %v769 = vunpack.c.l.b16 %v298
  %v770 = vunpack.c.h.b16 %v298
  %v771 = vunpack.c.l.b16 %v299
  %v772 = vunpack.c.h.b16 %v299
  %v773 = vunpack.c.l.b16 %v300
  %v774 = vunpack.c.h.b16 %v300
  %v775 = vunpack.c.l.b16 %v301
  %v776 = vunpack.c.h.b16 %v301
  %v777 = vunpack.c.l.b16 %v302
  %v778 = vunpack.c.h.b16 %v302
  %v779 = vunpack.c.l.b16 %v303
  %v780 = vunpack.c.h.b16 %v303
  %v781 = vunpack.c.l.b16 %v304
  %v782 = vunpack.c.h.b16 %v304
  %v783 = vunpack.c.l.b16 %v305
  %v784 = vunpack.c.h.b16 %v305
  %v785 = vunpack.c.l.b16 %v306
  %v786 = vunpack.c.h.b16 %v306
  %v787 = vunpack.c.l.b16 %v307
  %v788 = vunpack.c.h.b16 %v307
  %v789 = vunpack.c.l.b16 %v308
  %v790 = vunpack.c.h.b16 %v308
  %v791 = vunpack.c.l.b16 %v309
  %v792 = vunpack.c.h.b16 %v309
  %v793 = vunpack.c.l.b16 %v310
  %v794 = vunpack.c.h.b16 %v310
  %v795 = vunpack.c.l.b16 %v311
  %v796 = vunpack.c.h.b16 %v311
  %v797 = vunpack.c.l.b16 %v312
  %v798 = vunpack.c.h.b16 %v312
  %v799 = vunpack.c.l.b16 %v313
  %v800 = vunpack.c.h.b16 %v313
  %v801 = vunpack.c.l.b16 %v314
  %v802 = vunpack.c.h.b16 %v314
  %v803 = vunpack.c.l.b16 %v315
  %v804 = vunpack.c.h.b16 %v315
  %v805 = vunpack.c.l.b16 %v316
  %v806 = vunpack.c.h.b16 %v316
  %v807 = vunpack.c.l.b16 %v317
  %v808 = vunpack.c.h.b16 %v317
  %v809 = vunpack.c.l.b16 %v318
  %v810 = vunpack.c.h.b16 %v318
  %v811 = vunpack.c.l.b16 %v319
  %v812 = vunpack.c.h.b16 %v319
  %v813 = vunpack.c.l.b16 %v320
  %v814 = vunpack.c.h.b16 %v320
  %v815 = vunpack.c.l.b16 %v321
  %v816 = vunpack.c.h.b16 %v321
  %v817 = vunpack.c.l.b16 %v322
  %v818 = vunpack.c.h.b16 %v322
  %v819 = vunpack.c.l.b16 %v323
  %v820 = vunpack.c.h.b16 %v323
  %v821 = vunpack.c.l.b16 %v324
  %v822 = vunpack.c.h.b16 %v324
  %v823 = vunpack.c.l.b16 %v325
  %v824 = vunpack.c.h.b16 %v325
  %v825 = vunpack.c.l.b16 %v326
  %v826 = vunpack.c.h.b16 %v326
  %v827 = vunpack.c.l.b16 %v327
  %v828 = vunpack.c.h.b16 %v327
  %v829 = vunpack.c.l.b16 %v328
  %v830 = vunpack.c.h.b16 %v328
  %v831 = vunpack.c.l.b16 %v329
  %v832 = vunpack.c.h.b16 %v329
  %v833 = vunpack.c.l.b16 %v330
  %v834 = vunpack.c.h.b16 %v330
  %v835 = vunpack.c.l.b16 %v331
  %v836 = vunpack.c.h.b16 %v331
  %v837 = vunpack.c.l.b16 %v332
  %v838 = vunpack.c.h.b16 %v332
  %v839 = vunpack.c.l.b16 %v333
  %v840 = vunpack.c.h.b16 %v333
  %v841 = vunpack.c.l.b16 %v334
  %v842 = vunpack.c.h.b16 %v334
  %v843 = vunpack.c.l.b16 %v335
  %v844 = vunpack.c.h.b16 %v335
  %v845 = vunpack.c.l.b16 %v336
  %v846 = vunpack.c.h.b16 %v336
  %v847 = vunpack.c.l.b16 %v337
  %v848 = vunpack.c.h.b16 %v337
  %v849 = vunpack.c.l.b16 %v338
  %v850 = vunpack.c.h.b16 %v338
  %v851 = vunpack.c.l.b16 %v339
  %v852 = vunpack.c.h.b16 %v339
  %v853 = vunpack.c.l.b16 %v340
  %v854 = vunpack.c.h.b16 %v340
  %v855 = vunpack.c.l.b16 %v341
  %v856 = vunpack.c.h.b16 %v341
  %v857 = vunpack.c.l.b16 %v342
  %v858 = vunpack.c.h.b16 %v342
  %v859 = vunpack.c.l.b16 %v343
  %v860 = vunpack.c.h.b16 %v343
  %v861 = vunpack.c.l.b16 %v344
  %v862 = vunpack.c.h.b16 %v344
  %v863 = vunpack.c.l.b16 %v345
  %v864 = vunpack.c.h.b16 %v345
  %v865 = vunpack.c.l.b16 %v346
  %v866 = vunpack.c.h.b16 %v346
  %v867 = vunpack.c.l.b16 %v347
  %v868 = vunpack.c.h.b16 %v347
  %v869 = vunpack.c.l.b16 %v348
  %v870 = vunpack.c.h.b16 %v348
  %v871 = vunpack.c.l.b16 %v349
  %v872 = vunpack.c.h.b16 %v349
  %v873 = vunpack.c.l.b16 %v350
  %v874 = vunpack.c.h.b16 %v350
  %v875 = vpack.c.b16 %v589, %v587
  %v876 = vpack.c.b16 %v590, %v588
  %v877 = vpack.c.b16 %v593, %v591
  %v878 = vpack.c.b16 %v594, %v592
  %v879 = vpack.c.b16 %v597, %v595
  %v880 = vpack.c.b16 %v598, %v596
  %v881 = vpack.c.b16 %v601, %v599
  %v882 = vpack.c.b16 %v602, %v600
  %v883 = vpack.c.b16 %v605, %v603
  %v884 = vpack.c.b16 %v606, %v604
  %v885 = vpack.c.b16 %v609, %v607
  %v886 = vpack.c.b16 %v610, %v608
  %v887 = vpack.c.b16 %v613, %v611
  %v888 = vpack.c.b16 %v614, %v612
  %v889 = vpack.c.b16 %v617, %v615
  %v890 = vpack.c.b16 %v618, %v616
  %v891 = vpack.c.b16 %v621, %v619
  %v892 = vpack.c.b16 %v622, %v620
  %v893 = vpack.c.b16 %v625, %v623
  %v894 = vpack.c.b16 %v626, %v624
  %v895 = vpack.c.b16 %v629, %v627
  %v896 = vpack.c.b16 %v630, %v628
  %v897 = vpack.c.b16 %v633, %v631
  %v898 = vpack.c.b16 %v634, %v632
  %v899 = vpack.c.b16 %v637, %v635
  %v900 = vpack.c.b16 %v638, %v636
  %v901 = vpack.c.b16 %v641, %v639
  %v902 = vpack.c.b16 %v642, %v640
  %v903 = vpack.c.b16 %v645, %v643
  %v904 = vpack.c.b16 %v646, %v644
  %v905 = vpack.c.b16 %v649, %v647
  %v906 = vpack.c.b16 %v650, %v648
  %v907 = vpack.c.b16 %v653, %v651
  %v908 = vpack.c.b16 %v654, %v652
  %v909 = vpack.c.b16 %v657, %v655
  %v910 = vpack.c.b16 %v658, %v656
  %v911 = vpack.c.b16 %v661, %v659
  %v912 = vpack.c.b16 %v662, %v660
  %v913 = vpack.c.b16 %v665, %v663
  %v914 = vpack.c.b16 %v666, %v664
  %v915 = vpack.c.b16 %v669, %v667
  %v916 = vpack.c.b16 %v670, %v668
  %v917 = vpack.c.b16 %v673, %v671
  %v918 = vpack.c.b16 %v674, %v672
  %v919 = vpack.c.b16 %v677, %v675
  %v920 = vpack.c.b16 %v678, %v676
  %v921 = vpack.c.b16 %v681, %v679
  %v922 = vpack.c.b16 %v682, %v680
  %v923 = vpack.c.b16 %v685, %v683
  %v924 = vpack.c.b16 %v686, %v684
  %v925 = vpack.c.b16 %v689, %v687
  %v926 = vpack.c.b16 %v690, %v688
  %v927 = vpack.c.b16 %v693, %v691
  %v928 = vpack.c.b16 %v694, %v692
  %v929 = vpack.c.b16 %v697, %v695
  %v930 = vpack.c.b16 %v698, %v696
  %v931 = vpack.c.b16 %v701, %v699
  %v932 = vpack.c.b16 %v702, %v700
  %v933 = vpack.c.b16 %v705, %v703
  %v934 = vpack.c.b16 %v706, %v704
  %v935 = vpack.c.b16 %v709, %v707
  %v936 = vpack.c.b16 %v710, %v708
  %v937 = vpack.c.b16 %v713, %v711
  %v938 = vpack.c.b16 %v714, %v712
  %v939 = vpack.c.b16 %v717, %v715
  %v940 = vpack.c.b16 %v718, %v716
  %v941 = vpack.c.b16 %v721, %v719
  %v942 = vpack.c.b16 %v722, %v720
  %v943 = vpack.c.b16 %v725, %v723
  %v944 = vpack.c.b16 %v726, %v724
  %v945 = vpack.c.b16 %v729, %v727
  %v946 = vpack.c.b16 %v730, %v728
  %v947 = vpack.c.b16 %v733, %v731
  %v948 = vpack.c.b16 %v734, %v732
  %v949 = vpack.c.b16 %v737, %v735
  %v950 = vpack.c.b16 %v738, %v736
  %v951 = vpack.c.b16 %v741, %v739
  %v952 = vpack.c.b16 %v742, %v740
  %v953 = vpack.c.b16 %v745, %v743
  %v954 = vpack.c.b16 %v746, %v744
  %v955 = vpack.c.b16 %v749, %v747
  %v956 = vpack.c.b16 %v750, %v748
  %v957 = vpack.c.b16 %v753, %v751
  %v958 = vpack.c.b16 %v754, %v752
  %v959 = vpack.c.b16 %v757, %v755
  %v960 = vpack.c.b16 %v758, %v756
  %v961 = vpack.c.b16 %v761, %v759
  %v962 = vpack.c.b16 %v762, %v760
  %v963 = vpack.c.b16 %v765, %v763
  %v964 = vpack.c.b16 %v766, %v764
  %v965 = vpack.c.b16 %v769, %v767
  %v966 = vpack.c.b16 %v770, %v768
  %v967 = vpack.c.b16 %v773, %v771
  %v968 = vpack.c.b16 %v774, %v772
  %v969 = vpack.c.b16 %v777, %v775
  %v970 = vpack.c.b16 %v778, %v776
  %v971 = vpack.c.b16 %v781, %v779
  %v972 = vpack.c.b16 %v782, %v780
  %v973 = vpack.c.b16 %v785, %v783
  %v974 = vpack.c.b16 %v786, %v784
  %v975 = vpack.c.b16 %v789, %v787
  %v976 = vpack.c.b16 %v790, %v788
  %v977 = vpack.c.b16 %v793, %v791
  %v978 = vpack.c.b16 %v794, %v792
  %v979 = vpack.c.b16 %v797, %v795
  %v980 = vpack.c.b16 %v798, %v796
  %v981 = vpack.c.b16 %v801, %v799
  %v982 = vpack.c.b16 %v802, %v800
  %v983 = vpack.c.b16 %v805, %v803
  %v984 = vpack.c.b16 %v806, %v804
  %v985 = vpack.c.b16 %v809, %v807
  %v986 = vpack.c.b16 %v810, %v808
  %v987 = vpack.c.b16 %v813, %v811
  %v988 = vpack.c.b16 %v814, %v812
  %v989 = vpack.c.b16 %v817, %v815
  %v990 = vpack.c.b16 %v818, %v816
  %v991 = vpack.c.b16 %v821, %v819
  %v992 = vpack.c.b16 %v822, %v820
  %v993 = vpack.c.b16 %v825, %v823
  %v994 = vpack.c.b16 %v826, %v824
  %v995 = vpack.c.b16 %v829, %v827
  %v996 = vpack.c.b16 %v830, %v828
  %v997 = vpack.c.b16 %v833, %v831
  %v998 = vpack.c.b16 %v834, %v832
  %v999 = vpack.c.b16 %v837, %v835
  %v1000 = vpack.c.b16 %v838, %v836
  %v1001 = vpack.c.b16 %v841, %v839
  %v1002 = vpack.c.b16 %v842, %v840
  %v1003 = vpack.c.b16 %v845, %v843
  %v1004 = vpack.c.b16 %v846, %v844
  %v1005 = vpack.c.b16 %v849, %v847
  %v1006 = vpack.c.b16 %v850, %v848
  %v1007 = vpack.c.b16 %v853, %v851
  %v1008 = vpack.c.b16 %v854, %v852
  %v1009 = vpack.c.b16 %v857, %v855
  %v1010 = vpack.c.b16 %v858, %v856
  %v1011 = vpack.c.b16 %v861, %v859
  %v1012 = vpack.c.b16 %v862, %v860
  %v1013 = vpack.c.b16 %v865, %v863
  %v1014 = vpack.c.b16 %v866, %v864
  %v1015 = vpack.c.b16 %v869, %v867
  %v1016 = vpack.c.b16 %v870, %v868
  %v1017 = vpack.c.b16 %v873, %v871
  %v1018 = vpack.c.b16 %v874, %v872
  %1163 = vmatprep.subr.bf16.mxu0 %v890
  %1164 = vmatpush1.bf16.msra.mxu0 %v889
  %1165 = vmatprep.subr.bf16.mxu0 %v888
  %1166 = vmatpush1.bf16.msra.mxu0 %v887
  %1167 = vmatprep.subr.bf16.mxu0 %v886
  %1168 = vmatpush1.bf16.msra.mxu0 %v885
  %1169 = vmatprep.subr.bf16.mxu0 %v884
  %1170 = vmatpush1.bf16.msra.mxu0 %v883
  %1171 = vmatprep.subr.bf16.mxu0 %v882
  %1172 = vmatpush1.bf16.msra.mxu0 %v881
  %1173 = vmatprep.subr.bf16.mxu0 %v880
  %1174 = vmatpush1.bf16.msra.mxu0 %v879
  %1175 = vmatprep.subr.bf16.mxu0 %v878
  %1176 = vmatpush1.bf16.msra.mxu0 %v877
  %1177 = vmatprep.subr.bf16.mxu0 %v876
  %1178 = vmatpush1.bf16.msra.mxu0 %v875
  %1179 = vmatprep.subr.bf16.mxu0 %v906
  %1180 = vmatpush2.bf16.msra.mxu0 %v905
  %1181 = vmatprep.subr.bf16.mxu0 %v904
  %1182 = vmatpush2.bf16.msra.mxu0 %v903
  %1183 = vmatprep.subr.bf16.mxu0 %v902
  %1184 = vmatpush2.bf16.msra.mxu0 %v901
  %1185 = vmatprep.subr.bf16.mxu0 %v900
  %1186 = vmatpush2.bf16.msra.mxu0 %v899
  %1187 = vmatprep.subr.bf16.mxu0 %v898
  %1188 = vmatpush2.bf16.msra.mxu0 %v897
  %1189 = vmatprep.subr.bf16.mxu0 %v896
  %1190 = vmatpush2.bf16.msra.mxu0 %v895
  %1191 = vmatprep.subr.bf16.mxu0 %v894
  %1192 = vmatpush2.bf16.msra.mxu0 %v893
  %1193 = vmatprep.subr.bf16.mxu0 %v892
  %1194 = vmatpush2.bf16.msra.mxu0 %v891
  %1195 = vmatprep.mubr.bf16.mxu0 %v408
  %1196 = vmatmul.mubr.bf16.gmra.mxu0 %v407
  %v1197 = vpop.f32.mrf.mxu0
  %v1198 = vadd.f32 0.0, %v1197
  %v1199 = vpop.f32.mrf.mxu0
  %v1200 = vadd.f32 0.0, %v1199
  %v1201 = vpop.f32.mrf.mxu0
  %v1202 = vadd.f32 0.0, %v1201
  %v1203 = vpop.f32.mrf.mxu0
  %v1204 = vadd.f32 0.0, %v1203
  %1205 = vmatprep.mubr.bf16.mxu0 %v417
  %1206 = vmatmul.mubr.bf16.gmra.mxu0 %v416
  %v1207 = vpop.f32.mrf.mxu0
  %v1208 = vadd.f32 0.0, %v1207
  %v1209 = vpop.f32.mrf.mxu0
  %v1210 = vadd.f32 0.0, %v1209
  %v1211 = vpop.f32.mrf.mxu0
  %v1212 = vadd.f32 0.0, %v1211
  %v1213 = vpop.f32.mrf.mxu0
  %v1214 = vadd.f32 0.0, %v1213
  %1215 = vdwg.mxu0
  %1216 = vmatprep.subr.bf16.mxu0 %v922
  %1217 = vmatpush1.bf16.msra.mxu0 %v921
  %1218 = vmatprep.subr.bf16.mxu0 %v920
  %1219 = vmatpush1.bf16.msra.mxu0 %v919
  %1220 = vmatprep.subr.bf16.mxu0 %v918
  %1221 = vmatpush1.bf16.msra.mxu0 %v917
  %1222 = vmatprep.subr.bf16.mxu0 %v916
  %1223 = vmatpush1.bf16.msra.mxu0 %v915
  %1224 = vmatprep.subr.bf16.mxu0 %v914
  %1225 = vmatpush1.bf16.msra.mxu0 %v913
  %1226 = vmatprep.subr.bf16.mxu0 %v912
  %1227 = vmatpush1.bf16.msra.mxu0 %v911
  %1228 = vmatprep.subr.bf16.mxu0 %v910
  %1229 = vmatpush1.bf16.msra.mxu0 %v909
  %1230 = vmatprep.subr.bf16.mxu0 %v908
  %1231 = vmatpush1.bf16.msra.mxu0 %v907
  %1232 = vmatprep.subr.bf16.mxu0 %v938
  %1233 = vmatpush2.bf16.msra.mxu0 %v937
  %1234 = vmatprep.subr.bf16.mxu0 %v936
  %1235 = vmatpush2.bf16.msra.mxu0 %v935
  %1236 = vmatprep.subr.bf16.mxu0 %v934
  %1237 = vmatpush2.bf16.msra.mxu0 %v933
  %1238 = vmatprep.subr.bf16.mxu0 %v932
  %1239 = vmatpush2.bf16.msra.mxu0 %v931
  %1240 = vmatprep.subr.bf16.mxu0 %v930
  %1241 = vmatpush2.bf16.msra.mxu0 %v929
  %1242 = vmatprep.subr.bf16.mxu0 %v928
  %1243 = vmatpush2.bf16.msra.mxu0 %v927
  %1244 = vmatprep.subr.bf16.mxu0 %v926
  %1245 = vmatpush2.bf16.msra.mxu0 %v925
  %1246 = vmatprep.subr.bf16.mxu0 %v924
  %1247 = vmatpush2.bf16.msra.mxu0 %v923
  %1248 = vmatprep.mubr.bf16.mxu0 %v410
  %1249 = vmatmul.mubr.bf16.gmra.mxu0 %v409
  %v1250 = vpop.f32.mrf.mxu0
  %v1251 = vadd.f32 %v1198, %v1250
  %v1252 = vpop.f32.mrf.mxu0
  %v1253 = vadd.f32 %v1200, %v1252
  %v1254 = vpop.f32.mrf.mxu0
  %v1255 = vadd.f32 %v1202, %v1254
  %v1256 = vpop.f32.mrf.mxu0
  %v1257 = vadd.f32 %v1204, %v1256
  %1258 = vmatprep.mubr.bf16.mxu0 %v419
  %1259 = vmatmul.mubr.bf16.gmra.mxu0 %v418
  %v1260 = vpop.f32.mrf.mxu0
  %v1261 = vadd.f32 %v1208, %v1260
  %v1262 = vpop.f32.mrf.mxu0
  %v1263 = vadd.f32 %v1210, %v1262
  %v1264 = vpop.f32.mrf.mxu0
  %v1265 = vadd.f32 %v1212, %v1264
  %v1266 = vpop.f32.mrf.mxu0
  %v1267 = vadd.f32 %v1214, %v1266
  %1268 = vdwg.mxu0
  %1269 = vmatprep.subr.bf16.mxu0 %v954
  %1270 = vmatpush1.bf16.msra.mxu0 %v953
  %1271 = vmatprep.subr.bf16.mxu0 %v952
  %1272 = vmatpush1.bf16.msra.mxu0 %v951
  %1273 = vmatprep.subr.bf16.mxu0 %v950
  %1274 = vmatpush1.bf16.msra.mxu0 %v949
  %1275 = vmatprep.subr.bf16.mxu0 %v948
  %1276 = vmatpush1.bf16.msra.mxu0 %v947
  %1277 = vmatprep.subr.bf16.mxu0 %v946
  %1278 = vmatpush1.bf16.msra.mxu0 %v945
  %1279 = vmatprep.subr.bf16.mxu0 %v944
  %1280 = vmatpush1.bf16.msra.mxu0 %v943
  %1281 = vmatprep.subr.bf16.mxu0 %v942
  %1282 = vmatpush1.bf16.msra.mxu0 %v941
  %1283 = vmatprep.subr.bf16.mxu0 %v940
  %1284 = vmatpush1.bf16.msra.mxu0 %v939
  %1285 = vmatprep.subr.bf16.mxu0 %v970
  %1286 = vmatpush2.bf16.msra.mxu0 %v969
  %1287 = vmatprep.subr.bf16.mxu0 %v968
  %1288 = vmatpush2.bf16.msra.mxu0 %v967
  %1289 = vmatprep.subr.bf16.mxu0 %v966
  %1290 = vmatpush2.bf16.msra.mxu0 %v965
  %1291 = vmatprep.subr.bf16.mxu0 %v964
  %1292 = vmatpush2.bf16.msra.mxu0 %v963
  %1293 = vmatprep.subr.bf16.mxu0 %v962
  %1294 = vmatpush2.bf16.msra.mxu0 %v961
  %1295 = vmatprep.subr.bf16.mxu0 %v960
  %1296 = vmatpush2.bf16.msra.mxu0 %v959
  %1297 = vmatprep.subr.bf16.mxu0 %v958
  %1298 = vmatpush2.bf16.msra.mxu0 %v957
  %1299 = vmatprep.subr.bf16.mxu0 %v956
  %1300 = vmatpush2.bf16.msra.mxu0 %v955
  %1301 = vmatprep.mubr.bf16.mxu0 %v412
  %1302 = vmatmul.mubr.bf16.gmra.mxu0 %v411
  %v1303 = vpop.f32.mrf.mxu0
  %v1304 = vadd.f32 %v1251, %v1303
  %v1305 = vpop.f32.mrf.mxu0
  %v1306 = vadd.f32 %v1253, %v1305
  %v1307 = vpop.f32.mrf.mxu0
  %v1308 = vadd.f32 %v1255, %v1307
  %v1309 = vpop.f32.mrf.mxu0
  %v1310 = vadd.f32 %v1257, %v1309
  %1311 = vmatprep.mubr.bf16.mxu0 %v421
  %1312 = vmatmul.mubr.bf16.gmra.mxu0 %v420
  %v1313 = vpop.f32.mrf.mxu0
  %v1314 = vadd.f32 %v1261, %v1313
  %v1315 = vpop.f32.mrf.mxu0
  %v1316 = vadd.f32 %v1263, %v1315
  %v1317 = vpop.f32.mrf.mxu0
  %v1318 = vadd.f32 %v1265, %v1317
  %v1319 = vpop.f32.mrf.mxu0
  %v1320 = vadd.f32 %v1267, %v1319
  %1321 = vdwg.mxu0
  %1322 = vmatprep.subr.bf16.mxu0 %v986
  %1323 = vmatpush1.bf16.msra.mxu0 %v985
  %1324 = vmatprep.subr.bf16.mxu0 %v984
  %1325 = vmatpush1.bf16.msra.mxu0 %v983
  %1326 = vmatprep.subr.bf16.mxu0 %v982
  %1327 = vmatpush1.bf16.msra.mxu0 %v981
  %1328 = vmatprep.subr.bf16.mxu0 %v980
  %1329 = vmatpush1.bf16.msra.mxu0 %v979
  %1330 = vmatprep.subr.bf16.mxu0 %v978
  %1331 = vmatpush1.bf16.msra.mxu0 %v977
  %1332 = vmatprep.subr.bf16.mxu0 %v976
  %1333 = vmatpush1.bf16.msra.mxu0 %v975
  %1334 = vmatprep.subr.bf16.mxu0 %v974
  %1335 = vmatpush1.bf16.msra.mxu0 %v973
  %1336 = vmatprep.subr.bf16.mxu0 %v972
  %1337 = vmatpush1.bf16.msra.mxu0 %v971
  %1338 = vmatprep.subr.bf16.mxu0 %v1002
  %1339 = vmatpush2.bf16.msra.mxu0 %v1001
  %1340 = vmatprep.subr.bf16.mxu0 %v1000
  %1341 = vmatpush2.bf16.msra.mxu0 %v999
  %1342 = vmatprep.subr.bf16.mxu0 %v998
  %1343 = vmatpush2.bf16.msra.mxu0 %v997
  %1344 = vmatprep.subr.bf16.mxu0 %v996
  %1345 = vmatpush2.bf16.msra.mxu0 %v995
  %1346 = vmatprep.subr.bf16.mxu0 %v994
  %1347 = vmatpush2.bf16.msra.mxu0 %v993
  %1348 = vmatprep.subr.bf16.mxu0 %v992
  %1349 = vmatpush2.bf16.msra.mxu0 %v991
  %1350 = vmatprep.subr.bf16.mxu0 %v990
  %1351 = vmatpush2.bf16.msra.mxu0 %v989
  %1352 = vmatprep.subr.bf16.mxu0 %v988
  %1353 = vmatpush2.bf16.msra.mxu0 %v987
  %1354 = vmatprep.mubr.bf16.mxu0 %v414
  %1355 = vmatmul.mubr.bf16.gmra.mxu0 %v413
  %v1356 = vpop.f32.mrf.mxu0
  %v1357 = vadd.f32 %v1304, %v1356
  %v1358 = vpop.f32.mrf.mxu0
  %v1359 = vadd.f32 %v1306, %v1358
  %v1360 = vpop.f32.mrf.mxu0
  %v1361 = vadd.f32 %v1308, %v1360
  %v1362 = vpop.f32.mrf.mxu0
  %v1363 = vadd.f32 %v1310, %v1362
  %1364 = vmatprep.mubr.bf16.mxu0 %v423
  %1365 = vmatmul.mubr.bf16.gmra.mxu0 %v422
  %v1366 = vpop.f32.mrf.mxu0
  %v1367 = vadd.f32 %v1314, %v1366
  %v1368 = vpop.f32.mrf.mxu0
  %v1369 = vadd.f32 %v1316, %v1368
  %v1370 = vpop.f32.mrf.mxu0
  %v1371 = vadd.f32 %v1318, %v1370
  %v1372 = vpop.f32.mrf.mxu0
  %v1373 = vadd.f32 %v1320, %v1372
  %1374 = vdwg.mxu0
  %1375 = vmatprep.subr.bf16.mxu0 %v1018
  %1376 = vmatpush1.bf16.msra.mxu0 %v1017
  %1377 = vmatprep.subr.bf16.mxu0 %v1016
  %1378 = vmatpush1.bf16.msra.mxu0 %v1015
  %1379 = vmatprep.subr.bf16.mxu0 %v1014
  %1380 = vmatpush1.bf16.msra.mxu0 %v1013
  %1381 = vmatprep.subr.bf16.mxu0 %v1012
  %1382 = vmatpush1.bf16.msra.mxu0 %v1011
  %1383 = vmatprep.subr.bf16.mxu0 %v1010
  %1384 = vmatpush1.bf16.msra.mxu0 %v1009
  %1385 = vmatprep.subr.bf16.mxu0 %v1008
  %1386 = vmatpush1.bf16.msra.mxu0 %v1007
  %1387 = vmatprep.subr.bf16.mxu0 %v1006
  %1388 = vmatpush1.bf16.msra.mxu0 %v1005
  %1389 = vmatprep.subr.bf16.mxu0 %v1004
  %1390 = vmatpush1.bf16.msra.mxu0 %v1003
  %1391 = vmatprep.subr.bf16.mxu0 0
  %1392 = vmatpush2.bf16.msra.mxu0 0
  %1393 = vmatprep.subr.bf16.mxu0 0
  %1394 = vmatpush2.bf16.msra.mxu0 0
  %1395 = vmatprep.subr.bf16.mxu0 0
  %1396 = vmatpush2.bf16.msra.mxu0 0
  %1397 = vmatprep.subr.bf16.mxu0 0
  %1398 = vmatpush2.bf16.msra.mxu0 0
  %1399 = vmatprep.subr.bf16.mxu0 0
  %1400 = vmatpush2.bf16.msra.mxu0 0
  %1401 = vmatprep.subr.bf16.mxu0 0
  %1402 = vmatpush2.bf16.msra.mxu0 0
  %1403 = vmatprep.subr.bf16.mxu0 0
  %1404 = vmatpush2.bf16.msra.mxu0 0
  %1405 = vmatprep.subr.bf16.mxu0 0
  %1406 = vmatpush2.bf16.msra.mxu0 0
  %1407 = vmatprep.mubr.bf16.mxu0 0
  %1408 = vmatmul.mubr.bf16.gmra.mxu0 %v415
  %v1409 = vpop.f32.mrf.mxu0
  %v1410 = vadd.f32 %v1357, %v1409
  %v1411 = vpop.f32.mrf.mxu0
  %v1412 = vadd.f32 %v1359, %v1411
  %v1413 = vpop.f32.mrf.mxu0
  %v1414 = vadd.f32 %v1361, %v1413
  %v1415 = vpop.f32.mrf.mxu0
  %v1416 = vadd.f32 %v1363, %v1415
  %1417 = vmatprep.mubr.bf16.mxu0 0
  %1418 = vmatmul.mubr.bf16.gmra.mxu0 %v424
  %v1419 = vpop.f32.mrf.mxu0
  %v1420 = vadd.f32 %v1367, %v1419
  %v1421 = vpop.f32.mrf.mxu0
  %v1422 = vadd.f32 %v1369, %v1421
  %v1423 = vpop.f32.mrf.mxu0
  %v1424 = vadd.f32 %v1371, %v1423
  %v1425 = vpop.f32.mrf.mxu0
  %v1426 = vadd.f32 %v1373, %v1425
  %1427 = vdwg.mxu0
  %v1448 = vunpack.c.l.b16 %v23
  %v1449 = vunpack.c.h.b16 %v23
  %v1450 = vunpack.c.l.b16 %v24
  %v1451 = vunpack.c.h.b16 %v24
  %v1452 = vunpack.c.l.b16 %v25
  %v1453 = vunpack.c.h.b16 %v25
  %v1454 = vunpack.c.l.b16 %v26
  %v1455 = vunpack.c.h.b16 %v26
  %v1456 = vunpack.c.l.b16 %v27
  %v1457 = vunpack.c.l.b16 %v28
  %v1458 = vunpack.c.h.b16 %v28
  %v1459 = vunpack.c.l.b16 %v29
  %v1460 = vunpack.c.h.b16 %v29
  %v1461 = vunpack.c.l.b16 %v30
  %v1462 = vunpack.c.h.b16 %v30
  %v1463 = vunpack.c.l.b16 %v31
  %v1464 = vunpack.c.h.b16 %v31
  %v1465 = vunpack.c.l.b16 %v32
  %v1466 = vunpack.c.l.b16 %v33
  %v1467 = vunpack.c.h.b16 %v33
  %v1468 = vunpack.c.l.b16 %v34
  %v1469 = vunpack.c.h.b16 %v34
  %v1470 = vunpack.c.l.b16 %v35
  %v1471 = vunpack.c.h.b16 %v35
  %v1472 = vunpack.c.l.b16 %v36
  %v1473 = vunpack.c.h.b16 %v36
  %v1474 = vunpack.c.l.b16 %v37
  %v1475 = vunpack.c.l.b16 %v38
  %v1476 = vunpack.c.h.b16 %v38
  %v1477 = vunpack.c.l.b16 %v39
  %v1478 = vunpack.c.h.b16 %v39
  %v1479 = vunpack.c.l.b16 %v40
  %v1480 = vunpack.c.h.b16 %v40
  %v1481 = vunpack.c.l.b16 %v41
  %v1482 = vunpack.c.h.b16 %v41
  %v1483 = vunpack.c.l.b16 %v42
  %v1484 = vpack.c.b16 %v1457, %v1448
  %v1485 = vpack.c.b16 %v1458, %v1449
  %v1486 = vpack.c.b16 %v1459, %v1450
  %v1487 = vpack.c.b16 %v1460, %v1451
  %v1488 = vpack.c.b16 %v1461, %v1452
  %v1489 = vpack.c.b16 %v1462, %v1453
  %v1490 = vpack.c.b16 %v1463, %v1454
  %v1491 = vpack.c.b16 %v1464, %v1455
  %v1492 = vpack.c.b16 %v1465, %v1456
  %v1493 = vpack.c.b16 %v1475, %v1466
  %v1494 = vpack.c.b16 %v1476, %v1467
  %v1495 = vpack.c.b16 %v1477, %v1468
  %v1496 = vpack.c.b16 %v1478, %v1469
  %v1497 = vpack.c.b16 %v1479, %v1470
  %v1498 = vpack.c.b16 %v1480, %v1471
  %v1499 = vpack.c.b16 %v1481, %v1472
  %v1500 = vpack.c.b16 %v1482, %v1473
  %v1501 = vpack.c.b16 %v1483, %v1474
  %v1664 = vunpack.c.l.b16 %v43
  %v1665 = vunpack.c.h.b16 %v43
  %v1666 = vunpack.c.l.b16 %v44
  %v1667 = vunpack.c.h.b16 %v44
  %v1668 = vunpack.c.l.b16 %v45
  %v1669 = vunpack.c.h.b16 %v45
  %v1670 = vunpack.c.l.b16 %v46
  %v1671 = vunpack.c.h.b16 %v46
  %v1672 = vunpack.c.l.b16 %v47
  %v1673 = vunpack.c.h.b16 %v47
  %v1674 = vunpack.c.l.b16 %v48
  %v1675 = vunpack.c.h.b16 %v48
  %v1676 = vunpack.c.l.b16 %v49
  %v1677 = vunpack.c.h.b16 %v49
  %v1678 = vunpack.c.l.b16 %v50
  %v1679 = vunpack.c.h.b16 %v50
  %v1680 = vunpack.c.l.b16 %v51
  %v1681 = vunpack.c.h.b16 %v51
  %v1682 = vunpack.c.l.b16 %v52
  %v1683 = vunpack.c.h.b16 %v52
  %v1684 = vunpack.c.l.b16 %v53
  %v1685 = vunpack.c.h.b16 %v53
  %v1686 = vunpack.c.l.b16 %v54
  %v1687 = vunpack.c.h.b16 %v54
  %v1688 = vunpack.c.l.b16 %v55
  %v1689 = vunpack.c.h.b16 %v55
  %v1690 = vunpack.c.l.b16 %v56
  %v1691 = vunpack.c.h.b16 %v56
  %v1692 = vunpack.c.l.b16 %v57
  %v1693 = vunpack.c.h.b16 %v57
  %v1694 = vunpack.c.l.b16 %v58
  %v1695 = vunpack.c.h.b16 %v58
  %v1696 = vunpack.c.l.b16 %v59
  %v1697 = vunpack.c.h.b16 %v59
  %v1698 = vunpack.c.l.b16 %v60
  %v1699 = vunpack.c.h.b16 %v60
  %v1700 = vunpack.c.l.b16 %v61
  %v1701 = vunpack.c.h.b16 %v61
  %v1702 = vunpack.c.l.b16 %v62
  %v1703 = vunpack.c.h.b16 %v62
  %v1704 = vunpack.c.l.b16 %v63
  %v1705 = vunpack.c.h.b16 %v63
  %v1706 = vunpack.c.l.b16 %v64
  %v1707 = vunpack.c.h.b16 %v64
  %v1708 = vunpack.c.l.b16 %v65
  %v1709 = vunpack.c.h.b16 %v65
  %v1710 = vunpack.c.l.b16 %v66
  %v1711 = vunpack.c.h.b16 %v66
  %v1712 = vunpack.c.l.b16 %v67
  %v1713 = vunpack.c.h.b16 %v67
  %v1714 = vunpack.c.l.b16 %v68
  %v1715 = vunpack.c.h.b16 %v68
  %v1716 = vunpack.c.l.b16 %v69
  %v1717 = vunpack.c.h.b16 %v69
  %v1718 = vunpack.c.l.b16 %v70
  %v1719 = vunpack.c.h.b16 %v70
  %v1720 = vunpack.c.l.b16 %v71
  %v1721 = vunpack.c.h.b16 %v71
  %v1722 = vunpack.c.l.b16 %v72
  %v1723 = vunpack.c.h.b16 %v72
  %v1724 = vunpack.c.l.b16 %v73
  %v1725 = vunpack.c.h.b16 %v73
  %v1726 = vunpack.c.l.b16 %v74
  %v1727 = vunpack.c.h.b16 %v74
  %v1728 = vunpack.c.l.b16 %v75
  %v1729 = vunpack.c.h.b16 %v75
  %v1730 = vunpack.c.l.b16 %v76
  %v1731 = vunpack.c.h.b16 %v76
  %v1732 = vunpack.c.l.b16 %v77
  %v1733 = vunpack.c.h.b16 %v77
  %v1734 = vunpack.c.l.b16 %v78
  %v1735 = vunpack.c.h.b16 %v78
  %v1736 = vunpack.c.l.b16 %v79
  %v1737 = vunpack.c.h.b16 %v79
  %v1738 = vunpack.c.l.b16 %v80
  %v1739 = vunpack.c.h.b16 %v80
  %v1740 = vunpack.c.l.b16 %v81
  %v1741 = vunpack.c.h.b16 %v81
  %v1742 = vunpack.c.l.b16 %v82
  %v1743 = vunpack.c.h.b16 %v82
  %v1744 = vunpack.c.l.b16 %v83
  %v1745 = vunpack.c.h.b16 %v83
  %v1746 = vunpack.c.l.b16 %v84
  %v1747 = vunpack.c.h.b16 %v84
  %v1748 = vunpack.c.l.b16 %v85
  %v1749 = vunpack.c.h.b16 %v85
  %v1750 = vunpack.c.l.b16 %v86
  %v1751 = vunpack.c.h.b16 %v86
  %v1752 = vunpack.c.l.b16 %v87
  %v1753 = vunpack.c.h.b16 %v87
  %v1754 = vunpack.c.l.b16 %v88
  %v1755 = vunpack.c.h.b16 %v88
  %v1756 = vunpack.c.l.b16 %v89
  %v1757 = vunpack.c.h.b16 %v89
  %v1758 = vunpack.c.l.b16 %v90
  %v1759 = vunpack.c.h.b16 %v90
  %v1760 = vunpack.c.l.b16 %v91
  %v1761 = vunpack.c.h.b16 %v91
  %v1762 = vunpack.c.l.b16 %v92
  %v1763 = vunpack.c.h.b16 %v92
  %v1764 = vunpack.c.l.b16 %v93
  %v1765 = vunpack.c.h.b16 %v93
  %v1766 = vunpack.c.l.b16 %v94
  %v1767 = vunpack.c.h.b16 %v94
  %v1768 = vunpack.c.l.b16 %v95
  %v1769 = vunpack.c.h.b16 %v95
  %v1770 = vunpack.c.l.b16 %v96
  %v1771 = vunpack.c.h.b16 %v96
  %v1772 = vunpack.c.l.b16 %v97
  %v1773 = vunpack.c.h.b16 %v97
  %v1774 = vunpack.c.l.b16 %v98
  %v1775 = vunpack.c.h.b16 %v98
  %v1776 = vunpack.c.l.b16 %v99
  %v1777 = vunpack.c.h.b16 %v99
  %v1778 = vunpack.c.l.b16 %v100
  %v1779 = vunpack.c.h.b16 %v100
  %v1780 = vunpack.c.l.b16 %v101
  %v1781 = vunpack.c.h.b16 %v101
  %v1782 = vunpack.c.l.b16 %v102
  %v1783 = vunpack.c.h.b16 %v102
  %v1784 = vunpack.c.l.b16 %v103
  %v1785 = vunpack.c.h.b16 %v103
  %v1786 = vunpack.c.l.b16 %v104
  %v1787 = vunpack.c.h.b16 %v104
  %v1788 = vunpack.c.l.b16 %v105
  %v1789 = vunpack.c.h.b16 %v105
  %v1790 = vunpack.c.l.b16 %v106
  %v1791 = vunpack.c.h.b16 %v106
  %v1792 = vunpack.c.l.b16 %v107
  %v1793 = vunpack.c.h.b16 %v107
  %v1794 = vunpack.c.l.b16 %v108
  %v1795 = vunpack.c.h.b16 %v108
  %v1796 = vunpack.c.l.b16 %v109
  %v1797 = vunpack.c.h.b16 %v109
  %v1798 = vunpack.c.l.b16 %v110
  %v1799 = vunpack.c.h.b16 %v110
  %v1800 = vunpack.c.l.b16 %v111
  %v1801 = vunpack.c.h.b16 %v111
  %v1802 = vunpack.c.l.b16 %v112
  %v1803 = vunpack.c.h.b16 %v112
  %v1804 = vunpack.c.l.b16 %v113
  %v1805 = vunpack.c.h.b16 %v113
  %v1806 = vunpack.c.l.b16 %v114
  %v1807 = vunpack.c.h.b16 %v114
  %v1808 = vunpack.c.l.b16 %v115
  %v1809 = vunpack.c.h.b16 %v115
  %v1810 = vunpack.c.l.b16 %v116
  %v1811 = vunpack.c.h.b16 %v116
  %v1812 = vunpack.c.l.b16 %v117
  %v1813 = vunpack.c.h.b16 %v117
  %v1814 = vunpack.c.l.b16 %v118
  %v1815 = vunpack.c.h.b16 %v118
  %v1816 = vunpack.c.l.b16 %v119
  %v1817 = vunpack.c.h.b16 %v119
  %v1818 = vunpack.c.l.b16 %v120
  %v1819 = vunpack.c.h.b16 %v120
  %v1820 = vunpack.c.l.b16 %v121
  %v1821 = vunpack.c.h.b16 %v121
  %v1822 = vunpack.c.l.b16 %v122
  %v1823 = vunpack.c.h.b16 %v122
  %v1824 = vunpack.c.l.b16 %v123
  %v1825 = vunpack.c.h.b16 %v123
  %v1826 = vunpack.c.l.b16 %v124
  %v1827 = vunpack.c.h.b16 %v124
  %v1828 = vunpack.c.l.b16 %v125
  %v1829 = vunpack.c.h.b16 %v125
  %v1830 = vunpack.c.l.b16 %v126
  %v1831 = vunpack.c.h.b16 %v126
  %v1832 = vunpack.c.l.b16 %v127
  %v1833 = vunpack.c.h.b16 %v127
  %v1834 = vunpack.c.l.b16 %v128
  %v1835 = vunpack.c.h.b16 %v128
  %v1836 = vunpack.c.l.b16 %v129
  %v1837 = vunpack.c.h.b16 %v129
  %v1838 = vunpack.c.l.b16 %v130
  %v1839 = vunpack.c.h.b16 %v130
  %v1840 = vunpack.c.l.b16 %v131
  %v1841 = vunpack.c.h.b16 %v131
  %v1842 = vunpack.c.l.b16 %v132
  %v1843 = vunpack.c.h.b16 %v132
  %v1844 = vunpack.c.l.b16 %v133
  %v1845 = vunpack.c.h.b16 %v133
  %v1846 = vunpack.c.l.b16 %v134
  %v1847 = vunpack.c.h.b16 %v134
  %v1848 = vunpack.c.l.b16 %v135
  %v1849 = vunpack.c.h.b16 %v135
  %v1850 = vunpack.c.l.b16 %v136
  %v1851 = vunpack.c.h.b16 %v136
  %v1852 = vunpack.c.l.b16 %v137
  %v1853 = vunpack.c.h.b16 %v137
  %v1854 = vunpack.c.l.b16 %v138
  %v1855 = vunpack.c.h.b16 %v138
  %v1856 = vunpack.c.l.b16 %v139
  %v1857 = vunpack.c.h.b16 %v139
  %v1858 = vunpack.c.l.b16 %v140
  %v1859 = vunpack.c.h.b16 %v140
  %v1860 = vunpack.c.l.b16 %v141
  %v1861 = vunpack.c.h.b16 %v141
  %v1862 = vunpack.c.l.b16 %v142
  %v1863 = vunpack.c.h.b16 %v142
  %v1864 = vunpack.c.l.b16 %v143
  %v1865 = vunpack.c.h.b16 %v143
  %v1866 = vunpack.c.l.b16 %v144
  %v1867 = vunpack.c.h.b16 %v144
  %v1868 = vunpack.c.l.b16 %v145
  %v1869 = vunpack.c.h.b16 %v145
  %v1870 = vunpack.c.l.b16 %v146
  %v1871 = vunpack.c.h.b16 %v146
  %v1872 = vunpack.c.l.b16 %v147
  %v1873 = vunpack.c.h.b16 %v147
  %v1874 = vunpack.c.l.b16 %v148
  %v1875 = vunpack.c.h.b16 %v148
  %v1876 = vunpack.c.l.b16 %v149
  %v1877 = vunpack.c.h.b16 %v149
  %v1878 = vunpack.c.l.b16 %v150
  %v1879 = vunpack.c.h.b16 %v150
  %v1880 = vunpack.c.l.b16 %v151
  %v1881 = vunpack.c.h.b16 %v151
  %v1882 = vunpack.c.l.b16 %v152
  %v1883 = vunpack.c.h.b16 %v152
  %v1884 = vunpack.c.l.b16 %v153
  %v1885 = vunpack.c.h.b16 %v153
  %v1886 = vunpack.c.l.b16 %v154
  %v1887 = vunpack.c.h.b16 %v154
  %v1888 = vunpack.c.l.b16 %v155
  %v1889 = vunpack.c.h.b16 %v155
  %v1890 = vunpack.c.l.b16 %v156
  %v1891 = vunpack.c.h.b16 %v156
  %v1892 = vunpack.c.l.b16 %v157
  %v1893 = vunpack.c.h.b16 %v157
  %v1894 = vunpack.c.l.b16 %v158
  %v1895 = vunpack.c.h.b16 %v158
  %v1896 = vunpack.c.l.b16 %v159
  %v1897 = vunpack.c.h.b16 %v159
  %v1898 = vunpack.c.l.b16 %v160
  %v1899 = vunpack.c.h.b16 %v160
  %v1900 = vunpack.c.l.b16 %v161
  %v1901 = vunpack.c.h.b16 %v161
  %v1902 = vunpack.c.l.b16 %v162
  %v1903 = vunpack.c.h.b16 %v162
  %v1904 = vunpack.c.l.b16 %v163
  %v1905 = vunpack.c.h.b16 %v163
  %v1906 = vunpack.c.l.b16 %v164
  %v1907 = vunpack.c.h.b16 %v164
  %v1908 = vunpack.c.l.b16 %v165
  %v1909 = vunpack.c.h.b16 %v165
  %v1910 = vunpack.c.l.b16 %v166
  %v1911 = vunpack.c.h.b16 %v166
  %v1912 = vunpack.c.l.b16 %v167
  %v1913 = vunpack.c.h.b16 %v167
  %v1914 = vunpack.c.l.b16 %v168
  %v1915 = vunpack.c.h.b16 %v168
  %v1916 = vunpack.c.l.b16 %v169
  %v1917 = vunpack.c.h.b16 %v169
  %v1918 = vunpack.c.l.b16 %v170
  %v1919 = vunpack.c.h.b16 %v170
  %v1920 = vunpack.c.l.b16 %v171
  %v1921 = vunpack.c.h.b16 %v171
  %v1922 = vunpack.c.l.b16 %v172
  %v1923 = vunpack.c.h.b16 %v172
  %v1924 = vunpack.c.l.b16 %v173
  %v1925 = vunpack.c.h.b16 %v173
  %v1926 = vunpack.c.l.b16 %v174
  %v1927 = vunpack.c.h.b16 %v174
  %v1928 = vunpack.c.l.b16 %v175
  %v1929 = vunpack.c.h.b16 %v175
  %v1930 = vunpack.c.l.b16 %v176
  %v1931 = vunpack.c.h.b16 %v176
  %v1932 = vunpack.c.l.b16 %v177
  %v1933 = vunpack.c.h.b16 %v177
  %v1934 = vunpack.c.l.b16 %v178
  %v1935 = vunpack.c.h.b16 %v178
  %v1936 = vunpack.c.l.b16 %v179
  %v1937 = vunpack.c.h.b16 %v179
  %v1938 = vunpack.c.l.b16 %v180
  %v1939 = vunpack.c.h.b16 %v180
  %v1940 = vunpack.c.l.b16 %v181
  %v1941 = vunpack.c.h.b16 %v181
  %v1942 = vunpack.c.l.b16 %v182
  %v1943 = vunpack.c.h.b16 %v182
  %v1944 = vunpack.c.l.b16 %v183
  %v1945 = vunpack.c.h.b16 %v183
  %v1946 = vunpack.c.l.b16 %v184
  %v1947 = vunpack.c.h.b16 %v184
  %v1948 = vunpack.c.l.b16 %v185
  %v1949 = vunpack.c.h.b16 %v185
  %v1950 = vunpack.c.l.b16 %v186
  %v1951 = vunpack.c.h.b16 %v186
  %v1952 = vpack.c.b16 %v1666, %v1664
  %v1953 = vpack.c.b16 %v1667, %v1665
  %v1954 = vpack.c.b16 %v1670, %v1668
  %v1955 = vpack.c.b16 %v1671, %v1669
  %v1956 = vpack.c.b16 %v1674, %v1672
  %v1957 = vpack.c.b16 %v1675, %v1673
  %v1958 = vpack.c.b16 %v1678, %v1676
  %v1959 = vpack.c.b16 %v1679, %v1677
  %v1960 = vpack.c.b16 %v1682, %v1680
  %v1961 = vpack.c.b16 %v1683, %v1681
  %v1962 = vpack.c.b16 %v1686, %v1684
  %v1963 = vpack.c.b16 %v1687, %v1685
  %v1964 = vpack.c.b16 %v1690, %v1688
  %v1965 = vpack.c.b16 %v1691, %v1689
  %v1966 = vpack.c.b16 %v1694, %v1692
  %v1967 = vpack.c.b16 %v1695, %v1693
  %v1968 = vpack.c.b16 %v1698, %v1696
  %v1969 = vpack.c.b16 %v1699, %v1697
  %v1970 = vpack.c.b16 %v1702, %v1700
  %v1971 = vpack.c.b16 %v1703, %v1701
  %v1972 = vpack.c.b16 %v1706, %v1704
  %v1973 = vpack.c.b16 %v1707, %v1705
  %v1974 = vpack.c.b16 %v1710, %v1708
  %v1975 = vpack.c.b16 %v1711, %v1709
  %v1976 = vpack.c.b16 %v1714, %v1712
  %v1977 = vpack.c.b16 %v1715, %v1713
  %v1978 = vpack.c.b16 %v1718, %v1716
  %v1979 = vpack.c.b16 %v1719, %v1717
  %v1980 = vpack.c.b16 %v1722, %v1720
  %v1981 = vpack.c.b16 %v1723, %v1721
  %v1982 = vpack.c.b16 %v1726, %v1724
  %v1983 = vpack.c.b16 %v1727, %v1725
  %v1984 = vpack.c.b16 %v1730, %v1728
  %v1985 = vpack.c.b16 %v1731, %v1729
  %v1986 = vpack.c.b16 %v1734, %v1732
  %v1987 = vpack.c.b16 %v1735, %v1733
  %v1988 = vpack.c.b16 %v1738, %v1736
  %v1989 = vpack.c.b16 %v1739, %v1737
  %v1990 = vpack.c.b16 %v1742, %v1740
  %v1991 = vpack.c.b16 %v1743, %v1741
  %v1992 = vpack.c.b16 %v1746, %v1744
  %v1993 = vpack.c.b16 %v1747, %v1745
  %v1994 = vpack.c.b16 %v1750, %v1748
  %v1995 = vpack.c.b16 %v1751, %v1749
  %v1996 = vpack.c.b16 %v1754, %v1752
  %v1997 = vpack.c.b16 %v1755, %v1753
  %v1998 = vpack.c.b16 %v1758, %v1756
  %v1999 = vpack.c.b16 %v1759, %v1757
  %v2000 = vpack.c.b16 %v1762, %v1760
  %v2001 = vpack.c.b16 %v1763, %v1761
  %v2002 = vpack.c.b16 %v1766, %v1764
  %v2003 = vpack.c.b16 %v1767, %v1765
  %v2004 = vpack.c.b16 %v1770, %v1768
  %v2005 = vpack.c.b16 %v1771, %v1769
  %v2006 = vpack.c.b16 %v1774, %v1772
  %v2007 = vpack.c.b16 %v1775, %v1773
  %v2008 = vpack.c.b16 %v1778, %v1776
  %v2009 = vpack.c.b16 %v1779, %v1777
  %v2010 = vpack.c.b16 %v1782, %v1780
  %v2011 = vpack.c.b16 %v1783, %v1781
  %v2012 = vpack.c.b16 %v1786, %v1784
  %v2013 = vpack.c.b16 %v1787, %v1785
  %v2014 = vpack.c.b16 %v1790, %v1788
  %v2015 = vpack.c.b16 %v1791, %v1789
  %v2016 = vpack.c.b16 %v1794, %v1792
  %v2017 = vpack.c.b16 %v1795, %v1793
  %v2018 = vpack.c.b16 %v1798, %v1796
  %v2019 = vpack.c.b16 %v1799, %v1797
  %v2020 = vpack.c.b16 %v1802, %v1800
  %v2021 = vpack.c.b16 %v1803, %v1801
  %v2022 = vpack.c.b16 %v1806, %v1804
  %v2023 = vpack.c.b16 %v1807, %v1805
  %v2024 = vpack.c.b16 %v1810, %v1808
  %v2025 = vpack.c.b16 %v1811, %v1809
  %v2026 = vpack.c.b16 %v1814, %v1812
  %v2027 = vpack.c.b16 %v1815, %v1813
  %v2028 = vpack.c.b16 %v1818, %v1816
  %v2029 = vpack.c.b16 %v1819, %v1817
  %v2030 = vpack.c.b16 %v1822, %v1820
  %v2031 = vpack.c.b16 %v1823, %v1821
  %v2032 = vpack.c.b16 %v1826, %v1824
  %v2033 = vpack.c.b16 %v1827, %v1825
  %v2034 = vpack.c.b16 %v1830, %v1828
  %v2035 = vpack.c.b16 %v1831, %v1829
  %v2036 = vpack.c.b16 %v1834, %v1832
  %v2037 = vpack.c.b16 %v1835, %v1833
  %v2038 = vpack.c.b16 %v1838, %v1836
  %v2039 = vpack.c.b16 %v1839, %v1837
  %v2040 = vpack.c.b16 %v1842, %v1840
  %v2041 = vpack.c.b16 %v1843, %v1841
  %v2042 = vpack.c.b16 %v1846, %v1844
  %v2043 = vpack.c.b16 %v1847, %v1845
  %v2044 = vpack.c.b16 %v1850, %v1848
  %v2045 = vpack.c.b16 %v1851, %v1849
  %v2046 = vpack.c.b16 %v1854, %v1852
  %v2047 = vpack.c.b16 %v1855, %v1853
  %v2048 = vpack.c.b16 %v1858, %v1856
  %v2049 = vpack.c.b16 %v1859, %v1857
  %v2050 = vpack.c.b16 %v1862, %v1860
  %v2051 = vpack.c.b16 %v1863, %v1861
  %v2052 = vpack.c.b16 %v1866, %v1864
  %v2053 = vpack.c.b16 %v1867, %v1865
  %v2054 = vpack.c.b16 %v1870, %v1868
  %v2055 = vpack.c.b16 %v1871, %v1869
  %v2056 = vpack.c.b16 %v1874, %v1872
  %v2057 = vpack.c.b16 %v1875, %v1873
  %v2058 = vpack.c.b16 %v1878, %v1876
  %v2059 = vpack.c.b16 %v1879, %v1877
  %v2060 = vpack.c.b16 %v1882, %v1880
  %v2061 = vpack.c.b16 %v1883, %v1881
  %v2062 = vpack.c.b16 %v1886, %v1884
  %v2063 = vpack.c.b16 %v1887, %v1885
  %v2064 = vpack.c.b16 %v1890, %v1888
  %v2065 = vpack.c.b16 %v1891, %v1889
  %v2066 = vpack.c.b16 %v1894, %v1892
  %v2067 = vpack.c.b16 %v1895, %v1893
  %v2068 = vpack.c.b16 %v1898, %v1896
  %v2069 = vpack.c.b16 %v1899, %v1897
  %v2070 = vpack.c.b16 %v1902, %v1900
  %v2071 = vpack.c.b16 %v1903, %v1901
  %v2072 = vpack.c.b16 %v1906, %v1904
  %v2073 = vpack.c.b16 %v1907, %v1905
  %v2074 = vpack.c.b16 %v1910, %v1908
  %v2075 = vpack.c.b16 %v1911, %v1909
  %v2076 = vpack.c.b16 %v1914, %v1912
  %v2077 = vpack.c.b16 %v1915, %v1913
  %v2078 = vpack.c.b16 %v1918, %v1916
  %v2079 = vpack.c.b16 %v1919, %v1917
  %v2080 = vpack.c.b16 %v1922, %v1920
  %v2081 = vpack.c.b16 %v1923, %v1921
  %v2082 = vpack.c.b16 %v1926, %v1924
  %v2083 = vpack.c.b16 %v1927, %v1925
  %v2084 = vpack.c.b16 %v1930, %v1928
  %v2085 = vpack.c.b16 %v1931, %v1929
  %v2086 = vpack.c.b16 %v1934, %v1932
  %v2087 = vpack.c.b16 %v1935, %v1933
  %v2088 = vpack.c.b16 %v1938, %v1936
  %v2089 = vpack.c.b16 %v1939, %v1937
  %v2090 = vpack.c.b16 %v1942, %v1940
  %v2091 = vpack.c.b16 %v1943, %v1941
  %v2092 = vpack.c.b16 %v1946, %v1944
  %v2093 = vpack.c.b16 %v1947, %v1945
  %v2094 = vpack.c.b16 %v1950, %v1948
  %v2095 = vpack.c.b16 %v1951, %v1949
  %2240 = vmatprep.subr.bf16.mxu0 %v1967
  %2241 = vmatpush1.bf16.msra.mxu0 %v1966
  %2242 = vmatprep.subr.bf16.mxu0 %v1965
  %2243 = vmatpush1.bf16.msra.mxu0 %v1964
  %2244 = vmatprep.subr.bf16.mxu0 %v1963
  %2245 = vmatpush1.bf16.msra.mxu0 %v1962
  %2246 = vmatprep.subr.bf16.mxu0 %v1961
  %2247 = vmatpush1.bf16.msra.mxu0 %v1960
  %2248 = vmatprep.subr.bf16.mxu0 %v1959
  %2249 = vmatpush1.bf16.msra.mxu0 %v1958
  %2250 = vmatprep.subr.bf16.mxu0 %v1957
  %2251 = vmatpush1.bf16.msra.mxu0 %v1956
  %2252 = vmatprep.subr.bf16.mxu0 %v1955
  %2253 = vmatpush1.bf16.msra.mxu0 %v1954
  %2254 = vmatprep.subr.bf16.mxu0 %v1953
  %2255 = vmatpush1.bf16.msra.mxu0 %v1952
  %2256 = vmatprep.subr.bf16.mxu0 %v1983
  %2257 = vmatpush2.bf16.msra.mxu0 %v1982
  %2258 = vmatprep.subr.bf16.mxu0 %v1981
  %2259 = vmatpush2.bf16.msra.mxu0 %v1980
  %2260 = vmatprep.subr.bf16.mxu0 %v1979
  %2261 = vmatpush2.bf16.msra.mxu0 %v1978
  %2262 = vmatprep.subr.bf16.mxu0 %v1977
  %2263 = vmatpush2.bf16.msra.mxu0 %v1976
  %2264 = vmatprep.subr.bf16.mxu0 %v1975
  %2265 = vmatpush2.bf16.msra.mxu0 %v1974
  %2266 = vmatprep.subr.bf16.mxu0 %v1973
  %2267 = vmatpush2.bf16.msra.mxu0 %v1972
  %2268 = vmatprep.subr.bf16.mxu0 %v1971
  %2269 = vmatpush2.bf16.msra.mxu0 %v1970
  %2270 = vmatprep.subr.bf16.mxu0 %v1969
  %2271 = vmatpush2.bf16.msra.mxu0 %v1968
  %2272 = vmatprep.mubr.bf16.mxu0 %v1485
  %2273 = vmatmul.mubr.bf16.gmra.mxu0 %v1484
  %v2274 = vpop.f32.mrf.mxu0
  %v2275 = vadd.f32 %v1410, %v2274
  %v2276 = vpop.f32.mrf.mxu0
  %v2277 = vadd.f32 %v1412, %v2276
  %v2278 = vpop.f32.mrf.mxu0
  %v2279 = vadd.f32 %v1414, %v2278
  %v2280 = vpop.f32.mrf.mxu0
  %v2281 = vadd.f32 %v1416, %v2280
  %2282 = vmatprep.mubr.bf16.mxu0 %v1494
  %2283 = vmatmul.mubr.bf16.gmra.mxu0 %v1493
  %v2284 = vpop.f32.mrf.mxu0
  %v2285 = vadd.f32 %v1420, %v2284
  %v2286 = vpop.f32.mrf.mxu0
  %v2287 = vadd.f32 %v1422, %v2286
  %v2288 = vpop.f32.mrf.mxu0
  %v2289 = vadd.f32 %v1424, %v2288
  %v2290 = vpop.f32.mrf.mxu0
  %v2291 = vadd.f32 %v1426, %v2290
  %2292 = vdwg.mxu0
  %2293 = vmatprep.subr.bf16.mxu0 %v1999
  %2294 = vmatpush1.bf16.msra.mxu0 %v1998
  %2295 = vmatprep.subr.bf16.mxu0 %v1997
  %2296 = vmatpush1.bf16.msra.mxu0 %v1996
  %2297 = vmatprep.subr.bf16.mxu0 %v1995
  %2298 = vmatpush1.bf16.msra.mxu0 %v1994
  %2299 = vmatprep.subr.bf16.mxu0 %v1993
  %2300 = vmatpush1.bf16.msra.mxu0 %v1992
  %2301 = vmatprep.subr.bf16.mxu0 %v1991
  %2302 = vmatpush1.bf16.msra.mxu0 %v1990
  %2303 = vmatprep.subr.bf16.mxu0 %v1989
  %2304 = vmatpush1.bf16.msra.mxu0 %v1988
  %2305 = vmatprep.subr.bf16.mxu0 %v1987
  %2306 = vmatpush1.bf16.msra.mxu0 %v1986
  %2307 = vmatprep.subr.bf16.mxu0 %v1985
  %2308 = vmatpush1.bf16.msra.mxu0 %v1984
  %2309 = vmatprep.subr.bf16.mxu0 %v2015
  %2310 = vmatpush2.bf16.msra.mxu0 %v2014
  %2311 = vmatprep.subr.bf16.mxu0 %v2013
  %2312 = vmatpush2.bf16.msra.mxu0 %v2012
  %2313 = vmatprep.subr.bf16.mxu0 %v2011
  %2314 = vmatpush2.bf16.msra.mxu0 %v2010
  %2315 = vmatprep.subr.bf16.mxu0 %v2009
  %2316 = vmatpush2.bf16.msra.mxu0 %v2008
  %2317 = vmatprep.subr.bf16.mxu0 %v2007
  %2318 = vmatpush2.bf16.msra.mxu0 %v2006
  %2319 = vmatprep.subr.bf16.mxu0 %v2005
  %2320 = vmatpush2.bf16.msra.mxu0 %v2004
  %2321 = vmatprep.subr.bf16.mxu0 %v2003
  %2322 = vmatpush2.bf16.msra.mxu0 %v2002
  %2323 = vmatprep.subr.bf16.mxu0 %v2001
  %2324 = vmatpush2.bf16.msra.mxu0 %v2000
  %2325 = vmatprep.mubr.bf16.mxu0 %v1487
  %2326 = vmatmul.mubr.bf16.gmra.mxu0 %v1486
  %v2327 = vpop.f32.mrf.mxu0
  %v2328 = vadd.f32 %v2275, %v2327
  %v2329 = vpop.f32.mrf.mxu0
  %v2330 = vadd.f32 %v2277, %v2329
  %v2331 = vpop.f32.mrf.mxu0
  %v2332 = vadd.f32 %v2279, %v2331
  %v2333 = vpop.f32.mrf.mxu0
  %v2334 = vadd.f32 %v2281, %v2333
  %2335 = vmatprep.mubr.bf16.mxu0 %v1496
  %2336 = vmatmul.mubr.bf16.gmra.mxu0 %v1495
  %v2337 = vpop.f32.mrf.mxu0
  %v2338 = vadd.f32 %v2285, %v2337
  %v2339 = vpop.f32.mrf.mxu0
  %v2340 = vadd.f32 %v2287, %v2339
  %v2341 = vpop.f32.mrf.mxu0
  %v2342 = vadd.f32 %v2289, %v2341
  %v2343 = vpop.f32.mrf.mxu0
  %v2344 = vadd.f32 %v2291, %v2343
  %2345 = vdwg.mxu0
  %2346 = vmatprep.subr.bf16.mxu0 %v2031
  %2347 = vmatpush1.bf16.msra.mxu0 %v2030
  %2348 = vmatprep.subr.bf16.mxu0 %v2029
  %2349 = vmatpush1.bf16.msra.mxu0 %v2028
  %2350 = vmatprep.subr.bf16.mxu0 %v2027
  %2351 = vmatpush1.bf16.msra.mxu0 %v2026
  %2352 = vmatprep.subr.bf16.mxu0 %v2025
  %2353 = vmatpush1.bf16.msra.mxu0 %v2024
  %2354 = vmatprep.subr.bf16.mxu0 %v2023
  %2355 = vmatpush1.bf16.msra.mxu0 %v2022
  %2356 = vmatprep.subr.bf16.mxu0 %v2021
  %2357 = vmatpush1.bf16.msra.mxu0 %v2020
  %2358 = vmatprep.subr.bf16.mxu0 %v2019
  %2359 = vmatpush1.bf16.msra.mxu0 %v2018
  %2360 = vmatprep.subr.bf16.mxu0 %v2017
  %2361 = vmatpush1.bf16.msra.mxu0 %v2016
  %2362 = vmatprep.subr.bf16.mxu0 %v2047
  %2363 = vmatpush2.bf16.msra.mxu0 %v2046
  %2364 = vmatprep.subr.bf16.mxu0 %v2045
  %2365 = vmatpush2.bf16.msra.mxu0 %v2044
  %2366 = vmatprep.subr.bf16.mxu0 %v2043
  %2367 = vmatpush2.bf16.msra.mxu0 %v2042
  %2368 = vmatprep.subr.bf16.mxu0 %v2041
  %2369 = vmatpush2.bf16.msra.mxu0 %v2040
  %2370 = vmatprep.subr.bf16.mxu0 %v2039
  %2371 = vmatpush2.bf16.msra.mxu0 %v2038
  %2372 = vmatprep.subr.bf16.mxu0 %v2037
  %2373 = vmatpush2.bf16.msra.mxu0 %v2036
  %2374 = vmatprep.subr.bf16.mxu0 %v2035
  %2375 = vmatpush2.bf16.msra.mxu0 %v2034
  %2376 = vmatprep.subr.bf16.mxu0 %v2033
  %2377 = vmatpush2.bf16.msra.mxu0 %v2032
  %2378 = vmatprep.mubr.bf16.mxu0 %v1489
  %2379 = vmatmul.mubr.bf16.gmra.mxu0 %v1488
  %v2380 = vpop.f32.mrf.mxu0
  %v2381 = vadd.f32 %v2328, %v2380
  %v2382 = vpop.f32.mrf.mxu0
  %v2383 = vadd.f32 %v2330, %v2382
  %v2384 = vpop.f32.mrf.mxu0
  %v2385 = vadd.f32 %v2332, %v2384
  %v2386 = vpop.f32.mrf.mxu0
  %v2387 = vadd.f32 %v2334, %v2386
  %2388 = vmatprep.mubr.bf16.mxu0 %v1498
  %2389 = vmatmul.mubr.bf16.gmra.mxu0 %v1497
  %v2390 = vpop.f32.mrf.mxu0
  %v2391 = vadd.f32 %v2338, %v2390
  %v2392 = vpop.f32.mrf.mxu0
  %v2393 = vadd.f32 %v2340, %v2392
  %v2394 = vpop.f32.mrf.mxu0
  %v2395 = vadd.f32 %v2342, %v2394
  %v2396 = vpop.f32.mrf.mxu0
  %v2397 = vadd.f32 %v2344, %v2396
  %2398 = vdwg.mxu0
  %2399 = vmatprep.subr.bf16.mxu0 %v2063
  %2400 = vmatpush1.bf16.msra.mxu0 %v2062
  %2401 = vmatprep.subr.bf16.mxu0 %v2061
  %2402 = vmatpush1.bf16.msra.mxu0 %v2060
  %2403 = vmatprep.subr.bf16.mxu0 %v2059
  %2404 = vmatpush1.bf16.msra.mxu0 %v2058
  %2405 = vmatprep.subr.bf16.mxu0 %v2057
  %2406 = vmatpush1.bf16.msra.mxu0 %v2056
  %2407 = vmatprep.subr.bf16.mxu0 %v2055
  %2408 = vmatpush1.bf16.msra.mxu0 %v2054
  %2409 = vmatprep.subr.bf16.mxu0 %v2053
  %2410 = vmatpush1.bf16.msra.mxu0 %v2052
  %2411 = vmatprep.subr.bf16.mxu0 %v2051
  %2412 = vmatpush1.bf16.msra.mxu0 %v2050
  %2413 = vmatprep.subr.bf16.mxu0 %v2049
  %2414 = vmatpush1.bf16.msra.mxu0 %v2048
  %2415 = vmatprep.subr.bf16.mxu0 %v2079
  %2416 = vmatpush2.bf16.msra.mxu0 %v2078
  %2417 = vmatprep.subr.bf16.mxu0 %v2077
  %2418 = vmatpush2.bf16.msra.mxu0 %v2076
  %2419 = vmatprep.subr.bf16.mxu0 %v2075
  %2420 = vmatpush2.bf16.msra.mxu0 %v2074
  %2421 = vmatprep.subr.bf16.mxu0 %v2073
  %2422 = vmatpush2.bf16.msra.mxu0 %v2072
  %2423 = vmatprep.subr.bf16.mxu0 %v2071
  %2424 = vmatpush2.bf16.msra.mxu0 %v2070
  %2425 = vmatprep.subr.bf16.mxu0 %v2069
  %2426 = vmatpush2.bf16.msra.mxu0 %v2068
  %2427 = vmatprep.subr.bf16.mxu0 %v2067
  %2428 = vmatpush2.bf16.msra.mxu0 %v2066
  %2429 = vmatprep.subr.bf16.mxu0 %v2065
  %2430 = vmatpush2.bf16.msra.mxu0 %v2064
  %2431 = vmatprep.mubr.bf16.mxu0 %v1491
  %2432 = vmatmul.mubr.bf16.gmra.mxu0 %v1490
  %v2433 = vpop.f32.mrf.mxu0
  %v2434 = vadd.f32 %v2381, %v2433
  %v2435 = vpop.f32.mrf.mxu0
  %v2436 = vadd.f32 %v2383, %v2435
  %v2437 = vpop.f32.mrf.mxu0
  %v2438 = vadd.f32 %v2385, %v2437
  %v2439 = vpop.f32.mrf.mxu0
  %v2440 = vadd.f32 %v2387, %v2439
  %2441 = vmatprep.mubr.bf16.mxu0 %v1500
  %2442 = vmatmul.mubr.bf16.gmra.mxu0 %v1499
  %v2443 = vpop.f32.mrf.mxu0
  %v2444 = vadd.f32 %v2391, %v2443
  %v2445 = vpop.f32.mrf.mxu0
  %v2446 = vadd.f32 %v2393, %v2445
  %v2447 = vpop.f32.mrf.mxu0
  %v2448 = vadd.f32 %v2395, %v2447
  %v2449 = vpop.f32.mrf.mxu0
  %v2450 = vadd.f32 %v2397, %v2449
  %2451 = vdwg.mxu0
  %2452 = vmatprep.subr.bf16.mxu0 %v2095
  %2453 = vmatpush1.bf16.msra.mxu0 %v2094
  %2454 = vmatprep.subr.bf16.mxu0 %v2093
  %2455 = vmatpush1.bf16.msra.mxu0 %v2092
  %2456 = vmatprep.subr.bf16.mxu0 %v2091
  %2457 = vmatpush1.bf16.msra.mxu0 %v2090
  %2458 = vmatprep.subr.bf16.mxu0 %v2089
  %2459 = vmatpush1.bf16.msra.mxu0 %v2088
  %2460 = vmatprep.subr.bf16.mxu0 %v2087
  %2461 = vmatpush1.bf16.msra.mxu0 %v2086
  %2462 = vmatprep.subr.bf16.mxu0 %v2085
  %2463 = vmatpush1.bf16.msra.mxu0 %v2084
  %2464 = vmatprep.subr.bf16.mxu0 %v2083
  %2465 = vmatpush1.bf16.msra.mxu0 %v2082
  %2466 = vmatprep.subr.bf16.mxu0 %v2081
  %2467 = vmatpush1.bf16.msra.mxu0 %v2080
  %2468 = vmatprep.subr.bf16.mxu0 0
  %2469 = vmatpush2.bf16.msra.mxu0 0
  %2470 = vmatprep.subr.bf16.mxu0 0
  %2471 = vmatpush2.bf16.msra.mxu0 0
  %2472 = vmatprep.subr.bf16.mxu0 0
  %2473 = vmatpush2.bf16.msra.mxu0 0
  %2474 = vmatprep.subr.bf16.mxu0 0
  %2475 = vmatpush2.bf16.msra.mxu0 0
  %2476 = vmatprep.subr.bf16.mxu0 0
  %2477 = vmatpush2.bf16.msra.mxu0 0
  %2478 = vmatprep.subr.bf16.mxu0 0
  %2479 = vmatpush2.bf16.msra.mxu0 0
  %2480 = vmatprep.subr.bf16.mxu0 0
  %2481 = vmatpush2.bf16.msra.mxu0 0
  %2482 = vmatprep.subr.bf16.mxu0 0
  %2483 = vmatpush2.bf16.msra.mxu0 0
  %2484 = vmatprep.mubr.bf16.mxu0 0
  %2485 = vmatmul.mubr.bf16.gmra.mxu0 %v1492
  %v2486 = vpop.f32.mrf.mxu0
  %v2487 = vadd.f32 %v2434, %v2486
  %v2488 = vpop.f32.mrf.mxu0
  %v2489 = vadd.f32 %v2436, %v2488
  %v2490 = vpop.f32.mrf.mxu0
  %v2491 = vadd.f32 %v2438, %v2490
  %v2492 = vpop.f32.mrf.mxu0
  %v2493 = vadd.f32 %v2440, %v2492
  %2494 = vmatprep.mubr.bf16.mxu0 0
  %2495 = vmatmul.mubr.bf16.gmra.mxu0 %v1501
  %v2496 = vpop.f32.mrf.mxu0
  %v2497 = vadd.f32 %v2444, %v2496
  %v2498 = vpop.f32.mrf.mxu0
  %v2499 = vadd.f32 %v2446, %v2498
  %v2500 = vpop.f32.mrf.mxu0
  %v2501 = vadd.f32 %v2448, %v2500
  %v2502 = vpop.f32.mrf.mxu0
  %v2503 = vadd.f32 %v2450, %v2502
  %2504 = vdwg.mxu0
  %v2505 = vld [vmem:[%s4] ss:$8 sm:$0x3]
  %v2507 = vlaneseq
  %v2508 = vshrl.u32 %v2507, 7
  %v2509 = vsub.s32 0, %v2508
  %v2510 = vrot.slane %v2505, %v2509
  %v2511 = vlaneseq
  %v2512 = vshrl.u32 %v2511, 7
  %v2513 = vsub.s32 1, %v2512
  %v2514 = vrot.slane %v2505, %v2513
  %v2517 = vadd.f32 %v2487, %v2510
  %v2518 = vadd.f32 %v2489, %v2514
  %v2519 = vadd.f32 %v2491, %v2510
  %v2520 = vadd.f32 %v2493, %v2514
  %v2521 = vadd.f32 %v2497, %v2510
  %v2522 = vadd.f32 %v2499, %v2514
  %v2523 = vadd.f32 %v2501, %v2510
  %v2524 = vadd.f32 %v2503, %v2514
  %v2525 = vpack.c.bf16 %v2519, %v2517
  %v2526 = vpack.c.bf16 %v2520, %v2518
  %v2527 = vpack.c.bf16 %v2523, %v2521
  %v2528 = vpack.c.bf16 %v2524, %v2522
  %v2533 = vunpack.c.l.b16 %v2525
  %v2534 = vunpack.c.l.b16 %v2526
  %v2535 = vunpack.c.h.b16 %v2525
  %v2536 = vunpack.c.h.b16 %v2526
  %v2537 = vunpack.c.l.b16 %v2527
  %v2538 = vunpack.c.l.b16 %v2528
  %v2539 = vunpack.c.h.b16 %v2527
  %v2540 = vunpack.c.h.b16 %v2528
  %v2541 = vpack.c.b16 %v2534, %v2533
  %v2542 = vpack.c.b16 %v2536, %v2535
  %v2543 = vpack.c.b16 %v2538, %v2537
  %v2544 = vpack.c.b16 %v2540, %v2539
  %2549 = vst [vmem:[%s5] sm:$0xff] %v2541
  %2550 = vst [vmem:[%s5 + $0x8] sm:$0xff] %v2542
  %2551 = vst [vmem:[%s5 + $0x10] sm:$0xff] %v2543
  %2552 = vst [vmem:[%s5 + $0x18] sm:$0xff] %v2544
  %v2553 = vadd.f32 %v2517, %v2519
  %v2554 = vadd.f32 %v2553, %v2521
  %v2555 = vadd.f32 %v2554, %v2523
  %v2556 = vrot.slane %v2555, 4
  %v2557 = vadd.f32 %v2555, %v2556
  %v2558 = vrot.slane %v2557, 2
  %v2559 = vadd.f32 %v2557, %v2558
  %v2560 = vrot.slane %v2559, 1
  %v2561 = vadd.f32 %v2559, %v2560
  %v2562 = vadd.f32 %v2518, %v2520
  %v2563 = vadd.f32 %v2562, %v2522
  %v2564 = vadd.f32 %v2563, %v2524
  %v2565 = vrot.slane %v2564, 4
  %v2566 = vadd.f32 %v2564, %v2565
  %v2567 = vrot.slane %v2566, 2
  %v2568 = vadd.f32 %v2566, %v2567
  %v2569 = vrot.slane %v2568, 1
  %v2570 = vadd.f32 %v2568, %v2569
  %v2573 = vcombine.low %v2561, %v2570
  %v2575 = vunpack.c.l.s4 1966171168
  %v2576 = vunpack.c.0.s8 %v2575
  %v2577 = vlaneseq
  %v2578 = vshrl.u32 %v2577, 7
  %v2579 = vsub.s32 %v2576, %v2578
  %v2580 = vrot.slane %v2573, %v2579
  %v2582 = vunpack.c.l.s4 1966171168
  %v2583 = vunpack.c.0.s8 %v2582
  %v2584 = vlaneseq
  %v2585 = vshrl.u32 %v2584, 7
  %v2586 = vsub.s32 %v2583, %v2585
  %v2587 = vrot.slane %v2580, %v2586
  %v2589 = vlaneseq
  %vm2590 = vcmp.ge.s32.totalorder %v2589, 0
  %vm2591 = vcmp.lt.s32.totalorder %v2589, 256
  %vm2592 = vmand %vm2590, %vm2591
  %2593 = vst.msk [vmem:[%s6] ss:$8 sm:$0x3] %vm2592, %v2587
  %2594 = vst.msk [vmem:[%s6] ss:$8 sm:$0x0] %vm2592, %v2587
  %v2595 = vmul.f32 %v2517, %v2517
  %v2596 = vmul.f32 %v2518, %v2518
  %v2597 = vmul.f32 %v2519, %v2519
  %v2598 = vmul.f32 %v2520, %v2520
  %v2599 = vmul.f32 %v2521, %v2521
  %v2600 = vmul.f32 %v2522, %v2522
  %v2601 = vmul.f32 %v2523, %v2523
  %v2602 = vmul.f32 %v2524, %v2524
  %v2603 = vadd.f32 %v2595, %v2597
  %v2604 = vadd.f32 %v2603, %v2599
  %v2605 = vadd.f32 %v2604, %v2601
  %v2606 = vrot.slane %v2605, 4
  %v2607 = vadd.f32 %v2605, %v2606
  %v2608 = vrot.slane %v2607, 2
  %v2609 = vadd.f32 %v2607, %v2608
  %v2610 = vrot.slane %v2609, 1
  %v2611 = vadd.f32 %v2609, %v2610
  %v2612 = vadd.f32 %v2596, %v2598
  %v2613 = vadd.f32 %v2612, %v2600
  %v2614 = vadd.f32 %v2613, %v2602
  %v2615 = vrot.slane %v2614, 4
  %v2616 = vadd.f32 %v2614, %v2615
  %v2617 = vrot.slane %v2616, 2
  %v2618 = vadd.f32 %v2616, %v2617
  %v2619 = vrot.slane %v2618, 1
  %v2620 = vadd.f32 %v2618, %v2619
  %v2623 = vcombine.low %v2611, %v2620
  %v2625 = vunpack.c.l.s4 1966171168
  %v2626 = vunpack.c.0.s8 %v2625
  %v2627 = vlaneseq
  %v2628 = vshrl.u32 %v2627, 7
  %v2629 = vsub.s32 %v2626, %v2628
  %v2630 = vrot.slane %v2623, %v2629
  %v2632 = vunpack.c.l.s4 1966171168
  %v2633 = vunpack.c.0.s8 %v2632
  %v2634 = vlaneseq
  %v2635 = vshrl.u32 %v2634, 7
  %v2636 = vsub.s32 %v2633, %v2635
  %v2637 = vrot.slane %v2630, %v2636
  %s2639 = scalar_lea.vmem %s6, 1
  %2640 = vst.msk [vmem:[%s2639] ss:$8 sm:$0x3] %vm2592, %v2637
  %2641 = vst.msk [vmem:[%s2639] ss:$8 sm:$0x0] %vm2592, %v2637
  %2642 = vst [vmem:[%s6] sm:$0xfc] 0.0
  %2643 = vst [vmem:[%s6 + $0x8] sm:$0xfc] 0.0
  // Predicated region
  $region22: #{cgan_forward.13} parent=0 // pred_check
    _
  $region23: #{cgan_forward.13} parent=0 // pred_check_branch
    %2645 = sbr.rel (0) target = $region25
  $region24: #{cgan_forward.13} parent=0 // pred_region
    _
  $region25: #{cgan_forward.13} parent=0 // pred_fallthru
    _
  // Predicated region
  $region26: #{cgan_forward.13} parent=0 // pred_check
    _
  $region27: #{cgan_forward.13} parent=0 // pred_check_branch
    %2647 = sbr.rel (0) target = $region29
  $region28: #{cgan_forward.13} parent=0 // pred_region
    _
  $region29: #{cgan_forward.13} parent=0 // pred_fallthru
    _
  // Predicated region
  $region30: #{cgan_forward.13} parent=0 // pred_check
    _
  $region31: #{cgan_forward.13} parent=0 // pred_check_branch
    %2649 = sbr.rel (0) target = $region33
  $region32: #{cgan_forward.13} parent=0 // pred_region
    _
  $region33: #{cgan_forward.13} parent=0 // pred_fallthru
    _
  // Predicated region
  $region34: #{cgan_forward.13} parent=0 // pred_check
    _
  $region35: #{cgan_forward.13} parent=0 // pred_check_branch
    %2651 = sbr.rel (0) target = $region37
  $region36: #{cgan_forward.13} parent=0 // pred_region
    _
  $region37: #{cgan_forward.13} parent=0 // pred_fallthru
    _

// kernel: cgan_forward.15
$region0: #{cgan_forward.15}
  #allocation0 [shape = 'u32[]', space=smem, size = 0x4, offset = 0x4, fixed_abs, tag = 'smem constant byte address 0x4 - core index']
  #allocation1 [shape = 'u32[144,128]{1,0:T(1,128)}', space=vmem, size = 0x12000, scoped, tag = 'internal scratch']
  %s0 = inlined_call_operand.vmem [shape: bf16[128,576], index: 0, kind: input, shape index: {}]
  %s1 = inlined_call_operand.vmem [shape: bf16[128,576], index: 1, kind: input, shape index: {}]
  %s2 = inlined_call_operand.vmem [shape: bf16[576,128], index: 2, kind: input, shape index: {}]
  %s3 = inlined_call_operand.vmem [shape: bf16[576,128], index: 3, kind: input, shape index: {}]
  %s4 = inlined_call_operand.vmem [shape: f32[8,128], index: 4, kind: input, shape index: {}]
  %s5 = inlined_call_operand.vmem [shape: bf16[128,128], index: 5, kind: output, shape index: {}]
  %s6 = sld [smem:[#allocation0]]
  $region30: #{cgan_forward.15} parent=0
    _
  %s8 = ssub.s32 1, %s6
  %s9 = scalar_select 0, %s8, %s6
  // Predicated region
  $region2: #{cgan_forward.15} parent=0 // pred_check
    _
  $region3: #{cgan_forward.15} parent=0 // pred_check_branch
    %11 = sbr.rel (0) target = $region5
  $region4: #{cgan_forward.15} parent=0 // pred_region
    _
  $region5: #{cgan_forward.15} parent=0 // pred_fallthru
    _
  // Predicated region
  $region6: #{cgan_forward.15} parent=0 // pred_check
    _
  $region7: #{cgan_forward.15} parent=0 // pred_check_branch
    %13 = sbr.rel (0) target = $region9
  $region8: #{cgan_forward.15} parent=0 // pred_region
    _
  $region9: #{cgan_forward.15} parent=0 // pred_fallthru
    _
  // Predicated region
  $region10: #{cgan_forward.15} parent=0 // pred_check
    _
  $region11: #{cgan_forward.15} parent=0 // pred_check_branch
    %15 = sbr.rel (0) target = $region13
  $region12: #{cgan_forward.15} parent=0 // pred_region
    _
  $region13: #{cgan_forward.15} parent=0 // pred_fallthru
    _
  // Predicated region
  $region14: #{cgan_forward.15} parent=0 // pred_check
    _
  $region15: #{cgan_forward.15} parent=0 // pred_check_branch
    %17 = sbr.rel (0) target = $region17
  $region16: #{cgan_forward.15} parent=0 // pred_region
    _
  $region17: #{cgan_forward.15} parent=0 // pred_fallthru
    _
  // Predicated region
  $region18: #{cgan_forward.15} parent=0 // pred_check
    _
  $region19: #{cgan_forward.15} parent=0 // pred_check_branch
    %19 = sbr.rel (0) target = $region21
  $region20: #{cgan_forward.15} parent=0 // pred_region
    _
  $region21: #{cgan_forward.15} parent=0 // pred_fallthru
    _
  %v21 = vld [vmem:[%s0] sm:$0xff]
  %v22 = vld [vmem:[%s0 + $0x8] sm:$0xff]
  %v23 = vld [vmem:[%s0 + $0x10] sm:$0xf]
  %v24 = vld [vmem:[%s0 + $0x14] sm:$0xff]
  %v25 = vld [vmem:[%s0 + $0x1c] sm:$0xff]
  %v26 = vld [vmem:[%s0 + $0x24] sm:$0xf]
  %v27 = vld [vmem:[%s0 + $0x28] sm:$0xff]
  %v28 = vld [vmem:[%s0 + $0x30] sm:$0xff]
  %v29 = vld [vmem:[%s0 + $0x38] sm:$0xf]
  %v30 = vld [vmem:[%s0 + $0x3c] sm:$0xff]
  %v31 = vld [vmem:[%s0 + $0x44] sm:$0xff]
  %v32 = vld [vmem:[%s0 + $0x4c] sm:$0xf]
  %v33 = vld [vmem:[%s0 + $0x50] sm:$0xff]
  %v34 = vld [vmem:[%s0 + $0x58] sm:$0xff]
  %v35 = vld [vmem:[%s0 + $0x60] sm:$0xf]
  %v36 = vld [vmem:[%s0 + $0x64] sm:$0xff]
  %v37 = vld [vmem:[%s0 + $0x6c] sm:$0xff]
  %v38 = vld [vmem:[%s0 + $0x74] sm:$0xf]
  %v39 = vld [vmem:[%s0 + $0x78] sm:$0xff]
  %v40 = vld [vmem:[%s0 + $0x80] sm:$0xff]
  %v41 = vld [vmem:[%s0 + $0x88] sm:$0xf]
  %v42 = vld [vmem:[%s0 + $0x8c] sm:$0xff]
  %v43 = vld [vmem:[%s0 + $0x94] sm:$0xff]
  %v44 = vld [vmem:[%s0 + $0x9c] sm:$0xf]
  %v45 = vld [vmem:[%s0 + $0xa0] sm:$0xff]
  %v46 = vld [vmem:[%s0 + $0xa8] sm:$0xff]
  %v47 = vld [vmem:[%s0 + $0xb0] sm:$0xf]
  %v48 = vld [vmem:[%s0 + $0xb4] sm:$0xff]
  %v49 = vld [vmem:[%s0 + $0xbc] sm:$0xff]
  %v50 = vld [vmem:[%s0 + $0xc4] sm:$0xf]
  %v51 = vld [vmem:[%s0 + $0xc8] sm:$0xff]
  %v52 = vld [vmem:[%s0 + $0xd0] sm:$0xff]
  %v53 = vld [vmem:[%s0 + $0xd8] sm:$0xf]
  %v54 = vld [vmem:[%s0 + $0xdc] sm:$0xff]
  %v55 = vld [vmem:[%s0 + $0xe4] sm:$0xff]
  %v56 = vld [vmem:[%s0 + $0xec] sm:$0xf]
  %v57 = vld [vmem:[%s0 + $0xf0] sm:$0xff]
  %v58 = vld [vmem:[%s0 + $0xf8] sm:$0xff]
  %v59 = vld [vmem:[%s0 + $0x100] sm:$0xf]
  %v60 = vld [vmem:[%s0 + $0x104] sm:$0xff]
  %v61 = vld [vmem:[%s0 + $0x10c] sm:$0xff]
  %v62 = vld [vmem:[%s0 + $0x114] sm:$0xf]
  %v63 = vld [vmem:[%s0 + $0x118] sm:$0xff]
  %v64 = vld [vmem:[%s0 + $0x120] sm:$0xff]
  %v65 = vld [vmem:[%s0 + $0x128] sm:$0xf]
  %v66 = vld [vmem:[%s0 + $0x12c] sm:$0xff]
  %v67 = vld [vmem:[%s0 + $0x134] sm:$0xff]
  %v68 = vld [vmem:[%s0 + $0x13c] sm:$0xf]
  %v69 = vld [vmem:[%s2] sm:$0xf]
  %v70 = vld [vmem:[%s2 + $0x4] sm:$0xf]
  %v71 = vld [vmem:[%s2 + $0x8] sm:$0xf]
  %v72 = vld [vmem:[%s2 + $0xc] sm:$0xf]
  %v73 = vld [vmem:[%s2 + $0x10] sm:$0xf]
  %v74 = vld [vmem:[%s2 + $0x14] sm:$0xf]
  %v75 = vld [vmem:[%s2 + $0x18] sm:$0xf]
  %v76 = vld [vmem:[%s2 + $0x1c] sm:$0xf]
  %v77 = vld [vmem:[%s2 + $0x20] sm:$0xf]
  %v78 = vld [vmem:[%s2 + $0x24] sm:$0xf]
  %v79 = vld [vmem:[%s2 + $0x28] sm:$0xf]
  %v80 = vld [vmem:[%s2 + $0x2c] sm:$0xf]
  %v81 = vld [vmem:[%s2 + $0x30] sm:$0xf]
  %v82 = vld [vmem:[%s2 + $0x34] sm:$0xf]
  %v83 = vld [vmem:[%s2 + $0x38] sm:$0xf]
  %v84 = vld [vmem:[%s2 + $0x3c] sm:$0xf]
  %v85 = vld [vmem:[%s2 + $0x40] sm:$0xf]
  %v86 = vld [vmem:[%s2 + $0x44] sm:$0xf]
  %v87 = vld [vmem:[%s2 + $0x48] sm:$0xf]
  %v88 = vld [vmem:[%s2 + $0x4c] sm:$0xf]
  %v89 = vld [vmem:[%s2 + $0x50] sm:$0xf]
  %v90 = vld [vmem:[%s2 + $0x54] sm:$0xf]
  %v91 = vld [vmem:[%s2 + $0x58] sm:$0xf]
  %v92 = vld [vmem:[%s2 + $0x5c] sm:$0xf]
  %v93 = vld [vmem:[%s2 + $0x60] sm:$0xf]
  %v94 = vld [vmem:[%s2 + $0x64] sm:$0xf]
  %v95 = vld [vmem:[%s2 + $0x68] sm:$0xf]
  %v96 = vld [vmem:[%s2 + $0x6c] sm:$0xf]
  %v97 = vld [vmem:[%s2 + $0x70] sm:$0xf]
  %v98 = vld [vmem:[%s2 + $0x74] sm:$0xf]
  %v99 = vld [vmem:[%s2 + $0x78] sm:$0xf]
  %v100 = vld [vmem:[%s2 + $0x7c] sm:$0xf]
  %v101 = vld [vmem:[%s2 + $0x80] sm:$0xf]
  %v102 = vld [vmem:[%s2 + $0x84] sm:$0xf]
  %v103 = vld [vmem:[%s2 + $0x88] sm:$0xf]
  %v104 = vld [vmem:[%s2 + $0x8c] sm:$0xf]
  %v105 = vld [vmem:[%s2 + $0x90] sm:$0xf]
  %v106 = vld [vmem:[%s2 + $0x94] sm:$0xf]
  %v107 = vld [vmem:[%s2 + $0x98] sm:$0xf]
  %v108 = vld [vmem:[%s2 + $0x9c] sm:$0xf]
  %v109 = vld [vmem:[%s2 + $0xa0] sm:$0xf]
  %v110 = vld [vmem:[%s2 + $0xa4] sm:$0xf]
  %v111 = vld [vmem:[%s2 + $0xa8] sm:$0xf]
  %v112 = vld [vmem:[%s2 + $0xac] sm:$0xf]
  %v113 = vld [vmem:[%s2 + $0xb0] sm:$0xf]
  %v114 = vld [vmem:[%s2 + $0xb4] sm:$0xf]
  %v115 = vld [vmem:[%s2 + $0xb8] sm:$0xf]
  %v116 = vld [vmem:[%s2 + $0xbc] sm:$0xf]
  %v117 = vld [vmem:[%s2 + $0xc0] sm:$0xf]
  %v118 = vld [vmem:[%s2 + $0xc4] sm:$0xf]
  %v119 = vld [vmem:[%s2 + $0xc8] sm:$0xf]
  %v120 = vld [vmem:[%s2 + $0xcc] sm:$0xf]
  %v121 = vld [vmem:[%s2 + $0xd0] sm:$0xf]
  %v122 = vld [vmem:[%s2 + $0xd4] sm:$0xf]
  %v123 = vld [vmem:[%s2 + $0xd8] sm:$0xf]
  %v124 = vld [vmem:[%s2 + $0xdc] sm:$0xf]
  %v125 = vld [vmem:[%s2 + $0xe0] sm:$0xf]
  %v126 = vld [vmem:[%s2 + $0xe4] sm:$0xf]
  %v127 = vld [vmem:[%s2 + $0xe8] sm:$0xf]
  %v128 = vld [vmem:[%s2 + $0xec] sm:$0xf]
  %v129 = vld [vmem:[%s2 + $0xf0] sm:$0xf]
  %v130 = vld [vmem:[%s2 + $0xf4] sm:$0xf]
  %v131 = vld [vmem:[%s2 + $0xf8] sm:$0xf]
  %v132 = vld [vmem:[%s2 + $0xfc] sm:$0xf]
  %v133 = vld [vmem:[%s2 + $0x100] sm:$0xf]
  %v134 = vld [vmem:[%s2 + $0x104] sm:$0xf]
  %v135 = vld [vmem:[%s2 + $0x108] sm:$0xf]
  %v136 = vld [vmem:[%s2 + $0x10c] sm:$0xf]
  %v137 = vld [vmem:[%s2 + $0x110] sm:$0xf]
  %v138 = vld [vmem:[%s2 + $0x114] sm:$0xf]
  %v139 = vld [vmem:[%s2 + $0x118] sm:$0xf]
  %v140 = vld [vmem:[%s2 + $0x11c] sm:$0xf]
  %v141 = vld [vmem:[%s1] sm:$0xff]
  %v142 = vld [vmem:[%s1 + $0x8] sm:$0xff]
  %v143 = vld [vmem:[%s1 + $0x10] sm:$0xf]
  %v144 = vld [vmem:[%s1 + $0x14] sm:$0xff]
  %v145 = vld [vmem:[%s1 + $0x1c] sm:$0xff]
  %v146 = vld [vmem:[%s1 + $0x24] sm:$0xf]
  %v147 = vld [vmem:[%s1 + $0x28] sm:$0xff]
  %v148 = vld [vmem:[%s1 + $0x30] sm:$0xff]
  %v149 = vld [vmem:[%s1 + $0x38] sm:$0xf]
  %v150 = vld [vmem:[%s1 + $0x3c] sm:$0xff]
  %v151 = vld [vmem:[%s1 + $0x44] sm:$0xff]
  %v152 = vld [vmem:[%s1 + $0x4c] sm:$0xf]
  %v153 = vld [vmem:[%s1 + $0x50] sm:$0xff]
  %v154 = vld [vmem:[%s1 + $0x58] sm:$0xff]
  %v155 = vld [vmem:[%s1 + $0x60] sm:$0xf]
  %v156 = vld [vmem:[%s1 + $0x64] sm:$0xff]
  %v157 = vld [vmem:[%s1 + $0x6c] sm:$0xff]
  %v158 = vld [vmem:[%s1 + $0x74] sm:$0xf]
  %v159 = vld [vmem:[%s1 + $0x78] sm:$0xff]
  %v160 = vld [vmem:[%s1 + $0x80] sm:$0xff]
  %v161 = vld [vmem:[%s1 + $0x88] sm:$0xf]
  %v162 = vld [vmem:[%s1 + $0x8c] sm:$0xff]
  %v163 = vld [vmem:[%s1 + $0x94] sm:$0xff]
  %v164 = vld [vmem:[%s1 + $0x9c] sm:$0xf]
  %v165 = vld [vmem:[%s1 + $0xa0] sm:$0xff]
  %v166 = vld [vmem:[%s1 + $0xa8] sm:$0xff]
  %v167 = vld [vmem:[%s1 + $0xb0] sm:$0xf]
  %v168 = vld [vmem:[%s1 + $0xb4] sm:$0xff]
  %v169 = vld [vmem:[%s1 + $0xbc] sm:$0xff]
  %v170 = vld [vmem:[%s1 + $0xc4] sm:$0xf]
  %v171 = vld [vmem:[%s1 + $0xc8] sm:$0xff]
  %v172 = vld [vmem:[%s1 + $0xd0] sm:$0xff]
  %v173 = vld [vmem:[%s1 + $0xd8] sm:$0xf]
  %v174 = vld [vmem:[%s1 + $0xdc] sm:$0xff]
  %v175 = vld [vmem:[%s1 + $0xe4] sm:$0xff]
  %v176 = vld [vmem:[%s1 + $0xec] sm:$0xf]
  %v177 = vld [vmem:[%s1 + $0xf0] sm:$0xff]
  %v178 = vld [vmem:[%s1 + $0xf8] sm:$0xff]
  %v179 = vld [vmem:[%s1 + $0x100] sm:$0xf]
  %v180 = vld [vmem:[%s1 + $0x104] sm:$0xff]
  %v181 = vld [vmem:[%s1 + $0x10c] sm:$0xff]
  %v182 = vld [vmem:[%s1 + $0x114] sm:$0xf]
  %v183 = vld [vmem:[%s1 + $0x118] sm:$0xff]
  %v184 = vld [vmem:[%s1 + $0x120] sm:$0xff]
  %v185 = vld [vmem:[%s1 + $0x128] sm:$0xf]
  %v186 = vld [vmem:[%s1 + $0x12c] sm:$0xff]
  %v187 = vld [vmem:[%s1 + $0x134] sm:$0xff]
  %v188 = vld [vmem:[%s1 + $0x13c] sm:$0xf]
  %v189 = vld [vmem:[%s3] sm:$0xf]
  %v190 = vld [vmem:[%s3 + $0x4] sm:$0xf]
  %v191 = vld [vmem:[%s3 + $0x8] sm:$0xf]
  %v192 = vld [vmem:[%s3 + $0xc] sm:$0xf]
  %v193 = vld [vmem:[%s3 + $0x10] sm:$0xf]
  %v194 = vld [vmem:[%s3 + $0x14] sm:$0xf]
  %v195 = vld [vmem:[%s3 + $0x18] sm:$0xf]
  %v196 = vld [vmem:[%s3 + $0x1c] sm:$0xf]
  %v197 = vld [vmem:[%s3 + $0x20] sm:$0xf]
  %v198 = vld [vmem:[%s3 + $0x24] sm:$0xf]
  %v199 = vld [vmem:[%s3 + $0x28] sm:$0xf]
  %v200 = vld [vmem:[%s3 + $0x2c] sm:$0xf]
  %v201 = vld [vmem:[%s3 + $0x30] sm:$0xf]
  %v202 = vld [vmem:[%s3 + $0x34] sm:$0xf]
  %v203 = vld [vmem:[%s3 + $0x38] sm:$0xf]
  %v204 = vld [vmem:[%s3 + $0x3c] sm:$0xf]
  %v205 = vld [vmem:[%s3 + $0x40] sm:$0xf]
  %v206 = vld [vmem:[%s3 + $0x44] sm:$0xf]
  %v207 = vld [vmem:[%s3 + $0x48] sm:$0xf]
  %v208 = vld [vmem:[%s3 + $0x4c] sm:$0xf]
  %v209 = vld [vmem:[%s3 + $0x50] sm:$0xf]
  %v210 = vld [vmem:[%s3 + $0x54] sm:$0xf]
  %v211 = vld [vmem:[%s3 + $0x58] sm:$0xf]
  %v212 = vld [vmem:[%s3 + $0x5c] sm:$0xf]
  %v213 = vld [vmem:[%s3 + $0x60] sm:$0xf]
  %v214 = vld [vmem:[%s3 + $0x64] sm:$0xf]
  %v215 = vld [vmem:[%s3 + $0x68] sm:$0xf]
  %v216 = vld [vmem:[%s3 + $0x6c] sm:$0xf]
  %v217 = vld [vmem:[%s3 + $0x70] sm:$0xf]
  %v218 = vld [vmem:[%s3 + $0x74] sm:$0xf]
  %v219 = vld [vmem:[%s3 + $0x78] sm:$0xf]
  %v220 = vld [vmem:[%s3 + $0x7c] sm:$0xf]
  %v221 = vld [vmem:[%s3 + $0x80] sm:$0xf]
  %v222 = vld [vmem:[%s3 + $0x84] sm:$0xf]
  %v223 = vld [vmem:[%s3 + $0x88] sm:$0xf]
  %v224 = vld [vmem:[%s3 + $0x8c] sm:$0xf]
  %v225 = vld [vmem:[%s3 + $0x90] sm:$0xf]
  %v226 = vld [vmem:[%s3 + $0x94] sm:$0xf]
  %v227 = vld [vmem:[%s3 + $0x98] sm:$0xf]
  %v228 = vld [vmem:[%s3 + $0x9c] sm:$0xf]
  %v229 = vld [vmem:[%s3 + $0xa0] sm:$0xf]
  %v230 = vld [vmem:[%s3 + $0xa4] sm:$0xf]
  %v231 = vld [vmem:[%s3 + $0xa8] sm:$0xf]
  %v232 = vld [vmem:[%s3 + $0xac] sm:$0xf]
  %v233 = vld [vmem:[%s3 + $0xb0] sm:$0xf]
  %v234 = vld [vmem:[%s3 + $0xb4] sm:$0xf]
  %v235 = vld [vmem:[%s3 + $0xb8] sm:$0xf]
  %v236 = vld [vmem:[%s3 + $0xbc] sm:$0xf]
  %v237 = vld [vmem:[%s3 + $0xc0] sm:$0xf]
  %v238 = vld [vmem:[%s3 + $0xc4] sm:$0xf]
  %v239 = vld [vmem:[%s3 + $0xc8] sm:$0xf]
  %v240 = vld [vmem:[%s3 + $0xcc] sm:$0xf]
  %v241 = vld [vmem:[%s3 + $0xd0] sm:$0xf]
  %v242 = vld [vmem:[%s3 + $0xd4] sm:$0xf]
  %v243 = vld [vmem:[%s3 + $0xd8] sm:$0xf]
  %v244 = vld [vmem:[%s3 + $0xdc] sm:$0xf]
  %v245 = vld [vmem:[%s3 + $0xe0] sm:$0xf]
  %v246 = vld [vmem:[%s3 + $0xe4] sm:$0xf]
  %v247 = vld [vmem:[%s3 + $0xe8] sm:$0xf]
  %v248 = vld [vmem:[%s3 + $0xec] sm:$0xf]
  %v249 = vld [vmem:[%s3 + $0xf0] sm:$0xf]
  %v250 = vld [vmem:[%s3 + $0xf4] sm:$0xf]
  %v251 = vld [vmem:[%s3 + $0xf8] sm:$0xf]
  %v252 = vld [vmem:[%s3 + $0xfc] sm:$0xf]
  %v253 = vld [vmem:[%s3 + $0x100] sm:$0xf]
  %v254 = vld [vmem:[%s3 + $0x104] sm:$0xf]
  %v255 = vld [vmem:[%s3 + $0x108] sm:$0xf]
  %v256 = vld [vmem:[%s3 + $0x10c] sm:$0xf]
  %v257 = vld [vmem:[%s3 + $0x110] sm:$0xf]
  %v258 = vld [vmem:[%s3 + $0x114] sm:$0xf]
  %v259 = vld [vmem:[%s3 + $0x118] sm:$0xf]
  %v260 = vld [vmem:[%s3 + $0x11c] sm:$0xf]
  %v309 = vunpack.c.l.b16 %v141
  %v310 = vunpack.c.h.b16 %v141
  %v311 = vunpack.c.l.b16 %v142
  %v312 = vunpack.c.h.b16 %v142
  %v313 = vunpack.c.l.b16 %v143
  %v314 = vunpack.c.l.b16 %v144
  %v315 = vunpack.c.h.b16 %v144
  %v316 = vunpack.c.l.b16 %v145
  %v317 = vunpack.c.h.b16 %v145
  %v318 = vunpack.c.l.b16 %v146
  %v319 = vunpack.c.l.b16 %v147
  %v320 = vunpack.c.h.b16 %v147
  %v321 = vunpack.c.l.b16 %v148
  %v322 = vunpack.c.h.b16 %v148
  %v323 = vunpack.c.l.b16 %v149
  %v324 = vunpack.c.l.b16 %v150
  %v325 = vunpack.c.h.b16 %v150
  %v326 = vunpack.c.l.b16 %v151
  %v327 = vunpack.c.h.b16 %v151
  %v328 = vunpack.c.l.b16 %v152
  %v329 = vunpack.c.l.b16 %v153
  %v330 = vunpack.c.h.b16 %v153
  %v331 = vunpack.c.l.b16 %v154
  %v332 = vunpack.c.h.b16 %v154
  %v333 = vunpack.c.l.b16 %v155
  %v334 = vunpack.c.l.b16 %v156
  %v335 = vunpack.c.h.b16 %v156
  %v336 = vunpack.c.l.b16 %v157
  %v337 = vunpack.c.h.b16 %v157
  %v338 = vunpack.c.l.b16 %v158
  %v339 = vunpack.c.l.b16 %v159
  %v340 = vunpack.c.h.b16 %v159
  %v341 = vunpack.c.l.b16 %v160
  %v342 = vunpack.c.h.b16 %v160
  %v343 = vunpack.c.l.b16 %v161
  %v344 = vunpack.c.l.b16 %v162
  %v345 = vunpack.c.h.b16 %v162
  %v346 = vunpack.c.l.b16 %v163
  %v347 = vunpack.c.h.b16 %v163
  %v348 = vunpack.c.l.b16 %v164
  %v349 = vunpack.c.l.b16 %v165
  %v350 = vunpack.c.h.b16 %v165
  %v351 = vunpack.c.l.b16 %v166
  %v352 = vunpack.c.h.b16 %v166
  %v353 = vunpack.c.l.b16 %v167
  %v354 = vunpack.c.l.b16 %v168
  %v355 = vunpack.c.h.b16 %v168
  %v356 = vunpack.c.l.b16 %v169
  %v357 = vunpack.c.h.b16 %v169
  %v358 = vunpack.c.l.b16 %v170
  %v359 = vunpack.c.l.b16 %v171
  %v360 = vunpack.c.h.b16 %v171
  %v361 = vunpack.c.l.b16 %v172
  %v362 = vunpack.c.h.b16 %v172
  %v363 = vunpack.c.l.b16 %v173
  %v364 = vunpack.c.l.b16 %v174
  %v365 = vunpack.c.h.b16 %v174
  %v366 = vunpack.c.l.b16 %v175
  %v367 = vunpack.c.h.b16 %v175
  %v368 = vunpack.c.l.b16 %v176
  %v369 = vunpack.c.l.b16 %v177
  %v370 = vunpack.c.h.b16 %v177
  %v371 = vunpack.c.l.b16 %v178
  %v372 = vunpack.c.h.b16 %v178
  %v373 = vunpack.c.l.b16 %v179
  %v374 = vunpack.c.l.b16 %v180
  %v375 = vunpack.c.h.b16 %v180
  %v376 = vunpack.c.l.b16 %v181
  %v377 = vunpack.c.h.b16 %v181
  %v378 = vunpack.c.l.b16 %v182
  %v379 = vunpack.c.l.b16 %v183
  %v380 = vunpack.c.h.b16 %v183
  %v381 = vunpack.c.l.b16 %v184
  %v382 = vunpack.c.h.b16 %v184
  %v383 = vunpack.c.l.b16 %v185
  %v384 = vunpack.c.l.b16 %v186
  %v385 = vunpack.c.h.b16 %v186
  %v386 = vunpack.c.l.b16 %v187
  %v387 = vunpack.c.h.b16 %v187
  %v388 = vunpack.c.l.b16 %v188
  %v389 = vpack.c.b16 %v314, %v309
  %v390 = vpack.c.b16 %v315, %v310
  %v391 = vpack.c.b16 %v316, %v311
  %v392 = vpack.c.b16 %v317, %v312
  %v393 = vpack.c.b16 %v318, %v313
  %v394 = vpack.c.b16 %v324, %v319
  %v395 = vpack.c.b16 %v325, %v320
  %v396 = vpack.c.b16 %v326, %v321
  %v397 = vpack.c.b16 %v327, %v322
  %v398 = vpack.c.b16 %v328, %v323
  %v399 = vpack.c.b16 %v334, %v329
  %v400 = vpack.c.b16 %v335, %v330
  %v401 = vpack.c.b16 %v336, %v331
  %v402 = vpack.c.b16 %v337, %v332
  %v403 = vpack.c.b16 %v338, %v333
  %v404 = vpack.c.b16 %v344, %v339
  %v405 = vpack.c.b16 %v345, %v340
  %v406 = vpack.c.b16 %v346, %v341
  %v407 = vpack.c.b16 %v347, %v342
  %v408 = vpack.c.b16 %v348, %v343
  %v409 = vpack.c.b16 %v354, %v349
  %v410 = vpack.c.b16 %v355, %v350
  %v411 = vpack.c.b16 %v356, %v351
  %v412 = vpack.c.b16 %v357, %v352
  %v413 = vpack.c.b16 %v358, %v353
  %v414 = vpack.c.b16 %v364, %v359
  %v415 = vpack.c.b16 %v365, %v360
  %v416 = vpack.c.b16 %v366, %v361
  %v417 = vpack.c.b16 %v367, %v362
  %v418 = vpack.c.b16 %v368, %v363
  %v419 = vpack.c.b16 %v374, %v369
  %v420 = vpack.c.b16 %v375, %v370
  %v421 = vpack.c.b16 %v376, %v371
  %v422 = vpack.c.b16 %v377, %v372
  %v423 = vpack.c.b16 %v378, %v373
  %v424 = vpack.c.b16 %v384, %v379
  %v425 = vpack.c.b16 %v385, %v380
  %v426 = vpack.c.b16 %v386, %v381
  %v427 = vpack.c.b16 %v387, %v382
  %v428 = vpack.c.b16 %v388, %v383
  %v533 = vunpack.c.l.b16 %v189
  %v534 = vunpack.c.l.b16 %v190
  %v535 = vunpack.c.l.b16 %v191
  %v536 = vunpack.c.l.b16 %v192
  %v537 = vunpack.c.l.b16 %v193
  %v538 = vunpack.c.l.b16 %v194
  %v539 = vunpack.c.l.b16 %v195
  %v540 = vunpack.c.l.b16 %v196
  %v541 = vunpack.c.l.b16 %v197
  %v542 = vunpack.c.l.b16 %v198
  %v543 = vunpack.c.l.b16 %v199
  %v544 = vunpack.c.l.b16 %v200
  %v545 = vunpack.c.l.b16 %v201
  %v546 = vunpack.c.l.b16 %v202
  %v547 = vunpack.c.l.b16 %v203
  %v548 = vunpack.c.l.b16 %v204
  %v549 = vunpack.c.l.b16 %v205
  %v550 = vunpack.c.l.b16 %v206
  %v551 = vunpack.c.l.b16 %v207
  %v552 = vunpack.c.l.b16 %v208
  %v553 = vunpack.c.l.b16 %v209
  %v554 = vunpack.c.l.b16 %v210
  %v555 = vunpack.c.l.b16 %v211
  %v556 = vunpack.c.l.b16 %v212
  %v557 = vunpack.c.l.b16 %v213
  %v558 = vunpack.c.l.b16 %v214
  %v559 = vunpack.c.l.b16 %v215
  %v560 = vunpack.c.l.b16 %v216
  %v561 = vunpack.c.l.b16 %v217
  %v562 = vunpack.c.l.b16 %v218
  %v563 = vunpack.c.l.b16 %v219
  %v564 = vunpack.c.l.b16 %v220
  %v565 = vunpack.c.l.b16 %v221
  %v566 = vunpack.c.l.b16 %v222
  %v567 = vunpack.c.l.b16 %v223
  %v568 = vunpack.c.l.b16 %v224
  %v569 = vunpack.c.l.b16 %v225
  %v570 = vunpack.c.l.b16 %v226
  %v571 = vunpack.c.l.b16 %v227
  %v572 = vunpack.c.l.b16 %v228
  %v573 = vunpack.c.l.b16 %v229
  %v574 = vunpack.c.l.b16 %v230
  %v575 = vunpack.c.l.b16 %v231
  %v576 = vunpack.c.l.b16 %v232
  %v577 = vunpack.c.l.b16 %v233
  %v578 = vunpack.c.l.b16 %v234
  %v579 = vunpack.c.l.b16 %v235
  %v580 = vunpack.c.l.b16 %v236
  %v581 = vunpack.c.l.b16 %v237
  %v582 = vunpack.c.l.b16 %v238
  %v583 = vunpack.c.l.b16 %v239
  %v584 = vunpack.c.l.b16 %v240
  %v585 = vunpack.c.l.b16 %v241
  %v586 = vunpack.c.l.b16 %v242
  %v587 = vunpack.c.l.b16 %v243
  %v588 = vunpack.c.l.b16 %v244
  %v589 = vunpack.c.l.b16 %v245
  %v590 = vunpack.c.l.b16 %v246
  %v591 = vunpack.c.l.b16 %v247
  %v592 = vunpack.c.l.b16 %v248
  %v593 = vunpack.c.l.b16 %v249
  %v594 = vunpack.c.l.b16 %v250
  %v595 = vunpack.c.l.b16 %v251
  %v596 = vunpack.c.l.b16 %v252
  %v597 = vunpack.c.l.b16 %v253
  %v598 = vunpack.c.l.b16 %v254
  %v599 = vunpack.c.l.b16 %v255
  %v600 = vunpack.c.l.b16 %v256
  %v601 = vunpack.c.l.b16 %v257
  %v602 = vunpack.c.l.b16 %v258
  %v603 = vunpack.c.l.b16 %v259
  %v604 = vunpack.c.l.b16 %v260
  %v605 = vpack.c.b16 %v534, %v533
  %v606 = vpack.c.b16 %v536, %v535
  %v607 = vpack.c.b16 %v538, %v537
  %v608 = vpack.c.b16 %v540, %v539
  %v609 = vpack.c.b16 %v542, %v541
  %v610 = vpack.c.b16 %v544, %v543
  %v611 = vpack.c.b16 %v546, %v545
  %v612 = vpack.c.b16 %v548, %v547
  %v613 = vpack.c.b16 %v550, %v549
  %v614 = vpack.c.b16 %v552, %v551
  %v615 = vpack.c.b16 %v554, %v553
  %v616 = vpack.c.b16 %v556, %v555
  %v617 = vpack.c.b16 %v558, %v557
  %v618 = vpack.c.b16 %v560, %v559
  %v619 = vpack.c.b16 %v562, %v561
  %v620 = vpack.c.b16 %v564, %v563
  %v621 = vpack.c.b16 %v566, %v565
  %v622 = vpack.c.b16 %v568, %v567
  %v623 = vpack.c.b16 %v570, %v569
  %v624 = vpack.c.b16 %v572, %v571
  %v625 = vpack.c.b16 %v574, %v573
  %v626 = vpack.c.b16 %v576, %v575
  %v627 = vpack.c.b16 %v578, %v577
  %v628 = vpack.c.b16 %v580, %v579
  %v629 = vpack.c.b16 %v582, %v581
  %v630 = vpack.c.b16 %v584, %v583
  %v631 = vpack.c.b16 %v586, %v585
  %v632 = vpack.c.b16 %v588, %v587
  %v633 = vpack.c.b16 %v590, %v589
  %v634 = vpack.c.b16 %v592, %v591
  %v635 = vpack.c.b16 %v594, %v593
  %v636 = vpack.c.b16 %v596, %v595
  %v637 = vpack.c.b16 %v598, %v597
  %v638 = vpack.c.b16 %v600, %v599
  %v639 = vpack.c.b16 %v602, %v601
  %v640 = vpack.c.b16 %v604, %v603
  %vm677 = vcmask 523264
  %v679 = vsel %vm677, %v393, 0
  %v682 = vsel %vm677, %v398, 0
  %v685 = vsel %vm677, %v403, 0
  %v688 = vsel %vm677, %v408, 0
  %v691 = vsel %vm677, %v413, 0
  %v694 = vsel %vm677, %v418, 0
  %v697 = vsel %vm677, %v423, 0
  %v700 = vsel %vm677, %v428, 0
  %702 = vmatprep.subr.bf16.mxu0 0
  %703 = vmatpush1.bf16.msra.mxu0 %v612
  %704 = vmatprep.subr.bf16.mxu0 0
  %705 = vmatpush1.bf16.msra.mxu0 %v611
  %706 = vmatprep.subr.bf16.mxu0 0
  %707 = vmatpush1.bf16.msra.mxu0 %v610
  %708 = vmatprep.subr.bf16.mxu0 0
  %709 = vmatpush1.bf16.msra.mxu0 %v609
  %710 = vmatprep.subr.bf16.mxu0 0
  %711 = vmatpush1.bf16.msra.mxu0 %v608
  %712 = vmatprep.subr.bf16.mxu0 0
  %713 = vmatpush1.bf16.msra.mxu0 %v607
  %714 = vmatprep.subr.bf16.mxu0 0
  %715 = vmatpush1.bf16.msra.mxu0 %v606
  %716 = vmatprep.subr.bf16.mxu0 0
  %717 = vmatpush1.bf16.msra.mxu0 %v605
  %718 = vmatprep.subr.bf16.mxu0 0
  %719 = vmatpush2.bf16.msra.mxu0 %v620
  %720 = vmatprep.subr.bf16.mxu0 0
  %721 = vmatpush2.bf16.msra.mxu0 %v619
  %722 = vmatprep.subr.bf16.mxu0 0
  %723 = vmatpush2.bf16.msra.mxu0 %v618
  %724 = vmatprep.subr.bf16.mxu0 0
  %725 = vmatpush2.bf16.msra.mxu0 %v617
  %726 = vmatprep.subr.bf16.mxu0 0
  %727 = vmatpush2.bf16.msra.mxu0 %v616
  %728 = vmatprep.subr.bf16.mxu0 0
  %729 = vmatpush2.bf16.msra.mxu0 %v615
  %730 = vmatprep.subr.bf16.mxu0 0
  %731 = vmatpush2.bf16.msra.mxu0 %v614
  %732 = vmatprep.subr.bf16.mxu0 0
  %733 = vmatpush2.bf16.msra.mxu0 %v613
  %734 = vmatprep.mubr.bf16.mxu0 %v390
  %735 = vmatmul.mubr.bf16.gmra.mxu0 %v389
  %v736 = vpop.f32.mrf.mxu0
  %v737 = vadd.f32 0.0, %v736
  %v738 = vpop.f32.mrf.mxu0
  %v739 = vpop.f32.mrf.mxu0
  %v740 = vadd.f32 0.0, %v739
  %v741 = vpop.f32.mrf.mxu0
  %742 = vmatprep.mubr.bf16.mxu0 %v395
  %743 = vmatmul.mubr.bf16.gmra.mxu0 %v394
  %v744 = vpop.f32.mrf.mxu0
  %v745 = vadd.f32 0.0, %v744
  %v746 = vpop.f32.mrf.mxu0
  %v747 = vpop.f32.mrf.mxu0
  %v748 = vadd.f32 0.0, %v747
  %v749 = vpop.f32.mrf.mxu0
  %750 = vmatprep.mubr.bf16.mxu0 %v400
  %751 = vmatmul.mubr.bf16.gmra.mxu0 %v399
  %v752 = vpop.f32.mrf.mxu0
  %v753 = vadd.f32 0.0, %v752
  %v754 = vpop.f32.mrf.mxu0
  %v755 = vpop.f32.mrf.mxu0
  %v756 = vadd.f32 0.0, %v755
  %v757 = vpop.f32.mrf.mxu0
  %758 = vmatprep.mubr.bf16.mxu0 %v405
  %759 = vmatmul.mubr.bf16.gmra.mxu0 %v404
  %v760 = vpop.f32.mrf.mxu0
  %v761 = vadd.f32 0.0, %v760
  %v762 = vpop.f32.mrf.mxu0
  %v763 = vpop.f32.mrf.mxu0
  %v764 = vadd.f32 0.0, %v763
  %v765 = vpop.f32.mrf.mxu0
  %766 = vmatprep.mubr.bf16.mxu0 %v410
  %767 = vmatmul.mubr.bf16.gmra.mxu0 %v409
  %v768 = vpop.f32.mrf.mxu0
  %v769 = vadd.f32 0.0, %v768
  %v770 = vpop.f32.mrf.mxu0
  %v771 = vpop.f32.mrf.mxu0
  %v772 = vadd.f32 0.0, %v771
  %v773 = vpop.f32.mrf.mxu0
  %774 = vmatprep.mubr.bf16.mxu0 %v415
  %775 = vmatmul.mubr.bf16.gmra.mxu0 %v414
  %v776 = vpop.f32.mrf.mxu0
  %v777 = vadd.f32 0.0, %v776
  %v778 = vpop.f32.mrf.mxu0
  %v779 = vpop.f32.mrf.mxu0
  %v780 = vadd.f32 0.0, %v779
  %v781 = vpop.f32.mrf.mxu0
  %782 = vmatprep.mubr.bf16.mxu0 %v420
  %783 = vmatmul.mubr.bf16.gmra.mxu0 %v419
  %v784 = vpop.f32.mrf.mxu0
  %v785 = vadd.f32 0.0, %v784
  %v786 = vpop.f32.mrf.mxu0
  %v787 = vpop.f32.mrf.mxu0
  %v788 = vadd.f32 0.0, %v787
  %v789 = vpop.f32.mrf.mxu0
  %790 = vmatprep.mubr.bf16.mxu0 %v425
  %791 = vmatmul.mubr.bf16.gmra.mxu0 %v424
  %v792 = vpop.f32.mrf.mxu0
  %v793 = vadd.f32 0.0, %v792
  %v794 = vpop.f32.mrf.mxu0
  %v795 = vpop.f32.mrf.mxu0
  %v796 = vadd.f32 0.0, %v795
  %v797 = vpop.f32.mrf.mxu0
  %798 = vdwg.mxu0
  %799 = vmatprep.subr.bf16.mxu0 0
  %800 = vmatpush1.bf16.msra.mxu0 %v628
  %801 = vmatprep.subr.bf16.mxu0 0
  %802 = vmatpush1.bf16.msra.mxu0 %v627
  %803 = vmatprep.subr.bf16.mxu0 0
  %804 = vmatpush1.bf16.msra.mxu0 %v626
  %805 = vmatprep.subr.bf16.mxu0 0
  %806 = vmatpush1.bf16.msra.mxu0 %v625
  %807 = vmatprep.subr.bf16.mxu0 0
  %808 = vmatpush1.bf16.msra.mxu0 %v624
  %809 = vmatprep.subr.bf16.mxu0 0
  %810 = vmatpush1.bf16.msra.mxu0 %v623
  %811 = vmatprep.subr.bf16.mxu0 0
  %812 = vmatpush1.bf16.msra.mxu0 %v622
  %813 = vmatprep.subr.bf16.mxu0 0
  %814 = vmatpush1.bf16.msra.mxu0 %v621
  %815 = vmatprep.subr.bf16.mxu0 0
  %816 = vmatpush2.bf16.msra.mxu0 %v636
  %817 = vmatprep.subr.bf16.mxu0 0
  %818 = vmatpush2.bf16.msra.mxu0 %v635
  %819 = vmatprep.subr.bf16.mxu0 0
  %820 = vmatpush2.bf16.msra.mxu0 %v634
  %821 = vmatprep.subr.bf16.mxu0 0
  %822 = vmatpush2.bf16.msra.mxu0 %v633
  %823 = vmatprep.subr.bf16.mxu0 0
  %824 = vmatpush2.bf16.msra.mxu0 %v632
  %825 = vmatprep.subr.bf16.mxu0 0
  %826 = vmatpush2.bf16.msra.mxu0 %v631
  %827 = vmatprep.subr.bf16.mxu0 0
  %828 = vmatpush2.bf16.msra.mxu0 %v630
  %829 = vmatprep.subr.bf16.mxu0 0
  %830 = vmatpush2.bf16.msra.mxu0 %v629
  %831 = vmatprep.mubr.bf16.mxu0 %v392
  %832 = vmatmul.mubr.bf16.gmra.mxu0 %v391
  %v833 = vpop.f32.mrf.mxu0
  %v834 = vadd.f32 %v737, %v833
  %v835 = vpop.f32.mrf.mxu0
  %v836 = vpop.f32.mrf.mxu0
  %v837 = vadd.f32 %v740, %v836
  %v838 = vpop.f32.mrf.mxu0
  %839 = vmatprep.mubr.bf16.mxu0 %v397
  %840 = vmatmul.mubr.bf16.gmra.mxu0 %v396
  %v841 = vpop.f32.mrf.mxu0
  %v842 = vadd.f32 %v745, %v841
  %v843 = vpop.f32.mrf.mxu0
  %v844 = vpop.f32.mrf.mxu0
  %v845 = vadd.f32 %v748, %v844
  %v846 = vpop.f32.mrf.mxu0
  %847 = vmatprep.mubr.bf16.mxu0 %v402
  %848 = vmatmul.mubr.bf16.gmra.mxu0 %v401
  %v849 = vpop.f32.mrf.mxu0
  %v850 = vadd.f32 %v753, %v849
  %v851 = vpop.f32.mrf.mxu0
  %v852 = vpop.f32.mrf.mxu0
  %v853 = vadd.f32 %v756, %v852
  %v854 = vpop.f32.mrf.mxu0
  %855 = vmatprep.mubr.bf16.mxu0 %v407
  %856 = vmatmul.mubr.bf16.gmra.mxu0 %v406
  %v857 = vpop.f32.mrf.mxu0
  %v858 = vadd.f32 %v761, %v857
  %v859 = vpop.f32.mrf.mxu0
  %v860 = vpop.f32.mrf.mxu0
  %v861 = vadd.f32 %v764, %v860
  %v862 = vpop.f32.mrf.mxu0
  %863 = vmatprep.mubr.bf16.mxu0 %v412
  %864 = vmatmul.mubr.bf16.gmra.mxu0 %v411
  %v865 = vpop.f32.mrf.mxu0
  %v866 = vadd.f32 %v769, %v865
  %v867 = vpop.f32.mrf.mxu0
  %v868 = vpop.f32.mrf.mxu0
  %v869 = vadd.f32 %v772, %v868
  %v870 = vpop.f32.mrf.mxu0
  %871 = vmatprep.mubr.bf16.mxu0 %v417
  %872 = vmatmul.mubr.bf16.gmra.mxu0 %v416
  %v873 = vpop.f32.mrf.mxu0
  %v874 = vadd.f32 %v777, %v873
  %v875 = vpop.f32.mrf.mxu0
  %v876 = vpop.f32.mrf.mxu0
  %v877 = vadd.f32 %v780, %v876
  %v878 = vpop.f32.mrf.mxu0
  %879 = vmatprep.mubr.bf16.mxu0 %v422
  %880 = vmatmul.mubr.bf16.gmra.mxu0 %v421
  %v881 = vpop.f32.mrf.mxu0
  %v882 = vadd.f32 %v785, %v881
  %v883 = vpop.f32.mrf.mxu0
  %v884 = vpop.f32.mrf.mxu0
  %v885 = vadd.f32 %v788, %v884
  %v886 = vpop.f32.mrf.mxu0
  %887 = vmatprep.mubr.bf16.mxu0 %v427
  %888 = vmatmul.mubr.bf16.gmra.mxu0 %v426
  %v889 = vpop.f32.mrf.mxu0
  %v890 = vadd.f32 %v793, %v889
  %v891 = vpop.f32.mrf.mxu0
  %v892 = vpop.f32.mrf.mxu0
  %v893 = vadd.f32 %v796, %v892
  %v894 = vpop.f32.mrf.mxu0
  %895 = vdwg.mxu0
  %896 = vmatprep.subr.bf16.mxu0 0
  %897 = vmatpush1.bf16.msra.mxu0 0
  %898 = vmatprep.subr.bf16.mxu0 0
  %899 = vmatpush1.bf16.msra.mxu0 0
  %900 = vmatprep.subr.bf16.mxu0 0
  %901 = vmatpush1.bf16.msra.mxu0 0
  %902 = vmatprep.subr.bf16.mxu0 0
  %903 = vmatpush1.bf16.msra.mxu0 0
  %904 = vmatprep.subr.bf16.mxu0 0
  %905 = vmatpush1.bf16.msra.mxu0 %v640
  %906 = vmatprep.subr.bf16.mxu0 0
  %907 = vmatpush1.bf16.msra.mxu0 %v639
  %908 = vmatprep.subr.bf16.mxu0 0
  %909 = vmatpush1.bf16.msra.mxu0 %v638
  %910 = vmatprep.subr.bf16.mxu0 0
  %911 = vmatpush1.bf16.msra.mxu0 %v637
  %912 = vmatprep.subr.bf16.mxu0 0
  %913 = vmatpush2.bf16.msra.mxu0 0
  %914 = vmatprep.subr.bf16.mxu0 0
  %915 = vmatpush2.bf16.msra.mxu0 0
  %916 = vmatprep.subr.bf16.mxu0 0
  %917 = vmatpush2.bf16.msra.mxu0 0
  %918 = vmatprep.subr.bf16.mxu0 0
  %919 = vmatpush2.bf16.msra.mxu0 0
  %920 = vmatprep.subr.bf16.mxu0 0
  %921 = vmatpush2.bf16.msra.mxu0 0
  %922 = vmatprep.subr.bf16.mxu0 0
  %923 = vmatpush2.bf16.msra.mxu0 0
  %924 = vmatprep.subr.bf16.mxu0 0
  %925 = vmatpush2.bf16.msra.mxu0 0
  %926 = vmatprep.subr.bf16.mxu0 0
  %927 = vmatpush2.bf16.msra.mxu0 0
  %928 = vmatprep.mubr.bf16.mxu0 0
  %929 = vmatmul.mubr.bf16.gmra.mxu0 %v679
  %v930 = vpop.f32.mrf.mxu0
  %v931 = vadd.f32 %v834, %v930
  %v932 = vpop.f32.mrf.mxu0
  %v933 = vpop.f32.mrf.mxu0
  %v934 = vadd.f32 %v837, %v933
  %v935 = vpop.f32.mrf.mxu0
  %936 = vmatprep.mubr.bf16.mxu0 0
  %937 = vmatmul.mubr.bf16.gmra.mxu0 %v682
  %v938 = vpop.f32.mrf.mxu0
  %v939 = vadd.f32 %v842, %v938
  %v940 = vpop.f32.mrf.mxu0
  %v941 = vpop.f32.mrf.mxu0
  %v942 = vadd.f32 %v845, %v941
  %v943 = vpop.f32.mrf.mxu0
  %944 = vmatprep.mubr.bf16.mxu0 0
  %945 = vmatmul.mubr.bf16.gmra.mxu0 %v685
  %v946 = vpop.f32.mrf.mxu0
  %v947 = vadd.f32 %v850, %v946
  %v948 = vpop.f32.mrf.mxu0
  %v949 = vpop.f32.mrf.mxu0
  %v950 = vadd.f32 %v853, %v949
  %v951 = vpop.f32.mrf.mxu0
  %952 = vmatprep.mubr.bf16.mxu0 0
  %953 = vmatmul.mubr.bf16.gmra.mxu0 %v688
  %v954 = vpop.f32.mrf.mxu0
  %v955 = vadd.f32 %v858, %v954
  %v956 = vpop.f32.mrf.mxu0
  %v957 = vpop.f32.mrf.mxu0
  %v958 = vadd.f32 %v861, %v957
  %v959 = vpop.f32.mrf.mxu0
  %960 = vmatprep.mubr.bf16.mxu0 0
  %961 = vmatmul.mubr.bf16.gmra.mxu0 %v691
  %v962 = vpop.f32.mrf.mxu0
  %v963 = vadd.f32 %v866, %v962
  %v964 = vpop.f32.mrf.mxu0
  %v965 = vpop.f32.mrf.mxu0
  %v966 = vadd.f32 %v869, %v965
  %v967 = vpop.f32.mrf.mxu0
  %968 = vmatprep.mubr.bf16.mxu0 0
  %969 = vmatmul.mubr.bf16.gmra.mxu0 %v694
  %v970 = vpop.f32.mrf.mxu0
  %v971 = vadd.f32 %v874, %v970
  %v972 = vpop.f32.mrf.mxu0
  %v973 = vpop.f32.mrf.mxu0
  %v974 = vadd.f32 %v877, %v973
  %v975 = vpop.f32.mrf.mxu0
  %976 = vmatprep.mubr.bf16.mxu0 0
  %977 = vmatmul.mubr.bf16.gmra.mxu0 %v697
  %v978 = vpop.f32.mrf.mxu0
  %v979 = vadd.f32 %v882, %v978
  %v980 = vpop.f32.mrf.mxu0
  %v981 = vpop.f32.mrf.mxu0
  %v982 = vadd.f32 %v885, %v981
  %v983 = vpop.f32.mrf.mxu0
  %984 = vmatprep.mubr.bf16.mxu0 0
  %985 = vmatmul.mubr.bf16.gmra.mxu0 %v700
  %v986 = vpop.f32.mrf.mxu0
  %v987 = vadd.f32 %v890, %v986
  %v988 = vpop.f32.mrf.mxu0
  %v989 = vpop.f32.mrf.mxu0
  %v990 = vadd.f32 %v893, %v989
  %v991 = vpop.f32.mrf.mxu0
  %992 = vdwg.mxu0
  %v1041 = vunpack.c.l.b16 %v21
  %v1042 = vunpack.c.h.b16 %v21
  %v1043 = vunpack.c.l.b16 %v22
  %v1044 = vunpack.c.h.b16 %v22
  %v1045 = vunpack.c.l.b16 %v23
  %v1046 = vunpack.c.l.b16 %v24
  %v1047 = vunpack.c.h.b16 %v24
  %v1048 = vunpack.c.l.b16 %v25
  %v1049 = vunpack.c.h.b16 %v25
  %v1050 = vunpack.c.l.b16 %v26
  %v1051 = vunpack.c.l.b16 %v27
  %v1052 = vunpack.c.h.b16 %v27
  %v1053 = vunpack.c.l.b16 %v28
  %v1054 = vunpack.c.h.b16 %v28
  %v1055 = vunpack.c.l.b16 %v29
  %v1056 = vunpack.c.l.b16 %v30
  %v1057 = vunpack.c.h.b16 %v30
  %v1058 = vunpack.c.l.b16 %v31
  %v1059 = vunpack.c.h.b16 %v31
  %v1060 = vunpack.c.l.b16 %v32
  %v1061 = vunpack.c.l.b16 %v33
  %v1062 = vunpack.c.h.b16 %v33
  %v1063 = vunpack.c.l.b16 %v34
  %v1064 = vunpack.c.h.b16 %v34
  %v1065 = vunpack.c.l.b16 %v35
  %v1066 = vunpack.c.l.b16 %v36
  %v1067 = vunpack.c.h.b16 %v36
  %v1068 = vunpack.c.l.b16 %v37
  %v1069 = vunpack.c.h.b16 %v37
  %v1070 = vunpack.c.l.b16 %v38
  %v1071 = vunpack.c.l.b16 %v39
  %v1072 = vunpack.c.h.b16 %v39
  %v1073 = vunpack.c.l.b16 %v40
  %v1074 = vunpack.c.h.b16 %v40
  %v1075 = vunpack.c.l.b16 %v41
  %v1076 = vunpack.c.l.b16 %v42
  %v1077 = vunpack.c.h.b16 %v42
  %v1078 = vunpack.c.l.b16 %v43
  %v1079 = vunpack.c.h.b16 %v43
  %v1080 = vunpack.c.l.b16 %v44
  %v1081 = vunpack.c.l.b16 %v45
  %v1082 = vunpack.c.h.b16 %v45
  %v1083 = vunpack.c.l.b16 %v46
  %v1084 = vunpack.c.h.b16 %v46
  %v1085 = vunpack.c.l.b16 %v47
  %v1086 = vunpack.c.l.b16 %v48
  %v1087 = vunpack.c.h.b16 %v48
  %v1088 = vunpack.c.l.b16 %v49
  %v1089 = vunpack.c.h.b16 %v49
  %v1090 = vunpack.c.l.b16 %v50
  %v1091 = vunpack.c.l.b16 %v51
  %v1092 = vunpack.c.h.b16 %v51
  %v1093 = vunpack.c.l.b16 %v52
  %v1094 = vunpack.c.h.b16 %v52
  %v1095 = vunpack.c.l.b16 %v53
  %v1096 = vunpack.c.l.b16 %v54
  %v1097 = vunpack.c.h.b16 %v54
  %v1098 = vunpack.c.l.b16 %v55
  %v1099 = vunpack.c.h.b16 %v55
  %v1100 = vunpack.c.l.b16 %v56
  %v1101 = vunpack.c.l.b16 %v57
  %v1102 = vunpack.c.h.b16 %v57
  %v1103 = vunpack.c.l.b16 %v58
  %v1104 = vunpack.c.h.b16 %v58
  %v1105 = vunpack.c.l.b16 %v59
  %v1106 = vunpack.c.l.b16 %v60
  %v1107 = vunpack.c.h.b16 %v60
  %v1108 = vunpack.c.l.b16 %v61
  %v1109 = vunpack.c.h.b16 %v61
  %v1110 = vunpack.c.l.b16 %v62
  %v1111 = vunpack.c.l.b16 %v63
  %v1112 = vunpack.c.h.b16 %v63
  %v1113 = vunpack.c.l.b16 %v64
  %v1114 = vunpack.c.h.b16 %v64
  %v1115 = vunpack.c.l.b16 %v65
  %v1116 = vunpack.c.l.b16 %v66
  %v1117 = vunpack.c.h.b16 %v66
  %v1118 = vunpack.c.l.b16 %v67
  %v1119 = vunpack.c.h.b16 %v67
  %v1120 = vunpack.c.l.b16 %v68
  %v1121 = vpack.c.b16 %v1046, %v1041
  %v1122 = vpack.c.b16 %v1047, %v1042
  %v1123 = vpack.c.b16 %v1048, %v1043
  %v1124 = vpack.c.b16 %v1049, %v1044
  %v1125 = vpack.c.b16 %v1050, %v1045
  %v1126 = vpack.c.b16 %v1056, %v1051
  %v1127 = vpack.c.b16 %v1057, %v1052
  %v1128 = vpack.c.b16 %v1058, %v1053
  %v1129 = vpack.c.b16 %v1059, %v1054
  %v1130 = vpack.c.b16 %v1060, %v1055
  %v1131 = vpack.c.b16 %v1066, %v1061
  %v1132 = vpack.c.b16 %v1067, %v1062
  %v1133 = vpack.c.b16 %v1068, %v1063
  %v1134 = vpack.c.b16 %v1069, %v1064
  %v1135 = vpack.c.b16 %v1070, %v1065
  %v1136 = vpack.c.b16 %v1076, %v1071
  %v1137 = vpack.c.b16 %v1077, %v1072
  %v1138 = vpack.c.b16 %v1078, %v1073
  %v1139 = vpack.c.b16 %v1079, %v1074
  %v1140 = vpack.c.b16 %v1080, %v1075
  %v1141 = vpack.c.b16 %v1086, %v1081
  %v1142 = vpack.c.b16 %v1087, %v1082
  %v1143 = vpack.c.b16 %v1088, %v1083
  %v1144 = vpack.c.b16 %v1089, %v1084
  %v1145 = vpack.c.b16 %v1090, %v1085
  %v1146 = vpack.c.b16 %v1096, %v1091
  %v1147 = vpack.c.b16 %v1097, %v1092
  %v1148 = vpack.c.b16 %v1098, %v1093
  %v1149 = vpack.c.b16 %v1099, %v1094
  %v1150 = vpack.c.b16 %v1100, %v1095
  %v1151 = vpack.c.b16 %v1106, %v1101
  %v1152 = vpack.c.b16 %v1107, %v1102
  %v1153 = vpack.c.b16 %v1108, %v1103
  %v1154 = vpack.c.b16 %v1109, %v1104
  %v1155 = vpack.c.b16 %v1110, %v1105
  %v1156 = vpack.c.b16 %v1116, %v1111
  %v1157 = vpack.c.b16 %v1117, %v1112
  %v1158 = vpack.c.b16 %v1118, %v1113
  %v1159 = vpack.c.b16 %v1119, %v1114
  %v1160 = vpack.c.b16 %v1120, %v1115
  %v1265 = vunpack.c.l.b16 %v69
  %v1266 = vunpack.c.l.b16 %v70
  %v1267 = vunpack.c.l.b16 %v71
  %v1268 = vunpack.c.l.b16 %v72
  %v1269 = vunpack.c.l.b16 %v73
  %v1270 = vunpack.c.l.b16 %v74
  %v1271 = vunpack.c.l.b16 %v75
  %v1272 = vunpack.c.l.b16 %v76
  %v1273 = vunpack.c.l.b16 %v77
  %v1274 = vunpack.c.l.b16 %v78
  %v1275 = vunpack.c.l.b16 %v79
  %v1276 = vunpack.c.l.b16 %v80
  %v1277 = vunpack.c.l.b16 %v81
  %v1278 = vunpack.c.l.b16 %v82
  %v1279 = vunpack.c.l.b16 %v83
  %v1280 = vunpack.c.l.b16 %v84
  %v1281 = vunpack.c.l.b16 %v85
  %v1282 = vunpack.c.l.b16 %v86
  %v1283 = vunpack.c.l.b16 %v87
  %v1284 = vunpack.c.l.b16 %v88
  %v1285 = vunpack.c.l.b16 %v89
  %v1286 = vunpack.c.l.b16 %v90
  %v1287 = vunpack.c.l.b16 %v91
  %v1288 = vunpack.c.l.b16 %v92
  %v1289 = vunpack.c.l.b16 %v93
  %v1290 = vunpack.c.l.b16 %v94
  %v1291 = vunpack.c.l.b16 %v95
  %v1292 = vunpack.c.l.b16 %v96
  %v1293 = vunpack.c.l.b16 %v97
  %v1294 = vunpack.c.l.b16 %v98
  %v1295 = vunpack.c.l.b16 %v99
  %v1296 = vunpack.c.l.b16 %v100
  %v1297 = vunpack.c.l.b16 %v101
  %v1298 = vunpack.c.l.b16 %v102
  %v1299 = vunpack.c.l.b16 %v103
  %v1300 = vunpack.c.l.b16 %v104
  %v1301 = vunpack.c.l.b16 %v105
  %v1302 = vunpack.c.l.b16 %v106
  %v1303 = vunpack.c.l.b16 %v107
  %v1304 = vunpack.c.l.b16 %v108
  %v1305 = vunpack.c.l.b16 %v109
  %v1306 = vunpack.c.l.b16 %v110
  %v1307 = vunpack.c.l.b16 %v111
  %v1308 = vunpack.c.l.b16 %v112
  %v1309 = vunpack.c.l.b16 %v113
  %v1310 = vunpack.c.l.b16 %v114
  %v1311 = vunpack.c.l.b16 %v115
  %v1312 = vunpack.c.l.b16 %v116
  %v1313 = vunpack.c.l.b16 %v117
  %v1314 = vunpack.c.l.b16 %v118
  %v1315 = vunpack.c.l.b16 %v119
  %v1316 = vunpack.c.l.b16 %v120
  %v1317 = vunpack.c.l.b16 %v121
  %v1318 = vunpack.c.l.b16 %v122
  %v1319 = vunpack.c.l.b16 %v123
  %v1320 = vunpack.c.l.b16 %v124
  %v1321 = vunpack.c.l.b16 %v125
  %v1322 = vunpack.c.l.b16 %v126
  %v1323 = vunpack.c.l.b16 %v127
  %v1324 = vunpack.c.l.b16 %v128
  %v1325 = vunpack.c.l.b16 %v129
  %v1326 = vunpack.c.l.b16 %v130
  %v1327 = vunpack.c.l.b16 %v131
  %v1328 = vunpack.c.l.b16 %v132
  %v1329 = vunpack.c.l.b16 %v133
  %v1330 = vunpack.c.l.b16 %v134
  %v1331 = vunpack.c.l.b16 %v135
  %v1332 = vunpack.c.l.b16 %v136
  %v1333 = vunpack.c.l.b16 %v137
  %v1334 = vunpack.c.l.b16 %v138
  %v1335 = vunpack.c.l.b16 %v139
  %v1336 = vunpack.c.l.b16 %v140
  %v1337 = vpack.c.b16 %v1266, %v1265
  %v1338 = vpack.c.b16 %v1268, %v1267
  %v1339 = vpack.c.b16 %v1270, %v1269
  %v1340 = vpack.c.b16 %v1272, %v1271
  %v1341 = vpack.c.b16 %v1274, %v1273
  %v1342 = vpack.c.b16 %v1276, %v1275
  %v1343 = vpack.c.b16 %v1278, %v1277
  %v1344 = vpack.c.b16 %v1280, %v1279
  %v1345 = vpack.c.b16 %v1282, %v1281
  %v1346 = vpack.c.b16 %v1284, %v1283
  %v1347 = vpack.c.b16 %v1286, %v1285
  %v1348 = vpack.c.b16 %v1288, %v1287
  %v1349 = vpack.c.b16 %v1290, %v1289
  %v1350 = vpack.c.b16 %v1292, %v1291
  %v1351 = vpack.c.b16 %v1294, %v1293
  %v1352 = vpack.c.b16 %v1296, %v1295
  %v1353 = vpack.c.b16 %v1298, %v1297
  %v1354 = vpack.c.b16 %v1300, %v1299
  %v1355 = vpack.c.b16 %v1302, %v1301
  %v1356 = vpack.c.b16 %v1304, %v1303
  %v1357 = vpack.c.b16 %v1306, %v1305
  %v1358 = vpack.c.b16 %v1308, %v1307
  %v1359 = vpack.c.b16 %v1310, %v1309
  %v1360 = vpack.c.b16 %v1312, %v1311
  %v1361 = vpack.c.b16 %v1314, %v1313
  %v1362 = vpack.c.b16 %v1316, %v1315
  %v1363 = vpack.c.b16 %v1318, %v1317
  %v1364 = vpack.c.b16 %v1320, %v1319
  %v1365 = vpack.c.b16 %v1322, %v1321
  %v1366 = vpack.c.b16 %v1324, %v1323
  %v1367 = vpack.c.b16 %v1326, %v1325
  %v1368 = vpack.c.b16 %v1328, %v1327
  %v1369 = vpack.c.b16 %v1330, %v1329
  %v1370 = vpack.c.b16 %v1332, %v1331
  %v1371 = vpack.c.b16 %v1334, %v1333
  %v1372 = vpack.c.b16 %v1336, %v1335
  %v1410 = vsel %vm677, %v1125, 0
  %v1413 = vsel %vm677, %v1130, 0
  %v1416 = vsel %vm677, %v1135, 0
  %v1419 = vsel %vm677, %v1140, 0
  %v1422 = vsel %vm677, %v1145, 0
  %v1425 = vsel %vm677, %v1150, 0
  %v1428 = vsel %vm677, %v1155, 0
  %v1431 = vsel %vm677, %v1160, 0
  %1433 = vmatprep.subr.bf16.mxu0 0
  %1434 = vmatpush1.bf16.msra.mxu0 %v1344
  %1435 = vmatprep.subr.bf16.mxu0 0
  %1436 = vmatpush1.bf16.msra.mxu0 %v1343
  %1437 = vmatprep.subr.bf16.mxu0 0
  %1438 = vmatpush1.bf16.msra.mxu0 %v1342
  %1439 = vmatprep.subr.bf16.mxu0 0
  %1440 = vmatpush1.bf16.msra.mxu0 %v1341
  %1441 = vmatprep.subr.bf16.mxu0 0
  %1442 = vmatpush1.bf16.msra.mxu0 %v1340
  %1443 = vmatprep.subr.bf16.mxu0 0
  %1444 = vmatpush1.bf16.msra.mxu0 %v1339
  %1445 = vmatprep.subr.bf16.mxu0 0
  %1446 = vmatpush1.bf16.msra.mxu0 %v1338
  %1447 = vmatprep.subr.bf16.mxu0 0
  %1448 = vmatpush1.bf16.msra.mxu0 %v1337
  %1449 = vmatprep.subr.bf16.mxu0 0
  %1450 = vmatpush2.bf16.msra.mxu0 %v1352
  %1451 = vmatprep.subr.bf16.mxu0 0
  %1452 = vmatpush2.bf16.msra.mxu0 %v1351
  %1453 = vmatprep.subr.bf16.mxu0 0
  %1454 = vmatpush2.bf16.msra.mxu0 %v1350
  %1455 = vmatprep.subr.bf16.mxu0 0
  %1456 = vmatpush2.bf16.msra.mxu0 %v1349
  %1457 = vmatprep.subr.bf16.mxu0 0
  %1458 = vmatpush2.bf16.msra.mxu0 %v1348
  %1459 = vmatprep.subr.bf16.mxu0 0
  %1460 = vmatpush2.bf16.msra.mxu0 %v1347
  %1461 = vmatprep.subr.bf16.mxu0 0
  %1462 = vmatpush2.bf16.msra.mxu0 %v1346
  %1463 = vmatprep.subr.bf16.mxu0 0
  %1464 = vmatpush2.bf16.msra.mxu0 %v1345
  %1465 = vmatprep.mubr.bf16.mxu0 %v1122
  %1466 = vmatmul.mubr.bf16.gmra.mxu0 %v1121
  %v1467 = vpop.f32.mrf.mxu0
  %v1468 = vadd.f32 %v931, %v1467
  %v1469 = vpop.f32.mrf.mxu0
  %v1470 = vpop.f32.mrf.mxu0
  %v1471 = vadd.f32 %v934, %v1470
  %v1472 = vpop.f32.mrf.mxu0
  %1473 = vmatprep.mubr.bf16.mxu0 %v1127
  %1474 = vmatmul.mubr.bf16.gmra.mxu0 %v1126
  %v1475 = vpop.f32.mrf.mxu0
  %v1476 = vadd.f32 %v939, %v1475
  %v1477 = vpop.f32.mrf.mxu0
  %v1478 = vpop.f32.mrf.mxu0
  %v1479 = vadd.f32 %v942, %v1478
  %v1480 = vpop.f32.mrf.mxu0
  %1481 = vmatprep.mubr.bf16.mxu0 %v1132
  %1482 = vmatmul.mubr.bf16.gmra.mxu0 %v1131
  %v1483 = vpop.f32.mrf.mxu0
  %v1484 = vadd.f32 %v947, %v1483
  %v1485 = vpop.f32.mrf.mxu0
  %v1486 = vpop.f32.mrf.mxu0
  %v1487 = vadd.f32 %v950, %v1486
  %v1488 = vpop.f32.mrf.mxu0
  %1489 = vmatprep.mubr.bf16.mxu0 %v1137
  %1490 = vmatmul.mubr.bf16.gmra.mxu0 %v1136
  %v1491 = vpop.f32.mrf.mxu0
  %v1492 = vadd.f32 %v955, %v1491
  %v1493 = vpop.f32.mrf.mxu0
  %v1494 = vpop.f32.mrf.mxu0
  %v1495 = vadd.f32 %v958, %v1494
  %v1496 = vpop.f32.mrf.mxu0
  %1497 = vmatprep.mubr.bf16.mxu0 %v1142
  %1498 = vmatmul.mubr.bf16.gmra.mxu0 %v1141
  %v1499 = vpop.f32.mrf.mxu0
  %v1500 = vadd.f32 %v963, %v1499
  %v1501 = vpop.f32.mrf.mxu0
  %v1502 = vpop.f32.mrf.mxu0
  %v1503 = vadd.f32 %v966, %v1502
  %v1504 = vpop.f32.mrf.mxu0
  %1505 = vmatprep.mubr.bf16.mxu0 %v1147
  %1506 = vmatmul.mubr.bf16.gmra.mxu0 %v1146
  %v1507 = vpop.f32.mrf.mxu0
  %v1508 = vadd.f32 %v971, %v1507
  %v1509 = vpop.f32.mrf.mxu0
  %v1510 = vpop.f32.mrf.mxu0
  %v1511 = vadd.f32 %v974, %v1510
  %v1512 = vpop.f32.mrf.mxu0
  %1513 = vmatprep.mubr.bf16.mxu0 %v1152
  %1514 = vmatmul.mubr.bf16.gmra.mxu0 %v1151
  %v1515 = vpop.f32.mrf.mxu0
  %v1516 = vadd.f32 %v979, %v1515
  %v1517 = vpop.f32.mrf.mxu0
  %v1518 = vpop.f32.mrf.mxu0
  %v1519 = vadd.f32 %v982, %v1518
  %v1520 = vpop.f32.mrf.mxu0
  %1521 = vmatprep.mubr.bf16.mxu0 %v1157
  %1522 = vmatmul.mubr.bf16.gmra.mxu0 %v1156
  %v1523 = vpop.f32.mrf.mxu0
  %v1524 = vadd.f32 %v987, %v1523
  %v1525 = vpop.f32.mrf.mxu0
  %v1526 = vpop.f32.mrf.mxu0
  %v1527 = vadd.f32 %v990, %v1526
  %v1528 = vpop.f32.mrf.mxu0
  %1529 = vdwg.mxu0
  %1530 = vmatprep.subr.bf16.mxu0 0
  %1531 = vmatpush1.bf16.msra.mxu0 %v1360
  %1532 = vmatprep.subr.bf16.mxu0 0
  %1533 = vmatpush1.bf16.msra.mxu0 %v1359
  %1534 = vmatprep.subr.bf16.mxu0 0
  %1535 = vmatpush1.bf16.msra.mxu0 %v1358
  %1536 = vmatprep.subr.bf16.mxu0 0
  %1537 = vmatpush1.bf16.msra.mxu0 %v1357
  %1538 = vmatprep.subr.bf16.mxu0 0
  %1539 = vmatpush1.bf16.msra.mxu0 %v1356
  %1540 = vmatprep.subr.bf16.mxu0 0
  %1541 = vmatpush1.bf16.msra.mxu0 %v1355
  %1542 = vmatprep.subr.bf16.mxu0 0
  %1543 = vmatpush1.bf16.msra.mxu0 %v1354
  %1544 = vmatprep.subr.bf16.mxu0 0
  %1545 = vmatpush1.bf16.msra.mxu0 %v1353
  %1546 = vmatprep.subr.bf16.mxu0 0
  %1547 = vmatpush2.bf16.msra.mxu0 %v1368
  %1548 = vmatprep.subr.bf16.mxu0 0
  %1549 = vmatpush2.bf16.msra.mxu0 %v1367
  %1550 = vmatprep.subr.bf16.mxu0 0
  %1551 = vmatpush2.bf16.msra.mxu0 %v1366
  %1552 = vmatprep.subr.bf16.mxu0 0
  %1553 = vmatpush2.bf16.msra.mxu0 %v1365
  %1554 = vmatprep.subr.bf16.mxu0 0
  %1555 = vmatpush2.bf16.msra.mxu0 %v1364
  %1556 = vmatprep.subr.bf16.mxu0 0
  %1557 = vmatpush2.bf16.msra.mxu0 %v1363
  %1558 = vmatprep.subr.bf16.mxu0 0
  %1559 = vmatpush2.bf16.msra.mxu0 %v1362
  %1560 = vmatprep.subr.bf16.mxu0 0
  %1561 = vmatpush2.bf16.msra.mxu0 %v1361
  %1562 = vmatprep.mubr.bf16.mxu0 %v1124
  %1563 = vmatmul.mubr.bf16.gmra.mxu0 %v1123
  %v1564 = vpop.f32.mrf.mxu0
  %v1565 = vadd.f32 %v1468, %v1564
  %v1566 = vpop.f32.mrf.mxu0
  %v1567 = vpop.f32.mrf.mxu0
  %v1568 = vadd.f32 %v1471, %v1567
  %v1569 = vpop.f32.mrf.mxu0
  %1570 = vmatprep.mubr.bf16.mxu0 %v1129
  %1571 = vmatmul.mubr.bf16.gmra.mxu0 %v1128
  %v1572 = vpop.f32.mrf.mxu0
  %v1573 = vadd.f32 %v1476, %v1572
  %v1574 = vpop.f32.mrf.mxu0
  %v1575 = vpop.f32.mrf.mxu0
  %v1576 = vadd.f32 %v1479, %v1575
  %v1577 = vpop.f32.mrf.mxu0
  %1578 = vmatprep.mubr.bf16.mxu0 %v1134
  %1579 = vmatmul.mubr.bf16.gmra.mxu0 %v1133
  %v1580 = vpop.f32.mrf.mxu0
  %v1581 = vadd.f32 %v1484, %v1580
  %v1582 = vpop.f32.mrf.mxu0
  %v1583 = vpop.f32.mrf.mxu0
  %v1584 = vadd.f32 %v1487, %v1583
  %v1585 = vpop.f32.mrf.mxu0
  %1586 = vmatprep.mubr.bf16.mxu0 %v1139
  %1587 = vmatmul.mubr.bf16.gmra.mxu0 %v1138
  %v1588 = vpop.f32.mrf.mxu0
  %v1589 = vadd.f32 %v1492, %v1588
  %v1590 = vpop.f32.mrf.mxu0
  %v1591 = vpop.f32.mrf.mxu0
  %v1592 = vadd.f32 %v1495, %v1591
  %v1593 = vpop.f32.mrf.mxu0
  %1594 = vmatprep.mubr.bf16.mxu0 %v1144
  %1595 = vmatmul.mubr.bf16.gmra.mxu0 %v1143
  %v1596 = vpop.f32.mrf.mxu0
  %v1597 = vadd.f32 %v1500, %v1596
  %v1598 = vpop.f32.mrf.mxu0
  %v1599 = vpop.f32.mrf.mxu0
  %v1600 = vadd.f32 %v1503, %v1599
  %v1601 = vpop.f32.mrf.mxu0
  %1602 = vmatprep.mubr.bf16.mxu0 %v1149
  %1603 = vmatmul.mubr.bf16.gmra.mxu0 %v1148
  %v1604 = vpop.f32.mrf.mxu0
  %v1605 = vadd.f32 %v1508, %v1604
  %v1606 = vpop.f32.mrf.mxu0
  %v1607 = vpop.f32.mrf.mxu0
  %v1608 = vadd.f32 %v1511, %v1607
  %v1609 = vpop.f32.mrf.mxu0
  %1610 = vmatprep.mubr.bf16.mxu0 %v1154
  %1611 = vmatmul.mubr.bf16.gmra.mxu0 %v1153
  %v1612 = vpop.f32.mrf.mxu0
  %v1613 = vadd.f32 %v1516, %v1612
  %v1614 = vpop.f32.mrf.mxu0
  %v1615 = vpop.f32.mrf.mxu0
  %v1616 = vadd.f32 %v1519, %v1615
  %v1617 = vpop.f32.mrf.mxu0
  %1618 = vmatprep.mubr.bf16.mxu0 %v1159
  %1619 = vmatmul.mubr.bf16.gmra.mxu0 %v1158
  %v1620 = vpop.f32.mrf.mxu0
  %v1621 = vadd.f32 %v1524, %v1620
  %v1622 = vpop.f32.mrf.mxu0
  %v1623 = vpop.f32.mrf.mxu0
  %v1624 = vadd.f32 %v1527, %v1623
  %v1625 = vpop.f32.mrf.mxu0
  %1626 = vdwg.mxu0
  %1627 = vmatprep.subr.bf16.mxu0 0
  %1628 = vmatpush1.bf16.msra.mxu0 0
  %1629 = vmatprep.subr.bf16.mxu0 0
  %1630 = vmatpush1.bf16.msra.mxu0 0
  %1631 = vmatprep.subr.bf16.mxu0 0
  %1632 = vmatpush1.bf16.msra.mxu0 0
  %1633 = vmatprep.subr.bf16.mxu0 0
  %1634 = vmatpush1.bf16.msra.mxu0 0
  %1635 = vmatprep.subr.bf16.mxu0 0
  %1636 = vmatpush1.bf16.msra.mxu0 %v1372
  %1637 = vmatprep.subr.bf16.mxu0 0
  %1638 = vmatpush1.bf16.msra.mxu0 %v1371
  %1639 = vmatprep.subr.bf16.mxu0 0
  %1640 = vmatpush1.bf16.msra.mxu0 %v1370
  %1641 = vmatprep.subr.bf16.mxu0 0
  %1642 = vmatpush1.bf16.msra.mxu0 %v1369
  %1643 = vmatprep.subr.bf16.mxu0 0
  %1644 = vmatpush2.bf16.msra.mxu0 0
  %1645 = vmatprep.subr.bf16.mxu0 0
  %1646 = vmatpush2.bf16.msra.mxu0 0
  %1647 = vmatprep.subr.bf16.mxu0 0
  %1648 = vmatpush2.bf16.msra.mxu0 0
  %1649 = vmatprep.subr.bf16.mxu0 0
  %1650 = vmatpush2.bf16.msra.mxu0 0
  %1651 = vmatprep.subr.bf16.mxu0 0
  %1652 = vmatpush2.bf16.msra.mxu0 0
  %1653 = vmatprep.subr.bf16.mxu0 0
  %1654 = vmatpush2.bf16.msra.mxu0 0
  %1655 = vmatprep.subr.bf16.mxu0 0
  %1656 = vmatpush2.bf16.msra.mxu0 0
  %1657 = vmatprep.subr.bf16.mxu0 0
  %1658 = vmatpush2.bf16.msra.mxu0 0
  %1659 = vmatprep.mubr.bf16.mxu0 0
  %1660 = vmatmul.mubr.bf16.gmra.mxu0 %v1410
  %v1661 = vpop.f32.mrf.mxu0
  %v1662 = vadd.f32 %v1565, %v1661
  %v1663 = vpop.f32.mrf.mxu0
  %v1664 = vpop.f32.mrf.mxu0
  %v1665 = vadd.f32 %v1568, %v1664
  %v1666 = vpop.f32.mrf.mxu0
  %1667 = vmatprep.mubr.bf16.mxu0 0
  %1668 = vmatmul.mubr.bf16.gmra.mxu0 %v1413
  %v1669 = vpop.f32.mrf.mxu0
  %v1670 = vadd.f32 %v1573, %v1669
  %v1671 = vpop.f32.mrf.mxu0
  %v1672 = vpop.f32.mrf.mxu0
  %v1673 = vadd.f32 %v1576, %v1672
  %v1674 = vpop.f32.mrf.mxu0
  %1675 = vmatprep.mubr.bf16.mxu0 0
  %1676 = vmatmul.mubr.bf16.gmra.mxu0 %v1416
  %v1677 = vpop.f32.mrf.mxu0
  %v1678 = vadd.f32 %v1581, %v1677
  %v1679 = vpop.f32.mrf.mxu0
  %v1680 = vpop.f32.mrf.mxu0
  %v1681 = vadd.f32 %v1584, %v1680
  %v1682 = vpop.f32.mrf.mxu0
  %1683 = vmatprep.mubr.bf16.mxu0 0
  %1684 = vmatmul.mubr.bf16.gmra.mxu0 %v1419
  %v1685 = vpop.f32.mrf.mxu0
  %v1686 = vadd.f32 %v1589, %v1685
  %v1687 = vpop.f32.mrf.mxu0
  %v1688 = vpop.f32.mrf.mxu0
  %v1689 = vadd.f32 %v1592, %v1688
  %v1690 = vpop.f32.mrf.mxu0
  %1691 = vmatprep.mubr.bf16.mxu0 0
  %1692 = vmatmul.mubr.bf16.gmra.mxu0 %v1422
  %v1693 = vpop.f32.mrf.mxu0
  %v1694 = vadd.f32 %v1597, %v1693
  %v1695 = vpop.f32.mrf.mxu0
  %v1696 = vpop.f32.mrf.mxu0
  %v1697 = vadd.f32 %v1600, %v1696
  %v1698 = vpop.f32.mrf.mxu0
  %1699 = vmatprep.mubr.bf16.mxu0 0
  %1700 = vmatmul.mubr.bf16.gmra.mxu0 %v1425
  %v1701 = vpop.f32.mrf.mxu0
  %v1702 = vadd.f32 %v1605, %v1701
  %v1703 = vpop.f32.mrf.mxu0
  %v1704 = vpop.f32.mrf.mxu0
  %v1705 = vadd.f32 %v1608, %v1704
  %v1706 = vpop.f32.mrf.mxu0
  %1707 = vmatprep.mubr.bf16.mxu0 0
  %1708 = vmatmul.mubr.bf16.gmra.mxu0 %v1428
  %v1709 = vpop.f32.mrf.mxu0
  %v1710 = vadd.f32 %v1613, %v1709
  %v1711 = vpop.f32.mrf.mxu0
  %v1712 = vpop.f32.mrf.mxu0
  %v1713 = vadd.f32 %v1616, %v1712
  %v1714 = vpop.f32.mrf.mxu0
  %1715 = vmatprep.mubr.bf16.mxu0 0
  %1716 = vmatmul.mubr.bf16.gmra.mxu0 %v1431
  %v1717 = vpop.f32.mrf.mxu0
  %v1718 = vadd.f32 %v1621, %v1717
  %v1719 = vpop.f32.mrf.mxu0
  %v1720 = vpop.f32.mrf.mxu0
  %v1721 = vadd.f32 %v1624, %v1720
  %v1722 = vpop.f32.mrf.mxu0
  %1723 = vdwg.mxu0
  %v1724 = vld [vmem:[%s4] sm:$0x1]
  %v1725 = vlaneseq
  %v1726 = vshrl.u32 %v1725, 7
  %v1727 = vsub.s32 0, %v1726
  %v1728 = vrot.slane %v1724, %v1727
  %v1729 = vadd.f32 %v1662, %v1728
  %v1730 = vadd.f32 %v1665, %v1728
  %v1731 = vadd.f32 %v1670, %v1728
  %v1732 = vadd.f32 %v1673, %v1728
  %v1733 = vadd.f32 %v1678, %v1728
  %v1734 = vadd.f32 %v1681, %v1728
  %v1735 = vadd.f32 %v1686, %v1728
  %v1736 = vadd.f32 %v1689, %v1728
  %v1737 = vadd.f32 %v1694, %v1728
  %v1738 = vadd.f32 %v1697, %v1728
  %v1739 = vadd.f32 %v1702, %v1728
  %v1740 = vadd.f32 %v1705, %v1728
  %v1741 = vadd.f32 %v1710, %v1728
  %v1742 = vadd.f32 %v1713, %v1728
  %v1743 = vadd.f32 %v1718, %v1728
  %v1744 = vadd.f32 %v1721, %v1728
  %v1745 = vtanh.pop %v1729
  %v1746 = vtanh.pop %v1730
  %v1747 = vtanh.pop %v1731
  %v1748 = vtanh.pop %v1732
  %v1749 = vtanh.pop %v1733
  %v1750 = vtanh.pop %v1734
  %v1751 = vtanh.pop %v1735
  %v1752 = vtanh.pop %v1736
  %v1753 = vtanh.pop %v1737
  %v1754 = vtanh.pop %v1738
  %v1755 = vtanh.pop %v1739
  %v1756 = vtanh.pop %v1740
  %v1757 = vtanh.pop %v1741
  %v1758 = vtanh.pop %v1742
  %v1759 = vtanh.pop %v1743
  %v1760 = vtanh.pop %v1744
  %v1761 = vpack.c.bf16 %v1746, %v1745
  %v1762 = vpack.c.bf16 %v1748, %v1747
  %v1763 = vpack.c.bf16 %v1750, %v1749
  %v1764 = vpack.c.bf16 %v1752, %v1751
  %v1765 = vpack.c.bf16 %v1754, %v1753
  %v1766 = vpack.c.bf16 %v1756, %v1755
  %v1767 = vpack.c.bf16 %v1758, %v1757
  %v1768 = vpack.c.bf16 %v1760, %v1759
  %v1777 = vunpack.c.l.b16 %v1761
  %v1778 = vunpack.c.h.b16 %v1761
  %v1779 = vunpack.c.l.b16 %v1762
  %v1780 = vunpack.c.h.b16 %v1762
  %v1781 = vunpack.c.l.b16 %v1763
  %v1782 = vunpack.c.h.b16 %v1763
  %v1783 = vunpack.c.l.b16 %v1764
  %v1784 = vunpack.c.h.b16 %v1764
  %v1785 = vunpack.c.l.b16 %v1765
  %v1786 = vunpack.c.h.b16 %v1765
  %v1787 = vunpack.c.l.b16 %v1766
  %v1788 = vunpack.c.h.b16 %v1766
  %v1789 = vunpack.c.l.b16 %v1767
  %v1790 = vunpack.c.h.b16 %v1767
  %v1791 = vunpack.c.l.b16 %v1768
  %v1792 = vunpack.c.h.b16 %v1768
  %v1793 = vpack.c.b16 %v1777, %v1777
  %v1794 = vpack.c.b16 %v1778, %v1778
  %v1795 = vpack.c.b16 %v1779, %v1779
  %v1796 = vpack.c.b16 %v1780, %v1780
  %v1797 = vpack.c.b16 %v1781, %v1781
  %v1798 = vpack.c.b16 %v1782, %v1782
  %v1799 = vpack.c.b16 %v1783, %v1783
  %v1800 = vpack.c.b16 %v1784, %v1784
  %v1801 = vpack.c.b16 %v1785, %v1785
  %v1802 = vpack.c.b16 %v1786, %v1786
  %v1803 = vpack.c.b16 %v1787, %v1787
  %v1804 = vpack.c.b16 %v1788, %v1788
  %v1805 = vpack.c.b16 %v1789, %v1789
  %v1806 = vpack.c.b16 %v1790, %v1790
  %v1807 = vpack.c.b16 %v1791, %v1791
  %v1808 = vpack.c.b16 %v1792, %v1792
  %1825 = vst [vmem:[%s5] sm:$0xf] %v1793
  %1826 = vst [vmem:[%s5 + $0x4] sm:$0xf] %v1794
  %1827 = vst [vmem:[%s5 + $0x8] sm:$0xf] %v1795
  %1828 = vst [vmem:[%s5 + $0xc] sm:$0xf] %v1796
  %1829 = vst [vmem:[%s5 + $0x10] sm:$0xf] %v1797
  %1830 = vst [vmem:[%s5 + $0x14] sm:$0xf] %v1798
  %1831 = vst [vmem:[%s5 + $0x18] sm:$0xf] %v1799
  %1832 = vst [vmem:[%s5 + $0x1c] sm:$0xf] %v1800
  %1833 = vst [vmem:[%s5 + $0x20] sm:$0xf] %v1801
  %1834 = vst [vmem:[%s5 + $0x24] sm:$0xf] %v1802
  %1835 = vst [vmem:[%s5 + $0x28] sm:$0xf] %v1803
  %1836 = vst [vmem:[%s5 + $0x2c] sm:$0xf] %v1804
  %1837 = vst [vmem:[%s5 + $0x30] sm:$0xf] %v1805
  %1838 = vst [vmem:[%s5 + $0x34] sm:$0xf] %v1806
  %1839 = vst [vmem:[%s5 + $0x38] sm:$0xf] %v1807
  %1840 = vst [vmem:[%s5 + $0x3c] sm:$0xf] %v1808
  // Predicated region
  $region22: #{cgan_forward.15} parent=0 // pred_check
    _
  $region23: #{cgan_forward.15} parent=0 // pred_check_branch
    %1842 = sbr.rel (0) target = $region25
  $region24: #{cgan_forward.15} parent=0 // pred_region
    _
  $region25: #{cgan_forward.15} parent=0 // pred_fallthru
    _
  // Predicated region
  $region26: #{cgan_forward.15} parent=0 // pred_check
    _
  $region27: #{cgan_forward.15} parent=0 // pred_check_branch
    %1844 = sbr.rel (0) target = $region29
  $region28: #{cgan_forward.15} parent=0 // pred_region
    _
  $region29: #{cgan_forward.15} parent=0 // pred_fallthru
    _

</llo_original>
